<compile_context>
chip_gen: v7x
topology: tpu7x:2x2x1
jax: 0.10.0
libtpu: 0.0.40
codegen_flags: <defaults>
</compile_context>

<pallas_src>
import math

import jax
import jax.numpy as jnp
from jax.experimental import pallas as pl
from jax.experimental.pallas import tpu as pltpu

# ---------------- config (synthetic, small) ----------------
HID_DIM = 32
N_HEADS = 4
HEAD_DIM = HID_DIM // N_HEADS
PF_DIM = 64
N_ENC_LAYERS = 2
N_DEC_LAYERS = 2
SRC_VOCAB = 20
TRG_VOCAB = 18
MAX_LEN = 100
SRC_PAD_IDX = 0
TRG_PAD_IDX = 0
INV_SCALE = 1.0 / math.sqrt(HEAD_DIM)

ENC_STACK_ORDER = (
    "wqkv", "bqkv", "wo", "bo", "ln1_g", "ln1_b",
    "w1", "b1", "w2", "b2", "ln2_g", "ln2_b",
)
DEC_STACK_ORDER = (
    "sa_wqkv", "sa_bqkv", "sa_wo", "sa_bo", "ln1_g", "ln1_b",
    "ca_wq", "ca_bq", "ca_wkv", "ca_bkv", "ca_wo", "ca_bo", "ln2_g", "ln2_b",
    "w1", "b1", "w2", "b2", "ln3_g", "ln3_b",
)


# ---------------- in-kernel helpers (operate on traced values) ----------------
def _mm(x, w, b=None):
    y = jnp.dot(x, w, preferred_element_type=jnp.float32)
    if b is not None:
        y = y + b
    return y


def _layer_norm(x, g, b, eps=1e-5):
    # x: [M, D], g/b: [1, D]   (matches torch.nn.LayerNorm(D), eps=1e-5)
    mean = jnp.mean(x, axis=-1, keepdims=True)
    cen = x - mean
    var = jnp.mean(cen * cen, axis=-1, keepdims=True)
    return cen * jax.lax.rsqrt(var + eps) * g + b


def _mha_heads(q, k, v, mask, need_attn):
    # q: [Lq, D] (already scaled by 1/sqrt(head_dim)), k/v: [Lk, D]
    # mask: int32, [1, Lk] or [Lq, Lk]  (nonzero = keep)
    outs, attns = [], []
    for h in range(N_HEADS):
        sl = slice(h * HEAD_DIM, (h + 1) * HEAD_DIM)
        energy = jax.lax.dot_general(
            q[:, sl], k[:, sl], (((1,), (1,)), ((), ())),
            preferred_element_type=jnp.float32)                 # [Lq, Lk]
        energy = jnp.where(mask != 0, energy, -1e10)
        energy = energy - jnp.max(energy, axis=-1, keepdims=True)
        p = jnp.exp(energy)
        attn = p / jnp.sum(p, axis=-1, keepdims=True)
        outs.append(jnp.dot(attn, v[:, sl], preferred_element_type=jnp.float32))
        if need_attn:
            attns.append(attn)
    return jnp.concatenate(outs, axis=-1), attns                # [Lq, D]


# ---------------- fused encoder-stack kernel (one grid step per batch elem) --
def _encoder_kernel(x_ref, sm_ref,
                    wqkv_ref, bqkv_ref, wo_ref, bo_ref, ln1g_ref, ln1b_ref,
                    w1_ref, b1_ref, w2_ref, b2_ref, ln2g_ref, ln2b_ref,
                    o_ref):
    x = x_ref[0]          # [Ls, D]
    mask = sm_ref[0]      # [1, Ls]  (broadcasts over query rows)
    for l in range(N_ENC_LAYERS):
        qkv = _mm(x, wqkv_ref[l], bqkv_ref[l])                   # [Ls, 3D]
        q = qkv[:, 0:HID_DIM] * INV_SCALE
        k = qkv[:, HID_DIM:2 * HID_DIM]
        v = qkv[:, 2 * HID_DIM:3 * HID_DIM]
        sa, _ = _mha_heads(q, k, v, mask, need_attn=False)
        sa = _mm(sa, wo_ref[l], bo_ref[l])
        x = _layer_norm(x + sa, ln1g_ref[l], ln1b_ref[l])
        hdn = jnp.maximum(_mm(x, w1_ref[l], b1_ref[l]), 0.0)
        ff = _mm(hdn, w2_ref[l], b2_ref[l])
        x = _layer_norm(x + ff, ln2g_ref[l], ln2b_ref[l])
    o_ref[0] = x


# ---------------- fused decoder-stack kernel (one grid step per batch elem) --
def _decoder_kernel(y_ref, enc_ref, tm_ref, sm_ref,
                    sa_wqkv_ref, sa_bqkv_ref, sa_wo_ref, sa_bo_ref,
                    ln1g_ref, ln1b_ref,
                    ca_wq_ref, ca_bq_ref, ca_wkv_ref, ca_bkv_ref,
                    ca_wo_ref, ca_bo_ref, ln2g_ref, ln2b_ref,
                    w1_ref, b1_ref, w2_ref, b2_ref, ln3g_ref, ln3b_ref,
                    wout_ref, bout_ref,
                    logits_ref, attn_ref):
    x = y_ref[0]              # [Lt, D]
    enc = enc_ref[0]          # [Ls, D]
    self_mask = tm_ref[0]     # [Lt, Lt]  pad & causal
    cross_mask = sm_ref[0]    # [1, Ls]   src pad
    for l in range(N_DEC_LAYERS):
        # masked self-attention
        qkv = _mm(x, sa_wqkv_ref[l], sa_bqkv_ref[l])
        q = qkv[:, 0:HID_DIM] * INV_SCALE
        k = qkv[:, HID_DIM:2 * HID_DIM]
        v = qkv[:, 2 * HID_DIM:3 * HID_DIM]
        sa, _ = _mha_heads(q, k, v, self_mask, need_attn=False)
        sa = _mm(sa, sa_wo_ref[l], sa_bo_ref[l])
        x = _layer_norm(x + sa, ln1g_ref[l], ln1b_ref[l])

        # encoder (cross) attention — only the last layer's probs are exported
        q = _mm(x, ca_wq_ref[l], ca_bq_ref[l]) * INV_SCALE
        kv = _mm(enc, ca_wkv_ref[l], ca_bkv_ref[l])
        k = kv[:, 0:HID_DIM]
        v = kv[:, HID_DIM:2 * HID_DIM]
        need_attn = (l == N_DEC_LAYERS - 1)
        ca, attns = _mha_heads(q, k, v, cross_mask, need_attn=need_attn)
        ca = _mm(ca, ca_wo_ref[l], ca_bo_ref[l])
        x = _layer_norm(x + ca, ln2g_ref[l], ln2b_ref[l])

        # position-wise feed-forward
        hdn = jnp.maximum(_mm(x, w1_ref[l], b1_ref[l]), 0.0)
        ff = _mm(hdn, w2_ref[l], b2_ref[l])
        x = _layer_norm(x + ff, ln3g_ref[l], ln3b_ref[l])

        if need_attn:
            for h in range(N_HEADS):
                attn_ref[0, h] = attns[h]

    logits_ref[0] = _mm(x, wout_ref[...], bout_ref[...])


# ---------------- BlockSpec helpers ----------------
def _batched_spec(shape):
    # one block per batch element along the leading axis
    nd = len(shape)
    return pl.BlockSpec((1,) + tuple(shape[1:]),
                        lambda b, _nd=nd: (b,) + (0,) * (_nd - 1))


def _shared_spec(shape):
    # whole array, same block for every grid step (DMA'd once)
    nd = len(shape)
    return pl.BlockSpec(tuple(shape), lambda b, _nd=nd: (0,) * _nd)


def _run_encoder(pe, x, src_mask3, B, Ls):
    weights = [pe["stack"][n] for n in ENC_STACK_ORDER]
    in_specs = ([_batched_spec(x.shape), _batched_spec(src_mask3.shape)]
                + [_shared_spec(w.shape) for w in weights])
    return pl.pallas_call(
        _encoder_kernel,
        grid=(B,),
        in_specs=in_specs,
        out_specs=_batched_spec((B, Ls, HID_DIM)),
        out_shape=jax.ShapeDtypeStruct((B, Ls, HID_DIM), jnp.float32),
        compiler_params=pltpu.CompilerParams(dimension_semantics=("parallel",)),
    )(x, src_mask3, *weights)


def _run_decoder(pd, y, enc, trg_mask, src_mask3, B, Lt, Ls):
    weights = [pd["stack"][n] for n in DEC_STACK_ORDER] + [pd["w_out"], pd["b_out"]]
    in_specs = ([_batched_spec(y.shape), _batched_spec(enc.shape),
                 _batched_spec(trg_mask.shape), _batched_spec(src_mask3.shape)]
                + [_shared_spec(w.shape) for w in weights])
    out_shapes = (jax.ShapeDtypeStruct((B, Lt, TRG_VOCAB), jnp.float32),
                  jax.ShapeDtypeStruct((B, N_HEADS, Lt, Ls), jnp.float32))
    out_specs = (_batched_spec((B, Lt, TRG_VOCAB)),
                 _batched_spec((B, N_HEADS, Lt, Ls)))
    return pl.pallas_call(
        _decoder_kernel,
        grid=(B,),
        in_specs=in_specs,
        out_specs=out_specs,
        out_shape=out_shapes,
        compiler_params=pltpu.CompilerParams(dimension_semantics=("parallel",)),
    )(y, enc, trg_mask, src_mask3, *weights)


# ---------------- model forward ----------------
@jax.jit
def seq2seq_forward(params, src, trg):
    B, Ls = src.shape
    Lt = trg.shape[1]

    # masks (tiny; built in XLA, broadcast inside the kernels)
    src_mask = (src != SRC_PAD_IDX).astype(jnp.int32).reshape(B, 1, Ls)      # [B,1,Ls]
    causal = jnp.tril(jnp.ones((Lt, Lt), dtype=jnp.int32))
    trg_mask = (trg != TRG_PAD_IDX).astype(jnp.int32)[:, None, :] * causal[None, :, :]  # [B,Lt,Lt]

    pe, pd = params["encoder"], params["decoder"]

    # TODO(synk): token/position embedding gathers are kept in plain JAX (one
    # tiny fused XLA gather each); everything else runs inside 2 fused kernels.
    x = pe["tok_emb"][src] * math.sqrt(HID_DIM) + pe["pos_emb"][:Ls][None, :, :]
    enc = _run_encoder(pe, x, src_mask, B, Ls)

    y = pd["tok_emb"][trg] * math.sqrt(HID_DIM) + pd["pos_emb"][:Lt][None, :, :]
    logits, attention = _run_decoder(pd, y, enc, trg_mask, src_mask, B, Lt, Ls)
    return logits, attention


# ---------------- deterministic parameter init ----------------
def _init_linear(key, din, dout):
    w = jax.random.normal(key, (din, dout), jnp.float32) * 0.02
    b = jnp.zeros((dout,), jnp.float32)
    return w, b


def _init_enc_layer(key):
    kq, kk, kv, ko, k1, k2 = jax.random.split(key, 6)
    wq, bq = _init_linear(kq, HID_DIM, HID_DIM)
    wk, bk = _init_linear(kk, HID_DIM, HID_DIM)
    wv, bv = _init_linear(kv, HID_DIM, HID_DIM)
    wo, bo = _init_linear(ko, HID_DIM, HID_DIM)
    w1, b1 = _init_linear(k1, HID_DIM, PF_DIM)
    w2, b2 = _init_linear(k2, PF_DIM, HID_DIM)
    ones = jnp.ones((1, HID_DIM), jnp.float32)
    zeros = jnp.zeros((1, HID_DIM), jnp.float32)
    return {
        "wqkv": jnp.concatenate([wq, wk, wv], axis=1),
        "bqkv": jnp.concatenate([bq, bk, bv]).reshape(1, 3 * HID_DIM),
        "wo": wo, "bo": bo.reshape(1, HID_DIM),
        "ln1_g": ones, "ln1_b": zeros,
        "w1": w1, "b1": b1.reshape(1, PF_DIM),
        "w2": w2, "b2": b2.reshape(1, HID_DIM),
        "ln2_g": ones, "ln2_b": zeros,
    }


def _init_dec_layer(key):
    ksq, ksk, ksv, kso, kcq, kck, kcv, kco, k1, k2 = jax.random.split(key, 10)
    wq, bq = _init_linear(ksq, HID_DIM, HID_DIM)
    wk, bk = _init_linear(ksk, HID_DIM, HID_DIM)
    wv, bv = _init_linear(ksv, HID_DIM, HID_DIM)
    wo, bo = _init_linear(kso, HID_DIM, HID_DIM)
    cwq, cbq = _init_linear(kcq, HID_DIM, HID_DIM)
    cwk, cbk = _init_linear(kck, HID_DIM, HID_DIM)
    cwv, cbv = _init_linear(kcv, HID_DIM, HID_DIM)
    cwo, cbo = _init_linear(kco, HID_DIM, HID_DIM)
    w1, b1 = _init_linear(k1, HID_DIM, PF_DIM)
    w2, b2 = _init_linear(k2, PF_DIM, HID_DIM)
    ones = jnp.ones((1, HID_DIM), jnp.float32)
    zeros = jnp.zeros((1, HID_DIM), jnp.float32)
    return {
        "sa_wqkv": jnp.concatenate([wq, wk, wv], axis=1),
        "sa_bqkv": jnp.concatenate([bq, bk, bv]).reshape(1, 3 * HID_DIM),
        "sa_wo": wo, "sa_bo": bo.reshape(1, HID_DIM),
        "ln1_g": ones, "ln1_b": zeros,
        "ca_wq": cwq, "ca_bq": cbq.reshape(1, HID_DIM),
        "ca_wkv": jnp.concatenate([cwk, cwv], axis=1),
        "ca_bkv": jnp.concatenate([cbk, cbv]).reshape(1, 2 * HID_DIM),
        "ca_wo": cwo, "ca_bo": cbo.reshape(1, HID_DIM),
        "ln2_g": ones, "ln2_b": zeros,
        "w1": w1, "b1": b1.reshape(1, PF_DIM),
        "w2": w2, "b2": b2.reshape(1, HID_DIM),
        "ln3_g": ones, "ln3_b": zeros,
    }


def init_params(key):
    ke, kd = jax.random.split(key)
    ke_tok, ke_pos, *ke_layers = jax.random.split(ke, 2 + N_ENC_LAYERS)
    kd_tok, kd_pos, kd_out, *kd_layers = jax.random.split(kd, 3 + N_DEC_LAYERS)
    enc_layers = [_init_enc_layer(k) for k in ke_layers]
    dec_layers = [_init_dec_layer(k) for k in kd_layers]
    w_out, b_out = _init_linear(kd_out, HID_DIM, TRG_VOCAB)
    return {
        "encoder": {
            "tok_emb": jax.random.normal(ke_tok, (SRC_VOCAB, HID_DIM), jnp.float32) * 0.02,
            "pos_emb": jax.random.normal(ke_pos, (MAX_LEN, HID_DIM), jnp.float32) * 0.02,
            "stack": {n: jnp.stack([lp[n] for lp in enc_layers], axis=0)
                      for n in ENC_STACK_ORDER},
        },
        "decoder": {
            "tok_emb": jax.random.normal(kd_tok, (TRG_VOCAB, HID_DIM), jnp.float32) * 0.02,
            "pos_emb": jax.random.normal(kd_pos, (MAX_LEN, HID_DIM), jnp.float32) * 0.02,
            "stack": {n: jnp.stack([lp[n] for lp in dec_layers], axis=0)
                      for n in DEC_STACK_ORDER},
            "w_out": w_out,
            "b_out": b_out.reshape(1, TRG_VOCAB),
        },
    }


if __name__ == "__main__":
    key = jax.random.PRNGKey(0)
    kp, ks, kt = jax.random.split(key, 3)
    params = init_params(kp)

    B, SRC_LEN, TRG_LEN = 2, 10, 8
    src = jax.random.randint(ks, (B, SRC_LEN), 0, SRC_VOCAB, dtype=jnp.int32)
    trg = jax.random.randint(kt, (B, TRG_LEN), 0, TRG_VOCAB, dtype=jnp.int32)

    output, attention = seq2seq_forward(params, src, trg)
    jax.block_until_ready((output, attention))

    assert output.shape == (B, TRG_LEN, TRG_VOCAB), output.shape
    assert attention.shape == (B, N_HEADS, TRG_LEN, SRC_LEN), attention.shape
    assert bool(jnp.all(jnp.isfinite(output)))
    assert bool(jnp.all(jnp.isfinite(attention)))
    print("KERNEL_OK")
</pallas_src>

<mosaic_0001>
module attributes {stable_mosaic.version = 11 : i64} {
  func.func @_encoder_kernel(%arg0: i32, %arg1: memref<1x10x32xf32, #tpu.memory_space<vmem>>, %arg2: memref<1x1x10xi32, #tpu.memory_space<vmem>>, %arg3: memref<2x32x96xf32, #tpu.memory_space<vmem>>, %arg4: memref<2x1x96xf32, #tpu.memory_space<vmem>>, %arg5: memref<2x32x32xf32, #tpu.memory_space<vmem>>, %arg6: memref<2x1x32xf32, #tpu.memory_space<vmem>>, %arg7: memref<2x1x32xf32, #tpu.memory_space<vmem>>, %arg8: memref<2x1x32xf32, #tpu.memory_space<vmem>>, %arg9: memref<2x32x64xf32, #tpu.memory_space<vmem>>, %arg10: memref<2x1x64xf32, #tpu.memory_space<vmem>>, %arg11: memref<2x64x32xf32, #tpu.memory_space<vmem>>, %arg12: memref<2x1x32xf32, #tpu.memory_space<vmem>>, %arg13: memref<2x1x32xf32, #tpu.memory_space<vmem>>, %arg14: memref<2x1x32xf32, #tpu.memory_space<vmem>>, %arg15: memref<1x10x32xf32, #tpu.memory_space<vmem>>) attributes {dimension_semantics = [#tpu.dimension_semantics<parallel>], iteration_bounds = array<i64: 2>, scalar_prefetch = 0 : i64, scratch_operands = 0 : i64, tpu.core_type = #tpu.core_type<tc>, window_params = [{transform_indices = @transform_0, window_bounds = array<i64: 1, 10, 32>}, {transform_indices = @transform_1, window_bounds = array<i64: 1, 1, 10>}, {pipeline_mode = #tpu.pipeline_mode<synchronous>, transform_indices = @transform_2, window_bounds = array<i64: 2, 32, 96>}, {pipeline_mode = #tpu.pipeline_mode<synchronous>, transform_indices = @transform_3, window_bounds = array<i64: 2, 1, 96>}, {pipeline_mode = #tpu.pipeline_mode<synchronous>, transform_indices = @transform_4, window_bounds = array<i64: 2, 32, 32>}, {pipeline_mode = #tpu.pipeline_mode<synchronous>, transform_indices = @transform_5, window_bounds = array<i64: 2, 1, 32>}, {pipeline_mode = #tpu.pipeline_mode<synchronous>, transform_indices = @transform_6, window_bounds = array<i64: 2, 1, 32>}, {pipeline_mode = #tpu.pipeline_mode<synchronous>, transform_indices = @transform_7, window_bounds = array<i64: 2, 1, 32>}, {pipeline_mode = #tpu.pipeline_mode<synchronous>, transform_indices = @transform_8, window_bounds = array<i64: 2, 32, 64>}, {pipeline_mode = #tpu.pipeline_mode<synchronous>, transform_indices = @transform_9, window_bounds = array<i64: 2, 1, 64>}, {pipeline_mode = #tpu.pipeline_mode<synchronous>, transform_indices = @transform_10, window_bounds = array<i64: 2, 64, 32>}, {pipeline_mode = #tpu.pipeline_mode<synchronous>, transform_indices = @transform_11, window_bounds = array<i64: 2, 1, 32>}, {pipeline_mode = #tpu.pipeline_mode<synchronous>, transform_indices = @transform_12, window_bounds = array<i64: 2, 1, 32>}, {pipeline_mode = #tpu.pipeline_mode<synchronous>, transform_indices = @transform_13, window_bounds = array<i64: 2, 1, 32>}, {transform_indices = @transform_14, window_bounds = array<i64: 1, 10, 32>}]} {
    %c0 = arith.constant 0 : index
    %c0_0 = arith.constant 0 : index
    %c0_1 = arith.constant 0 : index
    %0 = vector.load %arg1[%c0, %c0_0, %c0_1] : memref<1x10x32xf32, #tpu.memory_space<vmem>>, vector<1x10x32xf32>
    %1 = vector.shape_cast %0 : vector<1x10x32xf32> to vector<10x32xf32>
    %c0_2 = arith.constant 0 : index
    %c0_3 = arith.constant 0 : index
    %c0_4 = arith.constant 0 : index
    %2 = vector.load %arg2[%c0_2, %c0_3, %c0_4] : memref<1x1x10xi32, #tpu.memory_space<vmem>>, vector<1x1x10xi32>
    %3 = vector.shape_cast %2 : vector<1x1x10xi32> to vector<1x10xi32>
    %c0_5 = arith.constant 0 : index
    %c0_6 = arith.constant 0 : index
    %c0_7 = arith.constant 0 : index
    %4 = vector.load %arg3[%c0_5, %c0_6, %c0_7] : memref<2x32x96xf32, #tpu.memory_space<vmem>>, vector<1x32x96xf32>
    %5 = vector.shape_cast %4 : vector<1x32x96xf32> to vector<32x96xf32>
    %c0_8 = arith.constant 0 : index
    %c0_9 = arith.constant 0 : index
    %c0_10 = arith.constant 0 : index
    %6 = vector.load %arg4[%c0_8, %c0_9, %c0_10] : memref<2x1x96xf32, #tpu.memory_space<vmem>>, vector<1x1x96xf32>
    %7 = vector.shape_cast %6 : vector<1x1x96xf32> to vector<1x96xf32>
    %cst = arith.constant dense<0.000000e+00> : vector<10x96xf32>
    %8 = tpu.matmul %1, %5, %cst {dimension_numbers = #tpu.dot_dimension_numbers<[1], [0], [0], [1], [0, 0, 1, 1], [], []>} : vector<10x32xf32>, vector<32x96xf32>, vector<10x96xf32> -> vector<10x96xf32>
    %9 = vector.broadcast %7 : vector<1x96xf32> to vector<10x96xf32>
    %10 = arith.addf %8, %9 : vector<10x96xf32>
    %11 = vector.extract_strided_slice %10 {offsets = [0, 0], sizes = [10, 32], strides = [1, 1]} : vector<10x96xf32> to vector<10x32xf32>
    %cst_11 = arith.constant 0.353553385 : f32
    %12 = vector.broadcast %cst_11 : f32 to vector<10x32xf32>
    %13 = arith.mulf %11, %12 : vector<10x32xf32>
    %14 = vector.extract_strided_slice %10 {offsets = [0, 32], sizes = [10, 32], strides = [1, 1]} : vector<10x96xf32> to vector<10x32xf32>
    %15 = vector.extract_strided_slice %10 {offsets = [0, 64], sizes = [10, 32], strides = [1, 1]} : vector<10x96xf32> to vector<10x32xf32>
    %16 = vector.extract_strided_slice %13 {offsets = [0, 0], sizes = [10, 8], strides = [1, 1]} : vector<10x32xf32> to vector<10x8xf32>
    %17 = vector.extract_strided_slice %14 {offsets = [0, 0], sizes = [10, 8], strides = [1, 1]} : vector<10x32xf32> to vector<10x8xf32>
    %cst_12 = arith.constant dense<0.000000e+00> : vector<10x10xf32>
    %18 = tpu.matmul %16, %17, %cst_12 {dimension_numbers = #tpu.dot_dimension_numbers<[1], [1], [0], [0], [0, 0, 1, 0], [], []>} : vector<10x8xf32>, vector<10x8xf32>, vector<10x10xf32> -> vector<10x10xf32>
    %c0_i32 = arith.constant 0 : i32
    %19 = vector.broadcast %c0_i32 : i32 to vector<1x10xi32>
    %20 = arith.cmpi ne, %3, %19 : vector<1x10xi32>
    %cst_13 = arith.constant -1.000000e+10 : f32
    %21 = vector.shape_cast %20 : vector<1x10xi1> to vector<1x10xi1>
    %22 = vector.broadcast %21 : vector<1x10xi1> to vector<10x10xi1>
    %23 = vector.broadcast %cst_13 : f32 to vector<10x10xf32>
    %24 = arith.select %22, %18, %23 : vector<10x10xi1>, vector<10x10xf32>
    %cst_14 = arith.constant dense<0xFF800000> : vector<10xf32>
    %25 = vector.multi_reduction <maximumf>, %24, %cst_14 [1] : vector<10x10xf32> to vector<10xf32>
    %26 = vector.shape_cast %25 : vector<10xf32> to vector<10x1xf32>
    %27 = vector.broadcast %26 : vector<10x1xf32> to vector<10x10xf32>
    %28 = arith.subf %24, %27 : vector<10x10xf32>
    %29 = math.exp %28 : vector<10x10xf32>
    %cst_15 = arith.constant dense<0.000000e+00> : vector<10xf32>
    %30 = vector.multi_reduction <add>, %29, %cst_15 [1] : vector<10x10xf32> to vector<10xf32>
    %31 = vector.shape_cast %30 : vector<10xf32> to vector<10x1xf32>
    %32 = vector.broadcast %31 : vector<10x1xf32> to vector<10x10xf32>
    %33 = arith.divf %29, %32 : vector<10x10xf32>
    %34 = vector.extract_strided_slice %15 {offsets = [0, 0], sizes = [10, 8], strides = [1, 1]} : vector<10x32xf32> to vector<10x8xf32>
    %cst_16 = arith.constant dense<0.000000e+00> : vector<10x8xf32>
    %35 = tpu.matmul %33, %34, %cst_16 {dimension_numbers = #tpu.dot_dimension_numbers<[1], [0], [0], [1], [0, 0, 1, 1], [], []>} : vector<10x10xf32>, vector<10x8xf32>, vector<10x8xf32> -> vector<10x8xf32>
    %36 = vector.extract_strided_slice %13 {offsets = [0, 8], sizes = [10, 8], strides = [1, 1]} : vector<10x32xf32> to vector<10x8xf32>
    %37 = vector.extract_strided_slice %14 {offsets = [0, 8], sizes = [10, 8], strides = [1, 1]} : vector<10x32xf32> to vector<10x8xf32>
    %cst_17 = arith.constant dense<0.000000e+00> : vector<10x10xf32>
    %38 = tpu.matmul %36, %37, %cst_17 {dimension_numbers = #tpu.dot_dimension_numbers<[1], [1], [0], [0], [0, 0, 1, 0], [], []>} : vector<10x8xf32>, vector<10x8xf32>, vector<10x10xf32> -> vector<10x10xf32>
    %c0_i32_18 = arith.constant 0 : i32
    %39 = vector.broadcast %c0_i32_18 : i32 to vector<1x10xi32>
    %40 = arith.cmpi ne, %3, %39 : vector<1x10xi32>
    %cst_19 = arith.constant -1.000000e+10 : f32
    %41 = vector.shape_cast %40 : vector<1x10xi1> to vector<1x10xi1>
    %42 = vector.broadcast %41 : vector<1x10xi1> to vector<10x10xi1>
    %43 = vector.broadcast %cst_19 : f32 to vector<10x10xf32>
    %44 = arith.select %42, %38, %43 : vector<10x10xi1>, vector<10x10xf32>
    %cst_20 = arith.constant dense<0xFF800000> : vector<10xf32>
    %45 = vector.multi_reduction <maximumf>, %44, %cst_20 [1] : vector<10x10xf32> to vector<10xf32>
    %46 = vector.shape_cast %45 : vector<10xf32> to vector<10x1xf32>
    %47 = vector.broadcast %46 : vector<10x1xf32> to vector<10x10xf32>
    %48 = arith.subf %44, %47 : vector<10x10xf32>
    %49 = math.exp %48 : vector<10x10xf32>
    %cst_21 = arith.constant dense<0.000000e+00> : vector<10xf32>
    %50 = vector.multi_reduction <add>, %49, %cst_21 [1] : vector<10x10xf32> to vector<10xf32>
    %51 = vector.shape_cast %50 : vector<10xf32> to vector<10x1xf32>
    %52 = vector.broadcast %51 : vector<10x1xf32> to vector<10x10xf32>
    %53 = arith.divf %49, %52 : vector<10x10xf32>
    %54 = vector.extract_strided_slice %15 {offsets = [0, 8], sizes = [10, 8], strides = [1, 1]} : vector<10x32xf32> to vector<10x8xf32>
    %cst_22 = arith.constant dense<0.000000e+00> : vector<10x8xf32>
    %55 = tpu.matmul %53, %54, %cst_22 {dimension_numbers = #tpu.dot_dimension_numbers<[1], [0], [0], [1], [0, 0, 1, 1], [], []>} : vector<10x10xf32>, vector<10x8xf32>, vector<10x8xf32> -> vector<10x8xf32>
    %56 = vector.extract_strided_slice %13 {offsets = [0, 16], sizes = [10, 8], strides = [1, 1]} : vector<10x32xf32> to vector<10x8xf32>
    %57 = vector.extract_strided_slice %14 {offsets = [0, 16], sizes = [10, 8], strides = [1, 1]} : vector<10x32xf32> to vector<10x8xf32>
    %cst_23 = arith.constant dense<0.000000e+00> : vector<10x10xf32>
    %58 = tpu.matmul %56, %57, %cst_23 {dimension_numbers = #tpu.dot_dimension_numbers<[1], [1], [0], [0], [0, 0, 1, 0], [], []>} : vector<10x8xf32>, vector<10x8xf32>, vector<10x10xf32> -> vector<10x10xf32>
    %c0_i32_24 = arith.constant 0 : i32
    %59 = vector.broadcast %c0_i32_24 : i32 to vector<1x10xi32>
    %60 = arith.cmpi ne, %3, %59 : vector<1x10xi32>
    %cst_25 = arith.constant -1.000000e+10 : f32
    %61 = vector.shape_cast %60 : vector<1x10xi1> to vector<1x10xi1>
    %62 = vector.broadcast %61 : vector<1x10xi1> to vector<10x10xi1>
    %63 = vector.broadcast %cst_25 : f32 to vector<10x10xf32>
    %64 = arith.select %62, %58, %63 : vector<10x10xi1>, vector<10x10xf32>
    %cst_26 = arith.constant dense<0xFF800000> : vector<10xf32>
    %65 = vector.multi_reduction <maximumf>, %64, %cst_26 [1] : vector<10x10xf32> to vector<10xf32>
    %66 = vector.shape_cast %65 : vector<10xf32> to vector<10x1xf32>
    %67 = vector.broadcast %66 : vector<10x1xf32> to vector<10x10xf32>
    %68 = arith.subf %64, %67 : vector<10x10xf32>
    %69 = math.exp %68 : vector<10x10xf32>
    %cst_27 = arith.constant dense<0.000000e+00> : vector<10xf32>
    %70 = vector.multi_reduction <add>, %69, %cst_27 [1] : vector<10x10xf32> to vector<10xf32>
    %71 = vector.shape_cast %70 : vector<10xf32> to vector<10x1xf32>
    %72 = vector.broadcast %71 : vector<10x1xf32> to vector<10x10xf32>
    %73 = arith.divf %69, %72 : vector<10x10xf32>
    %74 = vector.extract_strided_slice %15 {offsets = [0, 16], sizes = [10, 8], strides = [1, 1]} : vector<10x32xf32> to vector<10x8xf32>
    %cst_28 = arith.constant dense<0.000000e+00> : vector<10x8xf32>
    %75 = tpu.matmul %73, %74, %cst_28 {dimension_numbers = #tpu.dot_dimension_numbers<[1], [0], [0], [1], [0, 0, 1, 1], [], []>} : vector<10x10xf32>, vector<10x8xf32>, vector<10x8xf32> -> vector<10x8xf32>
    %76 = vector.extract_strided_slice %13 {offsets = [0, 24], sizes = [10, 8], strides = [1, 1]} : vector<10x32xf32> to vector<10x8xf32>
    %77 = vector.extract_strided_slice %14 {offsets = [0, 24], sizes = [10, 8], strides = [1, 1]} : vector<10x32xf32> to vector<10x8xf32>
    %cst_29 = arith.constant dense<0.000000e+00> : vector<10x10xf32>
    %78 = tpu.matmul %76, %77, %cst_29 {dimension_numbers = #tpu.dot_dimension_numbers<[1], [1], [0], [0], [0, 0, 1, 0], [], []>} : vector<10x8xf32>, vector<10x8xf32>, vector<10x10xf32> -> vector<10x10xf32>
    %c0_i32_30 = arith.constant 0 : i32
    %79 = vector.broadcast %c0_i32_30 : i32 to vector<1x10xi32>
    %80 = arith.cmpi ne, %3, %79 : vector<1x10xi32>
    %cst_31 = arith.constant -1.000000e+10 : f32
    %81 = vector.shape_cast %80 : vector<1x10xi1> to vector<1x10xi1>
    %82 = vector.broadcast %81 : vector<1x10xi1> to vector<10x10xi1>
    %83 = vector.broadcast %cst_31 : f32 to vector<10x10xf32>
    %84 = arith.select %82, %78, %83 : vector<10x10xi1>, vector<10x10xf32>
    %cst_32 = arith.constant dense<0xFF800000> : vector<10xf32>
    %85 = vector.multi_reduction <maximumf>, %84, %cst_32 [1] : vector<10x10xf32> to vector<10xf32>
    %86 = vector.shape_cast %85 : vector<10xf32> to vector<10x1xf32>
    %87 = vector.broadcast %86 : vector<10x1xf32> to vector<10x10xf32>
    %88 = arith.subf %84, %87 : vector<10x10xf32>
    %89 = math.exp %88 : vector<10x10xf32>
    %cst_33 = arith.constant dense<0.000000e+00> : vector<10xf32>
    %90 = vector.multi_reduction <add>, %89, %cst_33 [1] : vector<10x10xf32> to vector<10xf32>
    %91 = vector.shape_cast %90 : vector<10xf32> to vector<10x1xf32>
    %92 = vector.broadcast %91 : vector<10x1xf32> to vector<10x10xf32>
    %93 = arith.divf %89, %92 : vector<10x10xf32>
    %94 = vector.extract_strided_slice %15 {offsets = [0, 24], sizes = [10, 8], strides = [1, 1]} : vector<10x32xf32> to vector<10x8xf32>
    %cst_34 = arith.constant dense<0.000000e+00> : vector<10x8xf32>
    %95 = tpu.matmul %93, %94, %cst_34 {dimension_numbers = #tpu.dot_dimension_numbers<[1], [0], [0], [1], [0, 0, 1, 1], [], []>} : vector<10x10xf32>, vector<10x8xf32>, vector<10x8xf32> -> vector<10x8xf32>
    %96 = tpu.concatenate %35, %55, %75, %95 in 1 : vector<10x8xf32>, vector<10x8xf32>, vector<10x8xf32>, vector<10x8xf32> -> vector<10x32xf32>
    %c0_35 = arith.constant 0 : index
    %c0_36 = arith.constant 0 : index
    %c0_37 = arith.constant 0 : index
    %97 = vector.load %arg5[%c0_35, %c0_36, %c0_37] : memref<2x32x32xf32, #tpu.memory_space<vmem>>, vector<1x32x32xf32>
    %98 = vector.shape_cast %97 : vector<1x32x32xf32> to vector<32x32xf32>
    %c0_38 = arith.constant 0 : index
    %c0_39 = arith.constant 0 : index
    %c0_40 = arith.constant 0 : index
    %99 = vector.load %arg6[%c0_38, %c0_39, %c0_40] : memref<2x1x32xf32, #tpu.memory_space<vmem>>, vector<1x1x32xf32>
    %100 = vector.shape_cast %99 : vector<1x1x32xf32> to vector<1x32xf32>
    %cst_41 = arith.constant dense<0.000000e+00> : vector<10x32xf32>
    %101 = tpu.matmul %96, %98, %cst_41 {dimension_numbers = #tpu.dot_dimension_numbers<[1], [0], [0], [1], [0, 0, 1, 1], [], []>} : vector<10x32xf32>, vector<32x32xf32>, vector<10x32xf32> -> vector<10x32xf32>
    %102 = vector.broadcast %100 : vector<1x32xf32> to vector<10x32xf32>
    %103 = arith.addf %101, %102 : vector<10x32xf32>
    %104 = arith.addf %1, %103 : vector<10x32xf32>
    %c0_42 = arith.constant 0 : index
    %c0_43 = arith.constant 0 : index
    %c0_44 = arith.constant 0 : index
    %105 = vector.load %arg7[%c0_42, %c0_43, %c0_44] : memref<2x1x32xf32, #tpu.memory_space<vmem>>, vector<1x1x32xf32>
    %106 = vector.shape_cast %105 : vector<1x1x32xf32> to vector<1x32xf32>
    %c0_45 = arith.constant 0 : index
    %c0_46 = arith.constant 0 : index
    %c0_47 = arith.constant 0 : index
    %107 = vector.load %arg8[%c0_45, %c0_46, %c0_47] : memref<2x1x32xf32, #tpu.memory_space<vmem>>, vector<1x1x32xf32>
    %108 = vector.shape_cast %107 : vector<1x1x32xf32> to vector<1x32xf32>
    %cst_48 = arith.constant dense<0.000000e+00> : vector<10xf32>
    %109 = vector.multi_reduction <add>, %104, %cst_48 [1] : vector<10x32xf32> to vector<10xf32>
    %110 = vector.shape_cast %109 : vector<10xf32> to vector<10x1xf32>
    %cst_49 = arith.constant 3.200000e+01 : f32
    %111 = vector.broadcast %cst_49 : f32 to vector<10x1xf32>
    %112 = arith.divf %110, %111 : vector<10x1xf32>
    %113 = vector.broadcast %112 : vector<10x1xf32> to vector<10x32xf32>
    %114 = arith.subf %104, %113 : vector<10x32xf32>
    %115 = arith.mulf %114, %114 : vector<10x32xf32>
    %cst_50 = arith.constant dense<0.000000e+00> : vector<10xf32>
    %116 = vector.multi_reduction <add>, %115, %cst_50 [1] : vector<10x32xf32> to vector<10xf32>
    %117 = vector.shape_cast %116 : vector<10xf32> to vector<10x1xf32>
    %cst_51 = arith.constant 3.200000e+01 : f32
    %118 = vector.broadcast %cst_51 : f32 to vector<10x1xf32>
    %119 = arith.divf %117, %118 : vector<10x1xf32>
    %cst_52 = arith.constant 9.99999974E-6 : f32
    %120 = vector.broadcast %cst_52 : f32 to vector<10x1xf32>
    %121 = arith.addf %119, %120 : vector<10x1xf32>
    %122 = math.rsqrt %121 : vector<10x1xf32>
    %123 = vector.broadcast %122 : vector<10x1xf32> to vector<10x32xf32>
    %124 = arith.mulf %114, %123 : vector<10x32xf32>
    %125 = vector.broadcast %106 : vector<1x32xf32> to vector<10x32xf32>
    %126 = arith.mulf %124, %125 : vector<10x32xf32>
    %127 = vector.broadcast %108 : vector<1x32xf32> to vector<10x32xf32>
    %128 = arith.addf %126, %127 : vector<10x32xf32>
    %c0_53 = arith.constant 0 : index
    %c0_54 = arith.constant 0 : index
    %c0_55 = arith.constant 0 : index
    %129 = vector.load %arg9[%c0_53, %c0_54, %c0_55] : memref<2x32x64xf32, #tpu.memory_space<vmem>>, vector<1x32x64xf32>
    %130 = vector.shape_cast %129 : vector<1x32x64xf32> to vector<32x64xf32>
    %c0_56 = arith.constant 0 : index
    %c0_57 = arith.constant 0 : index
    %c0_58 = arith.constant 0 : index
    %131 = vector.load %arg10[%c0_56, %c0_57, %c0_58] : memref<2x1x64xf32, #tpu.memory_space<vmem>>, vector<1x1x64xf32>
    %132 = vector.shape_cast %131 : vector<1x1x64xf32> to vector<1x64xf32>
    %cst_59 = arith.constant dense<0.000000e+00> : vector<10x64xf32>
    %133 = tpu.matmul %128, %130, %cst_59 {dimension_numbers = #tpu.dot_dimension_numbers<[1], [0], [0], [1], [0, 0, 1, 1], [], []>} : vector<10x32xf32>, vector<32x64xf32>, vector<10x64xf32> -> vector<10x64xf32>
    %134 = vector.broadcast %132 : vector<1x64xf32> to vector<10x64xf32>
    %135 = arith.addf %133, %134 : vector<10x64xf32>
    %cst_60 = arith.constant 0.000000e+00 : f32
    %136 = vector.broadcast %cst_60 : f32 to vector<10x64xf32>
    %137 = arith.maximumf %135, %136 : vector<10x64xf32>
    %c0_61 = arith.constant 0 : index
    %c0_62 = arith.constant 0 : index
    %c0_63 = arith.constant 0 : index
    %138 = vector.load %arg11[%c0_61, %c0_62, %c0_63] : memref<2x64x32xf32, #tpu.memory_space<vmem>>, vector<1x64x32xf32>
    %139 = vector.shape_cast %138 : vector<1x64x32xf32> to vector<64x32xf32>
    %c0_64 = arith.constant 0 : index
    %c0_65 = arith.constant 0 : index
    %c0_66 = arith.constant 0 : index
    %140 = vector.load %arg12[%c0_64, %c0_65, %c0_66] : memref<2x1x32xf32, #tpu.memory_space<vmem>>, vector<1x1x32xf32>
    %141 = vector.shape_cast %140 : vector<1x1x32xf32> to vector<1x32xf32>
    %cst_67 = arith.constant dense<0.000000e+00> : vector<10x32xf32>
    %142 = tpu.matmul %137, %139, %cst_67 {dimension_numbers = #tpu.dot_dimension_numbers<[1], [0], [0], [1], [0, 0, 1, 1], [], []>} : vector<10x64xf32>, vector<64x32xf32>, vector<10x32xf32> -> vector<10x32xf32>
    %143 = vector.broadcast %141 : vector<1x32xf32> to vector<10x32xf32>
    %144 = arith.addf %142, %143 : vector<10x32xf32>
    %145 = arith.addf %128, %144 : vector<10x32xf32>
    %c0_68 = arith.constant 0 : index
    %c0_69 = arith.constant 0 : index
    %c0_70 = arith.constant 0 : index
    %146 = vector.load %arg13[%c0_68, %c0_69, %c0_70] : memref<2x1x32xf32, #tpu.memory_space<vmem>>, vector<1x1x32xf32>
    %147 = vector.shape_cast %146 : vector<1x1x32xf32> to vector<1x32xf32>
    %c0_71 = arith.constant 0 : index
    %c0_72 = arith.constant 0 : index
    %c0_73 = arith.constant 0 : index
    %148 = vector.load %arg14[%c0_71, %c0_72, %c0_73] : memref<2x1x32xf32, #tpu.memory_space<vmem>>, vector<1x1x32xf32>
    %149 = vector.shape_cast %148 : vector<1x1x32xf32> to vector<1x32xf32>
    %cst_74 = arith.constant dense<0.000000e+00> : vector<10xf32>
    %150 = vector.multi_reduction <add>, %145, %cst_74 [1] : vector<10x32xf32> to vector<10xf32>
    %151 = vector.shape_cast %150 : vector<10xf32> to vector<10x1xf32>
    %cst_75 = arith.constant 3.200000e+01 : f32
    %152 = vector.broadcast %cst_75 : f32 to vector<10x1xf32>
    %153 = arith.divf %151, %152 : vector<10x1xf32>
    %154 = vector.broadcast %153 : vector<10x1xf32> to vector<10x32xf32>
    %155 = arith.subf %145, %154 : vector<10x32xf32>
    %156 = arith.mulf %155, %155 : vector<10x32xf32>
    %cst_76 = arith.constant dense<0.000000e+00> : vector<10xf32>
    %157 = vector.multi_reduction <add>, %156, %cst_76 [1] : vector<10x32xf32> to vector<10xf32>
    %158 = vector.shape_cast %157 : vector<10xf32> to vector<10x1xf32>
    %cst_77 = arith.constant 3.200000e+01 : f32
    %159 = vector.broadcast %cst_77 : f32 to vector<10x1xf32>
    %160 = arith.divf %158, %159 : vector<10x1xf32>
    %cst_78 = arith.constant 9.99999974E-6 : f32
    %161 = vector.broadcast %cst_78 : f32 to vector<10x1xf32>
    %162 = arith.addf %160, %161 : vector<10x1xf32>
    %163 = math.rsqrt %162 : vector<10x1xf32>
    %164 = vector.broadcast %163 : vector<10x1xf32> to vector<10x32xf32>
    %165 = arith.mulf %155, %164 : vector<10x32xf32>
    %166 = vector.broadcast %147 : vector<1x32xf32> to vector<10x32xf32>
    %167 = arith.mulf %165, %166 : vector<10x32xf32>
    %168 = vector.broadcast %149 : vector<1x32xf32> to vector<10x32xf32>
    %169 = arith.addf %167, %168 : vector<10x32xf32>
    %c1 = arith.constant 1 : index
    %c0_79 = arith.constant 0 : index
    %c0_80 = arith.constant 0 : index
    %170 = vector.load %arg3[%c1, %c0_79, %c0_80] : memref<2x32x96xf32, #tpu.memory_space<vmem>>, vector<1x32x96xf32>
    %171 = vector.shape_cast %170 : vector<1x32x96xf32> to vector<32x96xf32>
    %c1_81 = arith.constant 1 : index
    %c0_82 = arith.constant 0 : index
    %c0_83 = arith.constant 0 : index
    %172 = vector.load %arg4[%c1_81, %c0_82, %c0_83] : memref<2x1x96xf32, #tpu.memory_space<vmem>>, vector<1x1x96xf32>
    %173 = vector.shape_cast %172 : vector<1x1x96xf32> to vector<1x96xf32>
    %cst_84 = arith.constant dense<0.000000e+00> : vector<10x96xf32>
    %174 = tpu.matmul %169, %171, %cst_84 {dimension_numbers = #tpu.dot_dimension_numbers<[1], [0], [0], [1], [0, 0, 1, 1], [], []>} : vector<10x32xf32>, vector<32x96xf32>, vector<10x96xf32> -> vector<10x96xf32>
    %175 = vector.broadcast %173 : vector<1x96xf32> to vector<10x96xf32>
    %176 = arith.addf %174, %175 : vector<10x96xf32>
    %177 = vector.extract_strided_slice %176 {offsets = [0, 0], sizes = [10, 32], strides = [1, 1]} : vector<10x96xf32> to vector<10x32xf32>
    %cst_85 = arith.constant 0.353553385 : f32
    %178 = vector.broadcast %cst_85 : f32 to vector<10x32xf32>
    %179 = arith.mulf %177, %178 : vector<10x32xf32>
    %180 = vector.extract_strided_slice %176 {offsets = [0, 32], sizes = [10, 32], strides = [1, 1]} : vector<10x96xf32> to vector<10x32xf32>
    %181 = vector.extract_strided_slice %176 {offsets = [0, 64], sizes = [10, 32], strides = [1, 1]} : vector<10x96xf32> to vector<10x32xf32>
    %182 = vector.extract_strided_slice %179 {offsets = [0, 0], sizes = [10, 8], strides = [1, 1]} : vector<10x32xf32> to vector<10x8xf32>
    %183 = vector.extract_strided_slice %180 {offsets = [0, 0], sizes = [10, 8], strides = [1, 1]} : vector<10x32xf32> to vector<10x8xf32>
    %cst_86 = arith.constant dense<0.000000e+00> : vector<10x10xf32>
    %184 = tpu.matmul %182, %183, %cst_86 {dimension_numbers = #tpu.dot_dimension_numbers<[1], [1], [0], [0], [0, 0, 1, 0], [], []>} : vector<10x8xf32>, vector<10x8xf32>, vector<10x10xf32> -> vector<10x10xf32>
    %c0_i32_87 = arith.constant 0 : i32
    %185 = vector.broadcast %c0_i32_87 : i32 to vector<1x10xi32>
    %186 = arith.cmpi ne, %3, %185 : vector<1x10xi32>
    %cst_88 = arith.constant -1.000000e+10 : f32
    %187 = vector.shape_cast %186 : vector<1x10xi1> to vector<1x10xi1>
    %188 = vector.broadcast %187 : vector<1x10xi1> to vector<10x10xi1>
    %189 = vector.broadcast %cst_88 : f32 to vector<10x10xf32>
    %190 = arith.select %188, %184, %189 : vector<10x10xi1>, vector<10x10xf32>
    %cst_89 = arith.constant dense<0xFF800000> : vector<10xf32>
    %191 = vector.multi_reduction <maximumf>, %190, %cst_89 [1] : vector<10x10xf32> to vector<10xf32>
    %192 = vector.shape_cast %191 : vector<10xf32> to vector<10x1xf32>
    %193 = vector.broadcast %192 : vector<10x1xf32> to vector<10x10xf32>
    %194 = arith.subf %190, %193 : vector<10x10xf32>
    %195 = math.exp %194 : vector<10x10xf32>
    %cst_90 = arith.constant dense<0.000000e+00> : vector<10xf32>
    %196 = vector.multi_reduction <add>, %195, %cst_90 [1] : vector<10x10xf32> to vector<10xf32>
    %197 = vector.shape_cast %196 : vector<10xf32> to vector<10x1xf32>
    %198 = vector.broadcast %197 : vector<10x1xf32> to vector<10x10xf32>
    %199 = arith.divf %195, %198 : vector<10x10xf32>
    %200 = vector.extract_strided_slice %181 {offsets = [0, 0], sizes = [10, 8], strides = [1, 1]} : vector<10x32xf32> to vector<10x8xf32>
    %cst_91 = arith.constant dense<0.000000e+00> : vector<10x8xf32>
    %201 = tpu.matmul %199, %200, %cst_91 {dimension_numbers = #tpu.dot_dimension_numbers<[1], [0], [0], [1], [0, 0, 1, 1], [], []>} : vector<10x10xf32>, vector<10x8xf32>, vector<10x8xf32> -> vector<10x8xf32>
    %202 = vector.extract_strided_slice %179 {offsets = [0, 8], sizes = [10, 8], strides = [1, 1]} : vector<10x32xf32> to vector<10x8xf32>
    %203 = vector.extract_strided_slice %180 {offsets = [0, 8], sizes = [10, 8], strides = [1, 1]} : vector<10x32xf32> to vector<10x8xf32>
    %cst_92 = arith.constant dense<0.000000e+00> : vector<10x10xf32>
    %204 = tpu.matmul %202, %203, %cst_92 {dimension_numbers = #tpu.dot_dimension_numbers<[1], [1], [0], [0], [0, 0, 1, 0], [], []>} : vector<10x8xf32>, vector<10x8xf32>, vector<10x10xf32> -> vector<10x10xf32>
    %c0_i32_93 = arith.constant 0 : i32
    %205 = vector.broadcast %c0_i32_93 : i32 to vector<1x10xi32>
    %206 = arith.cmpi ne, %3, %205 : vector<1x10xi32>
    %cst_94 = arith.constant -1.000000e+10 : f32
    %207 = vector.shape_cast %206 : vector<1x10xi1> to vector<1x10xi1>
    %208 = vector.broadcast %207 : vector<1x10xi1> to vector<10x10xi1>
    %209 = vector.broadcast %cst_94 : f32 to vector<10x10xf32>
    %210 = arith.select %208, %204, %209 : vector<10x10xi1>, vector<10x10xf32>
    %cst_95 = arith.constant dense<0xFF800000> : vector<10xf32>
    %211 = vector.multi_reduction <maximumf>, %210, %cst_95 [1] : vector<10x10xf32> to vector<10xf32>
    %212 = vector.shape_cast %211 : vector<10xf32> to vector<10x1xf32>
    %213 = vector.broadcast %212 : vector<10x1xf32> to vector<10x10xf32>
    %214 = arith.subf %210, %213 : vector<10x10xf32>
    %215 = math.exp %214 : vector<10x10xf32>
    %cst_96 = arith.constant dense<0.000000e+00> : vector<10xf32>
    %216 = vector.multi_reduction <add>, %215, %cst_96 [1] : vector<10x10xf32> to vector<10xf32>
    %217 = vector.shape_cast %216 : vector<10xf32> to vector<10x1xf32>
    %218 = vector.broadcast %217 : vector<10x1xf32> to vector<10x10xf32>
    %219 = arith.divf %215, %218 : vector<10x10xf32>
    %220 = vector.extract_strided_slice %181 {offsets = [0, 8], sizes = [10, 8], strides = [1, 1]} : vector<10x32xf32> to vector<10x8xf32>
    %cst_97 = arith.constant dense<0.000000e+00> : vector<10x8xf32>
    %221 = tpu.matmul %219, %220, %cst_97 {dimension_numbers = #tpu.dot_dimension_numbers<[1], [0], [0], [1], [0, 0, 1, 1], [], []>} : vector<10x10xf32>, vector<10x8xf32>, vector<10x8xf32> -> vector<10x8xf32>
    %222 = vector.extract_strided_slice %179 {offsets = [0, 16], sizes = [10, 8], strides = [1, 1]} : vector<10x32xf32> to vector<10x8xf32>
    %223 = vector.extract_strided_slice %180 {offsets = [0, 16], sizes = [10, 8], strides = [1, 1]} : vector<10x32xf32> to vector<10x8xf32>
    %cst_98 = arith.constant dense<0.000000e+00> : vector<10x10xf32>
    %224 = tpu.matmul %222, %223, %cst_98 {dimension_numbers = #tpu.dot_dimension_numbers<[1], [1], [0], [0], [0, 0, 1, 0], [], []>} : vector<10x8xf32>, vector<10x8xf32>, vector<10x10xf32> -> vector<10x10xf32>
    %c0_i32_99 = arith.constant 0 : i32
    %225 = vector.broadcast %c0_i32_99 : i32 to vector<1x10xi32>
    %226 = arith.cmpi ne, %3, %225 : vector<1x10xi32>
    %cst_100 = arith.constant -1.000000e+10 : f32
    %227 = vector.shape_cast %226 : vector<1x10xi1> to vector<1x10xi1>
    %228 = vector.broadcast %227 : vector<1x10xi1> to vector<10x10xi1>
    %229 = vector.broadcast %cst_100 : f32 to vector<10x10xf32>
    %230 = arith.select %228, %224, %229 : vector<10x10xi1>, vector<10x10xf32>
    %cst_101 = arith.constant dense<0xFF800000> : vector<10xf32>
    %231 = vector.multi_reduction <maximumf>, %230, %cst_101 [1] : vector<10x10xf32> to vector<10xf32>
    %232 = vector.shape_cast %231 : vector<10xf32> to vector<10x1xf32>
    %233 = vector.broadcast %232 : vector<10x1xf32> to vector<10x10xf32>
    %234 = arith.subf %230, %233 : vector<10x10xf32>
    %235 = math.exp %234 : vector<10x10xf32>
    %cst_102 = arith.constant dense<0.000000e+00> : vector<10xf32>
    %236 = vector.multi_reduction <add>, %235, %cst_102 [1] : vector<10x10xf32> to vector<10xf32>
    %237 = vector.shape_cast %236 : vector<10xf32> to vector<10x1xf32>
    %238 = vector.broadcast %237 : vector<10x1xf32> to vector<10x10xf32>
    %239 = arith.divf %235, %238 : vector<10x10xf32>
    %240 = vector.extract_strided_slice %181 {offsets = [0, 16], sizes = [10, 8], strides = [1, 1]} : vector<10x32xf32> to vector<10x8xf32>
    %cst_103 = arith.constant dense<0.000000e+00> : vector<10x8xf32>
    %241 = tpu.matmul %239, %240, %cst_103 {dimension_numbers = #tpu.dot_dimension_numbers<[1], [0], [0], [1], [0, 0, 1, 1], [], []>} : vector<10x10xf32>, vector<10x8xf32>, vector<10x8xf32> -> vector<10x8xf32>
    %242 = vector.extract_strided_slice %179 {offsets = [0, 24], sizes = [10, 8], strides = [1, 1]} : vector<10x32xf32> to vector<10x8xf32>
    %243 = vector.extract_strided_slice %180 {offsets = [0, 24], sizes = [10, 8], strides = [1, 1]} : vector<10x32xf32> to vector<10x8xf32>
    %cst_104 = arith.constant dense<0.000000e+00> : vector<10x10xf32>
    %244 = tpu.matmul %242, %243, %cst_104 {dimension_numbers = #tpu.dot_dimension_numbers<[1], [1], [0], [0], [0, 0, 1, 0], [], []>} : vector<10x8xf32>, vector<10x8xf32>, vector<10x10xf32> -> vector<10x10xf32>
    %c0_i32_105 = arith.constant 0 : i32
    %245 = vector.broadcast %c0_i32_105 : i32 to vector<1x10xi32>
    %246 = arith.cmpi ne, %3, %245 : vector<1x10xi32>
    %cst_106 = arith.constant -1.000000e+10 : f32
    %247 = vector.shape_cast %246 : vector<1x10xi1> to vector<1x10xi1>
    %248 = vector.broadcast %247 : vector<1x10xi1> to vector<10x10xi1>
    %249 = vector.broadcast %cst_106 : f32 to vector<10x10xf32>
    %250 = arith.select %248, %244, %249 : vector<10x10xi1>, vector<10x10xf32>
    %cst_107 = arith.constant dense<0xFF800000> : vector<10xf32>
    %251 = vector.multi_reduction <maximumf>, %250, %cst_107 [1] : vector<10x10xf32> to vector<10xf32>
    %252 = vector.shape_cast %251 : vector<10xf32> to vector<10x1xf32>
    %253 = vector.broadcast %252 : vector<10x1xf32> to vector<10x10xf32>
    %254 = arith.subf %250, %253 : vector<10x10xf32>
    %255 = math.exp %254 : vector<10x10xf32>
    %cst_108 = arith.constant dense<0.000000e+00> : vector<10xf32>
    %256 = vector.multi_reduction <add>, %255, %cst_108 [1] : vector<10x10xf32> to vector<10xf32>
    %257 = vector.shape_cast %256 : vector<10xf32> to vector<10x1xf32>
    %258 = vector.broadcast %257 : vector<10x1xf32> to vector<10x10xf32>
    %259 = arith.divf %255, %258 : vector<10x10xf32>
    %260 = vector.extract_strided_slice %181 {offsets = [0, 24], sizes = [10, 8], strides = [1, 1]} : vector<10x32xf32> to vector<10x8xf32>
    %cst_109 = arith.constant dense<0.000000e+00> : vector<10x8xf32>
    %261 = tpu.matmul %259, %260, %cst_109 {dimension_numbers = #tpu.dot_dimension_numbers<[1], [0], [0], [1], [0, 0, 1, 1], [], []>} : vector<10x10xf32>, vector<10x8xf32>, vector<10x8xf32> -> vector<10x8xf32>
    %262 = tpu.concatenate %201, %221, %241, %261 in 1 : vector<10x8xf32>, vector<10x8xf32>, vector<10x8xf32>, vector<10x8xf32> -> vector<10x32xf32>
    %c1_110 = arith.constant 1 : index
    %c0_111 = arith.constant 0 : index
    %c0_112 = arith.constant 0 : index
    %263 = vector.load %arg5[%c1_110, %c0_111, %c0_112] : memref<2x32x32xf32, #tpu.memory_space<vmem>>, vector<1x32x32xf32>
    %264 = vector.shape_cast %263 : vector<1x32x32xf32> to vector<32x32xf32>
    %c1_113 = arith.constant 1 : index
    %c0_114 = arith.constant 0 : index
    %c0_115 = arith.constant 0 : index
    %265 = vector.load %arg6[%c1_113, %c0_114, %c0_115] : memref<2x1x32xf32, #tpu.memory_space<vmem>>, vector<1x1x32xf32>
    %266 = vector.shape_cast %265 : vector<1x1x32xf32> to vector<1x32xf32>
    %cst_116 = arith.constant dense<0.000000e+00> : vector<10x32xf32>
    %267 = tpu.matmul %262, %264, %cst_116 {dimension_numbers = #tpu.dot_dimension_numbers<[1], [0], [0], [1], [0, 0, 1, 1], [], []>} : vector<10x32xf32>, vector<32x32xf32>, vector<10x32xf32> -> vector<10x32xf32>
    %268 = vector.broadcast %266 : vector<1x32xf32> to vector<10x32xf32>
    %269 = arith.addf %267, %268 : vector<10x32xf32>
    %270 = arith.addf %169, %269 : vector<10x32xf32>
    %c1_117 = arith.constant 1 : index
    %c0_118 = arith.constant 0 : index
    %c0_119 = arith.constant 0 : index
    %271 = vector.load %arg7[%c1_117, %c0_118, %c0_119] : memref<2x1x32xf32, #tpu.memory_space<vmem>>, vector<1x1x32xf32>
    %272 = vector.shape_cast %271 : vector<1x1x32xf32> to vector<1x32xf32>
    %c1_120 = arith.constant 1 : index
    %c0_121 = arith.constant 0 : index
    %c0_122 = arith.constant 0 : index
    %273 = vector.load %arg8[%c1_120, %c0_121, %c0_122] : memref<2x1x32xf32, #tpu.memory_space<vmem>>, vector<1x1x32xf32>
    %274 = vector.shape_cast %273 : vector<1x1x32xf32> to vector<1x32xf32>
    %cst_123 = arith.constant dense<0.000000e+00> : vector<10xf32>
    %275 = vector.multi_reduction <add>, %270, %cst_123 [1] : vector<10x32xf32> to vector<10xf32>
    %276 = vector.shape_cast %275 : vector<10xf32> to vector<10x1xf32>
    %cst_124 = arith.constant 3.200000e+01 : f32
    %277 = vector.broadcast %cst_124 : f32 to vector<10x1xf32>
    %278 = arith.divf %276, %277 : vector<10x1xf32>
    %279 = vector.broadcast %278 : vector<10x1xf32> to vector<10x32xf32>
    %280 = arith.subf %270, %279 : vector<10x32xf32>
    %281 = arith.mulf %280, %280 : vector<10x32xf32>
    %cst_125 = arith.constant dense<0.000000e+00> : vector<10xf32>
    %282 = vector.multi_reduction <add>, %281, %cst_125 [1] : vector<10x32xf32> to vector<10xf32>
    %283 = vector.shape_cast %282 : vector<10xf32> to vector<10x1xf32>
    %cst_126 = arith.constant 3.200000e+01 : f32
    %284 = vector.broadcast %cst_126 : f32 to vector<10x1xf32>
    %285 = arith.divf %283, %284 : vector<10x1xf32>
    %cst_127 = arith.constant 9.99999974E-6 : f32
    %286 = vector.broadcast %cst_127 : f32 to vector<10x1xf32>
    %287 = arith.addf %285, %286 : vector<10x1xf32>
    %288 = math.rsqrt %287 : vector<10x1xf32>
    %289 = vector.broadcast %288 : vector<10x1xf32> to vector<10x32xf32>
    %290 = arith.mulf %280, %289 : vector<10x32xf32>
    %291 = vector.broadcast %272 : vector<1x32xf32> to vector<10x32xf32>
    %292 = arith.mulf %290, %291 : vector<10x32xf32>
    %293 = vector.broadcast %274 : vector<1x32xf32> to vector<10x32xf32>
    %294 = arith.addf %292, %293 : vector<10x32xf32>
    %c1_128 = arith.constant 1 : index
    %c0_129 = arith.constant 0 : index
    %c0_130 = arith.constant 0 : index
    %295 = vector.load %arg9[%c1_128, %c0_129, %c0_130] : memref<2x32x64xf32, #tpu.memory_space<vmem>>, vector<1x32x64xf32>
    %296 = vector.shape_cast %295 : vector<1x32x64xf32> to vector<32x64xf32>
    %c1_131 = arith.constant 1 : index
    %c0_132 = arith.constant 0 : index
    %c0_133 = arith.constant 0 : index
    %297 = vector.load %arg10[%c1_131, %c0_132, %c0_133] : memref<2x1x64xf32, #tpu.memory_space<vmem>>, vector<1x1x64xf32>
    %298 = vector.shape_cast %297 : vector<1x1x64xf32> to vector<1x64xf32>
    %cst_134 = arith.constant dense<0.000000e+00> : vector<10x64xf32>
    %299 = tpu.matmul %294, %296, %cst_134 {dimension_numbers = #tpu.dot_dimension_numbers<[1], [0], [0], [1], [0, 0, 1, 1], [], []>} : vector<10x32xf32>, vector<32x64xf32>, vector<10x64xf32> -> vector<10x64xf32>
    %300 = vector.broadcast %298 : vector<1x64xf32> to vector<10x64xf32>
    %301 = arith.addf %299, %300 : vector<10x64xf32>
    %cst_135 = arith.constant 0.000000e+00 : f32
    %302 = vector.broadcast %cst_135 : f32 to vector<10x64xf32>
    %303 = arith.maximumf %301, %302 : vector<10x64xf32>
    %c1_136 = arith.constant 1 : index
    %c0_137 = arith.constant 0 : index
    %c0_138 = arith.constant 0 : index
    %304 = vector.load %arg11[%c1_136, %c0_137, %c0_138] : memref<2x64x32xf32, #tpu.memory_space<vmem>>, vector<1x64x32xf32>
    %305 = vector.shape_cast %304 : vector<1x64x32xf32> to vector<64x32xf32>
    %c1_139 = arith.constant 1 : index
    %c0_140 = arith.constant 0 : index
    %c0_141 = arith.constant 0 : index
    %306 = vector.load %arg12[%c1_139, %c0_140, %c0_141] : memref<2x1x32xf32, #tpu.memory_space<vmem>>, vector<1x1x32xf32>
    %307 = vector.shape_cast %306 : vector<1x1x32xf32> to vector<1x32xf32>
    %cst_142 = arith.constant dense<0.000000e+00> : vector<10x32xf32>
    %308 = tpu.matmul %303, %305, %cst_142 {dimension_numbers = #tpu.dot_dimension_numbers<[1], [0], [0], [1], [0, 0, 1, 1], [], []>} : vector<10x64xf32>, vector<64x32xf32>, vector<10x32xf32> -> vector<10x32xf32>
    %309 = vector.broadcast %307 : vector<1x32xf32> to vector<10x32xf32>
    %310 = arith.addf %308, %309 : vector<10x32xf32>
    %311 = arith.addf %294, %310 : vector<10x32xf32>
    %c1_143 = arith.constant 1 : index
    %c0_144 = arith.constant 0 : index
    %c0_145 = arith.constant 0 : index
    %312 = vector.load %arg13[%c1_143, %c0_144, %c0_145] : memref<2x1x32xf32, #tpu.memory_space<vmem>>, vector<1x1x32xf32>
    %313 = vector.shape_cast %312 : vector<1x1x32xf32> to vector<1x32xf32>
    %c1_146 = arith.constant 1 : index
    %c0_147 = arith.constant 0 : index
    %c0_148 = arith.constant 0 : index
    %314 = vector.load %arg14[%c1_146, %c0_147, %c0_148] : memref<2x1x32xf32, #tpu.memory_space<vmem>>, vector<1x1x32xf32>
    %315 = vector.shape_cast %314 : vector<1x1x32xf32> to vector<1x32xf32>
    %cst_149 = arith.constant dense<0.000000e+00> : vector<10xf32>
    %316 = vector.multi_reduction <add>, %311, %cst_149 [1] : vector<10x32xf32> to vector<10xf32>
    %317 = vector.shape_cast %316 : vector<10xf32> to vector<10x1xf32>
    %cst_150 = arith.constant 3.200000e+01 : f32
    %318 = vector.broadcast %cst_150 : f32 to vector<10x1xf32>
    %319 = arith.divf %317, %318 : vector<10x1xf32>
    %320 = vector.broadcast %319 : vector<10x1xf32> to vector<10x32xf32>
    %321 = arith.subf %311, %320 : vector<10x32xf32>
    %322 = arith.mulf %321, %321 : vector<10x32xf32>
    %cst_151 = arith.constant dense<0.000000e+00> : vector<10xf32>
    %323 = vector.multi_reduction <add>, %322, %cst_151 [1] : vector<10x32xf32> to vector<10xf32>
    %324 = vector.shape_cast %323 : vector<10xf32> to vector<10x1xf32>
    %cst_152 = arith.constant 3.200000e+01 : f32
    %325 = vector.broadcast %cst_152 : f32 to vector<10x1xf32>
    %326 = arith.divf %324, %325 : vector<10x1xf32>
    %cst_153 = arith.constant 9.99999974E-6 : f32
    %327 = vector.broadcast %cst_153 : f32 to vector<10x1xf32>
    %328 = arith.addf %326, %327 : vector<10x1xf32>
    %329 = math.rsqrt %328 : vector<10x1xf32>
    %330 = vector.broadcast %329 : vector<10x1xf32> to vector<10x32xf32>
    %331 = arith.mulf %321, %330 : vector<10x32xf32>
    %332 = vector.broadcast %313 : vector<1x32xf32> to vector<10x32xf32>
    %333 = arith.mulf %331, %332 : vector<10x32xf32>
    %334 = vector.broadcast %315 : vector<1x32xf32> to vector<10x32xf32>
    %335 = arith.addf %333, %334 : vector<10x32xf32>
    %c0_154 = arith.constant 0 : index
    %c0_155 = arith.constant 0 : index
    %c0_156 = arith.constant 0 : index
    %336 = vector.load %arg15[%c0_154, %c0_155, %c0_156] : memref<1x10x32xf32, #tpu.memory_space<vmem>>, vector<1x10x32xf32>
    %337 = vector.shape_cast %336 : vector<1x10x32xf32> to vector<10x32xf32>
    %338 = vector.shape_cast %335 : vector<10x32xf32> to vector<1x10x32xf32>
    tpu.vector_store %arg15[%c0_154, %c0_155, %c0_156], %338 {strides = array<i32>} : memref<1x10x32xf32, #tpu.memory_space<vmem>>, vector<1x10x32xf32>,
    return
  }
  func.func @transform_0(%arg0: i32) -> (i32, i32, i32) {
    %c0_i32 = arith.constant 0 : i32
    %c0_i32_0 = arith.constant 0 : i32
    %c0_i32_1 = arith.constant 0 : i32
    return %arg0, %c0_i32, %c0_i32_0 : i32, i32, i32
  }
  func.func @transform_1(%arg0: i32) -> (i32, i32, i32) {
    %c0_i32 = arith.constant 0 : i32
    %c0_i32_0 = arith.constant 0 : i32
    %c0_i32_1 = arith.constant 0 : i32
    return %arg0, %c0_i32, %c0_i32_0 : i32, i32, i32
  }
  func.func @transform_2(%arg0: i32) -> (i32, i32, i32) {
    %c0_i32 = arith.constant 0 : i32
    %c0_i32_0 = arith.constant 0 : i32
    %c0_i32_1 = arith.constant 0 : i32
    %c0_i32_2 = arith.constant 0 : i32
    return %c0_i32, %c0_i32_0, %c0_i32_1 : i32, i32, i32
  }
  func.func @transform_3(%arg0: i32) -> (i32, i32, i32) {
    %c0_i32 = arith.constant 0 : i32
    %c0_i32_0 = arith.constant 0 : i32
    %c0_i32_1 = arith.constant 0 : i32
    %c0_i32_2 = arith.constant 0 : i32
    return %c0_i32, %c0_i32_0, %c0_i32_1 : i32, i32, i32
  }
  func.func @transform_4(%arg0: i32) -> (i32, i32, i32) {
    %c0_i32 = arith.constant 0 : i32
    %c0_i32_0 = arith.constant 0 : i32
    %c0_i32_1 = arith.constant 0 : i32
    %c0_i32_2 = arith.constant 0 : i32
    return %c0_i32, %c0_i32_0, %c0_i32_1 : i32, i32, i32
  }
  func.func @transform_5(%arg0: i32) -> (i32, i32, i32) {
    %c0_i32 = arith.constant 0 : i32
    %c0_i32_0 = arith.constant 0 : i32
    %c0_i32_1 = arith.constant 0 : i32
    %c0_i32_2 = arith.constant 0 : i32
    return %c0_i32, %c0_i32_0, %c0_i32_1 : i32, i32, i32
  }
  func.func @transform_6(%arg0: i32) -> (i32, i32, i32) {
    %c0_i32 = arith.constant 0 : i32
    %c0_i32_0 = arith.constant 0 : i32
    %c0_i32_1 = arith.constant 0 : i32
    %c0_i32_2 = arith.constant 0 : i32
    return %c0_i32, %c0_i32_0, %c0_i32_1 : i32, i32, i32
  }
  func.func @transform_7(%arg0: i32) -> (i32, i32, i32) {
    %c0_i32 = arith.constant 0 : i32
    %c0_i32_0 = arith.constant 0 : i32
    %c0_i32_1 = arith.constant 0 : i32
    %c0_i32_2 = arith.constant 0 : i32
    return %c0_i32, %c0_i32_0, %c0_i32_1 : i32, i32, i32
  }
  func.func @transform_8(%arg0: i32) -> (i32, i32, i32) {
    %c0_i32 = arith.constant 0 : i32
    %c0_i32_0 = arith.constant 0 : i32
    %c0_i32_1 = arith.constant 0 : i32
    %c0_i32_2 = arith.constant 0 : i32
    return %c0_i32, %c0_i32_0, %c0_i32_1 : i32, i32, i32
  }
  func.func @transform_9(%arg0: i32) -> (i32, i32, i32) {
    %c0_i32 = arith.constant 0 : i32
    %c0_i32_0 = arith.constant 0 : i32
    %c0_i32_1 = arith.constant 0 : i32
    %c0_i32_2 = arith.constant 0 : i32
    return %c0_i32, %c0_i32_0, %c0_i32_1 : i32, i32, i32
  }
  func.func @transform_10(%arg0: i32) -> (i32, i32, i32) {
    %c0_i32 = arith.constant 0 : i32
    %c0_i32_0 = arith.constant 0 : i32
    %c0_i32_1 = arith.constant 0 : i32
    %c0_i32_2 = arith.constant 0 : i32
    return %c0_i32, %c0_i32_0, %c0_i32_1 : i32, i32, i32
  }
  func.func @transform_11(%arg0: i32) -> (i32, i32, i32) {
    %c0_i32 = arith.constant 0 : i32
    %c0_i32_0 = arith.constant 0 : i32
    %c0_i32_1 = arith.constant 0 : i32
    %c0_i32_2 = arith.constant 0 : i32
    return %c0_i32, %c0_i32_0, %c0_i32_1 : i32, i32, i32
  }
  func.func @transform_12(%arg0: i32) -> (i32, i32, i32) {
    %c0_i32 = arith.constant 0 : i32
    %c0_i32_0 = arith.constant 0 : i32
    %c0_i32_1 = arith.constant 0 : i32
    %c0_i32_2 = arith.constant 0 : i32
    return %c0_i32, %c0_i32_0, %c0_i32_1 : i32, i32, i32
  }
  func.func @transform_13(%arg0: i32) -> (i32, i32, i32) {
    %c0_i32 = arith.constant 0 : i32
    %c0_i32_0 = arith.constant 0 : i32
    %c0_i32_1 = arith.constant 0 : i32
    %c0_i32_2 = arith.constant 0 : i32
    return %c0_i32, %c0_i32_0, %c0_i32_1 : i32, i32, i32
  }
  func.func @transform_14(%arg0: i32) -> (i32, i32, i32) {
    %c0_i32 = arith.constant 0 : i32
    %c0_i32_0 = arith.constant 0 : i32
    %c0_i32_1 = arith.constant 0 : i32
    return %arg0, %c0_i32, %c0_i32_0 : i32, i32, i32
  }
}

module attributes {stable_mosaic.version = 11 : i64} {
  func.func @_decoder_kernel(%arg0: i32, %arg1: memref<1x8x32xf32, #tpu.memory_space<vmem>>, %arg2: memref<1x10x32xf32, #tpu.memory_space<vmem>>, %arg3: memref<1x8x8xi32, #tpu.memory_space<vmem>>, %arg4: memref<1x1x10xi32, #tpu.memory_space<vmem>>, %arg5: memref<2x32x96xf32, #tpu.memory_space<vmem>>, %arg6: memref<2x1x96xf32, #tpu.memory_space<vmem>>, %arg7: memref<2x32x32xf32, #tpu.memory_space<vmem>>, %arg8: memref<2x1x32xf32, #tpu.memory_space<vmem>>, %arg9: memref<2x1x32xf32, #tpu.memory_space<vmem>>, %arg10: memref<2x1x32xf32, #tpu.memory_space<vmem>>, %arg11: memref<2x32x32xf32, #tpu.memory_space<vmem>>, %arg12: memref<2x1x32xf32, #tpu.memory_space<vmem>>, %arg13: memref<2x32x64xf32, #tpu.memory_space<vmem>>, %arg14: memref<2x1x64xf32, #tpu.memory_space<vmem>>, %arg15: memref<2x32x32xf32, #tpu.memory_space<vmem>>, %arg16: memref<2x1x32xf32, #tpu.memory_space<vmem>>, %arg17: memref<2x1x32xf32, #tpu.memory_space<vmem>>, %arg18: memref<2x1x32xf32, #tpu.memory_space<vmem>>, %arg19: memref<2x32x64xf32, #tpu.memory_space<vmem>>, %arg20: memref<2x1x64xf32, #tpu.memory_space<vmem>>, %arg21: memref<2x64x32xf32, #tpu.memory_space<vmem>>, %arg22: memref<2x1x32xf32, #tpu.memory_space<vmem>>, %arg23: memref<2x1x32xf32, #tpu.memory_space<vmem>>, %arg24: memref<2x1x32xf32, #tpu.memory_space<vmem>>, %arg25: memref<32x18xf32, #tpu.memory_space<vmem>>, %arg26: memref<1x18xf32, #tpu.memory_space<vmem>>, %arg27: memref<1x8x18xf32, #tpu.memory_space<vmem>>, %arg28: memref<1x4x8x10xf32, #tpu.memory_space<vmem>>) attributes {dimension_semantics = [#tpu.dimension_semantics<parallel>], iteration_bounds = array<i64: 2>, scalar_prefetch = 0 : i64, scratch_operands = 0 : i64, tpu.core_type = #tpu.core_type<tc>, window_params = [{transform_indices = @transform_0, window_bounds = array<i64: 1, 8, 32>}, {transform_indices = @transform_1, window_bounds = array<i64: 1, 10, 32>}, {transform_indices = @transform_2, window_bounds = array<i64: 1, 8, 8>}, {transform_indices = @transform_3, window_bounds = array<i64: 1, 1, 10>}, {pipeline_mode = #tpu.pipeline_mode<synchronous>, transform_indices = @transform_4, window_bounds = array<i64: 2, 32, 96>}, {pipeline_mode = #tpu.pipeline_mode<synchronous>, transform_indices = @transform_5, window_bounds = array<i64: 2, 1, 96>}, {pipeline_mode = #tpu.pipeline_mode<synchronous>, transform_indices = @transform_6, window_bounds = array<i64: 2, 32, 32>}, {pipeline_mode = #tpu.pipeline_mode<synchronous>, transform_indices = @transform_7, window_bounds = array<i64: 2, 1, 32>}, {pipeline_mode = #tpu.pipeline_mode<synchronous>, transform_indices = @transform_8, window_bounds = array<i64: 2, 1, 32>}, {pipeline_mode = #tpu.pipeline_mode<synchronous>, transform_indices = @transform_9, window_bounds = array<i64: 2, 1, 32>}, {pipeline_mode = #tpu.pipeline_mode<synchronous>, transform_indices = @transform_10, window_bounds = array<i64: 2, 32, 32>}, {pipeline_mode = #tpu.pipeline_mode<synchronous>, transform_indices = @transform_11, window_bounds = array<i64: 2, 1, 32>}, {pipeline_mode = #tpu.pipeline_mode<synchronous>, transform_indices = @transform_12, window_bounds = array<i64: 2, 32, 64>}, {pipeline_mode = #tpu.pipeline_mode<synchronous>, transform_indices = @transform_13, window_bounds = array<i64: 2, 1, 64>}, {pipeline_mode = #tpu.pipeline_mode<synchronous>, transform_indices = @transform_14, window_bounds = array<i64: 2, 32, 32>}, {pipeline_mode = #tpu.pipeline_mode<synchronous>, transform_indices = @transform_15, window_bounds = array<i64: 2, 1, 32>}, {pipeline_mode = #tpu.pipeline_mode<synchronous>, transform_indices = @transform_16, window_bounds = array<i64: 2, 1, 32>}, {pipeline_mode = #tpu.pipeline_mode<synchronous>, transform_indices = @transform_17, window_bounds = array<i64: 2, 1, 32>}, {pipeline_mode = #tpu.pipeline_mode<synchronous>, transform_indices = @transform_18, window_bounds = array<i64: 2, 32, 64>}, {pipeline_mode = #tpu.pipeline_mode<synchronous>, transform_indices = @transform_19, window_bounds = array<i64: 2, 1, 64>}, {pipeline_mode = #tpu.pipeline_mode<synchronous>, transform_indices = @transform_20, window_bounds = array<i64: 2, 64, 32>}, {pipeline_mode = #tpu.pipeline_mode<synchronous>, transform_indices = @transform_21, window_bounds = array<i64: 2, 1, 32>}, {pipeline_mode = #tpu.pipeline_mode<synchronous>, transform_indices = @transform_22, window_bounds = array<i64: 2, 1, 32>}, {pipeline_mode = #tpu.pipeline_mode<synchronous>, transform_indices = @transform_23, window_bounds = array<i64: 2, 1, 32>}, {pipeline_mode = #tpu.pipeline_mode<synchronous>, transform_indices = @transform_24, window_bounds = array<i64: 32, 18>}, {pipeline_mode = #tpu.pipeline_mode<synchronous>, transform_indices = @transform_25, window_bounds = array<i64: 1, 18>}, {transform_indices = @transform_26, window_bounds = array<i64: 1, 8, 18>}, {transform_indices = @transform_27, window_bounds = array<i64: 1, 4, 8, 10>}]} {
    %c0 = arith.constant 0 : index
    %c0_0 = arith.constant 0 : index
    %c0_1 = arith.constant 0 : index
    %0 = vector.load %arg1[%c0, %c0_0, %c0_1] : memref<1x8x32xf32, #tpu.memory_space<vmem>>, vector<1x8x32xf32>
    %1 = vector.shape_cast %0 : vector<1x8x32xf32> to vector<8x32xf32>
    %c0_2 = arith.constant 0 : index
    %c0_3 = arith.constant 0 : index
    %c0_4 = arith.constant 0 : index
    %2 = vector.load %arg2[%c0_2, %c0_3, %c0_4] : memref<1x10x32xf32, #tpu.memory_space<vmem>>, vector<1x10x32xf32>
    %3 = vector.shape_cast %2 : vector<1x10x32xf32> to vector<10x32xf32>
    %c0_5 = arith.constant 0 : index
    %c0_6 = arith.constant 0 : index
    %c0_7 = arith.constant 0 : index
    %4 = vector.load %arg3[%c0_5, %c0_6, %c0_7] : memref<1x8x8xi32, #tpu.memory_space<vmem>>, vector<1x8x8xi32>
    %5 = vector.shape_cast %4 : vector<1x8x8xi32> to vector<8x8xi32>
    %c0_8 = arith.constant 0 : index
    %c0_9 = arith.constant 0 : index
    %c0_10 = arith.constant 0 : index
    %6 = vector.load %arg4[%c0_8, %c0_9, %c0_10] : memref<1x1x10xi32, #tpu.memory_space<vmem>>, vector<1x1x10xi32>
    %7 = vector.shape_cast %6 : vector<1x1x10xi32> to vector<1x10xi32>
    %c0_11 = arith.constant 0 : index
    %c0_12 = arith.constant 0 : index
    %c0_13 = arith.constant 0 : index
    %8 = vector.load %arg5[%c0_11, %c0_12, %c0_13] : memref<2x32x96xf32, #tpu.memory_space<vmem>>, vector<1x32x96xf32>
    %9 = vector.shape_cast %8 : vector<1x32x96xf32> to vector<32x96xf32>
    %c0_14 = arith.constant 0 : index
    %c0_15 = arith.constant 0 : index
    %c0_16 = arith.constant 0 : index
    %10 = vector.load %arg6[%c0_14, %c0_15, %c0_16] : memref<2x1x96xf32, #tpu.memory_space<vmem>>, vector<1x1x96xf32>
    %11 = vector.shape_cast %10 : vector<1x1x96xf32> to vector<1x96xf32>
    %cst = arith.constant dense<0.000000e+00> : vector<8x96xf32>
    %12 = tpu.matmul %1, %9, %cst {dimension_numbers = #tpu.dot_dimension_numbers<[1], [0], [0], [1], [0, 0, 1, 1], [], []>} : vector<8x32xf32>, vector<32x96xf32>, vector<8x96xf32> -> vector<8x96xf32>
    %13 = vector.broadcast %11 : vector<1x96xf32> to vector<8x96xf32>
    %14 = arith.addf %12, %13 : vector<8x96xf32>
    %15 = vector.extract_strided_slice %14 {offsets = [0, 0], sizes = [8, 32], strides = [1, 1]} : vector<8x96xf32> to vector<8x32xf32>
    %cst_17 = arith.constant 0.353553385 : f32
    %16 = vector.broadcast %cst_17 : f32 to vector<8x32xf32>
    %17 = arith.mulf %15, %16 : vector<8x32xf32>
    %18 = vector.extract_strided_slice %14 {offsets = [0, 32], sizes = [8, 32], strides = [1, 1]} : vector<8x96xf32> to vector<8x32xf32>
    %19 = vector.extract_strided_slice %14 {offsets = [0, 64], sizes = [8, 32], strides = [1, 1]} : vector<8x96xf32> to vector<8x32xf32>
    %20 = vector.extract_strided_slice %17 {offsets = [0, 0], sizes = [8, 8], strides = [1, 1]} : vector<8x32xf32> to vector<8x8xf32>
    %21 = vector.extract_strided_slice %18 {offsets = [0, 0], sizes = [8, 8], strides = [1, 1]} : vector<8x32xf32> to vector<8x8xf32>
    %cst_18 = arith.constant dense<0.000000e+00> : vector<8x8xf32>
    %22 = tpu.matmul %20, %21, %cst_18 {dimension_numbers = #tpu.dot_dimension_numbers<[1], [1], [0], [0], [0, 0, 1, 0], [], []>} : vector<8x8xf32>, vector<8x8xf32>, vector<8x8xf32> -> vector<8x8xf32>
    %c0_i32 = arith.constant 0 : i32
    %23 = vector.broadcast %c0_i32 : i32 to vector<8x8xi32>
    %24 = arith.cmpi ne, %5, %23 : vector<8x8xi32>
    %cst_19 = arith.constant -1.000000e+10 : f32
    %25 = vector.broadcast %cst_19 : f32 to vector<8x8xf32>
    %26 = arith.select %24, %22, %25 : vector<8x8xi1>, vector<8x8xf32>
    %cst_20 = arith.constant dense<0xFF800000> : vector<8xf32>
    %27 = vector.multi_reduction <maximumf>, %26, %cst_20 [1] : vector<8x8xf32> to vector<8xf32>
    %28 = vector.shape_cast %27 : vector<8xf32> to vector<8x1xf32>
    %29 = vector.broadcast %28 : vector<8x1xf32> to vector<8x8xf32>
    %30 = arith.subf %26, %29 : vector<8x8xf32>
    %31 = math.exp %30 : vector<8x8xf32>
    %cst_21 = arith.constant dense<0.000000e+00> : vector<8xf32>
    %32 = vector.multi_reduction <add>, %31, %cst_21 [1] : vector<8x8xf32> to vector<8xf32>
    %33 = vector.shape_cast %32 : vector<8xf32> to vector<8x1xf32>
    %34 = vector.broadcast %33 : vector<8x1xf32> to vector<8x8xf32>
    %35 = arith.divf %31, %34 : vector<8x8xf32>
    %36 = vector.extract_strided_slice %19 {offsets = [0, 0], sizes = [8, 8], strides = [1, 1]} : vector<8x32xf32> to vector<8x8xf32>
    %cst_22 = arith.constant dense<0.000000e+00> : vector<8x8xf32>
    %37 = tpu.matmul %35, %36, %cst_22 {dimension_numbers = #tpu.dot_dimension_numbers<[1], [0], [0], [1], [0, 0, 1, 1], [], []>} : vector<8x8xf32>, vector<8x8xf32>, vector<8x8xf32> -> vector<8x8xf32>
    %38 = vector.extract_strided_slice %17 {offsets = [0, 8], sizes = [8, 8], strides = [1, 1]} : vector<8x32xf32> to vector<8x8xf32>
    %39 = vector.extract_strided_slice %18 {offsets = [0, 8], sizes = [8, 8], strides = [1, 1]} : vector<8x32xf32> to vector<8x8xf32>
    %cst_23 = arith.constant dense<0.000000e+00> : vector<8x8xf32>
    %40 = tpu.matmul %38, %39, %cst_23 {dimension_numbers = #tpu.dot_dimension_numbers<[1], [1], [0], [0], [0, 0, 1, 0], [], []>} : vector<8x8xf32>, vector<8x8xf32>, vector<8x8xf32> -> vector<8x8xf32>
    %c0_i32_24 = arith.constant 0 : i32
    %41 = vector.broadcast %c0_i32_24 : i32 to vector<8x8xi32>
    %42 = arith.cmpi ne, %5, %41 : vector<8x8xi32>
    %cst_25 = arith.constant -1.000000e+10 : f32
    %43 = vector.broadcast %cst_25 : f32 to vector<8x8xf32>
    %44 = arith.select %42, %40, %43 : vector<8x8xi1>, vector<8x8xf32>
    %cst_26 = arith.constant dense<0xFF800000> : vector<8xf32>
    %45 = vector.multi_reduction <maximumf>, %44, %cst_26 [1] : vector<8x8xf32> to vector<8xf32>
    %46 = vector.shape_cast %45 : vector<8xf32> to vector<8x1xf32>
    %47 = vector.broadcast %46 : vector<8x1xf32> to vector<8x8xf32>
    %48 = arith.subf %44, %47 : vector<8x8xf32>
    %49 = math.exp %48 : vector<8x8xf32>
    %cst_27 = arith.constant dense<0.000000e+00> : vector<8xf32>
    %50 = vector.multi_reduction <add>, %49, %cst_27 [1] : vector<8x8xf32> to vector<8xf32>
    %51 = vector.shape_cast %50 : vector<8xf32> to vector<8x1xf32>
    %52 = vector.broadcast %51 : vector<8x1xf32> to vector<8x8xf32>
    %53 = arith.divf %49, %52 : vector<8x8xf32>
    %54 = vector.extract_strided_slice %19 {offsets = [0, 8], sizes = [8, 8], strides = [1, 1]} : vector<8x32xf32> to vector<8x8xf32>
    %cst_28 = arith.constant dense<0.000000e+00> : vector<8x8xf32>
    %55 = tpu.matmul %53, %54, %cst_28 {dimension_numbers = #tpu.dot_dimension_numbers<[1], [0], [0], [1], [0, 0, 1, 1], [], []>} : vector<8x8xf32>, vector<8x8xf32>, vector<8x8xf32> -> vector<8x8xf32>
    %56 = vector.extract_strided_slice %17 {offsets = [0, 16], sizes = [8, 8], strides = [1, 1]} : vector<8x32xf32> to vector<8x8xf32>
    %57 = vector.extract_strided_slice %18 {offsets = [0, 16], sizes = [8, 8], strides = [1, 1]} : vector<8x32xf32> to vector<8x8xf32>
    %cst_29 = arith.constant dense<0.000000e+00> : vector<8x8xf32>
    %58 = tpu.matmul %56, %57, %cst_29 {dimension_numbers = #tpu.dot_dimension_numbers<[1], [1], [0], [0], [0, 0, 1, 0], [], []>} : vector<8x8xf32>, vector<8x8xf32>, vector<8x8xf32> -> vector<8x8xf32>
    %c0_i32_30 = arith.constant 0 : i32
    %59 = vector.broadcast %c0_i32_30 : i32 to vector<8x8xi32>
    %60 = arith.cmpi ne, %5, %59 : vector<8x8xi32>
    %cst_31 = arith.constant -1.000000e+10 : f32
    %61 = vector.broadcast %cst_31 : f32 to vector<8x8xf32>
    %62 = arith.select %60, %58, %61 : vector<8x8xi1>, vector<8x8xf32>
    %cst_32 = arith.constant dense<0xFF800000> : vector<8xf32>
    %63 = vector.multi_reduction <maximumf>, %62, %cst_32 [1] : vector<8x8xf32> to vector<8xf32>
    %64 = vector.shape_cast %63 : vector<8xf32> to vector<8x1xf32>
    %65 = vector.broadcast %64 : vector<8x1xf32> to vector<8x8xf32>
    %66 = arith.subf %62, %65 : vector<8x8xf32>
    %67 = math.exp %66 : vector<8x8xf32>
    %cst_33 = arith.constant dense<0.000000e+00> : vector<8xf32>
    %68 = vector.multi_reduction <add>, %67, %cst_33 [1] : vector<8x8xf32> to vector<8xf32>
    %69 = vector.shape_cast %68 : vector<8xf32> to vector<8x1xf32>
    %70 = vector.broadcast %69 : vector<8x1xf32> to vector<8x8xf32>
    %71 = arith.divf %67, %70 : vector<8x8xf32>
    %72 = vector.extract_strided_slice %19 {offsets = [0, 16], sizes = [8, 8], strides = [1, 1]} : vector<8x32xf32> to vector<8x8xf32>
    %cst_34 = arith.constant dense<0.000000e+00> : vector<8x8xf32>
    %73 = tpu.matmul %71, %72, %cst_34 {dimension_numbers = #tpu.dot_dimension_numbers<[1], [0], [0], [1], [0, 0, 1, 1], [], []>} : vector<8x8xf32>, vector<8x8xf32>, vector<8x8xf32> -> vector<8x8xf32>
    %74 = vector.extract_strided_slice %17 {offsets = [0, 24], sizes = [8, 8], strides = [1, 1]} : vector<8x32xf32> to vector<8x8xf32>
    %75 = vector.extract_strided_slice %18 {offsets = [0, 24], sizes = [8, 8], strides = [1, 1]} : vector<8x32xf32> to vector<8x8xf32>
    %cst_35 = arith.constant dense<0.000000e+00> : vector<8x8xf32>
    %76 = tpu.matmul %74, %75, %cst_35 {dimension_numbers = #tpu.dot_dimension_numbers<[1], [1], [0], [0], [0, 0, 1, 0], [], []>} : vector<8x8xf32>, vector<8x8xf32>, vector<8x8xf32> -> vector<8x8xf32>
    %c0_i32_36 = arith.constant 0 : i32
    %77 = vector.broadcast %c0_i32_36 : i32 to vector<8x8xi32>
    %78 = arith.cmpi ne, %5, %77 : vector<8x8xi32>
    %cst_37 = arith.constant -1.000000e+10 : f32
    %79 = vector.broadcast %cst_37 : f32 to vector<8x8xf32>
    %80 = arith.select %78, %76, %79 : vector<8x8xi1>, vector<8x8xf32>
    %cst_38 = arith.constant dense<0xFF800000> : vector<8xf32>
    %81 = vector.multi_reduction <maximumf>, %80, %cst_38 [1] : vector<8x8xf32> to vector<8xf32>
    %82 = vector.shape_cast %81 : vector<8xf32> to vector<8x1xf32>
    %83 = vector.broadcast %82 : vector<8x1xf32> to vector<8x8xf32>
    %84 = arith.subf %80, %83 : vector<8x8xf32>
    %85 = math.exp %84 : vector<8x8xf32>
    %cst_39 = arith.constant dense<0.000000e+00> : vector<8xf32>
    %86 = vector.multi_reduction <add>, %85, %cst_39 [1] : vector<8x8xf32> to vector<8xf32>
    %87 = vector.shape_cast %86 : vector<8xf32> to vector<8x1xf32>
    %88 = vector.broadcast %87 : vector<8x1xf32> to vector<8x8xf32>
    %89 = arith.divf %85, %88 : vector<8x8xf32>
    %90 = vector.extract_strided_slice %19 {offsets = [0, 24], sizes = [8, 8], strides = [1, 1]} : vector<8x32xf32> to vector<8x8xf32>
    %cst_40 = arith.constant dense<0.000000e+00> : vector<8x8xf32>
    %91 = tpu.matmul %89, %90, %cst_40 {dimension_numbers = #tpu.dot_dimension_numbers<[1], [0], [0], [1], [0, 0, 1, 1], [], []>} : vector<8x8xf32>, vector<8x8xf32>, vector<8x8xf32> -> vector<8x8xf32>
    %92 = tpu.concatenate %37, %55, %73, %91 in 1 : vector<8x8xf32>, vector<8x8xf32>, vector<8x8xf32>, vector<8x8xf32> -> vector<8x32xf32>
    %c0_41 = arith.constant 0 : index
    %c0_42 = arith.constant 0 : index
    %c0_43 = arith.constant 0 : index
    %93 = vector.load %arg7[%c0_41, %c0_42, %c0_43] : memref<2x32x32xf32, #tpu.memory_space<vmem>>, vector<1x32x32xf32>
    %94 = vector.shape_cast %93 : vector<1x32x32xf32> to vector<32x32xf32>
    %c0_44 = arith.constant 0 : index
    %c0_45 = arith.constant 0 : index
    %c0_46 = arith.constant 0 : index
    %95 = vector.load %arg8[%c0_44, %c0_45, %c0_46] : memref<2x1x32xf32, #tpu.memory_space<vmem>>, vector<1x1x32xf32>
    %96 = vector.shape_cast %95 : vector<1x1x32xf32> to vector<1x32xf32>
    %cst_47 = arith.constant dense<0.000000e+00> : vector<8x32xf32>
    %97 = tpu.matmul %92, %94, %cst_47 {dimension_numbers = #tpu.dot_dimension_numbers<[1], [0], [0], [1], [0, 0, 1, 1], [], []>} : vector<8x32xf32>, vector<32x32xf32>, vector<8x32xf32> -> vector<8x32xf32>
    %98 = vector.broadcast %96 : vector<1x32xf32> to vector<8x32xf32>
    %99 = arith.addf %97, %98 : vector<8x32xf32>
    %100 = arith.addf %1, %99 : vector<8x32xf32>
    %c0_48 = arith.constant 0 : index
    %c0_49 = arith.constant 0 : index
    %c0_50 = arith.constant 0 : index
    %101 = vector.load %arg9[%c0_48, %c0_49, %c0_50] : memref<2x1x32xf32, #tpu.memory_space<vmem>>, vector<1x1x32xf32>
    %102 = vector.shape_cast %101 : vector<1x1x32xf32> to vector<1x32xf32>
    %c0_51 = arith.constant 0 : index
    %c0_52 = arith.constant 0 : index
    %c0_53 = arith.constant 0 : index
    %103 = vector.load %arg10[%c0_51, %c0_52, %c0_53] : memref<2x1x32xf32, #tpu.memory_space<vmem>>, vector<1x1x32xf32>
    %104 = vector.shape_cast %103 : vector<1x1x32xf32> to vector<1x32xf32>
    %cst_54 = arith.constant dense<0.000000e+00> : vector<8xf32>
    %105 = vector.multi_reduction <add>, %100, %cst_54 [1] : vector<8x32xf32> to vector<8xf32>
    %106 = vector.shape_cast %105 : vector<8xf32> to vector<8x1xf32>
    %cst_55 = arith.constant 3.200000e+01 : f32
    %107 = vector.broadcast %cst_55 : f32 to vector<8x1xf32>
    %108 = arith.divf %106, %107 : vector<8x1xf32>
    %109 = vector.broadcast %108 : vector<8x1xf32> to vector<8x32xf32>
    %110 = arith.subf %100, %109 : vector<8x32xf32>
    %111 = arith.mulf %110, %110 : vector<8x32xf32>
    %cst_56 = arith.constant dense<0.000000e+00> : vector<8xf32>
    %112 = vector.multi_reduction <add>, %111, %cst_56 [1] : vector<8x32xf32> to vector<8xf32>
    %113 = vector.shape_cast %112 : vector<8xf32> to vector<8x1xf32>
    %cst_57 = arith.constant 3.200000e+01 : f32
    %114 = vector.broadcast %cst_57 : f32 to vector<8x1xf32>
    %115 = arith.divf %113, %114 : vector<8x1xf32>
    %cst_58 = arith.constant 9.99999974E-6 : f32
    %116 = vector.broadcast %cst_58 : f32 to vector<8x1xf32>
    %117 = arith.addf %115, %116 : vector<8x1xf32>
    %118 = math.rsqrt %117 : vector<8x1xf32>
    %119 = vector.broadcast %118 : vector<8x1xf32> to vector<8x32xf32>
    %120 = arith.mulf %110, %119 : vector<8x32xf32>
    %121 = vector.broadcast %102 : vector<1x32xf32> to vector<8x32xf32>
    %122 = arith.mulf %120, %121 : vector<8x32xf32>
    %123 = vector.broadcast %104 : vector<1x32xf32> to vector<8x32xf32>
    %124 = arith.addf %122, %123 : vector<8x32xf32>
    %c0_59 = arith.constant 0 : index
    %c0_60 = arith.constant 0 : index
    %c0_61 = arith.constant 0 : index
    %125 = vector.load %arg11[%c0_59, %c0_60, %c0_61] : memref<2x32x32xf32, #tpu.memory_space<vmem>>, vector<1x32x32xf32>
    %126 = vector.shape_cast %125 : vector<1x32x32xf32> to vector<32x32xf32>
    %c0_62 = arith.constant 0 : index
    %c0_63 = arith.constant 0 : index
    %c0_64 = arith.constant 0 : index
    %127 = vector.load %arg12[%c0_62, %c0_63, %c0_64] : memref<2x1x32xf32, #tpu.memory_space<vmem>>, vector<1x1x32xf32>
    %128 = vector.shape_cast %127 : vector<1x1x32xf32> to vector<1x32xf32>
    %cst_65 = arith.constant dense<0.000000e+00> : vector<8x32xf32>
    %129 = tpu.matmul %124, %126, %cst_65 {dimension_numbers = #tpu.dot_dimension_numbers<[1], [0], [0], [1], [0, 0, 1, 1], [], []>} : vector<8x32xf32>, vector<32x32xf32>, vector<8x32xf32> -> vector<8x32xf32>
    %130 = vector.broadcast %128 : vector<1x32xf32> to vector<8x32xf32>
    %131 = arith.addf %129, %130 : vector<8x32xf32>
    %cst_66 = arith.constant 0.353553385 : f32
    %132 = vector.broadcast %cst_66 : f32 to vector<8x32xf32>
    %133 = arith.mulf %131, %132 : vector<8x32xf32>
    %c0_67 = arith.constant 0 : index
    %c0_68 = arith.constant 0 : index
    %c0_69 = arith.constant 0 : index
    %134 = vector.load %arg13[%c0_67, %c0_68, %c0_69] : memref<2x32x64xf32, #tpu.memory_space<vmem>>, vector<1x32x64xf32>
    %135 = vector.shape_cast %134 : vector<1x32x64xf32> to vector<32x64xf32>
    %c0_70 = arith.constant 0 : index
    %c0_71 = arith.constant 0 : index
    %c0_72 = arith.constant 0 : index
    %136 = vector.load %arg14[%c0_70, %c0_71, %c0_72] : memref<2x1x64xf32, #tpu.memory_space<vmem>>, vector<1x1x64xf32>
    %137 = vector.shape_cast %136 : vector<1x1x64xf32> to vector<1x64xf32>
    %cst_73 = arith.constant dense<0.000000e+00> : vector<10x64xf32>
    %138 = tpu.matmul %3, %135, %cst_73 {dimension_numbers = #tpu.dot_dimension_numbers<[1], [0], [0], [1], [0, 0, 1, 1], [], []>} : vector<10x32xf32>, vector<32x64xf32>, vector<10x64xf32> -> vector<10x64xf32>
    %139 = vector.broadcast %137 : vector<1x64xf32> to vector<10x64xf32>
    %140 = arith.addf %138, %139 : vector<10x64xf32>
    %141 = vector.extract_strided_slice %140 {offsets = [0, 0], sizes = [10, 32], strides = [1, 1]} : vector<10x64xf32> to vector<10x32xf32>
    %142 = vector.extract_strided_slice %140 {offsets = [0, 32], sizes = [10, 32], strides = [1, 1]} : vector<10x64xf32> to vector<10x32xf32>
    %143 = vector.extract_strided_slice %133 {offsets = [0, 0], sizes = [8, 8], strides = [1, 1]} : vector<8x32xf32> to vector<8x8xf32>
    %144 = vector.extract_strided_slice %141 {offsets = [0, 0], sizes = [10, 8], strides = [1, 1]} : vector<10x32xf32> to vector<10x8xf32>
    %cst_74 = arith.constant dense<0.000000e+00> : vector<8x10xf32>
    %145 = tpu.matmul %143, %144, %cst_74 {dimension_numbers = #tpu.dot_dimension_numbers<[1], [1], [0], [0], [0, 0, 1, 0], [], []>} : vector<8x8xf32>, vector<10x8xf32>, vector<8x10xf32> -> vector<8x10xf32>
    %c0_i32_75 = arith.constant 0 : i32
    %146 = vector.broadcast %c0_i32_75 : i32 to vector<1x10xi32>
    %147 = arith.cmpi ne, %7, %146 : vector<1x10xi32>
    %cst_76 = arith.constant -1.000000e+10 : f32
    %148 = vector.shape_cast %147 : vector<1x10xi1> to vector<1x10xi1>
    %149 = vector.broadcast %148 : vector<1x10xi1> to vector<8x10xi1>
    %150 = vector.broadcast %cst_76 : f32 to vector<8x10xf32>
    %151 = arith.select %149, %145, %150 : vector<8x10xi1>, vector<8x10xf32>
    %cst_77 = arith.constant dense<0xFF800000> : vector<8xf32>
    %152 = vector.multi_reduction <maximumf>, %151, %cst_77 [1] : vector<8x10xf32> to vector<8xf32>
    %153 = vector.shape_cast %152 : vector<8xf32> to vector<8x1xf32>
    %154 = vector.broadcast %153 : vector<8x1xf32> to vector<8x10xf32>
    %155 = arith.subf %151, %154 : vector<8x10xf32>
    %156 = math.exp %155 : vector<8x10xf32>
    %cst_78 = arith.constant dense<0.000000e+00> : vector<8xf32>
    %157 = vector.multi_reduction <add>, %156, %cst_78 [1] : vector<8x10xf32> to vector<8xf32>
    %158 = vector.shape_cast %157 : vector<8xf32> to vector<8x1xf32>
    %159 = vector.broadcast %158 : vector<8x1xf32> to vector<8x10xf32>
    %160 = arith.divf %156, %159 : vector<8x10xf32>
    %161 = vector.extract_strided_slice %142 {offsets = [0, 0], sizes = [10, 8], strides = [1, 1]} : vector<10x32xf32> to vector<10x8xf32>
    %cst_79 = arith.constant dense<0.000000e+00> : vector<8x8xf32>
    %162 = tpu.matmul %160, %161, %cst_79 {dimension_numbers = #tpu.dot_dimension_numbers<[1], [0], [0], [1], [0, 0, 1, 1], [], []>} : vector<8x10xf32>, vector<10x8xf32>, vector<8x8xf32> -> vector<8x8xf32>
    %163 = vector.extract_strided_slice %133 {offsets = [0, 8], sizes = [8, 8], strides = [1, 1]} : vector<8x32xf32> to vector<8x8xf32>
    %164 = vector.extract_strided_slice %141 {offsets = [0, 8], sizes = [10, 8], strides = [1, 1]} : vector<10x32xf32> to vector<10x8xf32>
    %cst_80 = arith.constant dense<0.000000e+00> : vector<8x10xf32>
    %165 = tpu.matmul %163, %164, %cst_80 {dimension_numbers = #tpu.dot_dimension_numbers<[1], [1], [0], [0], [0, 0, 1, 0], [], []>} : vector<8x8xf32>, vector<10x8xf32>, vector<8x10xf32> -> vector<8x10xf32>
    %c0_i32_81 = arith.constant 0 : i32
    %166 = vector.broadcast %c0_i32_81 : i32 to vector<1x10xi32>
    %167 = arith.cmpi ne, %7, %166 : vector<1x10xi32>
    %cst_82 = arith.constant -1.000000e+10 : f32
    %168 = vector.shape_cast %167 : vector<1x10xi1> to vector<1x10xi1>
    %169 = vector.broadcast %168 : vector<1x10xi1> to vector<8x10xi1>
    %170 = vector.broadcast %cst_82 : f32 to vector<8x10xf32>
    %171 = arith.select %169, %165, %170 : vector<8x10xi1>, vector<8x10xf32>
    %cst_83 = arith.constant dense<0xFF800000> : vector<8xf32>
    %172 = vector.multi_reduction <maximumf>, %171, %cst_83 [1] : vector<8x10xf32> to vector<8xf32>
    %173 = vector.shape_cast %172 : vector<8xf32> to vector<8x1xf32>
    %174 = vector.broadcast %173 : vector<8x1xf32> to vector<8x10xf32>
    %175 = arith.subf %171, %174 : vector<8x10xf32>
    %176 = math.exp %175 : vector<8x10xf32>
    %cst_84 = arith.constant dense<0.000000e+00> : vector<8xf32>
    %177 = vector.multi_reduction <add>, %176, %cst_84 [1] : vector<8x10xf32> to vector<8xf32>
    %178 = vector.shape_cast %177 : vector<8xf32> to vector<8x1xf32>
    %179 = vector.broadcast %178 : vector<8x1xf32> to vector<8x10xf32>
    %180 = arith.divf %176, %179 : vector<8x10xf32>
    %181 = vector.extract_strided_slice %142 {offsets = [0, 8], sizes = [10, 8], strides = [1, 1]} : vector<10x32xf32> to vector<10x8xf32>
    %cst_85 = arith.constant dense<0.000000e+00> : vector<8x8xf32>
    %182 = tpu.matmul %180, %181, %cst_85 {dimension_numbers = #tpu.dot_dimension_numbers<[1], [0], [0], [1], [0, 0, 1, 1], [], []>} : vector<8x10xf32>, vector<10x8xf32>, vector<8x8xf32> -> vector<8x8xf32>
    %183 = vector.extract_strided_slice %133 {offsets = [0, 16], sizes = [8, 8], strides = [1, 1]} : vector<8x32xf32> to vector<8x8xf32>
    %184 = vector.extract_strided_slice %141 {offsets = [0, 16], sizes = [10, 8], strides = [1, 1]} : vector<10x32xf32> to vector<10x8xf32>
    %cst_86 = arith.constant dense<0.000000e+00> : vector<8x10xf32>
    %185 = tpu.matmul %183, %184, %cst_86 {dimension_numbers = #tpu.dot_dimension_numbers<[1], [1], [0], [0], [0, 0, 1, 0], [], []>} : vector<8x8xf32>, vector<10x8xf32>, vector<8x10xf32> -> vector<8x10xf32>
    %c0_i32_87 = arith.constant 0 : i32
    %186 = vector.broadcast %c0_i32_87 : i32 to vector<1x10xi32>
    %187 = arith.cmpi ne, %7, %186 : vector<1x10xi32>
    %cst_88 = arith.constant -1.000000e+10 : f32
    %188 = vector.shape_cast %187 : vector<1x10xi1> to vector<1x10xi1>
    %189 = vector.broadcast %188 : vector<1x10xi1> to vector<8x10xi1>
    %190 = vector.broadcast %cst_88 : f32 to vector<8x10xf32>
    %191 = arith.select %189, %185, %190 : vector<8x10xi1>, vector<8x10xf32>
    %cst_89 = arith.constant dense<0xFF800000> : vector<8xf32>
    %192 = vector.multi_reduction <maximumf>, %191, %cst_89 [1] : vector<8x10xf32> to vector<8xf32>
    %193 = vector.shape_cast %192 : vector<8xf32> to vector<8x1xf32>
    %194 = vector.broadcast %193 : vector<8x1xf32> to vector<8x10xf32>
    %195 = arith.subf %191, %194 : vector<8x10xf32>
    %196 = math.exp %195 : vector<8x10xf32>
    %cst_90 = arith.constant dense<0.000000e+00> : vector<8xf32>
    %197 = vector.multi_reduction <add>, %196, %cst_90 [1] : vector<8x10xf32> to vector<8xf32>
    %198 = vector.shape_cast %197 : vector<8xf32> to vector<8x1xf32>
    %199 = vector.broadcast %198 : vector<8x1xf32> to vector<8x10xf32>
    %200 = arith.divf %196, %199 : vector<8x10xf32>
    %201 = vector.extract_strided_slice %142 {offsets = [0, 16], sizes = [10, 8], strides = [1, 1]} : vector<10x32xf32> to vector<10x8xf32>
    %cst_91 = arith.constant dense<0.000000e+00> : vector<8x8xf32>
    %202 = tpu.matmul %200, %201, %cst_91 {dimension_numbers = #tpu.dot_dimension_numbers<[1], [0], [0], [1], [0, 0, 1, 1], [], []>} : vector<8x10xf32>, vector<10x8xf32>, vector<8x8xf32> -> vector<8x8xf32>
    %203 = vector.extract_strided_slice %133 {offsets = [0, 24], sizes = [8, 8], strides = [1, 1]} : vector<8x32xf32> to vector<8x8xf32>
    %204 = vector.extract_strided_slice %141 {offsets = [0, 24], sizes = [10, 8], strides = [1, 1]} : vector<10x32xf32> to vector<10x8xf32>
    %cst_92 = arith.constant dense<0.000000e+00> : vector<8x10xf32>
    %205 = tpu.matmul %203, %204, %cst_92 {dimension_numbers = #tpu.dot_dimension_numbers<[1], [1], [0], [0], [0, 0, 1, 0], [], []>} : vector<8x8xf32>, vector<10x8xf32>, vector<8x10xf32> -> vector<8x10xf32>
    %c0_i32_93 = arith.constant 0 : i32
    %206 = vector.broadcast %c0_i32_93 : i32 to vector<1x10xi32>
    %207 = arith.cmpi ne, %7, %206 : vector<1x10xi32>
    %cst_94 = arith.constant -1.000000e+10 : f32
    %208 = vector.shape_cast %207 : vector<1x10xi1> to vector<1x10xi1>
    %209 = vector.broadcast %208 : vector<1x10xi1> to vector<8x10xi1>
    %210 = vector.broadcast %cst_94 : f32 to vector<8x10xf32>
    %211 = arith.select %209, %205, %210 : vector<8x10xi1>, vector<8x10xf32>
    %cst_95 = arith.constant dense<0xFF800000> : vector<8xf32>
    %212 = vector.multi_reduction <maximumf>, %211, %cst_95 [1] : vector<8x10xf32> to vector<8xf32>
    %213 = vector.shape_cast %212 : vector<8xf32> to vector<8x1xf32>
    %214 = vector.broadcast %213 : vector<8x1xf32> to vector<8x10xf32>
    %215 = arith.subf %211, %214 : vector<8x10xf32>
    %216 = math.exp %215 : vector<8x10xf32>
    %cst_96 = arith.constant dense<0.000000e+00> : vector<8xf32>
    %217 = vector.multi_reduction <add>, %216, %cst_96 [1] : vector<8x10xf32> to vector<8xf32>
    %218 = vector.shape_cast %217 : vector<8xf32> to vector<8x1xf32>
    %219 = vector.broadcast %218 : vector<8x1xf32> to vector<8x10xf32>
    %220 = arith.divf %216, %219 : vector<8x10xf32>
    %221 = vector.extract_strided_slice %142 {offsets = [0, 24], sizes = [10, 8], strides = [1, 1]} : vector<10x32xf32> to vector<10x8xf32>
    %cst_97 = arith.constant dense<0.000000e+00> : vector<8x8xf32>
    %222 = tpu.matmul %220, %221, %cst_97 {dimension_numbers = #tpu.dot_dimension_numbers<[1], [0], [0], [1], [0, 0, 1, 1], [], []>} : vector<8x10xf32>, vector<10x8xf32>, vector<8x8xf32> -> vector<8x8xf32>
    %223 = tpu.concatenate %162, %182, %202, %222 in 1 : vector<8x8xf32>, vector<8x8xf32>, vector<8x8xf32>, vector<8x8xf32> -> vector<8x32xf32>
    %c0_98 = arith.constant 0 : index
    %c0_99 = arith.constant 0 : index
    %c0_100 = arith.constant 0 : index
    %224 = vector.load %arg15[%c0_98, %c0_99, %c0_100] : memref<2x32x32xf32, #tpu.memory_space<vmem>>, vector<1x32x32xf32>
    %225 = vector.shape_cast %224 : vector<1x32x32xf32> to vector<32x32xf32>
    %c0_101 = arith.constant 0 : index
    %c0_102 = arith.constant 0 : index
    %c0_103 = arith.constant 0 : index
    %226 = vector.load %arg16[%c0_101, %c0_102, %c0_103] : memref<2x1x32xf32, #tpu.memory_space<vmem>>, vector<1x1x32xf32>
    %227 = vector.shape_cast %226 : vector<1x1x32xf32> to vector<1x32xf32>
    %cst_104 = arith.constant dense<0.000000e+00> : vector<8x32xf32>
    %228 = tpu.matmul %223, %225, %cst_104 {dimension_numbers = #tpu.dot_dimension_numbers<[1], [0], [0], [1], [0, 0, 1, 1], [], []>} : vector<8x32xf32>, vector<32x32xf32>, vector<8x32xf32> -> vector<8x32xf32>
    %229 = vector.broadcast %227 : vector<1x32xf32> to vector<8x32xf32>
    %230 = arith.addf %228, %229 : vector<8x32xf32>
    %231 = arith.addf %124, %230 : vector<8x32xf32>
    %c0_105 = arith.constant 0 : index
    %c0_106 = arith.constant 0 : index
    %c0_107 = arith.constant 0 : index
    %232 = vector.load %arg17[%c0_105, %c0_106, %c0_107] : memref<2x1x32xf32, #tpu.memory_space<vmem>>, vector<1x1x32xf32>
    %233 = vector.shape_cast %232 : vector<1x1x32xf32> to vector<1x32xf32>
    %c0_108 = arith.constant 0 : index
    %c0_109 = arith.constant 0 : index
    %c0_110 = arith.constant 0 : index
    %234 = vector.load %arg18[%c0_108, %c0_109, %c0_110] : memref<2x1x32xf32, #tpu.memory_space<vmem>>, vector<1x1x32xf32>
    %235 = vector.shape_cast %234 : vector<1x1x32xf32> to vector<1x32xf32>
    %cst_111 = arith.constant dense<0.000000e+00> : vector<8xf32>
    %236 = vector.multi_reduction <add>, %231, %cst_111 [1] : vector<8x32xf32> to vector<8xf32>
    %237 = vector.shape_cast %236 : vector<8xf32> to vector<8x1xf32>
    %cst_112 = arith.constant 3.200000e+01 : f32
    %238 = vector.broadcast %cst_112 : f32 to vector<8x1xf32>
    %239 = arith.divf %237, %238 : vector<8x1xf32>
    %240 = vector.broadcast %239 : vector<8x1xf32> to vector<8x32xf32>
    %241 = arith.subf %231, %240 : vector<8x32xf32>
    %242 = arith.mulf %241, %241 : vector<8x32xf32>
    %cst_113 = arith.constant dense<0.000000e+00> : vector<8xf32>
    %243 = vector.multi_reduction <add>, %242, %cst_113 [1] : vector<8x32xf32> to vector<8xf32>
    %244 = vector.shape_cast %243 : vector<8xf32> to vector<8x1xf32>
    %cst_114 = arith.constant 3.200000e+01 : f32
    %245 = vector.broadcast %cst_114 : f32 to vector<8x1xf32>
    %246 = arith.divf %244, %245 : vector<8x1xf32>
    %cst_115 = arith.constant 9.99999974E-6 : f32
    %247 = vector.broadcast %cst_115 : f32 to vector<8x1xf32>
    %248 = arith.addf %246, %247 : vector<8x1xf32>
    %249 = math.rsqrt %248 : vector<8x1xf32>
    %250 = vector.broadcast %249 : vector<8x1xf32> to vector<8x32xf32>
    %251 = arith.mulf %241, %250 : vector<8x32xf32>
    %252 = vector.broadcast %233 : vector<1x32xf32> to vector<8x32xf32>
    %253 = arith.mulf %251, %252 : vector<8x32xf32>
    %254 = vector.broadcast %235 : vector<1x32xf32> to vector<8x32xf32>
    %255 = arith.addf %253, %254 : vector<8x32xf32>
    %c0_116 = arith.constant 0 : index
    %c0_117 = arith.constant 0 : index
    %c0_118 = arith.constant 0 : index
    %256 = vector.load %arg19[%c0_116, %c0_117, %c0_118] : memref<2x32x64xf32, #tpu.memory_space<vmem>>, vector<1x32x64xf32>
    %257 = vector.shape_cast %256 : vector<1x32x64xf32> to vector<32x64xf32>
    %c0_119 = arith.constant 0 : index
    %c0_120 = arith.constant 0 : index
    %c0_121 = arith.constant 0 : index
    %258 = vector.load %arg20[%c0_119, %c0_120, %c0_121] : memref<2x1x64xf32, #tpu.memory_space<vmem>>, vector<1x1x64xf32>
    %259 = vector.shape_cast %258 : vector<1x1x64xf32> to vector<1x64xf32>
    %cst_122 = arith.constant dense<0.000000e+00> : vector<8x64xf32>
    %260 = tpu.matmul %255, %257, %cst_122 {dimension_numbers = #tpu.dot_dimension_numbers<[1], [0], [0], [1], [0, 0, 1, 1], [], []>} : vector<8x32xf32>, vector<32x64xf32>, vector<8x64xf32> -> vector<8x64xf32>
    %261 = vector.broadcast %259 : vector<1x64xf32> to vector<8x64xf32>
    %262 = arith.addf %260, %261 : vector<8x64xf32>
    %cst_123 = arith.constant 0.000000e+00 : f32
    %263 = vector.broadcast %cst_123 : f32 to vector<8x64xf32>
    %264 = arith.maximumf %262, %263 : vector<8x64xf32>
    %c0_124 = arith.constant 0 : index
    %c0_125 = arith.constant 0 : index
    %c0_126 = arith.constant 0 : index
    %265 = vector.load %arg21[%c0_124, %c0_125, %c0_126] : memref<2x64x32xf32, #tpu.memory_space<vmem>>, vector<1x64x32xf32>
    %266 = vector.shape_cast %265 : vector<1x64x32xf32> to vector<64x32xf32>
    %c0_127 = arith.constant 0 : index
    %c0_128 = arith.constant 0 : index
    %c0_129 = arith.constant 0 : index
    %267 = vector.load %arg22[%c0_127, %c0_128, %c0_129] : memref<2x1x32xf32, #tpu.memory_space<vmem>>, vector<1x1x32xf32>
    %268 = vector.shape_cast %267 : vector<1x1x32xf32> to vector<1x32xf32>
    %cst_130 = arith.constant dense<0.000000e+00> : vector<8x32xf32>
    %269 = tpu.matmul %264, %266, %cst_130 {dimension_numbers = #tpu.dot_dimension_numbers<[1], [0], [0], [1], [0, 0, 1, 1], [], []>} : vector<8x64xf32>, vector<64x32xf32>, vector<8x32xf32> -> vector<8x32xf32>
    %270 = vector.broadcast %268 : vector<1x32xf32> to vector<8x32xf32>
    %271 = arith.addf %269, %270 : vector<8x32xf32>
    %272 = arith.addf %255, %271 : vector<8x32xf32>
    %c0_131 = arith.constant 0 : index
    %c0_132 = arith.constant 0 : index
    %c0_133 = arith.constant 0 : index
    %273 = vector.load %arg23[%c0_131, %c0_132, %c0_133] : memref<2x1x32xf32, #tpu.memory_space<vmem>>, vector<1x1x32xf32>
    %274 = vector.shape_cast %273 : vector<1x1x32xf32> to vector<1x32xf32>
    %c0_134 = arith.constant 0 : index
    %c0_135 = arith.constant 0 : index
    %c0_136 = arith.constant 0 : index
    %275 = vector.load %arg24[%c0_134, %c0_135, %c0_136] : memref<2x1x32xf32, #tpu.memory_space<vmem>>, vector<1x1x32xf32>
    %276 = vector.shape_cast %275 : vector<1x1x32xf32> to vector<1x32xf32>
    %cst_137 = arith.constant dense<0.000000e+00> : vector<8xf32>
    %277 = vector.multi_reduction <add>, %272, %cst_137 [1] : vector<8x32xf32> to vector<8xf32>
    %278 = vector.shape_cast %277 : vector<8xf32> to vector<8x1xf32>
    %cst_138 = arith.constant 3.200000e+01 : f32
    %279 = vector.broadcast %cst_138 : f32 to vector<8x1xf32>
    %280 = arith.divf %278, %279 : vector<8x1xf32>
    %281 = vector.broadcast %280 : vector<8x1xf32> to vector<8x32xf32>
    %282 = arith.subf %272, %281 : vector<8x32xf32>
    %283 = arith.mulf %282, %282 : vector<8x32xf32>
    %cst_139 = arith.constant dense<0.000000e+00> : vector<8xf32>
    %284 = vector.multi_reduction <add>, %283, %cst_139 [1] : vector<8x32xf32> to vector<8xf32>
    %285 = vector.shape_cast %284 : vector<8xf32> to vector<8x1xf32>
    %cst_140 = arith.constant 3.200000e+01 : f32
    %286 = vector.broadcast %cst_140 : f32 to vector<8x1xf32>
    %287 = arith.divf %285, %286 : vector<8x1xf32>
    %cst_141 = arith.constant 9.99999974E-6 : f32
    %288 = vector.broadcast %cst_141 : f32 to vector<8x1xf32>
    %289 = arith.addf %287, %288 : vector<8x1xf32>
    %290 = math.rsqrt %289 : vector<8x1xf32>
    %291 = vector.broadcast %290 : vector<8x1xf32> to vector<8x32xf32>
    %292 = arith.mulf %282, %291 : vector<8x32xf32>
    %293 = vector.broadcast %274 : vector<1x32xf32> to vector<8x32xf32>
    %294 = arith.mulf %292, %293 : vector<8x32xf32>
    %295 = vector.broadcast %276 : vector<1x32xf32> to vector<8x32xf32>
    %296 = arith.addf %294, %295 : vector<8x32xf32>
    %c1 = arith.constant 1 : index
    %c0_142 = arith.constant 0 : index
    %c0_143 = arith.constant 0 : index
    %297 = vector.load %arg5[%c1, %c0_142, %c0_143] : memref<2x32x96xf32, #tpu.memory_space<vmem>>, vector<1x32x96xf32>
    %298 = vector.shape_cast %297 : vector<1x32x96xf32> to vector<32x96xf32>
    %c1_144 = arith.constant 1 : index
    %c0_145 = arith.constant 0 : index
    %c0_146 = arith.constant 0 : index
    %299 = vector.load %arg6[%c1_144, %c0_145, %c0_146] : memref<2x1x96xf32, #tpu.memory_space<vmem>>, vector<1x1x96xf32>
    %300 = vector.shape_cast %299 : vector<1x1x96xf32> to vector<1x96xf32>
    %cst_147 = arith.constant dense<0.000000e+00> : vector<8x96xf32>
    %301 = tpu.matmul %296, %298, %cst_147 {dimension_numbers = #tpu.dot_dimension_numbers<[1], [0], [0], [1], [0, 0, 1, 1], [], []>} : vector<8x32xf32>, vector<32x96xf32>, vector<8x96xf32> -> vector<8x96xf32>
    %302 = vector.broadcast %300 : vector<1x96xf32> to vector<8x96xf32>
    %303 = arith.addf %301, %302 : vector<8x96xf32>
    %304 = vector.extract_strided_slice %303 {offsets = [0, 0], sizes = [8, 32], strides = [1, 1]} : vector<8x96xf32> to vector<8x32xf32>
    %cst_148 = arith.constant 0.353553385 : f32
    %305 = vector.broadcast %cst_148 : f32 to vector<8x32xf32>
    %306 = arith.mulf %304, %305 : vector<8x32xf32>
    %307 = vector.extract_strided_slice %303 {offsets = [0, 32], sizes = [8, 32], strides = [1, 1]} : vector<8x96xf32> to vector<8x32xf32>
    %308 = vector.extract_strided_slice %303 {offsets = [0, 64], sizes = [8, 32], strides = [1, 1]} : vector<8x96xf32> to vector<8x32xf32>
    %309 = vector.extract_strided_slice %306 {offsets = [0, 0], sizes = [8, 8], strides = [1, 1]} : vector<8x32xf32> to vector<8x8xf32>
    %310 = vector.extract_strided_slice %307 {offsets = [0, 0], sizes = [8, 8], strides = [1, 1]} : vector<8x32xf32> to vector<8x8xf32>
    %cst_149 = arith.constant dense<0.000000e+00> : vector<8x8xf32>
    %311 = tpu.matmul %309, %310, %cst_149 {dimension_numbers = #tpu.dot_dimension_numbers<[1], [1], [0], [0], [0, 0, 1, 0], [], []>} : vector<8x8xf32>, vector<8x8xf32>, vector<8x8xf32> -> vector<8x8xf32>
    %c0_i32_150 = arith.constant 0 : i32
    %312 = vector.broadcast %c0_i32_150 : i32 to vector<8x8xi32>
    %313 = arith.cmpi ne, %5, %312 : vector<8x8xi32>
    %cst_151 = arith.constant -1.000000e+10 : f32
    %314 = vector.broadcast %cst_151 : f32 to vector<8x8xf32>
    %315 = arith.select %313, %311, %314 : vector<8x8xi1>, vector<8x8xf32>
    %cst_152 = arith.constant dense<0xFF800000> : vector<8xf32>
    %316 = vector.multi_reduction <maximumf>, %315, %cst_152 [1] : vector<8x8xf32> to vector<8xf32>
    %317 = vector.shape_cast %316 : vector<8xf32> to vector<8x1xf32>
    %318 = vector.broadcast %317 : vector<8x1xf32> to vector<8x8xf32>
    %319 = arith.subf %315, %318 : vector<8x8xf32>
    %320 = math.exp %319 : vector<8x8xf32>
    %cst_153 = arith.constant dense<0.000000e+00> : vector<8xf32>
    %321 = vector.multi_reduction <add>, %320, %cst_153 [1] : vector<8x8xf32> to vector<8xf32>
    %322 = vector.shape_cast %321 : vector<8xf32> to vector<8x1xf32>
    %323 = vector.broadcast %322 : vector<8x1xf32> to vector<8x8xf32>
    %324 = arith.divf %320, %323 : vector<8x8xf32>
    %325 = vector.extract_strided_slice %308 {offsets = [0, 0], sizes = [8, 8], strides = [1, 1]} : vector<8x32xf32> to vector<8x8xf32>
    %cst_154 = arith.constant dense<0.000000e+00> : vector<8x8xf32>
    %326 = tpu.matmul %324, %325, %cst_154 {dimension_numbers = #tpu.dot_dimension_numbers<[1], [0], [0], [1], [0, 0, 1, 1], [], []>} : vector<8x8xf32>, vector<8x8xf32>, vector<8x8xf32> -> vector<8x8xf32>
    %327 = vector.extract_strided_slice %306 {offsets = [0, 8], sizes = [8, 8], strides = [1, 1]} : vector<8x32xf32> to vector<8x8xf32>
    %328 = vector.extract_strided_slice %307 {offsets = [0, 8], sizes = [8, 8], strides = [1, 1]} : vector<8x32xf32> to vector<8x8xf32>
    %cst_155 = arith.constant dense<0.000000e+00> : vector<8x8xf32>
    %329 = tpu.matmul %327, %328, %cst_155 {dimension_numbers = #tpu.dot_dimension_numbers<[1], [1], [0], [0], [0, 0, 1, 0], [], []>} : vector<8x8xf32>, vector<8x8xf32>, vector<8x8xf32> -> vector<8x8xf32>
    %c0_i32_156 = arith.constant 0 : i32
    %330 = vector.broadcast %c0_i32_156 : i32 to vector<8x8xi32>
    %331 = arith.cmpi ne, %5, %330 : vector<8x8xi32>
    %cst_157 = arith.constant -1.000000e+10 : f32
    %332 = vector.broadcast %cst_157 : f32 to vector<8x8xf32>
    %333 = arith.select %331, %329, %332 : vector<8x8xi1>, vector<8x8xf32>
    %cst_158 = arith.constant dense<0xFF800000> : vector<8xf32>
    %334 = vector.multi_reduction <maximumf>, %333, %cst_158 [1] : vector<8x8xf32> to vector<8xf32>
    %335 = vector.shape_cast %334 : vector<8xf32> to vector<8x1xf32>
    %336 = vector.broadcast %335 : vector<8x1xf32> to vector<8x8xf32>
    %337 = arith.subf %333, %336 : vector<8x8xf32>
    %338 = math.exp %337 : vector<8x8xf32>
    %cst_159 = arith.constant dense<0.000000e+00> : vector<8xf32>
    %339 = vector.multi_reduction <add>, %338, %cst_159 [1] : vector<8x8xf32> to vector<8xf32>
    %340 = vector.shape_cast %339 : vector<8xf32> to vector<8x1xf32>
    %341 = vector.broadcast %340 : vector<8x1xf32> to vector<8x8xf32>
    %342 = arith.divf %338, %341 : vector<8x8xf32>
    %343 = vector.extract_strided_slice %308 {offsets = [0, 8], sizes = [8, 8], strides = [1, 1]} : vector<8x32xf32> to vector<8x8xf32>
    %cst_160 = arith.constant dense<0.000000e+00> : vector<8x8xf32>
    %344 = tpu.matmul %342, %343, %cst_160 {dimension_numbers = #tpu.dot_dimension_numbers<[1], [0], [0], [1], [0, 0, 1, 1], [], []>} : vector<8x8xf32>, vector<8x8xf32>, vector<8x8xf32> -> vector<8x8xf32>
    %345 = vector.extract_strided_slice %306 {offsets = [0, 16], sizes = [8, 8], strides = [1, 1]} : vector<8x32xf32> to vector<8x8xf32>
    %346 = vector.extract_strided_slice %307 {offsets = [0, 16], sizes = [8, 8], strides = [1, 1]} : vector<8x32xf32> to vector<8x8xf32>
    %cst_161 = arith.constant dense<0.000000e+00> : vector<8x8xf32>
    %347 = tpu.matmul %345, %346, %cst_161 {dimension_numbers = #tpu.dot_dimension_numbers<[1], [1], [0], [0], [0, 0, 1, 0], [], []>} : vector<8x8xf32>, vector<8x8xf32>, vector<8x8xf32> -> vector<8x8xf32>
    %c0_i32_162 = arith.constant 0 : i32
    %348 = vector.broadcast %c0_i32_162 : i32 to vector<8x8xi32>
    %349 = arith.cmpi ne, %5, %348 : vector<8x8xi32>
    %cst_163 = arith.constant -1.000000e+10 : f32
    %350 = vector.broadcast %cst_163 : f32 to vector<8x8xf32>
    %351 = arith.select %349, %347, %350 : vector<8x8xi1>, vector<8x8xf32>
    %cst_164 = arith.constant dense<0xFF800000> : vector<8xf32>
    %352 = vector.multi_reduction <maximumf>, %351, %cst_164 [1] : vector<8x8xf32> to vector<8xf32>
    %353 = vector.shape_cast %352 : vector<8xf32> to vector<8x1xf32>
    %354 = vector.broadcast %353 : vector<8x1xf32> to vector<8x8xf32>
    %355 = arith.subf %351, %354 : vector<8x8xf32>
    %356 = math.exp %355 : vector<8x8xf32>
    %cst_165 = arith.constant dense<0.000000e+00> : vector<8xf32>
    %357 = vector.multi_reduction <add>, %356, %cst_165 [1] : vector<8x8xf32> to vector<8xf32>
    %358 = vector.shape_cast %357 : vector<8xf32> to vector<8x1xf32>
    %359 = vector.broadcast %358 : vector<8x1xf32> to vector<8x8xf32>
    %360 = arith.divf %356, %359 : vector<8x8xf32>
    %361 = vector.extract_strided_slice %308 {offsets = [0, 16], sizes = [8, 8], strides = [1, 1]} : vector<8x32xf32> to vector<8x8xf32>
    %cst_166 = arith.constant dense<0.000000e+00> : vector<8x8xf32>
    %362 = tpu.matmul %360, %361, %cst_166 {dimension_numbers = #tpu.dot_dimension_numbers<[1], [0], [0], [1], [0, 0, 1, 1], [], []>} : vector<8x8xf32>, vector<8x8xf32>, vector<8x8xf32> -> vector<8x8xf32>
    %363 = vector.extract_strided_slice %306 {offsets = [0, 24], sizes = [8, 8], strides = [1, 1]} : vector<8x32xf32> to vector<8x8xf32>
    %364 = vector.extract_strided_slice %307 {offsets = [0, 24], sizes = [8, 8], strides = [1, 1]} : vector<8x32xf32> to vector<8x8xf32>
    %cst_167 = arith.constant dense<0.000000e+00> : vector<8x8xf32>
    %365 = tpu.matmul %363, %364, %cst_167 {dimension_numbers = #tpu.dot_dimension_numbers<[1], [1], [0], [0], [0, 0, 1, 0], [], []>} : vector<8x8xf32>, vector<8x8xf32>, vector<8x8xf32> -> vector<8x8xf32>
    %c0_i32_168 = arith.constant 0 : i32
    %366 = vector.broadcast %c0_i32_168 : i32 to vector<8x8xi32>
    %367 = arith.cmpi ne, %5, %366 : vector<8x8xi32>
    %cst_169 = arith.constant -1.000000e+10 : f32
    %368 = vector.broadcast %cst_169 : f32 to vector<8x8xf32>
    %369 = arith.select %367, %365, %368 : vector<8x8xi1>, vector<8x8xf32>
    %cst_170 = arith.constant dense<0xFF800000> : vector<8xf32>
    %370 = vector.multi_reduction <maximumf>, %369, %cst_170 [1] : vector<8x8xf32> to vector<8xf32>
    %371 = vector.shape_cast %370 : vector<8xf32> to vector<8x1xf32>
    %372 = vector.broadcast %371 : vector<8x1xf32> to vector<8x8xf32>
    %373 = arith.subf %369, %372 : vector<8x8xf32>
    %374 = math.exp %373 : vector<8x8xf32>
    %cst_171 = arith.constant dense<0.000000e+00> : vector<8xf32>
    %375 = vector.multi_reduction <add>, %374, %cst_171 [1] : vector<8x8xf32> to vector<8xf32>
    %376 = vector.shape_cast %375 : vector<8xf32> to vector<8x1xf32>
    %377 = vector.broadcast %376 : vector<8x1xf32> to vector<8x8xf32>
    %378 = arith.divf %374, %377 : vector<8x8xf32>
    %379 = vector.extract_strided_slice %308 {offsets = [0, 24], sizes = [8, 8], strides = [1, 1]} : vector<8x32xf32> to vector<8x8xf32>
    %cst_172 = arith.constant dense<0.000000e+00> : vector<8x8xf32>
    %380 = tpu.matmul %378, %379, %cst_172 {dimension_numbers = #tpu.dot_dimension_numbers<[1], [0], [0], [1], [0, 0, 1, 1], [], []>} : vector<8x8xf32>, vector<8x8xf32>, vector<8x8xf32> -> vector<8x8xf32>
    %381 = tpu.concatenate %326, %344, %362, %380 in 1 : vector<8x8xf32>, vector<8x8xf32>, vector<8x8xf32>, vector<8x8xf32> -> vector<8x32xf32>
    %c1_173 = arith.constant 1 : index
    %c0_174 = arith.constant 0 : index
    %c0_175 = arith.constant 0 : index
    %382 = vector.load %arg7[%c1_173, %c0_174, %c0_175] : memref<2x32x32xf32, #tpu.memory_space<vmem>>, vector<1x32x32xf32>
    %383 = vector.shape_cast %382 : vector<1x32x32xf32> to vector<32x32xf32>
    %c1_176 = arith.constant 1 : index
    %c0_177 = arith.constant 0 : index
    %c0_178 = arith.constant 0 : index
    %384 = vector.load %arg8[%c1_176, %c0_177, %c0_178] : memref<2x1x32xf32, #tpu.memory_space<vmem>>, vector<1x1x32xf32>
    %385 = vector.shape_cast %384 : vector<1x1x32xf32> to vector<1x32xf32>
    %cst_179 = arith.constant dense<0.000000e+00> : vector<8x32xf32>
    %386 = tpu.matmul %381, %383, %cst_179 {dimension_numbers = #tpu.dot_dimension_numbers<[1], [0], [0], [1], [0, 0, 1, 1], [], []>} : vector<8x32xf32>, vector<32x32xf32>, vector<8x32xf32> -> vector<8x32xf32>
    %387 = vector.broadcast %385 : vector<1x32xf32> to vector<8x32xf32>
    %388 = arith.addf %386, %387 : vector<8x32xf32>
    %389 = arith.addf %296, %388 : vector<8x32xf32>
    %c1_180 = arith.constant 1 : index
    %c0_181 = arith.constant 0 : index
    %c0_182 = arith.constant 0 : index
    %390 = vector.load %arg9[%c1_180, %c0_181, %c0_182] : memref<2x1x32xf32, #tpu.memory_space<vmem>>, vector<1x1x32xf32>
    %391 = vector.shape_cast %390 : vector<1x1x32xf32> to vector<1x32xf32>
    %c1_183 = arith.constant 1 : index
    %c0_184 = arith.constant 0 : index
    %c0_185 = arith.constant 0 : index
    %392 = vector.load %arg10[%c1_183, %c0_184, %c0_185] : memref<2x1x32xf32, #tpu.memory_space<vmem>>, vector<1x1x32xf32>
    %393 = vector.shape_cast %392 : vector<1x1x32xf32> to vector<1x32xf32>
    %cst_186 = arith.constant dense<0.000000e+00> : vector<8xf32>
    %394 = vector.multi_reduction <add>, %389, %cst_186 [1] : vector<8x32xf32> to vector<8xf32>
    %395 = vector.shape_cast %394 : vector<8xf32> to vector<8x1xf32>
    %cst_187 = arith.constant 3.200000e+01 : f32
    %396 = vector.broadcast %cst_187 : f32 to vector<8x1xf32>
    %397 = arith.divf %395, %396 : vector<8x1xf32>
    %398 = vector.broadcast %397 : vector<8x1xf32> to vector<8x32xf32>
    %399 = arith.subf %389, %398 : vector<8x32xf32>
    %400 = arith.mulf %399, %399 : vector<8x32xf32>
    %cst_188 = arith.constant dense<0.000000e+00> : vector<8xf32>
    %401 = vector.multi_reduction <add>, %400, %cst_188 [1] : vector<8x32xf32> to vector<8xf32>
    %402 = vector.shape_cast %401 : vector<8xf32> to vector<8x1xf32>
    %cst_189 = arith.constant 3.200000e+01 : f32
    %403 = vector.broadcast %cst_189 : f32 to vector<8x1xf32>
    %404 = arith.divf %402, %403 : vector<8x1xf32>
    %cst_190 = arith.constant 9.99999974E-6 : f32
    %405 = vector.broadcast %cst_190 : f32 to vector<8x1xf32>
    %406 = arith.addf %404, %405 : vector<8x1xf32>
    %407 = math.rsqrt %406 : vector<8x1xf32>
    %408 = vector.broadcast %407 : vector<8x1xf32> to vector<8x32xf32>
    %409 = arith.mulf %399, %408 : vector<8x32xf32>
    %410 = vector.broadcast %391 : vector<1x32xf32> to vector<8x32xf32>
    %411 = arith.mulf %409, %410 : vector<8x32xf32>
    %412 = vector.broadcast %393 : vector<1x32xf32> to vector<8x32xf32>
    %413 = arith.addf %411, %412 : vector<8x32xf32>
    %c1_191 = arith.constant 1 : index
    %c0_192 = arith.constant 0 : index
    %c0_193 = arith.constant 0 : index
    %414 = vector.load %arg11[%c1_191, %c0_192, %c0_193] : memref<2x32x32xf32, #tpu.memory_space<vmem>>, vector<1x32x32xf32>
    %415 = vector.shape_cast %414 : vector<1x32x32xf32> to vector<32x32xf32>
    %c1_194 = arith.constant 1 : index
    %c0_195 = arith.constant 0 : index
    %c0_196 = arith.constant 0 : index
    %416 = vector.load %arg12[%c1_194, %c0_195, %c0_196] : memref<2x1x32xf32, #tpu.memory_space<vmem>>, vector<1x1x32xf32>
    %417 = vector.shape_cast %416 : vector<1x1x32xf32> to vector<1x32xf32>
    %cst_197 = arith.constant dense<0.000000e+00> : vector<8x32xf32>
    %418 = tpu.matmul %413, %415, %cst_197 {dimension_numbers = #tpu.dot_dimension_numbers<[1], [0], [0], [1], [0, 0, 1, 1], [], []>} : vector<8x32xf32>, vector<32x32xf32>, vector<8x32xf32> -> vector<8x32xf32>
    %419 = vector.broadcast %417 : vector<1x32xf32> to vector<8x32xf32>
    %420 = arith.addf %418, %419 : vector<8x32xf32>
    %cst_198 = arith.constant 0.353553385 : f32
    %421 = vector.broadcast %cst_198 : f32 to vector<8x32xf32>
    %422 = arith.mulf %420, %421 : vector<8x32xf32>
    %c1_199 = arith.constant 1 : index
    %c0_200 = arith.constant 0 : index
    %c0_201 = arith.constant 0 : index
    %423 = vector.load %arg13[%c1_199, %c0_200, %c0_201] : memref<2x32x64xf32, #tpu.memory_space<vmem>>, vector<1x32x64xf32>
    %424 = vector.shape_cast %423 : vector<1x32x64xf32> to vector<32x64xf32>
    %c1_202 = arith.constant 1 : index
    %c0_203 = arith.constant 0 : index
    %c0_204 = arith.constant 0 : index
    %425 = vector.load %arg14[%c1_202, %c0_203, %c0_204] : memref<2x1x64xf32, #tpu.memory_space<vmem>>, vector<1x1x64xf32>
    %426 = vector.shape_cast %425 : vector<1x1x64xf32> to vector<1x64xf32>
    %cst_205 = arith.constant dense<0.000000e+00> : vector<10x64xf32>
    %427 = tpu.matmul %3, %424, %cst_205 {dimension_numbers = #tpu.dot_dimension_numbers<[1], [0], [0], [1], [0, 0, 1, 1], [], []>} : vector<10x32xf32>, vector<32x64xf32>, vector<10x64xf32> -> vector<10x64xf32>
    %428 = vector.broadcast %426 : vector<1x64xf32> to vector<10x64xf32>
    %429 = arith.addf %427, %428 : vector<10x64xf32>
    %430 = vector.extract_strided_slice %429 {offsets = [0, 0], sizes = [10, 32], strides = [1, 1]} : vector<10x64xf32> to vector<10x32xf32>
    %431 = vector.extract_strided_slice %429 {offsets = [0, 32], sizes = [10, 32], strides = [1, 1]} : vector<10x64xf32> to vector<10x32xf32>
    %432 = vector.extract_strided_slice %422 {offsets = [0, 0], sizes = [8, 8], strides = [1, 1]} : vector<8x32xf32> to vector<8x8xf32>
    %433 = vector.extract_strided_slice %430 {offsets = [0, 0], sizes = [10, 8], strides = [1, 1]} : vector<10x32xf32> to vector<10x8xf32>
    %cst_206 = arith.constant dense<0.000000e+00> : vector<8x10xf32>
    %434 = tpu.matmul %432, %433, %cst_206 {dimension_numbers = #tpu.dot_dimension_numbers<[1], [1], [0], [0], [0, 0, 1, 0], [], []>} : vector<8x8xf32>, vector<10x8xf32>, vector<8x10xf32> -> vector<8x10xf32>
    %c0_i32_207 = arith.constant 0 : i32
    %435 = vector.broadcast %c0_i32_207 : i32 to vector<1x10xi32>
    %436 = arith.cmpi ne, %7, %435 : vector<1x10xi32>
    %cst_208 = arith.constant -1.000000e+10 : f32
    %437 = vector.shape_cast %436 : vector<1x10xi1> to vector<1x10xi1>
    %438 = vector.broadcast %437 : vector<1x10xi1> to vector<8x10xi1>
    %439 = vector.broadcast %cst_208 : f32 to vector<8x10xf32>
    %440 = arith.select %438, %434, %439 : vector<8x10xi1>, vector<8x10xf32>
    %cst_209 = arith.constant dense<0xFF800000> : vector<8xf32>
    %441 = vector.multi_reduction <maximumf>, %440, %cst_209 [1] : vector<8x10xf32> to vector<8xf32>
    %442 = vector.shape_cast %441 : vector<8xf32> to vector<8x1xf32>
    %443 = vector.broadcast %442 : vector<8x1xf32> to vector<8x10xf32>
    %444 = arith.subf %440, %443 : vector<8x10xf32>
    %445 = math.exp %444 : vector<8x10xf32>
    %cst_210 = arith.constant dense<0.000000e+00> : vector<8xf32>
    %446 = vector.multi_reduction <add>, %445, %cst_210 [1] : vector<8x10xf32> to vector<8xf32>
    %447 = vector.shape_cast %446 : vector<8xf32> to vector<8x1xf32>
    %448 = vector.broadcast %447 : vector<8x1xf32> to vector<8x10xf32>
    %449 = arith.divf %445, %448 : vector<8x10xf32>
    %450 = vector.extract_strided_slice %431 {offsets = [0, 0], sizes = [10, 8], strides = [1, 1]} : vector<10x32xf32> to vector<10x8xf32>
    %cst_211 = arith.constant dense<0.000000e+00> : vector<8x8xf32>
    %451 = tpu.matmul %449, %450, %cst_211 {dimension_numbers = #tpu.dot_dimension_numbers<[1], [0], [0], [1], [0, 0, 1, 1], [], []>} : vector<8x10xf32>, vector<10x8xf32>, vector<8x8xf32> -> vector<8x8xf32>
    %452 = vector.extract_strided_slice %422 {offsets = [0, 8], sizes = [8, 8], strides = [1, 1]} : vector<8x32xf32> to vector<8x8xf32>
    %453 = vector.extract_strided_slice %430 {offsets = [0, 8], sizes = [10, 8], strides = [1, 1]} : vector<10x32xf32> to vector<10x8xf32>
    %cst_212 = arith.constant dense<0.000000e+00> : vector<8x10xf32>
    %454 = tpu.matmul %452, %453, %cst_212 {dimension_numbers = #tpu.dot_dimension_numbers<[1], [1], [0], [0], [0, 0, 1, 0], [], []>} : vector<8x8xf32>, vector<10x8xf32>, vector<8x10xf32> -> vector<8x10xf32>
    %c0_i32_213 = arith.constant 0 : i32
    %455 = vector.broadcast %c0_i32_213 : i32 to vector<1x10xi32>
    %456 = arith.cmpi ne, %7, %455 : vector<1x10xi32>
    %cst_214 = arith.constant -1.000000e+10 : f32
    %457 = vector.shape_cast %456 : vector<1x10xi1> to vector<1x10xi1>
    %458 = vector.broadcast %457 : vector<1x10xi1> to vector<8x10xi1>
    %459 = vector.broadcast %cst_214 : f32 to vector<8x10xf32>
    %460 = arith.select %458, %454, %459 : vector<8x10xi1>, vector<8x10xf32>
    %cst_215 = arith.constant dense<0xFF800000> : vector<8xf32>
    %461 = vector.multi_reduction <maximumf>, %460, %cst_215 [1] : vector<8x10xf32> to vector<8xf32>
    %462 = vector.shape_cast %461 : vector<8xf32> to vector<8x1xf32>
    %463 = vector.broadcast %462 : vector<8x1xf32> to vector<8x10xf32>
    %464 = arith.subf %460, %463 : vector<8x10xf32>
    %465 = math.exp %464 : vector<8x10xf32>
    %cst_216 = arith.constant dense<0.000000e+00> : vector<8xf32>
    %466 = vector.multi_reduction <add>, %465, %cst_216 [1] : vector<8x10xf32> to vector<8xf32>
    %467 = vector.shape_cast %466 : vector<8xf32> to vector<8x1xf32>
    %468 = vector.broadcast %467 : vector<8x1xf32> to vector<8x10xf32>
    %469 = arith.divf %465, %468 : vector<8x10xf32>
    %470 = vector.extract_strided_slice %431 {offsets = [0, 8], sizes = [10, 8], strides = [1, 1]} : vector<10x32xf32> to vector<10x8xf32>
    %cst_217 = arith.constant dense<0.000000e+00> : vector<8x8xf32>
    %471 = tpu.matmul %469, %470, %cst_217 {dimension_numbers = #tpu.dot_dimension_numbers<[1], [0], [0], [1], [0, 0, 1, 1], [], []>} : vector<8x10xf32>, vector<10x8xf32>, vector<8x8xf32> -> vector<8x8xf32>
    %472 = vector.extract_strided_slice %422 {offsets = [0, 16], sizes = [8, 8], strides = [1, 1]} : vector<8x32xf32> to vector<8x8xf32>
    %473 = vector.extract_strided_slice %430 {offsets = [0, 16], sizes = [10, 8], strides = [1, 1]} : vector<10x32xf32> to vector<10x8xf32>
    %cst_218 = arith.constant dense<0.000000e+00> : vector<8x10xf32>
    %474 = tpu.matmul %472, %473, %cst_218 {dimension_numbers = #tpu.dot_dimension_numbers<[1], [1], [0], [0], [0, 0, 1, 0], [], []>} : vector<8x8xf32>, vector<10x8xf32>, vector<8x10xf32> -> vector<8x10xf32>
    %c0_i32_219 = arith.constant 0 : i32
    %475 = vector.broadcast %c0_i32_219 : i32 to vector<1x10xi32>
    %476 = arith.cmpi ne, %7, %475 : vector<1x10xi32>
    %cst_220 = arith.constant -1.000000e+10 : f32
    %477 = vector.shape_cast %476 : vector<1x10xi1> to vector<1x10xi1>
    %478 = vector.broadcast %477 : vector<1x10xi1> to vector<8x10xi1>
    %479 = vector.broadcast %cst_220 : f32 to vector<8x10xf32>
    %480 = arith.select %478, %474, %479 : vector<8x10xi1>, vector<8x10xf32>
    %cst_221 = arith.constant dense<0xFF800000> : vector<8xf32>
    %481 = vector.multi_reduction <maximumf>, %480, %cst_221 [1] : vector<8x10xf32> to vector<8xf32>
    %482 = vector.shape_cast %481 : vector<8xf32> to vector<8x1xf32>
    %483 = vector.broadcast %482 : vector<8x1xf32> to vector<8x10xf32>
    %484 = arith.subf %480, %483 : vector<8x10xf32>
    %485 = math.exp %484 : vector<8x10xf32>
    %cst_222 = arith.constant dense<0.000000e+00> : vector<8xf32>
    %486 = vector.multi_reduction <add>, %485, %cst_222 [1] : vector<8x10xf32> to vector<8xf32>
    %487 = vector.shape_cast %486 : vector<8xf32> to vector<8x1xf32>
    %488 = vector.broadcast %487 : vector<8x1xf32> to vector<8x10xf32>
    %489 = arith.divf %485, %488 : vector<8x10xf32>
    %490 = vector.extract_strided_slice %431 {offsets = [0, 16], sizes = [10, 8], strides = [1, 1]} : vector<10x32xf32> to vector<10x8xf32>
    %cst_223 = arith.constant dense<0.000000e+00> : vector<8x8xf32>
    %491 = tpu.matmul %489, %490, %cst_223 {dimension_numbers = #tpu.dot_dimension_numbers<[1], [0], [0], [1], [0, 0, 1, 1], [], []>} : vector<8x10xf32>, vector<10x8xf32>, vector<8x8xf32> -> vector<8x8xf32>
    %492 = vector.extract_strided_slice %422 {offsets = [0, 24], sizes = [8, 8], strides = [1, 1]} : vector<8x32xf32> to vector<8x8xf32>
    %493 = vector.extract_strided_slice %430 {offsets = [0, 24], sizes = [10, 8], strides = [1, 1]} : vector<10x32xf32> to vector<10x8xf32>
    %cst_224 = arith.constant dense<0.000000e+00> : vector<8x10xf32>
    %494 = tpu.matmul %492, %493, %cst_224 {dimension_numbers = #tpu.dot_dimension_numbers<[1], [1], [0], [0], [0, 0, 1, 0], [], []>} : vector<8x8xf32>, vector<10x8xf32>, vector<8x10xf32> -> vector<8x10xf32>
    %c0_i32_225 = arith.constant 0 : i32
    %495 = vector.broadcast %c0_i32_225 : i32 to vector<1x10xi32>
    %496 = arith.cmpi ne, %7, %495 : vector<1x10xi32>
    %cst_226 = arith.constant -1.000000e+10 : f32
    %497 = vector.shape_cast %496 : vector<1x10xi1> to vector<1x10xi1>
    %498 = vector.broadcast %497 : vector<1x10xi1> to vector<8x10xi1>
    %499 = vector.broadcast %cst_226 : f32 to vector<8x10xf32>
    %500 = arith.select %498, %494, %499 : vector<8x10xi1>, vector<8x10xf32>
    %cst_227 = arith.constant dense<0xFF800000> : vector<8xf32>
    %501 = vector.multi_reduction <maximumf>, %500, %cst_227 [1] : vector<8x10xf32> to vector<8xf32>
    %502 = vector.shape_cast %501 : vector<8xf32> to vector<8x1xf32>
    %503 = vector.broadcast %502 : vector<8x1xf32> to vector<8x10xf32>
    %504 = arith.subf %500, %503 : vector<8x10xf32>
    %505 = math.exp %504 : vector<8x10xf32>
    %cst_228 = arith.constant dense<0.000000e+00> : vector<8xf32>
    %506 = vector.multi_reduction <add>, %505, %cst_228 [1] : vector<8x10xf32> to vector<8xf32>
    %507 = vector.shape_cast %506 : vector<8xf32> to vector<8x1xf32>
    %508 = vector.broadcast %507 : vector<8x1xf32> to vector<8x10xf32>
    %509 = arith.divf %505, %508 : vector<8x10xf32>
    %510 = vector.extract_strided_slice %431 {offsets = [0, 24], sizes = [10, 8], strides = [1, 1]} : vector<10x32xf32> to vector<10x8xf32>
    %cst_229 = arith.constant dense<0.000000e+00> : vector<8x8xf32>
    %511 = tpu.matmul %509, %510, %cst_229 {dimension_numbers = #tpu.dot_dimension_numbers<[1], [0], [0], [1], [0, 0, 1, 1], [], []>} : vector<8x10xf32>, vector<10x8xf32>, vector<8x8xf32> -> vector<8x8xf32>
    %512 = tpu.concatenate %451, %471, %491, %511 in 1 : vector<8x8xf32>, vector<8x8xf32>, vector<8x8xf32>, vector<8x8xf32> -> vector<8x32xf32>
    %c1_230 = arith.constant 1 : index
    %c0_231 = arith.constant 0 : index
    %c0_232 = arith.constant 0 : index
    %513 = vector.load %arg15[%c1_230, %c0_231, %c0_232] : memref<2x32x32xf32, #tpu.memory_space<vmem>>, vector<1x32x32xf32>
    %514 = vector.shape_cast %513 : vector<1x32x32xf32> to vector<32x32xf32>
    %c1_233 = arith.constant 1 : index
    %c0_234 = arith.constant 0 : index
    %c0_235 = arith.constant 0 : index
    %515 = vector.load %arg16[%c1_233, %c0_234, %c0_235] : memref<2x1x32xf32, #tpu.memory_space<vmem>>, vector<1x1x32xf32>
    %516 = vector.shape_cast %515 : vector<1x1x32xf32> to vector<1x32xf32>
    %cst_236 = arith.constant dense<0.000000e+00> : vector<8x32xf32>
    %517 = tpu.matmul %512, %514, %cst_236 {dimension_numbers = #tpu.dot_dimension_numbers<[1], [0], [0], [1], [0, 0, 1, 1], [], []>} : vector<8x32xf32>, vector<32x32xf32>, vector<8x32xf32> -> vector<8x32xf32>
    %518 = vector.broadcast %516 : vector<1x32xf32> to vector<8x32xf32>
    %519 = arith.addf %517, %518 : vector<8x32xf32>
    %520 = arith.addf %413, %519 : vector<8x32xf32>
    %c1_237 = arith.constant 1 : index
    %c0_238 = arith.constant 0 : index
    %c0_239 = arith.constant 0 : index
    %521 = vector.load %arg17[%c1_237, %c0_238, %c0_239] : memref<2x1x32xf32, #tpu.memory_space<vmem>>, vector<1x1x32xf32>
    %522 = vector.shape_cast %521 : vector<1x1x32xf32> to vector<1x32xf32>
    %c1_240 = arith.constant 1 : index
    %c0_241 = arith.constant 0 : index
    %c0_242 = arith.constant 0 : index
    %523 = vector.load %arg18[%c1_240, %c0_241, %c0_242] : memref<2x1x32xf32, #tpu.memory_space<vmem>>, vector<1x1x32xf32>
    %524 = vector.shape_cast %523 : vector<1x1x32xf32> to vector<1x32xf32>
    %cst_243 = arith.constant dense<0.000000e+00> : vector<8xf32>
    %525 = vector.multi_reduction <add>, %520, %cst_243 [1] : vector<8x32xf32> to vector<8xf32>
    %526 = vector.shape_cast %525 : vector<8xf32> to vector<8x1xf32>
    %cst_244 = arith.constant 3.200000e+01 : f32
    %527 = vector.broadcast %cst_244 : f32 to vector<8x1xf32>
    %528 = arith.divf %526, %527 : vector<8x1xf32>
    %529 = vector.broadcast %528 : vector<8x1xf32> to vector<8x32xf32>
    %530 = arith.subf %520, %529 : vector<8x32xf32>
    %531 = arith.mulf %530, %530 : vector<8x32xf32>
    %cst_245 = arith.constant dense<0.000000e+00> : vector<8xf32>
    %532 = vector.multi_reduction <add>, %531, %cst_245 [1] : vector<8x32xf32> to vector<8xf32>
    %533 = vector.shape_cast %532 : vector<8xf32> to vector<8x1xf32>
    %cst_246 = arith.constant 3.200000e+01 : f32
    %534 = vector.broadcast %cst_246 : f32 to vector<8x1xf32>
    %535 = arith.divf %533, %534 : vector<8x1xf32>
    %cst_247 = arith.constant 9.99999974E-6 : f32
    %536 = vector.broadcast %cst_247 : f32 to vector<8x1xf32>
    %537 = arith.addf %535, %536 : vector<8x1xf32>
    %538 = math.rsqrt %537 : vector<8x1xf32>
    %539 = vector.broadcast %538 : vector<8x1xf32> to vector<8x32xf32>
    %540 = arith.mulf %530, %539 : vector<8x32xf32>
    %541 = vector.broadcast %522 : vector<1x32xf32> to vector<8x32xf32>
    %542 = arith.mulf %540, %541 : vector<8x32xf32>
    %543 = vector.broadcast %524 : vector<1x32xf32> to vector<8x32xf32>
    %544 = arith.addf %542, %543 : vector<8x32xf32>
    %c1_248 = arith.constant 1 : index
    %c0_249 = arith.constant 0 : index
    %c0_250 = arith.constant 0 : index
    %545 = vector.load %arg19[%c1_248, %c0_249, %c0_250] : memref<2x32x64xf32, #tpu.memory_space<vmem>>, vector<1x32x64xf32>
    %546 = vector.shape_cast %545 : vector<1x32x64xf32> to vector<32x64xf32>
    %c1_251 = arith.constant 1 : index
    %c0_252 = arith.constant 0 : index
    %c0_253 = arith.constant 0 : index
    %547 = vector.load %arg20[%c1_251, %c0_252, %c0_253] : memref<2x1x64xf32, #tpu.memory_space<vmem>>, vector<1x1x64xf32>
    %548 = vector.shape_cast %547 : vector<1x1x64xf32> to vector<1x64xf32>
    %cst_254 = arith.constant dense<0.000000e+00> : vector<8x64xf32>
    %549 = tpu.matmul %544, %546, %cst_254 {dimension_numbers = #tpu.dot_dimension_numbers<[1], [0], [0], [1], [0, 0, 1, 1], [], []>} : vector<8x32xf32>, vector<32x64xf32>, vector<8x64xf32> -> vector<8x64xf32>
    %550 = vector.broadcast %548 : vector<1x64xf32> to vector<8x64xf32>
    %551 = arith.addf %549, %550 : vector<8x64xf32>
    %cst_255 = arith.constant 0.000000e+00 : f32
    %552 = vector.broadcast %cst_255 : f32 to vector<8x64xf32>
    %553 = arith.maximumf %551, %552 : vector<8x64xf32>
    %c1_256 = arith.constant 1 : index
    %c0_257 = arith.constant 0 : index
    %c0_258 = arith.constant 0 : index
    %554 = vector.load %arg21[%c1_256, %c0_257, %c0_258] : memref<2x64x32xf32, #tpu.memory_space<vmem>>, vector<1x64x32xf32>
    %555 = vector.shape_cast %554 : vector<1x64x32xf32> to vector<64x32xf32>
    %c1_259 = arith.constant 1 : index
    %c0_260 = arith.constant 0 : index
    %c0_261 = arith.constant 0 : index
    %556 = vector.load %arg22[%c1_259, %c0_260, %c0_261] : memref<2x1x32xf32, #tpu.memory_space<vmem>>, vector<1x1x32xf32>
    %557 = vector.shape_cast %556 : vector<1x1x32xf32> to vector<1x32xf32>
    %cst_262 = arith.constant dense<0.000000e+00> : vector<8x32xf32>
    %558 = tpu.matmul %553, %555, %cst_262 {dimension_numbers = #tpu.dot_dimension_numbers<[1], [0], [0], [1], [0, 0, 1, 1], [], []>} : vector<8x64xf32>, vector<64x32xf32>, vector<8x32xf32> -> vector<8x32xf32>
    %559 = vector.broadcast %557 : vector<1x32xf32> to vector<8x32xf32>
    %560 = arith.addf %558, %559 : vector<8x32xf32>
    %561 = arith.addf %544, %560 : vector<8x32xf32>
    %c1_263 = arith.constant 1 : index
    %c0_264 = arith.constant 0 : index
    %c0_265 = arith.constant 0 : index
    %562 = vector.load %arg23[%c1_263, %c0_264, %c0_265] : memref<2x1x32xf32, #tpu.memory_space<vmem>>, vector<1x1x32xf32>
    %563 = vector.shape_cast %562 : vector<1x1x32xf32> to vector<1x32xf32>
    %c1_266 = arith.constant 1 : index
    %c0_267 = arith.constant 0 : index
    %c0_268 = arith.constant 0 : index
    %564 = vector.load %arg24[%c1_266, %c0_267, %c0_268] : memref<2x1x32xf32, #tpu.memory_space<vmem>>, vector<1x1x32xf32>
    %565 = vector.shape_cast %564 : vector<1x1x32xf32> to vector<1x32xf32>
    %cst_269 = arith.constant dense<0.000000e+00> : vector<8xf32>
    %566 = vector.multi_reduction <add>, %561, %cst_269 [1] : vector<8x32xf32> to vector<8xf32>
    %567 = vector.shape_cast %566 : vector<8xf32> to vector<8x1xf32>
    %cst_270 = arith.constant 3.200000e+01 : f32
    %568 = vector.broadcast %cst_270 : f32 to vector<8x1xf32>
    %569 = arith.divf %567, %568 : vector<8x1xf32>
    %570 = vector.broadcast %569 : vector<8x1xf32> to vector<8x32xf32>
    %571 = arith.subf %561, %570 : vector<8x32xf32>
    %572 = arith.mulf %571, %571 : vector<8x32xf32>
    %cst_271 = arith.constant dense<0.000000e+00> : vector<8xf32>
    %573 = vector.multi_reduction <add>, %572, %cst_271 [1] : vector<8x32xf32> to vector<8xf32>
    %574 = vector.shape_cast %573 : vector<8xf32> to vector<8x1xf32>
    %cst_272 = arith.constant 3.200000e+01 : f32
    %575 = vector.broadcast %cst_272 : f32 to vector<8x1xf32>
    %576 = arith.divf %574, %575 : vector<8x1xf32>
    %cst_273 = arith.constant 9.99999974E-6 : f32
    %577 = vector.broadcast %cst_273 : f32 to vector<8x1xf32>
    %578 = arith.addf %576, %577 : vector<8x1xf32>
    %579 = math.rsqrt %578 : vector<8x1xf32>
    %580 = vector.broadcast %579 : vector<8x1xf32> to vector<8x32xf32>
    %581 = arith.mulf %571, %580 : vector<8x32xf32>
    %582 = vector.broadcast %563 : vector<1x32xf32> to vector<8x32xf32>
    %583 = arith.mulf %581, %582 : vector<8x32xf32>
    %584 = vector.broadcast %565 : vector<1x32xf32> to vector<8x32xf32>
    %585 = arith.addf %583, %584 : vector<8x32xf32>
    %c0_274 = arith.constant 0 : index
    %c0_275 = arith.constant 0 : index
    %c0_276 = arith.constant 0 : index
    %c0_277 = arith.constant 0 : index
    %586 = vector.load %arg28[%c0_274, %c0_275, %c0_276, %c0_277] : memref<1x4x8x10xf32, #tpu.memory_space<vmem>>, vector<1x1x8x10xf32>
    %587 = vector.shape_cast %586 : vector<1x1x8x10xf32> to vector<8x10xf32>
    %588 = vector.shape_cast %449 : vector<8x10xf32> to vector<1x1x8x10xf32>
    tpu.vector_store %arg28[%c0_274, %c0_275, %c0_276, %c0_277], %588 {strides = array<i32>} : memref<1x4x8x10xf32, #tpu.memory_space<vmem>>, vector<1x1x8x10xf32>,
    %c0_278 = arith.constant 0 : index
    %c1_279 = arith.constant 1 : index
    %c0_280 = arith.constant 0 : index
    %c0_281 = arith.constant 0 : index
    %589 = vector.load %arg28[%c0_278, %c1_279, %c0_280, %c0_281] : memref<1x4x8x10xf32, #tpu.memory_space<vmem>>, vector<1x1x8x10xf32>
    %590 = vector.shape_cast %589 : vector<1x1x8x10xf32> to vector<8x10xf32>
    %591 = vector.shape_cast %469 : vector<8x10xf32> to vector<1x1x8x10xf32>
    tpu.vector_store %arg28[%c0_278, %c1_279, %c0_280, %c0_281], %591 {strides = array<i32>} : memref<1x4x8x10xf32, #tpu.memory_space<vmem>>, vector<1x1x8x10xf32>,
    %c0_282 = arith.constant 0 : index
    %c2 = arith.constant 2 : index
    %c0_283 = arith.constant 0 : index
    %c0_284 = arith.constant 0 : index
    %592 = vector.load %arg28[%c0_282, %c2, %c0_283, %c0_284] : memref<1x4x8x10xf32, #tpu.memory_space<vmem>>, vector<1x1x8x10xf32>
    %593 = vector.shape_cast %592 : vector<1x1x8x10xf32> to vector<8x10xf32>
    %594 = vector.shape_cast %489 : vector<8x10xf32> to vector<1x1x8x10xf32>
    tpu.vector_store %arg28[%c0_282, %c2, %c0_283, %c0_284], %594 {strides = array<i32>} : memref<1x4x8x10xf32, #tpu.memory_space<vmem>>, vector<1x1x8x10xf32>,
    %c0_285 = arith.constant 0 : index
    %c3 = arith.constant 3 : index
    %c0_286 = arith.constant 0 : index
    %c0_287 = arith.constant 0 : index
    %595 = vector.load %arg28[%c0_285, %c3, %c0_286, %c0_287] : memref<1x4x8x10xf32, #tpu.memory_space<vmem>>, vector<1x1x8x10xf32>
    %596 = vector.shape_cast %595 : vector<1x1x8x10xf32> to vector<8x10xf32>
    %597 = vector.shape_cast %509 : vector<8x10xf32> to vector<1x1x8x10xf32>
    tpu.vector_store %arg28[%c0_285, %c3, %c0_286, %c0_287], %597 {strides = array<i32>} : memref<1x4x8x10xf32, #tpu.memory_space<vmem>>, vector<1x1x8x10xf32>,
    %c0_288 = arith.constant 0 : index
    %c0_289 = arith.constant 0 : index
    %598 = vector.load %arg25[%c0_288, %c0_289] : memref<32x18xf32, #tpu.memory_space<vmem>>, vector<32x18xf32>
    %c0_290 = arith.constant 0 : index
    %c0_291 = arith.constant 0 : index
    %599 = vector.load %arg26[%c0_290, %c0_291] : memref<1x18xf32, #tpu.memory_space<vmem>>, vector<1x18xf32>
    %cst_292 = arith.constant dense<0.000000e+00> : vector<8x18xf32>
    %600 = tpu.matmul %585, %598, %cst_292 {dimension_numbers = #tpu.dot_dimension_numbers<[1], [0], [0], [1], [0, 0, 1, 1], [], []>} : vector<8x32xf32>, vector<32x18xf32>, vector<8x18xf32> -> vector<8x18xf32>
    %601 = vector.broadcast %599 : vector<1x18xf32> to vector<8x18xf32>
    %602 = arith.addf %600, %601 : vector<8x18xf32>
    %c0_293 = arith.constant 0 : index
    %c0_294 = arith.constant 0 : index
    %c0_295 = arith.constant 0 : index
    %603 = vector.load %arg27[%c0_293, %c0_294, %c0_295] : memref<1x8x18xf32, #tpu.memory_space<vmem>>, vector<1x8x18xf32>
    %604 = vector.shape_cast %603 : vector<1x8x18xf32> to vector<8x18xf32>
    %605 = vector.shape_cast %602 : vector<8x18xf32> to vector<1x8x18xf32>
    tpu.vector_store %arg27[%c0_293, %c0_294, %c0_295], %605 {strides = array<i32>} : memref<1x8x18xf32, #tpu.memory_space<vmem>>, vector<1x8x18xf32>,
    return
  }
  func.func @transform_0(%arg0: i32) -> (i32, i32, i32) {
    %c0_i32 = arith.constant 0 : i32
    %c0_i32_0 = arith.constant 0 : i32
    %c0_i32_1 = arith.constant 0 : i32
    return %arg0, %c0_i32, %c0_i32_0 : i32, i32, i32
  }
  func.func @transform_1(%arg0: i32) -> (i32, i32, i32) {
    %c0_i32 = arith.constant 0 : i32
    %c0_i32_0 = arith.constant 0 : i32
    %c0_i32_1 = arith.constant 0 : i32
    return %arg0, %c0_i32, %c0_i32_0 : i32, i32, i32
  }
  func.func @transform_2(%arg0: i32) -> (i32, i32, i32) {
    %c0_i32 = arith.constant 0 : i32
    %c0_i32_0 = arith.constant 0 : i32
    %c0_i32_1 = arith.constant 0 : i32
    return %arg0, %c0_i32, %c0_i32_0 : i32, i32, i32
  }
  func.func @transform_3(%arg0: i32) -> (i32, i32, i32) {
    %c0_i32 = arith.constant 0 : i32
    %c0_i32_0 = arith.constant 0 : i32
    %c0_i32_1 = arith.constant 0 : i32
    return %arg0, %c0_i32, %c0_i32_0 : i32, i32, i32
  }
  func.func @transform_4(%arg0: i32) -> (i32, i32, i32) {
    %c0_i32 = arith.constant 0 : i32
    %c0_i32_0 = arith.constant 0 : i32
    %c0_i32_1 = arith.constant 0 : i32
    %c0_i32_2 = arith.constant 0 : i32
    return %c0_i32, %c0_i32_0, %c0_i32_1 : i32, i32, i32
  }
  func.func @transform_5(%arg0: i32) -> (i32, i32, i32) {
    %c0_i32 = arith.constant 0 : i32
    %c0_i32_0 = arith.constant 0 : i32
    %c0_i32_1 = arith.constant 0 : i32
    %c0_i32_2 = arith.constant 0 : i32
    return %c0_i32, %c0_i32_0, %c0_i32_1 : i32, i32, i32
  }
  func.func @transform_6(%arg0: i32) -> (i32, i32, i32) {
    %c0_i32 = arith.constant 0 : i32
    %c0_i32_0 = arith.constant 0 : i32
    %c0_i32_1 = arith.constant 0 : i32
    %c0_i32_2 = arith.constant 0 : i32
    return %c0_i32, %c0_i32_0, %c0_i32_1 : i32, i32, i32
  }
  func.func @transform_7(%arg0: i32) -> (i32, i32, i32) {
    %c0_i32 = arith.constant 0 : i32
    %c0_i32_0 = arith.constant 0 : i32
    %c0_i32_1 = arith.constant 0 : i32
    %c0_i32_2 = arith.constant 0 : i32
    return %c0_i32, %c0_i32_0, %c0_i32_1 : i32, i32, i32
  }
  func.func @transform_8(%arg0: i32) -> (i32, i32, i32) {
    %c0_i32 = arith.constant 0 : i32
    %c0_i32_0 = arith.constant 0 : i32
    %c0_i32_1 = arith.constant 0 : i32
    %c0_i32_2 = arith.constant 0 : i32
    return %c0_i32, %c0_i32_0, %c0_i32_1 : i32, i32, i32
  }
  func.func @transform_9(%arg0: i32) -> (i32, i32, i32) {
    %c0_i32 = arith.constant 0 : i32
    %c0_i32_0 = arith.constant 0 : i32
    %c0_i32_1 = arith.constant 0 : i32
    %c0_i32_2 = arith.constant 0 : i32
    return %c0_i32, %c0_i32_0, %c0_i32_1 : i32, i32, i32
  }
  func.func @transform_10(%arg0: i32) -> (i32, i32, i32) {
    %c0_i32 = arith.constant 0 : i32
    %c0_i32_0 = arith.constant 0 : i32
    %c0_i32_1 = arith.constant 0 : i32
    %c0_i32_2 = arith.constant 0 : i32
    return %c0_i32, %c0_i32_0, %c0_i32_1 : i32, i32, i32
  }
  func.func @transform_11(%arg0: i32) -> (i32, i32, i32) {
    %c0_i32 = arith.constant 0 : i32
    %c0_i32_0 = arith.constant 0 : i32
    %c0_i32_1 = arith.constant 0 : i32
    %c0_i32_2 = arith.constant 0 : i32
    return %c0_i32, %c0_i32_0, %c0_i32_1 : i32, i32, i32
  }
  func.func @transform_12(%arg0: i32) -> (i32, i32, i32) {
    %c0_i32 = arith.constant 0 : i32
    %c0_i32_0 = arith.constant 0 : i32
    %c0_i32_1 = arith.constant 0 : i32
    %c0_i32_2 = arith.constant 0 : i32
    return %c0_i32, %c0_i32_0, %c0_i32_1 : i32, i32, i32
  }
  func.func @transform_13(%arg0: i32) -> (i32, i32, i32) {
    %c0_i32 = arith.constant 0 : i32
    %c0_i32_0 = arith.constant 0 : i32
    %c0_i32_1 = arith.constant 0 : i32
    %c0_i32_2 = arith.constant 0 : i32
    return %c0_i32, %c0_i32_0, %c0_i32_1 : i32, i32, i32
  }
  func.func @transform_14(%arg0: i32) -> (i32, i32, i32) {
    %c0_i32 = arith.constant 0 : i32
    %c0_i32_0 = arith.constant 0 : i32
    %c0_i32_1 = arith.constant 0 : i32
    %c0_i32_2 = arith.constant 0 : i32
    return %c0_i32, %c0_i32_0, %c0_i32_1 : i32, i32, i32
  }
  func.func @transform_15(%arg0: i32) -> (i32, i32, i32) {
    %c0_i32 = arith.constant 0 : i32
    %c0_i32_0 = arith.constant 0 : i32
    %c0_i32_1 = arith.constant 0 : i32
    %c0_i32_2 = arith.constant 0 : i32
    return %c0_i32, %c0_i32_0, %c0_i32_1 : i32, i32, i32
  }
  func.func @transform_16(%arg0: i32) -> (i32, i32, i32) {
    %c0_i32 = arith.constant 0 : i32
    %c0_i32_0 = arith.constant 0 : i32
    %c0_i32_1 = arith.constant 0 : i32
    %c0_i32_2 = arith.constant 0 : i32
    return %c0_i32, %c0_i32_0, %c0_i32_1 : i32, i32, i32
  }
  func.func @transform_17(%arg0: i32) -> (i32, i32, i32) {
    %c0_i32 = arith.constant 0 : i32
    %c0_i32_0 = arith.constant 0 : i32
    %c0_i32_1 = arith.constant 0 : i32
    %c0_i32_2 = arith.constant 0 : i32
    return %c0_i32, %c0_i32_0, %c0_i32_1 : i32, i32, i32
  }
  func.func @transform_18(%arg0: i32) -> (i32, i32, i32) {
    %c0_i32 = arith.constant 0 : i32
    %c0_i32_0 = arith.constant 0 : i32
    %c0_i32_1 = arith.constant 0 : i32
    %c0_i32_2 = arith.constant 0 : i32
    return %c0_i32, %c0_i32_0, %c0_i32_1 : i32, i32, i32
  }
  func.func @transform_19(%arg0: i32) -> (i32, i32, i32) {
    %c0_i32 = arith.constant 0 : i32
    %c0_i32_0 = arith.constant 0 : i32
    %c0_i32_1 = arith.constant 0 : i32
    %c0_i32_2 = arith.constant 0 : i32
    return %c0_i32, %c0_i32_0, %c0_i32_1 : i32, i32, i32
  }
  func.func @transform_20(%arg0: i32) -> (i32, i32, i32) {
    %c0_i32 = arith.constant 0 : i32
    %c0_i32_0 = arith.constant 0 : i32
    %c0_i32_1 = arith.constant 0 : i32
    %c0_i32_2 = arith.constant 0 : i32
    return %c0_i32, %c0_i32_0, %c0_i32_1 : i32, i32, i32
  }
  func.func @transform_21(%arg0: i32) -> (i32, i32, i32) {
    %c0_i32 = arith.constant 0 : i32
    %c0_i32_0 = arith.constant 0 : i32
    %c0_i32_1 = arith.constant 0 : i32
    %c0_i32_2 = arith.constant 0 : i32
    return %c0_i32, %c0_i32_0, %c0_i32_1 : i32, i32, i32
  }
  func.func @transform_22(%arg0: i32) -> (i32, i32, i32) {
    %c0_i32 = arith.constant 0 : i32
    %c0_i32_0 = arith.constant 0 : i32
    %c0_i32_1 = arith.constant 0 : i32
    %c0_i32_2 = arith.constant 0 : i32
    return %c0_i32, %c0_i32_0, %c0_i32_1 : i32, i32, i32
  }
  func.func @transform_23(%arg0: i32) -> (i32, i32, i32) {
    %c0_i32 = arith.constant 0 : i32
    %c0_i32_0 = arith.constant 0 : i32
    %c0_i32_1 = arith.constant 0 : i32
    %c0_i32_2 = arith.constant 0 : i32
    return %c0_i32, %c0_i32_0, %c0_i32_1 : i32, i32, i32
  }
  func.func @transform_24(%arg0: i32) -> (i32, i32) {
    %c0_i32 = arith.constant 0 : i32
    %c0_i32_0 = arith.constant 0 : i32
    %c0_i32_1 = arith.constant 0 : i32
    return %c0_i32, %c0_i32_0 : i32, i32
  }
  func.func @transform_25(%arg0: i32) -> (i32, i32) {
    %c0_i32 = arith.constant 0 : i32
    %c0_i32_0 = arith.constant 0 : i32
    %c0_i32_1 = arith.constant 0 : i32
    return %c0_i32, %c0_i32_0 : i32, i32
  }
  func.func @transform_26(%arg0: i32) -> (i32, i32, i32) {
    %c0_i32 = arith.constant 0 : i32
    %c0_i32_0 = arith.constant 0 : i32
    %c0_i32_1 = arith.constant 0 : i32
    return %arg0, %c0_i32, %c0_i32_0 : i32, i32, i32
  }
  func.func @transform_27(%arg0: i32) -> (i32, i32, i32, i32) {
    %c0_i32 = arith.constant 0 : i32
    %c0_i32_0 = arith.constant 0 : i32
    %c0_i32_1 = arith.constant 0 : i32
    %c0_i32_2 = arith.constant 0 : i32
    return %arg0, %c0_i32, %c0_i32_0, %c0_i32_1 : i32, i32, i32, i32
  }
}

</mosaic_0001>

<llo_original>
// kernel: seq2seq_forward.2
$region0: #{seq2seq_forward.2}
  #allocation0 [shape = 'u32[]', space=smem, size = 0x4, offset = 0x4, fixed_abs, tag = 'smem constant byte address 0x4 - core index']
  #allocation1 [shape = 'u32[144,128]{1,0:T(1,128)}', space=vmem, size = 0x12000, scoped, tag = 'internal scratch']
  %s0 = inlined_call_operand.vmem [shape: f32[2,10,32], index: 0, kind: input, shape index: {}]
  %s1 = inlined_call_operand.vmem [shape: s32[2,1,10], index: 1, kind: input, shape index: {}]
  %s2 = inlined_call_operand.vmem [shape: f32[2,32,96], index: 2, kind: input, shape index: {}]
  %s3 = inlined_call_operand.vmem [shape: f32[2,1,96], index: 3, kind: input, shape index: {}]
  %s4 = inlined_call_operand.vmem [shape: f32[2,32,32], index: 4, kind: input, shape index: {}]
  %s5 = inlined_call_operand.vmem [shape: f32[2,1,32], index: 5, kind: input, shape index: {}]
  %s6 = inlined_call_operand.vmem [shape: f32[2,1,32], index: 6, kind: input, shape index: {}]
  %s7 = inlined_call_operand.vmem [shape: f32[2,1,32], index: 7, kind: input, shape index: {}]
  %s8 = inlined_call_operand.vmem [shape: f32[2,32,64], index: 8, kind: input, shape index: {}]
  %s9 = inlined_call_operand.vmem [shape: f32[2,1,64], index: 9, kind: input, shape index: {}]
  %s10 = inlined_call_operand.vmem [shape: f32[2,64,32], index: 10, kind: input, shape index: {}]
  %s11 = inlined_call_operand.vmem [shape: f32[2,1,32], index: 11, kind: input, shape index: {}]
  %s12 = inlined_call_operand.vmem [shape: f32[2,1,32], index: 12, kind: input, shape index: {}]
  %s13 = inlined_call_operand.vmem [shape: f32[2,1,32], index: 13, kind: input, shape index: {}]
  %s14 = inlined_call_operand.vmem [shape: f32[2,10,32], index: 14, kind: output, shape index: {}]
  %s15 = sld [smem:[#allocation0]]
  $region89: #{seq2seq_forward.2} parent=0
    _
  %s17 = ssub.s32 1, %s15
  %s18 = scalar_select 0, %s17, %s15
  loop: start=0, step=1, limit=4
  $region2: #{seq2seq_forward.2} parent=0 // loop_pre_header
    _
  $region3: #{seq2seq_forward.2} parent=0 // loop_header
    %s20 = sphi 0, %s24
    %p21 = scmp.ge.s32.totalorder %s20, 4
    %s30 = sphi 0, %s32
    %s33 = sphi 0, %s30
    %s34 = sphi 0, %s33
    %s50 = sphi 0, %s34
    %s56 = sphi 0, %s58
    %s59 = sphi 0, %s56
    %s60 = sphi 0, %s59
    %s76 = sphi 0, %s60
    %s80 = sphi 0, %s80
    %s82 = sphi 0, %s80
    %s83 = sphi 0, %s82
    %s97 = sphi 0, %s83
    %s101 = sphi 0, %s101
    %s103 = sphi 0, %s101
    %s104 = sphi 0, %s103
    %s118 = sphi 0, %s104
    %s122 = sphi 0, %s122
    %s124 = sphi 0, %s122
    %s125 = sphi 0, %s124
    %s139 = sphi 0, %s125
    %s143 = sphi 0, %s143
    %s145 = sphi 0, %s143
    %s146 = sphi 0, %s145
    %s160 = sphi 0, %s146
    %s164 = sphi 0, %s164
    %s166 = sphi 0, %s164
    %s167 = sphi 0, %s166
    %s181 = sphi 0, %s167
    %s185 = sphi 0, %s185
    %s187 = sphi 0, %s185
    %s188 = sphi 0, %s187
    %s202 = sphi 0, %s188
    %s206 = sphi 0, %s206
    %s208 = sphi 0, %s206
    %s209 = sphi 0, %s208
    %s223 = sphi 0, %s209
    %s227 = sphi 0, %s227
    %s229 = sphi 0, %s227
    %s230 = sphi 0, %s229
    %s244 = sphi 0, %s230
    %s248 = sphi 0, %s248
    %s250 = sphi 0, %s248
    %s251 = sphi 0, %s250
    %s265 = sphi 0, %s251
    %s269 = sphi 0, %s269
    %s271 = sphi 0, %s269
    %s272 = sphi 0, %s271
    %s286 = sphi 0, %s272
    %s290 = sphi 0, %s290
    %s292 = sphi 0, %s290
    %s293 = sphi 0, %s292
    %s307 = sphi 0, %s293
    %s311 = sphi 0, %s311
    %s313 = sphi 0, %s311
    %s314 = sphi 0, %s313
    %s328 = sphi 0, %s314
    %s334 = sphi 0, %s336
    %s337 = sphi 0, %s334
    %s338 = sphi 0, %s337
    %s354 = sphi 0, %s338
  $region4: #{seq2seq_forward.2} parent=0 // loop_header_branch
    %23 = sbr.rel (%p21) target = $region8
  $region5: #{seq2seq_forward.2} parent=0 // loop_body
    %s25 = ssub.s32 %s20, 1
    %s26 = ssub.s32 %s20, 2
    %s27 = sadd.s32 %s20, 1
    %s28 = ssub.s32 %s20, %s27
    %p29 = scmp.eq.s32.totalorder %s28, 0
    %s31 = sadd.s32 %s30, 1
    %s32 = scalar_select %p29, %s30, %s31
    %p35 = pneg %p29
    %p36 = scmp.eq.s32.totalorder %s20, 1
    %p37 = por %p35, %p36
    %p38 = scmp.ne.s32.totalorder %s30, %s33
    %p39 = scmp.eq.s32.totalorder %s20, 0
    %p40 = por %p38, %p39
    %p41 = scmp.ne.s32.totalorder %s30, %s33
    %p42 = scmp.eq.s32.totalorder %s25, 1
    %p43 = por %p41, %p42
    %p44 = scmp.ne.s32.totalorder %s33, %s34
    %p45 = scmp.eq.s32.totalorder %s25, 0
    %p46 = por %p44, %p45
    %p47 = scmp.ne.s32.totalorder %s33, %s34
    %p48 = scmp.eq.s32.totalorder %s26, 1
    %p49 = por %p47, %p48
    %p51 = scmp.ne.s32.totalorder %s34, %s50
    %p52 = scmp.eq.s32.totalorder %s26, 0
    %p53 = por %p51, %p52
    %s54 = ssub.s32 %s20, %s27
    %p55 = scmp.eq.s32.totalorder %s54, 0
    %s57 = sadd.s32 %s56, 1
    %s58 = scalar_select %p55, %s56, %s57
    %p61 = pneg %p55
    %p62 = scmp.eq.s32.totalorder %s20, 1
    %p63 = por %p61, %p62
    %p64 = scmp.ne.s32.totalorder %s56, %s59
    %p65 = scmp.eq.s32.totalorder %s20, 0
    %p66 = por %p64, %p65
    %p67 = scmp.ne.s32.totalorder %s56, %s59
    %p68 = scmp.eq.s32.totalorder %s25, 1
    %p69 = por %p67, %p68
    %p70 = scmp.ne.s32.totalorder %s59, %s60
    %p71 = scmp.eq.s32.totalorder %s25, 0
    %p72 = por %p70, %p71
    %p73 = scmp.ne.s32.totalorder %s59, %s60
    %p74 = scmp.eq.s32.totalorder %s26, 1
    %p75 = por %p73, %p74
    %p77 = scmp.ne.s32.totalorder %s60, %s76
    %p78 = scmp.eq.s32.totalorder %s26, 0
    %p79 = por %p77, %p78
    %s81 = sadd.s32 %s80, 1
    %p84 = scmp.eq.s32.totalorder %s20, 1
    %p85 = scmp.ne.s32.totalorder %s80, %s82
    %p86 = scmp.eq.s32.totalorder %s20, 0
    %p87 = por %p85, %p86
    %p88 = scmp.ne.s32.totalorder %s80, %s82
    %p89 = scmp.eq.s32.totalorder %s25, 1
    %p90 = por %p88, %p89
    %p91 = scmp.ne.s32.totalorder %s82, %s83
    %p92 = scmp.eq.s32.totalorder %s25, 0
    %p93 = por %p91, %p92
    %p94 = scmp.ne.s32.totalorder %s82, %s83
    %p95 = scmp.eq.s32.totalorder %s26, 1
    %p96 = por %p94, %p95
    %p98 = scmp.ne.s32.totalorder %s83, %s97
    %p99 = scmp.eq.s32.totalorder %s26, 0
    %p100 = por %p98, %p99
    %s102 = sadd.s32 %s101, 1
    %p105 = scmp.eq.s32.totalorder %s20, 1
    %p106 = scmp.ne.s32.totalorder %s101, %s103
    %p107 = scmp.eq.s32.totalorder %s20, 0
    %p108 = por %p106, %p107
    %p109 = scmp.ne.s32.totalorder %s101, %s103
    %p110 = scmp.eq.s32.totalorder %s25, 1
    %p111 = por %p109, %p110
    %p112 = scmp.ne.s32.totalorder %s103, %s104
    %p113 = scmp.eq.s32.totalorder %s25, 0
    %p114 = por %p112, %p113
    %p115 = scmp.ne.s32.totalorder %s103, %s104
    %p116 = scmp.eq.s32.totalorder %s26, 1
    %p117 = por %p115, %p116
    %p119 = scmp.ne.s32.totalorder %s104, %s118
    %p120 = scmp.eq.s32.totalorder %s26, 0
    %p121 = por %p119, %p120
    %s123 = sadd.s32 %s122, 1
    %p126 = scmp.eq.s32.totalorder %s20, 1
    %p127 = scmp.ne.s32.totalorder %s122, %s124
    %p128 = scmp.eq.s32.totalorder %s20, 0
    %p129 = por %p127, %p128
    %p130 = scmp.ne.s32.totalorder %s122, %s124
    %p131 = scmp.eq.s32.totalorder %s25, 1
    %p132 = por %p130, %p131
    %p133 = scmp.ne.s32.totalorder %s124, %s125
    %p134 = scmp.eq.s32.totalorder %s25, 0
    %p135 = por %p133, %p134
    %p136 = scmp.ne.s32.totalorder %s124, %s125
    %p137 = scmp.eq.s32.totalorder %s26, 1
    %p138 = por %p136, %p137
    %p140 = scmp.ne.s32.totalorder %s125, %s139
    %p141 = scmp.eq.s32.totalorder %s26, 0
    %p142 = por %p140, %p141
    %s144 = sadd.s32 %s143, 1
    %p147 = scmp.eq.s32.totalorder %s20, 1
    %p148 = scmp.ne.s32.totalorder %s143, %s145
    %p149 = scmp.eq.s32.totalorder %s20, 0
    %p150 = por %p148, %p149
    %p151 = scmp.ne.s32.totalorder %s143, %s145
    %p152 = scmp.eq.s32.totalorder %s25, 1
    %p153 = por %p151, %p152
    %p154 = scmp.ne.s32.totalorder %s145, %s146
    %p155 = scmp.eq.s32.totalorder %s25, 0
    %p156 = por %p154, %p155
    %p157 = scmp.ne.s32.totalorder %s145, %s146
    %p158 = scmp.eq.s32.totalorder %s26, 1
    %p159 = por %p157, %p158
    %p161 = scmp.ne.s32.totalorder %s146, %s160
    %p162 = scmp.eq.s32.totalorder %s26, 0
    %p163 = por %p161, %p162
    %s165 = sadd.s32 %s164, 1
    %p168 = scmp.eq.s32.totalorder %s20, 1
    %p169 = scmp.ne.s32.totalorder %s164, %s166
    %p170 = scmp.eq.s32.totalorder %s20, 0
    %p171 = por %p169, %p170
    %p172 = scmp.ne.s32.totalorder %s164, %s166
    %p173 = scmp.eq.s32.totalorder %s25, 1
    %p174 = por %p172, %p173
    %p175 = scmp.ne.s32.totalorder %s166, %s167
    %p176 = scmp.eq.s32.totalorder %s25, 0
    %p177 = por %p175, %p176
    %p178 = scmp.ne.s32.totalorder %s166, %s167
    %p179 = scmp.eq.s32.totalorder %s26, 1
    %p180 = por %p178, %p179
    %p182 = scmp.ne.s32.totalorder %s167, %s181
    %p183 = scmp.eq.s32.totalorder %s26, 0
    %p184 = por %p182, %p183
    %s186 = sadd.s32 %s185, 1
    %p189 = scmp.eq.s32.totalorder %s20, 1
    %p190 = scmp.ne.s32.totalorder %s185, %s187
    %p191 = scmp.eq.s32.totalorder %s20, 0
    %p192 = por %p190, %p191
    %p193 = scmp.ne.s32.totalorder %s185, %s187
    %p194 = scmp.eq.s32.totalorder %s25, 1
    %p195 = por %p193, %p194
    %p196 = scmp.ne.s32.totalorder %s187, %s188
    %p197 = scmp.eq.s32.totalorder %s25, 0
    %p198 = por %p196, %p197
    %p199 = scmp.ne.s32.totalorder %s187, %s188
    %p200 = scmp.eq.s32.totalorder %s26, 1
    %p201 = por %p199, %p200
    %p203 = scmp.ne.s32.totalorder %s188, %s202
    %p204 = scmp.eq.s32.totalorder %s26, 0
    %p205 = por %p203, %p204
    %s207 = sadd.s32 %s206, 1
    %p210 = scmp.eq.s32.totalorder %s20, 1
    %p211 = scmp.ne.s32.totalorder %s206, %s208
    %p212 = scmp.eq.s32.totalorder %s20, 0
    %p213 = por %p211, %p212
    %p214 = scmp.ne.s32.totalorder %s206, %s208
    %p215 = scmp.eq.s32.totalorder %s25, 1
    %p216 = por %p214, %p215
    %p217 = scmp.ne.s32.totalorder %s208, %s209
    %p218 = scmp.eq.s32.totalorder %s25, 0
    %p219 = por %p217, %p218
    %p220 = scmp.ne.s32.totalorder %s208, %s209
    %p221 = scmp.eq.s32.totalorder %s26, 1
    %p222 = por %p220, %p221
    %p224 = scmp.ne.s32.totalorder %s209, %s223
    %p225 = scmp.eq.s32.totalorder %s26, 0
    %p226 = por %p224, %p225
    %s228 = sadd.s32 %s227, 1
    %p231 = scmp.eq.s32.totalorder %s20, 1
    %p232 = scmp.ne.s32.totalorder %s227, %s229
    %p233 = scmp.eq.s32.totalorder %s20, 0
    %p234 = por %p232, %p233
    %p235 = scmp.ne.s32.totalorder %s227, %s229
    %p236 = scmp.eq.s32.totalorder %s25, 1
    %p237 = por %p235, %p236
    %p238 = scmp.ne.s32.totalorder %s229, %s230
    %p239 = scmp.eq.s32.totalorder %s25, 0
    %p240 = por %p238, %p239
    %p241 = scmp.ne.s32.totalorder %s229, %s230
    %p242 = scmp.eq.s32.totalorder %s26, 1
    %p243 = por %p241, %p242
    %p245 = scmp.ne.s32.totalorder %s230, %s244
    %p246 = scmp.eq.s32.totalorder %s26, 0
    %p247 = por %p245, %p246
    %s249 = sadd.s32 %s248, 1
    %p252 = scmp.eq.s32.totalorder %s20, 1
    %p253 = scmp.ne.s32.totalorder %s248, %s250
    %p254 = scmp.eq.s32.totalorder %s20, 0
    %p255 = por %p253, %p254
    %p256 = scmp.ne.s32.totalorder %s248, %s250
    %p257 = scmp.eq.s32.totalorder %s25, 1
    %p258 = por %p256, %p257
    %p259 = scmp.ne.s32.totalorder %s250, %s251
    %p260 = scmp.eq.s32.totalorder %s25, 0
    %p261 = por %p259, %p260
    %p262 = scmp.ne.s32.totalorder %s250, %s251
    %p263 = scmp.eq.s32.totalorder %s26, 1
    %p264 = por %p262, %p263
    %p266 = scmp.ne.s32.totalorder %s251, %s265
    %p267 = scmp.eq.s32.totalorder %s26, 0
    %p268 = por %p266, %p267
    %s270 = sadd.s32 %s269, 1
    %p273 = scmp.eq.s32.totalorder %s20, 1
    %p274 = scmp.ne.s32.totalorder %s269, %s271
    %p275 = scmp.eq.s32.totalorder %s20, 0
    %p276 = por %p274, %p275
    %p277 = scmp.ne.s32.totalorder %s269, %s271
    %p278 = scmp.eq.s32.totalorder %s25, 1
    %p279 = por %p277, %p278
    %p280 = scmp.ne.s32.totalorder %s271, %s272
    %p281 = scmp.eq.s32.totalorder %s25, 0
    %p282 = por %p280, %p281
    %p283 = scmp.ne.s32.totalorder %s271, %s272
    %p284 = scmp.eq.s32.totalorder %s26, 1
    %p285 = por %p283, %p284
    %p287 = scmp.ne.s32.totalorder %s272, %s286
    %p288 = scmp.eq.s32.totalorder %s26, 0
    %p289 = por %p287, %p288
    %s291 = sadd.s32 %s290, 1
    %p294 = scmp.eq.s32.totalorder %s20, 1
    %p295 = scmp.ne.s32.totalorder %s290, %s292
    %p296 = scmp.eq.s32.totalorder %s20, 0
    %p297 = por %p295, %p296
    %p298 = scmp.ne.s32.totalorder %s290, %s292
    %p299 = scmp.eq.s32.totalorder %s25, 1
    %p300 = por %p298, %p299
    %p301 = scmp.ne.s32.totalorder %s292, %s293
    %p302 = scmp.eq.s32.totalorder %s25, 0
    %p303 = por %p301, %p302
    %p304 = scmp.ne.s32.totalorder %s292, %s293
    %p305 = scmp.eq.s32.totalorder %s26, 1
    %p306 = por %p304, %p305
    %p308 = scmp.ne.s32.totalorder %s293, %s307
    %p309 = scmp.eq.s32.totalorder %s26, 0
    %p310 = por %p308, %p309
    %s312 = sadd.s32 %s311, 1
    %p315 = scmp.eq.s32.totalorder %s20, 1
    %p316 = scmp.ne.s32.totalorder %s311, %s313
    %p317 = scmp.eq.s32.totalorder %s20, 0
    %p318 = por %p316, %p317
    %p319 = scmp.ne.s32.totalorder %s311, %s313
    %p320 = scmp.eq.s32.totalorder %s25, 1
    %p321 = por %p319, %p320
    %p322 = scmp.ne.s32.totalorder %s313, %s314
    %p323 = scmp.eq.s32.totalorder %s25, 0
    %p324 = por %p322, %p323
    %p325 = scmp.ne.s32.totalorder %s313, %s314
    %p326 = scmp.eq.s32.totalorder %s26, 1
    %p327 = por %p325, %p326
    %p329 = scmp.ne.s32.totalorder %s314, %s328
    %p330 = scmp.eq.s32.totalorder %s26, 0
    %p331 = por %p329, %p330
    %s332 = ssub.s32 %s20, %s27
    %p333 = scmp.eq.s32.totalorder %s332, 0
    %s335 = sadd.s32 %s334, 1
    %s336 = scalar_select %p333, %s334, %s335
    %p339 = pneg %p333
    %p340 = scmp.eq.s32.totalorder %s20, 1
    %p341 = por %p339, %p340
    %p342 = scmp.ne.s32.totalorder %s334, %s337
    %p343 = scmp.eq.s32.totalorder %s20, 0
    %p344 = por %p342, %p343
    %p345 = scmp.ne.s32.totalorder %s334, %s337
    %p346 = scmp.eq.s32.totalorder %s25, 1
    %p347 = por %p345, %p346
    %p348 = scmp.ne.s32.totalorder %s337, %s338
    %p349 = scmp.eq.s32.totalorder %s25, 0
    %p350 = por %p348, %p349
    %p351 = scmp.ne.s32.totalorder %s337, %s338
    %p352 = scmp.eq.s32.totalorder %s26, 1
    %p353 = por %p351, %p352
    %p355 = scmp.ne.s32.totalorder %s338, %s354
    %p356 = scmp.eq.s32.totalorder %s26, 0
    %p357 = por %p355, %p356
    %p358 = scmp.le.s32.totalorder 1, %s20
    %p359 = scmp.lt.s32.totalorder %s20, 3
    %p360 = pnand %p358, %p359
    %p361 = pneg %p360
    // Predicated region
    $region9: #{seq2seq_forward.2} parent=5 // pred_check
      _
    $region10: #{seq2seq_forward.2} parent=5 // pred_check_branch
      %363 = sbr.rel (%p360) target = $region12
    $region11: #{seq2seq_forward.2} parent=5 // pred_region
      %s364 = ssub.s32 %s20, 1
      // Predicated region
      $region13: #{seq2seq_forward.2} parent=11 // pred_check
        %p365 = pneg %p93
      $region14: #{seq2seq_forward.2} parent=11 // pred_check_branch
        %367 = sbr.rel (%p365) target = $region16
      $region15: #{seq2seq_forward.2} parent=11 // pred_region
        _
      $region16: #{seq2seq_forward.2} parent=11 // pred_fallthru
        _
      // Predicated region
      $region17: #{seq2seq_forward.2} parent=11 // pred_check
        %p368 = pneg %p114
      $region18: #{seq2seq_forward.2} parent=11 // pred_check_branch
        %370 = sbr.rel (%p368) target = $region20
      $region19: #{seq2seq_forward.2} parent=11 // pred_region
        _
      $region20: #{seq2seq_forward.2} parent=11 // pred_fallthru
        _
      // Predicated region
      $region21: #{seq2seq_forward.2} parent=11 // pred_check
        %p371 = pneg %p135
      $region22: #{seq2seq_forward.2} parent=11 // pred_check_branch
        %373 = sbr.rel (%p371) target = $region24
      $region23: #{seq2seq_forward.2} parent=11 // pred_region
        _
      $region24: #{seq2seq_forward.2} parent=11 // pred_fallthru
        _
      // Predicated region
      $region25: #{seq2seq_forward.2} parent=11 // pred_check
        %p374 = pneg %p156
      $region26: #{seq2seq_forward.2} parent=11 // pred_check_branch
        %376 = sbr.rel (%p374) target = $region28
      $region27: #{seq2seq_forward.2} parent=11 // pred_region
        _
      $region28: #{seq2seq_forward.2} parent=11 // pred_fallthru
        _
      // Predicated region
      $region29: #{seq2seq_forward.2} parent=11 // pred_check
        %p377 = pneg %p177
      $region30: #{seq2seq_forward.2} parent=11 // pred_check_branch
        %379 = sbr.rel (%p377) target = $region32
      $region31: #{seq2seq_forward.2} parent=11 // pred_region
        _
      $region32: #{seq2seq_forward.2} parent=11 // pred_fallthru
        _
      // Predicated region
      $region33: #{seq2seq_forward.2} parent=11 // pred_check
        %p380 = pneg %p198
      $region34: #{seq2seq_forward.2} parent=11 // pred_check_branch
        %382 = sbr.rel (%p380) target = $region36
      $region35: #{seq2seq_forward.2} parent=11 // pred_region
        _
      $region36: #{seq2seq_forward.2} parent=11 // pred_fallthru
        _
      // Predicated region
      $region37: #{seq2seq_forward.2} parent=11 // pred_check
        %p383 = pneg %p219
      $region38: #{seq2seq_forward.2} parent=11 // pred_check_branch
        %385 = sbr.rel (%p383) target = $region40
      $region39: #{seq2seq_forward.2} parent=11 // pred_region
        _
      $region40: #{seq2seq_forward.2} parent=11 // pred_fallthru
        _
      // Predicated region
      $region41: #{seq2seq_forward.2} parent=11 // pred_check
        %p386 = pneg %p240
      $region42: #{seq2seq_forward.2} parent=11 // pred_check_branch
        %388 = sbr.rel (%p386) target = $region44
      $region43: #{seq2seq_forward.2} parent=11 // pred_region
        _
      $region44: #{seq2seq_forward.2} parent=11 // pred_fallthru
        _
      // Predicated region
      $region45: #{seq2seq_forward.2} parent=11 // pred_check
        %p389 = pneg %p261
      $region46: #{seq2seq_forward.2} parent=11 // pred_check_branch
        %391 = sbr.rel (%p389) target = $region48
      $region47: #{seq2seq_forward.2} parent=11 // pred_region
        _
      $region48: #{seq2seq_forward.2} parent=11 // pred_fallthru
        _
      // Predicated region
      $region49: #{seq2seq_forward.2} parent=11 // pred_check
        %p392 = pneg %p282
      $region50: #{seq2seq_forward.2} parent=11 // pred_check_branch
        %394 = sbr.rel (%p392) target = $region52
      $region51: #{seq2seq_forward.2} parent=11 // pred_region
        _
      $region52: #{seq2seq_forward.2} parent=11 // pred_fallthru
        _
      // Predicated region
      $region53: #{seq2seq_forward.2} parent=11 // pred_check
        %p395 = pneg %p303
      $region54: #{seq2seq_forward.2} parent=11 // pred_check_branch
        %397 = sbr.rel (%p395) target = $region56
      $region55: #{seq2seq_forward.2} parent=11 // pred_region
        _
      $region56: #{seq2seq_forward.2} parent=11 // pred_fallthru
        _
      // Predicated region
      $region57: #{seq2seq_forward.2} parent=11 // pred_check
        %p398 = pneg %p324
      $region58: #{seq2seq_forward.2} parent=11 // pred_check_branch
        %400 = sbr.rel (%p398) target = $region60
      $region59: #{seq2seq_forward.2} parent=11 // pred_region
        _
      $region60: #{seq2seq_forward.2} parent=11 // pred_fallthru
        _
    $region12: #{seq2seq_forward.2} parent=5 // pred_fallthru
      _
    %p401 = scmp.lt.s32.totalorder %s20, 2
    // Predicated region
    $region61: #{seq2seq_forward.2} parent=5 // pred_check
      %p402 = pneg %p401
    $region62: #{seq2seq_forward.2} parent=5 // pred_check_branch
      %404 = sbr.rel (%p402) target = $region64
    $region63: #{seq2seq_forward.2} parent=5 // pred_region
      // Predicated region
      $region65: #{seq2seq_forward.2} parent=63 // pred_check
        %p405 = pneg %p40
      $region66: #{seq2seq_forward.2} parent=63 // pred_check_branch
        %407 = sbr.rel (%p405) target = $region68
      $region67: #{seq2seq_forward.2} parent=63 // pred_region
        %p408 = scmp.lt.s32.totalorder %s20, 1
        %s409 = scalar_select %p408, %s20, 1
        %s410 = smul.addr %s409, 2
        %s411 = smul.addr %s410, 8
        %s412 = scalar_lea.vmem %s0, %s411
      $region68: #{seq2seq_forward.2} parent=63 // pred_fallthru
        _
      // Predicated region
      $region69: #{seq2seq_forward.2} parent=63 // pred_check
        %p413 = pneg %p66
      $region70: #{seq2seq_forward.2} parent=63 // pred_check_branch
        %415 = sbr.rel (%p413) target = $region72
      $region71: #{seq2seq_forward.2} parent=63 // pred_region
        %p416 = scmp.lt.s32.totalorder %s20, 1
        %s417 = scalar_select %p416, %s20, 1
        %s418 = scalar_lea.vmem %s1, %s417
      $region72: #{seq2seq_forward.2} parent=63 // pred_fallthru
        _
    $region64: #{seq2seq_forward.2} parent=5 // pred_fallthru
      _
    %p419 = scmp.le.s32.totalorder 1, %s20
    %p420 = scmp.lt.s32.totalorder %s20, 3
    %p421 = pnand %p419, %p420
    %p422 = pneg %p421
    // Predicated region
    $region73: #{seq2seq_forward.2} parent=5 // pred_check
      _
    $region74: #{seq2seq_forward.2} parent=5 // pred_check_branch
      %424 = sbr.rel (%p421) target = $region76
    $region75: #{seq2seq_forward.2} parent=5 // pred_region
      %s425 = ssub.s32 %s20, 1
      %p426 = scmp.lt.s32.totalorder %s25, 1
      %s427 = scalar_select %p426, %s25, 1
      %s428 = smul.addr %s427, 2
      %s429 = smul.addr %s428, 8
      %s430 = scalar_lea.vmem %s0, %s429
      %p431 = pneg %p46
      %p432 = pneg %p43
      %p433 = scmp.lt.s32.totalorder %s25, 1
      %s434 = scalar_select %p433, %s25, 1
      %s435 = scalar_lea.vmem %s1, %s434
      %p436 = pneg %p72
      %p437 = pneg %p69
      %p438 = pneg %p93
      %p439 = pneg %p90
      %p440 = pneg %p114
      %p441 = pneg %p111
      %p442 = pneg %p135
      %p443 = pneg %p132
      %p444 = pneg %p156
      %p445 = pneg %p153
      %p446 = pneg %p177
      %p447 = pneg %p174
      %p448 = pneg %p198
      %p449 = pneg %p195
      %p450 = pneg %p219
      %p451 = pneg %p216
      %p452 = pneg %p240
      %p453 = pneg %p237
      %p454 = pneg %p261
      %p455 = pneg %p258
      %p456 = pneg %p282
      %p457 = pneg %p279
      %p458 = pneg %p303
      %p459 = pneg %p300
      %p460 = pneg %p324
      %p461 = pneg %p321
      %p462 = pneg %p350
      %p463 = pneg %p347
      %p464 = scmp.lt.s32.totalorder %s25, 1
      %s465 = scalar_select %p464, %s25, 1
      %s466 = smul.addr %s465, 2
      %s467 = smul.addr %s466, 8
      %s468 = scalar_lea.vmem %s14, %s467
      %p469 = scmp.lt.s32.totalorder %s25, 1
      %s470 = scalar_select %p469, %s25, 1
      %s471 = smul.addr %s470, 2
      %s472 = smul.addr %s471, 8
      %s473 = scalar_lea.vmem %s0, %s472
      %p474 = scmp.lt.s32.totalorder %s25, 1
      %s475 = scalar_select %p474, %s25, 1
      %s476 = scalar_lea.vmem %s1, %s475
      %p477 = scmp.lt.s32.totalorder %s25, 1
      %s478 = scalar_select %p477, %s25, 1
      %s479 = smul.addr %s478, 2
      %s480 = smul.addr %s479, 8
      %s481 = scalar_lea.vmem %s14, %s480
      %v482 = vld [vmem:[%s473] sm:$0xff]
      %v483 = vld [vmem:[%s473 + $0x8] sm:$0x3]
      %v484 = vld [vmem:[%s476] sm:$0x1]
      %v485 = vld [vmem:[%s2] sm:$0xff]
      %v486 = vld [vmem:[%s2 + $0x8] sm:$0xff]
      %v487 = vld [vmem:[%s2 + $0x10] sm:$0xff]
      %v488 = vld [vmem:[%s2 + $0x18] sm:$0xff]
      %v489 = vld [vmem:[%s3] sm:$0x1]
      %v491 = vlaneseq
      %v492 = vshrl.u32 %v491, 7
      %v493 = vsub.s32 0, %v492
      %v494 = vrot.slane %v489, %v493
      %vm496 = vcmask 261120
      %v498 = vsel %vm496, %v482, 0
      %v501 = vsel %vm496, %v483, 0
      %503 = vmatprep.subr.mxu0 0.0
      %504 = vmatpush1.msra.mxu0 %v485
      %505 = vmatprep.subr.mxu0 0.0
      %506 = vmatpush1.msra.mxu0 %v486
      %507 = vmatprep.subr.mxu0 0.0
      %508 = vmatpush1.msra.mxu0 %v487
      %509 = vmatprep.subr.mxu0 0.0
      %510 = vmatpush1.msra.mxu0 %v488
      %511 = vmatprep.subr.mxu0 0.0
      %512 = vmatpush1.msra.mxu0 0.0
      %513 = vmatprep.subr.mxu0 0.0
      %514 = vmatpush1.msra.mxu0 0.0
      %515 = vmatprep.subr.mxu0 0.0
      %516 = vmatpush1.msra.mxu0 0.0
      %517 = vmatprep.subr.mxu0 0.0
      %518 = vmatpush1.msra.mxu0 0.0
      %519 = vmatprep.subr.mxu0 0.0
      %520 = vmatpush1.msra.mxu0 0.0
      %521 = vmatprep.subr.mxu0 0.0
      %522 = vmatpush1.msra.mxu0 0.0
      %523 = vmatprep.subr.mxu0 0.0
      %524 = vmatpush1.msra.mxu0 0.0
      %525 = vmatprep.subr.mxu0 0.0
      %526 = vmatpush1.msra.mxu0 0.0
      %527 = vmatprep.subr.mxu0 0.0
      %528 = vmatpush1.msra.mxu0 0.0
      %529 = vmatprep.subr.mxu0 0.0
      %530 = vmatpush1.msra.mxu0 0.0
      %531 = vmatprep.subr.mxu0 0.0
      %532 = vmatpush1.msra.mxu0 0.0
      %533 = vmatprep.subr.mxu0 0.0
      %534 = vmatpush1.msra.mxu0 0.0
      %535 = vmatprep.subr.mxu0 0.0
      %536 = vmatpush1.msra.mxu0 0.0
      %537 = vmatprep.subr.mxu0 0.0
      %538 = vmatpush1.msra.mxu0 0.0
      %539 = vmatprep.subr.mxu0 0.0
      %540 = vmatpush1.msra.mxu0 0.0
      %541 = vmatprep.subr.mxu0 0.0
      %542 = vmatpush1.msra.mxu0 0.0
      %543 = vmatprep.subr.mxu0 0.0
      %544 = vmatpush1.msra.mxu0 0.0
      %545 = vmatprep.subr.mxu0 0.0
      %546 = vmatpush1.msra.mxu0 0.0
      %547 = vmatprep.subr.mxu0 0.0
      %548 = vmatpush1.msra.mxu0 0.0
      %549 = vmatprep.subr.mxu0 0.0
      %550 = vmatpush1.msra.mxu0 0.0
      %551 = vmatprep.subr.mxu0 0.0
      %552 = vmatpush1.msra.mxu0 0.0
      %553 = vmatprep.subr.mxu0 0.0
      %554 = vmatpush1.msra.mxu0 0.0
      %555 = vmatprep.subr.mxu0 0.0
      %556 = vmatpush1.msra.mxu0 0.0
      %557 = vmatprep.subr.mxu0 0.0
      %558 = vmatpush1.msra.mxu0 0.0
      %559 = vmatprep.subr.mxu0 0.0
      %560 = vmatpush1.msra.mxu0 0.0
      %561 = vmatprep.subr.mxu0 0.0
      %562 = vmatpush1.msra.mxu0 0.0
      %563 = vmatprep.subr.mxu0 0.0
      %564 = vmatpush1.msra.mxu0 0.0
      %565 = vmatprep.subr.mxu0 0.0
      %566 = vmatpush1.msra.mxu0 0.0
      %567 = vmatprep.mubr.f32.mxu0 0.0
      %568 = vmatmul.mubr.f32.gmra.mrb[0].mxu0 %v498
      %v569 = vpop.f32.mrb[0].mxu0
      %v570 = vadd.f32 %v494, %v569
      %v571 = vpop.f32.mrb[0].mxu0
      %572 = vmatprep.mubr.f32.mxu0 0.0
      %573 = vmatmul.mubr.f32.gmra.mrb[0].mxu0 %v501
      %v574 = vpop.f32.mrb[0].mxu0
      %v575 = vadd.f32 %v494, %v574
      %v576 = vpop.f32.mrb[0].mxu0
      %577 = vdwg.mxu0
      %v578 = vmul.f32 %v570, 0.35355338
      %v579 = vmul.f32 %v575, 0.35355338
      %582 = vrot.lane.b32.xlu0 %v570, 96
      %v583 = vpop.permute.xlu0 %582
      %584 = vrot.lane.b32.xlu0 %v575, 96
      %v585 = vpop.permute.xlu0 %584
      %vm586 = vcmask 64512
      %v588 = vsel %vm586, %v578, 0
      %v591 = vsel %vm586, %v579, 0
      %v593 = vsel %vm586, %v583, 0
      %v595 = vsel %vm586, %v585, 0
      %597 = vmatprep.subr.mxu0 0.0
      %598 = vmatpush1.xpose.msra.mxu0 %v593
      %599 = vmatprep.subr.mxu0 0.0
      %600 = vmatpush1.xpose.msra.mxu0 %v595
      %601 = vmatprep.subr.mxu0 0.0
      %602 = vmatpush1.xpose.msra.mxu0 0.0
      %603 = vmatprep.subr.mxu0 0.0
      %604 = vmatpush1.xpose.msra.mxu0 0.0
      %605 = vmatprep.subr.mxu0 0.0
      %606 = vmatpush1.xpose.msra.mxu0 0.0
      %607 = vmatprep.subr.mxu0 0.0
      %608 = vmatpush1.xpose.msra.mxu0 0.0
      %609 = vmatprep.subr.mxu0 0.0
      %610 = vmatpush1.xpose.msra.mxu0 0.0
      %611 = vmatprep.subr.mxu0 0.0
      %612 = vmatpush1.xpose.msra.mxu0 0.0
      %613 = vmatprep.subr.mxu0 0.0
      %614 = vmatpush1.xpose.msra.mxu0 0.0
      %615 = vmatprep.subr.mxu0 0.0
      %616 = vmatpush1.xpose.msra.mxu0 0.0
      %617 = vmatprep.subr.mxu0 0.0
      %618 = vmatpush1.xpose.msra.mxu0 0.0
      %619 = vmatprep.subr.mxu0 0.0
      %620 = vmatpush1.xpose.msra.mxu0 0.0
      %621 = vmatprep.subr.mxu0 0.0
      %622 = vmatpush1.xpose.msra.mxu0 0.0
      %623 = vmatprep.subr.mxu0 0.0
      %624 = vmatpush1.xpose.msra.mxu0 0.0
      %625 = vmatprep.subr.mxu0 0.0
      %626 = vmatpush1.xpose.msra.mxu0 0.0
      %627 = vmatprep.subr.mxu0 0.0
      %628 = vmatpush1.xpose.msra.mxu0 0.0
      %629 = vmatprep.subr.mxu0 0.0
      %630 = vmatpush1.xpose.msra.mxu0 0.0
      %631 = vmatprep.subr.mxu0 0.0
      %632 = vmatpush1.xpose.msra.mxu0 0.0
      %633 = vmatprep.subr.mxu0 0.0
      %634 = vmatpush1.xpose.msra.mxu0 0.0
      %635 = vmatprep.subr.mxu0 0.0
      %636 = vmatpush1.xpose.msra.mxu0 0.0
      %637 = vmatprep.subr.mxu0 0.0
      %638 = vmatpush1.xpose.msra.mxu0 0.0
      %639 = vmatprep.subr.mxu0 0.0
      %640 = vmatpush1.xpose.msra.mxu0 0.0
      %641 = vmatprep.subr.mxu0 0.0
      %642 = vmatpush1.xpose.msra.mxu0 0.0
      %643 = vmatprep.subr.mxu0 0.0
      %644 = vmatpush1.xpose.msra.mxu0 0.0
      %645 = vmatprep.subr.mxu0 0.0
      %646 = vmatpush1.xpose.msra.mxu0 0.0
      %647 = vmatprep.subr.mxu0 0.0
      %648 = vmatpush1.xpose.msra.mxu0 0.0
      %649 = vmatprep.subr.mxu0 0.0
      %650 = vmatpush1.xpose.msra.mxu0 0.0
      %651 = vmatprep.subr.mxu0 0.0
      %652 = vmatpush1.xpose.msra.mxu0 0.0
      %653 = vmatprep.subr.mxu0 0.0
      %654 = vmatpush1.xpose.msra.mxu0 0.0
      %655 = vmatprep.subr.mxu0 0.0
      %656 = vmatpush1.xpose.msra.mxu0 0.0
      %657 = vmatprep.subr.mxu0 0.0
      %658 = vmatpush1.xpose.msra.mxu0 0.0
      %659 = vmatprep.subr.mxu0 0.0
      %660 = vmatpush1.xpose.msra.mxu0 0.0
      %661 = vmatprep.mubr.f32.mxu0 0.0
      %662 = vmatmul.mubr.f32.gmra.mrb[0].mxu0 %v588
      %v663 = vpop.f32.mrb[0].mxu0
      %v664 = vadd.f32 0.0, %v663
      %v665 = vpop.f32.mrb[0].mxu0
      %666 = vmatprep.mubr.f32.mxu0 0.0
      %667 = vmatmul.mubr.f32.gmra.mrb[0].mxu0 %v591
      %v668 = vpop.f32.mrb[0].mxu0
      %v669 = vadd.f32 0.0, %v668
      %v670 = vpop.f32.mrb[0].mxu0
      %671 = vdwg.mxu0
      %vm672 = vcmp.ne.s32.totalorder %v484, 0
      %v673 = vsel %vm672, 1, 0
      %v674 = vlaneseq
      %v675 = vshrl.u32 %v674, 7
      %v676 = vsub.s32 0, %v675
      %v677 = vrot.slane %v673, %v676
      %vm678 = vcmp.eq.s32.totalorder %v677, 1
      %v679 = vsel %vm678, %v664, -1e+10
      %v680 = vsel %vm678, %v669, -1e+10
      %vm681 = vcmask 80896
      %v682 = vsel %vm681, %v679, -inf
      %683 = vmax.xlane.f32.xlu0 %v682
      %v684 = vpop.xlane.xlu0 %683
      %vm685 = vcmask 74752
      %v686 = vsel %vm685, %v680, -inf
      %687 = vmax.xlane.f32.xlu0 %v686
      %v688 = vpop.xlane.xlu0 %687
      %v689 = vsub.f32 %v679, %v684
      %v690 = vsub.f32 %v680, %v688
      %v691 = vmul.f32 %v689, 1.442695
      %v692 = vpow.pop %v691
      %v693 = vmul.f32 %v690, 1.442695
      %v694 = vpow.pop %v693
      %v695 = vsel %vm681, %v692, 0.0
      %696 = vadd.xlane.f32.xlu0 %v695
      %v697 = vpop.xlane.xlu0 %696
      %v698 = vsel %vm685, %v694, 0.0
      %699 = vadd.xlane.f32.xlu0 %v698
      %v700 = vpop.xlane.xlu0 %699
      %v701 = vrcp.pop %v697
      %v702 = vmul.f32 %v692, %v701
      %v703 = vrcp.pop %v700
      %v704 = vmul.f32 %v694, %v703
      %705 = vrot.lane.b32.xlu0 %v570, 64
      %v706 = vpop.permute.xlu0 %705
      %707 = vrot.lane.b32.xlu0 %v575, 64
      %v708 = vpop.permute.xlu0 %707
      %v711 = vsel %vm681, %v702, 0
      %v714 = vsel %vm681, %v704, 0
      %vm716 = vcmask 1041408
      %v717 = vsel %vm716, %v708, 0
      %719 = vmatprep.subr.mxu0 0.0
      %720 = vmatpush1.msra.mxu0 %v706
      %721 = vmatprep.subr.mxu0 0.0
      %722 = vmatpush1.msra.mxu0 %v717
      %723 = vmatprep.subr.mxu0 0.0
      %724 = vmatpush1.msra.mxu0 0.0
      %725 = vmatprep.subr.mxu0 0.0
      %726 = vmatpush1.msra.mxu0 0.0
      %727 = vmatprep.subr.mxu0 0.0
      %728 = vmatpush1.msra.mxu0 0.0
      %729 = vmatprep.subr.mxu0 0.0
      %730 = vmatpush1.msra.mxu0 0.0
      %731 = vmatprep.subr.mxu0 0.0
      %732 = vmatpush1.msra.mxu0 0.0
      %733 = vmatprep.subr.mxu0 0.0
      %734 = vmatpush1.msra.mxu0 0.0
      %735 = vmatprep.subr.mxu0 0.0
      %736 = vmatpush1.msra.mxu0 0.0
      %737 = vmatprep.subr.mxu0 0.0
      %738 = vmatpush1.msra.mxu0 0.0
      %739 = vmatprep.subr.mxu0 0.0
      %740 = vmatpush1.msra.mxu0 0.0
      %741 = vmatprep.subr.mxu0 0.0
      %742 = vmatpush1.msra.mxu0 0.0
      %743 = vmatprep.subr.mxu0 0.0
      %744 = vmatpush1.msra.mxu0 0.0
      %745 = vmatprep.subr.mxu0 0.0
      %746 = vmatpush1.msra.mxu0 0.0
      %747 = vmatprep.subr.mxu0 0.0
      %748 = vmatpush1.msra.mxu0 0.0
      %749 = vmatprep.subr.mxu0 0.0
      %750 = vmatpush1.msra.mxu0 0.0
      %751 = vmatprep.subr.mxu0 0.0
      %752 = vmatpush1.msra.mxu0 0.0
      %753 = vmatprep.subr.mxu0 0.0
      %754 = vmatpush1.msra.mxu0 0.0
      %755 = vmatprep.subr.mxu0 0.0
      %756 = vmatpush1.msra.mxu0 0.0
      %757 = vmatprep.subr.mxu0 0.0
      %758 = vmatpush1.msra.mxu0 0.0
      %759 = vmatprep.subr.mxu0 0.0
      %760 = vmatpush1.msra.mxu0 0.0
      %761 = vmatprep.subr.mxu0 0.0
      %762 = vmatpush1.msra.mxu0 0.0
      %763 = vmatprep.subr.mxu0 0.0
      %764 = vmatpush1.msra.mxu0 0.0
      %765 = vmatprep.subr.mxu0 0.0
      %766 = vmatpush1.msra.mxu0 0.0
      %767 = vmatprep.subr.mxu0 0.0
      %768 = vmatpush1.msra.mxu0 0.0
      %769 = vmatprep.subr.mxu0 0.0
      %770 = vmatpush1.msra.mxu0 0.0
      %771 = vmatprep.subr.mxu0 0.0
      %772 = vmatpush1.msra.mxu0 0.0
      %773 = vmatprep.subr.mxu0 0.0
      %774 = vmatpush1.msra.mxu0 0.0
      %775 = vmatprep.subr.mxu0 0.0
      %776 = vmatpush1.msra.mxu0 0.0
      %777 = vmatprep.subr.mxu0 0.0
      %778 = vmatpush1.msra.mxu0 0.0
      %779 = vmatprep.subr.mxu0 0.0
      %780 = vmatpush1.msra.mxu0 0.0
      %781 = vmatprep.subr.mxu0 0.0
      %782 = vmatpush1.msra.mxu0 0.0
      %783 = vmatprep.mubr.f32.mxu0 0.0
      %784 = vmatmul.mubr.f32.gmra.mrb[0].mxu0 %v711
      %v785 = vpop.f32.mrb[0].mxu0
      %v786 = vadd.f32 0.0, %v785
      %v787 = vpop.f32.mrb[0].mxu0
      %788 = vmatprep.mubr.f32.mxu0 0.0
      %789 = vmatmul.mubr.f32.gmra.mrb[0].mxu0 %v714
      %v790 = vpop.f32.mrb[0].mxu0
      %v791 = vadd.f32 0.0, %v790
      %v792 = vpop.f32.mrb[0].mxu0
      %793 = vdwg.mxu0
      %794 = vrot.lane.b32.xlu0 %v578, 120
      %v795 = vpop.permute.xlu0 %794
      %796 = vrot.lane.b32.xlu0 %v579, 120
      %v797 = vpop.permute.xlu0 %796
      %798 = vrot.lane.b32.xlu0 %v570, 88
      %v799 = vpop.permute.xlu0 %798
      %800 = vrot.lane.b32.xlu0 %v575, 88
      %v801 = vpop.permute.xlu0 %800
      %v802 = vsel %vm586, %v795, 0
      %v804 = vsel %vm586, %v797, 0
      %v806 = vsel %vm586, %v799, 0
      %v808 = vsel %vm586, %v801, 0
      %810 = vmatprep.subr.mxu0 0.0
      %811 = vmatpush1.xpose.msra.mxu0 %v806
      %812 = vmatprep.subr.mxu0 0.0
      %813 = vmatpush1.xpose.msra.mxu0 %v808
      %814 = vmatprep.subr.mxu0 0.0
      %815 = vmatpush1.xpose.msra.mxu0 0.0
      %816 = vmatprep.subr.mxu0 0.0
      %817 = vmatpush1.xpose.msra.mxu0 0.0
      %818 = vmatprep.subr.mxu0 0.0
      %819 = vmatpush1.xpose.msra.mxu0 0.0
      %820 = vmatprep.subr.mxu0 0.0
      %821 = vmatpush1.xpose.msra.mxu0 0.0
      %822 = vmatprep.subr.mxu0 0.0
      %823 = vmatpush1.xpose.msra.mxu0 0.0
      %824 = vmatprep.subr.mxu0 0.0
      %825 = vmatpush1.xpose.msra.mxu0 0.0
      %826 = vmatprep.subr.mxu0 0.0
      %827 = vmatpush1.xpose.msra.mxu0 0.0
      %828 = vmatprep.subr.mxu0 0.0
      %829 = vmatpush1.xpose.msra.mxu0 0.0
      %830 = vmatprep.subr.mxu0 0.0
      %831 = vmatpush1.xpose.msra.mxu0 0.0
      %832 = vmatprep.subr.mxu0 0.0
      %833 = vmatpush1.xpose.msra.mxu0 0.0
      %834 = vmatprep.subr.mxu0 0.0
      %835 = vmatpush1.xpose.msra.mxu0 0.0
      %836 = vmatprep.subr.mxu0 0.0
      %837 = vmatpush1.xpose.msra.mxu0 0.0
      %838 = vmatprep.subr.mxu0 0.0
      %839 = vmatpush1.xpose.msra.mxu0 0.0
      %840 = vmatprep.subr.mxu0 0.0
      %841 = vmatpush1.xpose.msra.mxu0 0.0
      %842 = vmatprep.subr.mxu0 0.0
      %843 = vmatpush1.xpose.msra.mxu0 0.0
      %844 = vmatprep.subr.mxu0 0.0
      %845 = vmatpush1.xpose.msra.mxu0 0.0
      %846 = vmatprep.subr.mxu0 0.0
      %847 = vmatpush1.xpose.msra.mxu0 0.0
      %848 = vmatprep.subr.mxu0 0.0
      %849 = vmatpush1.xpose.msra.mxu0 0.0
      %850 = vmatprep.subr.mxu0 0.0
      %851 = vmatpush1.xpose.msra.mxu0 0.0
      %852 = vmatprep.subr.mxu0 0.0
      %853 = vmatpush1.xpose.msra.mxu0 0.0
      %854 = vmatprep.subr.mxu0 0.0
      %855 = vmatpush1.xpose.msra.mxu0 0.0
      %856 = vmatprep.subr.mxu0 0.0
      %857 = vmatpush1.xpose.msra.mxu0 0.0
      %858 = vmatprep.subr.mxu0 0.0
      %859 = vmatpush1.xpose.msra.mxu0 0.0
      %860 = vmatprep.subr.mxu0 0.0
      %861 = vmatpush1.xpose.msra.mxu0 0.0
      %862 = vmatprep.subr.mxu0 0.0
      %863 = vmatpush1.xpose.msra.mxu0 0.0
      %864 = vmatprep.subr.mxu0 0.0
      %865 = vmatpush1.xpose.msra.mxu0 0.0
      %866 = vmatprep.subr.mxu0 0.0
      %867 = vmatpush1.xpose.msra.mxu0 0.0
      %868 = vmatprep.subr.mxu0 0.0
      %869 = vmatpush1.xpose.msra.mxu0 0.0
      %870 = vmatprep.subr.mxu0 0.0
      %871 = vmatpush1.xpose.msra.mxu0 0.0
      %872 = vmatprep.subr.mxu0 0.0
      %873 = vmatpush1.xpose.msra.mxu0 0.0
      %874 = vmatprep.mubr.f32.mxu0 0.0
      %875 = vmatmul.mubr.f32.gmra.mrb[0].mxu0 %v802
      %v876 = vpop.f32.mrb[0].mxu0
      %v877 = vadd.f32 0.0, %v876
      %v878 = vpop.f32.mrb[0].mxu0
      %879 = vmatprep.mubr.f32.mxu0 0.0
      %880 = vmatmul.mubr.f32.gmra.mrb[0].mxu0 %v804
      %v881 = vpop.f32.mrb[0].mxu0
      %v882 = vadd.f32 0.0, %v881
      %v883 = vpop.f32.mrb[0].mxu0
      %884 = vdwg.mxu0
      %v885 = vsel %vm678, %v877, -1e+10
      %v886 = vsel %vm678, %v882, -1e+10
      %v887 = vsel %vm681, %v885, -inf
      %888 = vmax.xlane.f32.xlu0 %v887
      %v889 = vpop.xlane.xlu0 %888
      %v890 = vsel %vm685, %v886, -inf
      %891 = vmax.xlane.f32.xlu0 %v890
      %v892 = vpop.xlane.xlu0 %891
      %v893 = vsub.f32 %v885, %v889
      %v894 = vsub.f32 %v886, %v892
      %v895 = vmul.f32 %v893, 1.442695
      %v896 = vpow.pop %v895
      %v897 = vmul.f32 %v894, 1.442695
      %v898 = vpow.pop %v897
      %v899 = vsel %vm681, %v896, 0.0
      %900 = vadd.xlane.f32.xlu0 %v899
      %v901 = vpop.xlane.xlu0 %900
      %v902 = vsel %vm685, %v898, 0.0
      %903 = vadd.xlane.f32.xlu0 %v902
      %v904 = vpop.xlane.xlu0 %903
      %v905 = vrcp.pop %v901
      %v906 = vmul.f32 %v896, %v905
      %v907 = vrcp.pop %v904
      %v908 = vmul.f32 %v898, %v907
      %909 = vrot.lane.b32.xlu0 %v570, 56
      %v910 = vpop.permute.xlu0 %909
      %911 = vrot.lane.b32.xlu0 %v575, 56
      %v912 = vpop.permute.xlu0 %911
      %v915 = vsel %vm681, %v906, 0
      %v918 = vsel %vm681, %v908, 0
      %v920 = vsel %vm716, %v912, 0
      %922 = vmatprep.subr.mxu0 0.0
      %923 = vmatpush1.msra.mxu0 %v910
      %924 = vmatprep.subr.mxu0 0.0
      %925 = vmatpush1.msra.mxu0 %v920
      %926 = vmatprep.subr.mxu0 0.0
      %927 = vmatpush1.msra.mxu0 0.0
      %928 = vmatprep.subr.mxu0 0.0
      %929 = vmatpush1.msra.mxu0 0.0
      %930 = vmatprep.subr.mxu0 0.0
      %931 = vmatpush1.msra.mxu0 0.0
      %932 = vmatprep.subr.mxu0 0.0
      %933 = vmatpush1.msra.mxu0 0.0
      %934 = vmatprep.subr.mxu0 0.0
      %935 = vmatpush1.msra.mxu0 0.0
      %936 = vmatprep.subr.mxu0 0.0
      %937 = vmatpush1.msra.mxu0 0.0
      %938 = vmatprep.subr.mxu0 0.0
      %939 = vmatpush1.msra.mxu0 0.0
      %940 = vmatprep.subr.mxu0 0.0
      %941 = vmatpush1.msra.mxu0 0.0
      %942 = vmatprep.subr.mxu0 0.0
      %943 = vmatpush1.msra.mxu0 0.0
      %944 = vmatprep.subr.mxu0 0.0
      %945 = vmatpush1.msra.mxu0 0.0
      %946 = vmatprep.subr.mxu0 0.0
      %947 = vmatpush1.msra.mxu0 0.0
      %948 = vmatprep.subr.mxu0 0.0
      %949 = vmatpush1.msra.mxu0 0.0
      %950 = vmatprep.subr.mxu0 0.0
      %951 = vmatpush1.msra.mxu0 0.0
      %952 = vmatprep.subr.mxu0 0.0
      %953 = vmatpush1.msra.mxu0 0.0
      %954 = vmatprep.subr.mxu0 0.0
      %955 = vmatpush1.msra.mxu0 0.0
      %956 = vmatprep.subr.mxu0 0.0
      %957 = vmatpush1.msra.mxu0 0.0
      %958 = vmatprep.subr.mxu0 0.0
      %959 = vmatpush1.msra.mxu0 0.0
      %960 = vmatprep.subr.mxu0 0.0
      %961 = vmatpush1.msra.mxu0 0.0
      %962 = vmatprep.subr.mxu0 0.0
      %963 = vmatpush1.msra.mxu0 0.0
      %964 = vmatprep.subr.mxu0 0.0
      %965 = vmatpush1.msra.mxu0 0.0
      %966 = vmatprep.subr.mxu0 0.0
      %967 = vmatpush1.msra.mxu0 0.0
      %968 = vmatprep.subr.mxu0 0.0
      %969 = vmatpush1.msra.mxu0 0.0
      %970 = vmatprep.subr.mxu0 0.0
      %971 = vmatpush1.msra.mxu0 0.0
      %972 = vmatprep.subr.mxu0 0.0
      %973 = vmatpush1.msra.mxu0 0.0
      %974 = vmatprep.subr.mxu0 0.0
      %975 = vmatpush1.msra.mxu0 0.0
      %976 = vmatprep.subr.mxu0 0.0
      %977 = vmatpush1.msra.mxu0 0.0
      %978 = vmatprep.subr.mxu0 0.0
      %979 = vmatpush1.msra.mxu0 0.0
      %980 = vmatprep.subr.mxu0 0.0
      %981 = vmatpush1.msra.mxu0 0.0
      %982 = vmatprep.subr.mxu0 0.0
      %983 = vmatpush1.msra.mxu0 0.0
      %984 = vmatprep.subr.mxu0 0.0
      %985 = vmatpush1.msra.mxu0 0.0
      %986 = vmatprep.mubr.f32.mxu0 0.0
      %987 = vmatmul.mubr.f32.gmra.mrb[0].mxu0 %v915
      %v988 = vpop.f32.mrb[0].mxu0
      %v989 = vadd.f32 0.0, %v988
      %v990 = vpop.f32.mrb[0].mxu0
      %991 = vmatprep.mubr.f32.mxu0 0.0
      %992 = vmatmul.mubr.f32.gmra.mrb[0].mxu0 %v918
      %v993 = vpop.f32.mrb[0].mxu0
      %v994 = vadd.f32 0.0, %v993
      %v995 = vpop.f32.mrb[0].mxu0
      %996 = vdwg.mxu0
      %997 = vrot.lane.b32.xlu0 %v578, 112
      %v998 = vpop.permute.xlu0 %997
      %999 = vrot.lane.b32.xlu0 %v579, 112
      %v1000 = vpop.permute.xlu0 %999
      %1001 = vrot.lane.b32.xlu0 %v570, 80
      %v1002 = vpop.permute.xlu0 %1001
      %1003 = vrot.lane.b32.xlu0 %v575, 80
      %v1004 = vpop.permute.xlu0 %1003
      %v1005 = vsel %vm586, %v998, 0
      %v1007 = vsel %vm586, %v1000, 0
      %v1009 = vsel %vm586, %v1002, 0
      %v1011 = vsel %vm586, %v1004, 0
      %1013 = vmatprep.subr.mxu0 0.0
      %1014 = vmatpush1.xpose.msra.mxu0 %v1009
      %1015 = vmatprep.subr.mxu0 0.0
      %1016 = vmatpush1.xpose.msra.mxu0 %v1011
      %1017 = vmatprep.subr.mxu0 0.0
      %1018 = vmatpush1.xpose.msra.mxu0 0.0
      %1019 = vmatprep.subr.mxu0 0.0
      %1020 = vmatpush1.xpose.msra.mxu0 0.0
      %1021 = vmatprep.subr.mxu0 0.0
      %1022 = vmatpush1.xpose.msra.mxu0 0.0
      %1023 = vmatprep.subr.mxu0 0.0
      %1024 = vmatpush1.xpose.msra.mxu0 0.0
      %1025 = vmatprep.subr.mxu0 0.0
      %1026 = vmatpush1.xpose.msra.mxu0 0.0
      %1027 = vmatprep.subr.mxu0 0.0
      %1028 = vmatpush1.xpose.msra.mxu0 0.0
      %1029 = vmatprep.subr.mxu0 0.0
      %1030 = vmatpush1.xpose.msra.mxu0 0.0
      %1031 = vmatprep.subr.mxu0 0.0
      %1032 = vmatpush1.xpose.msra.mxu0 0.0
      %1033 = vmatprep.subr.mxu0 0.0
      %1034 = vmatpush1.xpose.msra.mxu0 0.0
      %1035 = vmatprep.subr.mxu0 0.0
      %1036 = vmatpush1.xpose.msra.mxu0 0.0
      %1037 = vmatprep.subr.mxu0 0.0
      %1038 = vmatpush1.xpose.msra.mxu0 0.0
      %1039 = vmatprep.subr.mxu0 0.0
      %1040 = vmatpush1.xpose.msra.mxu0 0.0
      %1041 = vmatprep.subr.mxu0 0.0
      %1042 = vmatpush1.xpose.msra.mxu0 0.0
      %1043 = vmatprep.subr.mxu0 0.0
      %1044 = vmatpush1.xpose.msra.mxu0 0.0
      %1045 = vmatprep.subr.mxu0 0.0
      %1046 = vmatpush1.xpose.msra.mxu0 0.0
      %1047 = vmatprep.subr.mxu0 0.0
      %1048 = vmatpush1.xpose.msra.mxu0 0.0
      %1049 = vmatprep.subr.mxu0 0.0
      %1050 = vmatpush1.xpose.msra.mxu0 0.0
      %1051 = vmatprep.subr.mxu0 0.0
      %1052 = vmatpush1.xpose.msra.mxu0 0.0
      %1053 = vmatprep.subr.mxu0 0.0
      %1054 = vmatpush1.xpose.msra.mxu0 0.0
      %1055 = vmatprep.subr.mxu0 0.0
      %1056 = vmatpush1.xpose.msra.mxu0 0.0
      %1057 = vmatprep.subr.mxu0 0.0
      %1058 = vmatpush1.xpose.msra.mxu0 0.0
      %1059 = vmatprep.subr.mxu0 0.0
      %1060 = vmatpush1.xpose.msra.mxu0 0.0
      %1061 = vmatprep.subr.mxu0 0.0
      %1062 = vmatpush1.xpose.msra.mxu0 0.0
      %1063 = vmatprep.subr.mxu0 0.0
      %1064 = vmatpush1.xpose.msra.mxu0 0.0
      %1065 = vmatprep.subr.mxu0 0.0
      %1066 = vmatpush1.xpose.msra.mxu0 0.0
      %1067 = vmatprep.subr.mxu0 0.0
      %1068 = vmatpush1.xpose.msra.mxu0 0.0
      %1069 = vmatprep.subr.mxu0 0.0
      %1070 = vmatpush1.xpose.msra.mxu0 0.0
      %1071 = vmatprep.subr.mxu0 0.0
      %1072 = vmatpush1.xpose.msra.mxu0 0.0
      %1073 = vmatprep.subr.mxu0 0.0
      %1074 = vmatpush1.xpose.msra.mxu0 0.0
      %1075 = vmatprep.subr.mxu0 0.0
      %1076 = vmatpush1.xpose.msra.mxu0 0.0
      %1077 = vmatprep.mubr.f32.mxu0 0.0
      %1078 = vmatmul.mubr.f32.gmra.mrb[0].mxu0 %v1005
      %v1079 = vpop.f32.mrb[0].mxu0
      %v1080 = vadd.f32 0.0, %v1079
      %v1081 = vpop.f32.mrb[0].mxu0
      %1082 = vmatprep.mubr.f32.mxu0 0.0
      %1083 = vmatmul.mubr.f32.gmra.mrb[0].mxu0 %v1007
      %v1084 = vpop.f32.mrb[0].mxu0
      %v1085 = vadd.f32 0.0, %v1084
      %v1086 = vpop.f32.mrb[0].mxu0
      %1087 = vdwg.mxu0
      %v1088 = vsel %vm678, %v1080, -1e+10
      %v1089 = vsel %vm678, %v1085, -1e+10
      %v1090 = vsel %vm681, %v1088, -inf
      %1091 = vmax.xlane.f32.xlu0 %v1090
      %v1092 = vpop.xlane.xlu0 %1091
      %v1093 = vsel %vm685, %v1089, -inf
      %1094 = vmax.xlane.f32.xlu0 %v1093
      %v1095 = vpop.xlane.xlu0 %1094
      %v1096 = vsub.f32 %v1088, %v1092
      %v1097 = vsub.f32 %v1089, %v1095
      %v1098 = vmul.f32 %v1096, 1.442695
      %v1099 = vpow.pop %v1098
      %v1100 = vmul.f32 %v1097, 1.442695
      %v1101 = vpow.pop %v1100
      %v1102 = vsel %vm681, %v1099, 0.0
      %1103 = vadd.xlane.f32.xlu0 %v1102
      %v1104 = vpop.xlane.xlu0 %1103
      %v1105 = vsel %vm685, %v1101, 0.0
      %1106 = vadd.xlane.f32.xlu0 %v1105
      %v1107 = vpop.xlane.xlu0 %1106
      %v1108 = vrcp.pop %v1104
      %v1109 = vmul.f32 %v1099, %v1108
      %v1110 = vrcp.pop %v1107
      %v1111 = vmul.f32 %v1101, %v1110
      %1112 = vrot.lane.b32.xlu0 %v570, 48
      %v1113 = vpop.permute.xlu0 %1112
      %1114 = vrot.lane.b32.xlu0 %v575, 48
      %v1115 = vpop.permute.xlu0 %1114
      %v1118 = vsel %vm681, %v1109, 0
      %v1121 = vsel %vm681, %v1111, 0
      %v1123 = vsel %vm716, %v1115, 0
      %1125 = vmatprep.subr.mxu0 0.0
      %1126 = vmatpush1.msra.mxu0 %v1113
      %1127 = vmatprep.subr.mxu0 0.0
      %1128 = vmatpush1.msra.mxu0 %v1123
      %1129 = vmatprep.subr.mxu0 0.0
      %1130 = vmatpush1.msra.mxu0 0.0
      %1131 = vmatprep.subr.mxu0 0.0
      %1132 = vmatpush1.msra.mxu0 0.0
      %1133 = vmatprep.subr.mxu0 0.0
      %1134 = vmatpush1.msra.mxu0 0.0
      %1135 = vmatprep.subr.mxu0 0.0
      %1136 = vmatpush1.msra.mxu0 0.0
      %1137 = vmatprep.subr.mxu0 0.0
      %1138 = vmatpush1.msra.mxu0 0.0
      %1139 = vmatprep.subr.mxu0 0.0
      %1140 = vmatpush1.msra.mxu0 0.0
      %1141 = vmatprep.subr.mxu0 0.0
      %1142 = vmatpush1.msra.mxu0 0.0
      %1143 = vmatprep.subr.mxu0 0.0
      %1144 = vmatpush1.msra.mxu0 0.0
      %1145 = vmatprep.subr.mxu0 0.0
      %1146 = vmatpush1.msra.mxu0 0.0
      %1147 = vmatprep.subr.mxu0 0.0
      %1148 = vmatpush1.msra.mxu0 0.0
      %1149 = vmatprep.subr.mxu0 0.0
      %1150 = vmatpush1.msra.mxu0 0.0
      %1151 = vmatprep.subr.mxu0 0.0
      %1152 = vmatpush1.msra.mxu0 0.0
      %1153 = vmatprep.subr.mxu0 0.0
      %1154 = vmatpush1.msra.mxu0 0.0
      %1155 = vmatprep.subr.mxu0 0.0
      %1156 = vmatpush1.msra.mxu0 0.0
      %1157 = vmatprep.subr.mxu0 0.0
      %1158 = vmatpush1.msra.mxu0 0.0
      %1159 = vmatprep.subr.mxu0 0.0
      %1160 = vmatpush1.msra.mxu0 0.0
      %1161 = vmatprep.subr.mxu0 0.0
      %1162 = vmatpush1.msra.mxu0 0.0
      %1163 = vmatprep.subr.mxu0 0.0
      %1164 = vmatpush1.msra.mxu0 0.0
      %1165 = vmatprep.subr.mxu0 0.0
      %1166 = vmatpush1.msra.mxu0 0.0
      %1167 = vmatprep.subr.mxu0 0.0
      %1168 = vmatpush1.msra.mxu0 0.0
      %1169 = vmatprep.subr.mxu0 0.0
      %1170 = vmatpush1.msra.mxu0 0.0
      %1171 = vmatprep.subr.mxu0 0.0
      %1172 = vmatpush1.msra.mxu0 0.0
      %1173 = vmatprep.subr.mxu0 0.0
      %1174 = vmatpush1.msra.mxu0 0.0
      %1175 = vmatprep.subr.mxu0 0.0
      %1176 = vmatpush1.msra.mxu0 0.0
      %1177 = vmatprep.subr.mxu0 0.0
      %1178 = vmatpush1.msra.mxu0 0.0
      %1179 = vmatprep.subr.mxu0 0.0
      %1180 = vmatpush1.msra.mxu0 0.0
      %1181 = vmatprep.subr.mxu0 0.0
      %1182 = vmatpush1.msra.mxu0 0.0
      %1183 = vmatprep.subr.mxu0 0.0
      %1184 = vmatpush1.msra.mxu0 0.0
      %1185 = vmatprep.subr.mxu0 0.0
      %1186 = vmatpush1.msra.mxu0 0.0
      %1187 = vmatprep.subr.mxu0 0.0
      %1188 = vmatpush1.msra.mxu0 0.0
      %1189 = vmatprep.mubr.f32.mxu0 0.0
      %1190 = vmatmul.mubr.f32.gmra.mrb[0].mxu0 %v1118
      %v1191 = vpop.f32.mrb[0].mxu0
      %v1192 = vadd.f32 0.0, %v1191
      %v1193 = vpop.f32.mrb[0].mxu0
      %1194 = vmatprep.mubr.f32.mxu0 0.0
      %1195 = vmatmul.mubr.f32.gmra.mrb[0].mxu0 %v1121
      %v1196 = vpop.f32.mrb[0].mxu0
      %v1197 = vadd.f32 0.0, %v1196
      %v1198 = vpop.f32.mrb[0].mxu0
      %1199 = vdwg.mxu0
      %1200 = vrot.lane.b32.xlu0 %v578, 104
      %v1201 = vpop.permute.xlu0 %1200
      %1202 = vrot.lane.b32.xlu0 %v579, 104
      %v1203 = vpop.permute.xlu0 %1202
      %1204 = vrot.lane.b32.xlu0 %v570, 72
      %v1205 = vpop.permute.xlu0 %1204
      %1206 = vrot.lane.b32.xlu0 %v575, 72
      %v1207 = vpop.permute.xlu0 %1206
      %v1208 = vsel %vm586, %v1201, 0
      %v1210 = vsel %vm586, %v1203, 0
      %v1212 = vsel %vm586, %v1205, 0
      %v1214 = vsel %vm586, %v1207, 0
      %1216 = vmatprep.subr.mxu0 0.0
      %1217 = vmatpush1.xpose.msra.mxu0 %v1212
      %1218 = vmatprep.subr.mxu0 0.0
      %1219 = vmatpush1.xpose.msra.mxu0 %v1214
      %1220 = vmatprep.subr.mxu0 0.0
      %1221 = vmatpush1.xpose.msra.mxu0 0.0
      %1222 = vmatprep.subr.mxu0 0.0
      %1223 = vmatpush1.xpose.msra.mxu0 0.0
      %1224 = vmatprep.subr.mxu0 0.0
      %1225 = vmatpush1.xpose.msra.mxu0 0.0
      %1226 = vmatprep.subr.mxu0 0.0
      %1227 = vmatpush1.xpose.msra.mxu0 0.0
      %1228 = vmatprep.subr.mxu0 0.0
      %1229 = vmatpush1.xpose.msra.mxu0 0.0
      %1230 = vmatprep.subr.mxu0 0.0
      %1231 = vmatpush1.xpose.msra.mxu0 0.0
      %1232 = vmatprep.subr.mxu0 0.0
      %1233 = vmatpush1.xpose.msra.mxu0 0.0
      %1234 = vmatprep.subr.mxu0 0.0
      %1235 = vmatpush1.xpose.msra.mxu0 0.0
      %1236 = vmatprep.subr.mxu0 0.0
      %1237 = vmatpush1.xpose.msra.mxu0 0.0
      %1238 = vmatprep.subr.mxu0 0.0
      %1239 = vmatpush1.xpose.msra.mxu0 0.0
      %1240 = vmatprep.subr.mxu0 0.0
      %1241 = vmatpush1.xpose.msra.mxu0 0.0
      %1242 = vmatprep.subr.mxu0 0.0
      %1243 = vmatpush1.xpose.msra.mxu0 0.0
      %1244 = vmatprep.subr.mxu0 0.0
      %1245 = vmatpush1.xpose.msra.mxu0 0.0
      %1246 = vmatprep.subr.mxu0 0.0
      %1247 = vmatpush1.xpose.msra.mxu0 0.0
      %1248 = vmatprep.subr.mxu0 0.0
      %1249 = vmatpush1.xpose.msra.mxu0 0.0
      %1250 = vmatprep.subr.mxu0 0.0
      %1251 = vmatpush1.xpose.msra.mxu0 0.0
      %1252 = vmatprep.subr.mxu0 0.0
      %1253 = vmatpush1.xpose.msra.mxu0 0.0
      %1254 = vmatprep.subr.mxu0 0.0
      %1255 = vmatpush1.xpose.msra.mxu0 0.0
      %1256 = vmatprep.subr.mxu0 0.0
      %1257 = vmatpush1.xpose.msra.mxu0 0.0
      %1258 = vmatprep.subr.mxu0 0.0
      %1259 = vmatpush1.xpose.msra.mxu0 0.0
      %1260 = vmatprep.subr.mxu0 0.0
      %1261 = vmatpush1.xpose.msra.mxu0 0.0
      %1262 = vmatprep.subr.mxu0 0.0
      %1263 = vmatpush1.xpose.msra.mxu0 0.0
      %1264 = vmatprep.subr.mxu0 0.0
      %1265 = vmatpush1.xpose.msra.mxu0 0.0
      %1266 = vmatprep.subr.mxu0 0.0
      %1267 = vmatpush1.xpose.msra.mxu0 0.0
      %1268 = vmatprep.subr.mxu0 0.0
      %1269 = vmatpush1.xpose.msra.mxu0 0.0
      %1270 = vmatprep.subr.mxu0 0.0
      %1271 = vmatpush1.xpose.msra.mxu0 0.0
      %1272 = vmatprep.subr.mxu0 0.0
      %1273 = vmatpush1.xpose.msra.mxu0 0.0
      %1274 = vmatprep.subr.mxu0 0.0
      %1275 = vmatpush1.xpose.msra.mxu0 0.0
      %1276 = vmatprep.subr.mxu0 0.0
      %1277 = vmatpush1.xpose.msra.mxu0 0.0
      %1278 = vmatprep.subr.mxu0 0.0
      %1279 = vmatpush1.xpose.msra.mxu0 0.0
      %1280 = vmatprep.mubr.f32.mxu0 0.0
      %1281 = vmatmul.mubr.f32.gmra.mrb[0].mxu0 %v1208
      %v1282 = vpop.f32.mrb[0].mxu0
      %v1283 = vadd.f32 0.0, %v1282
      %v1284 = vpop.f32.mrb[0].mxu0
      %1285 = vmatprep.mubr.f32.mxu0 0.0
      %1286 = vmatmul.mubr.f32.gmra.mrb[0].mxu0 %v1210
      %v1287 = vpop.f32.mrb[0].mxu0
      %v1288 = vadd.f32 0.0, %v1287
      %v1289 = vpop.f32.mrb[0].mxu0
      %1290 = vdwg.mxu0
      %v1291 = vsel %vm678, %v1283, -1e+10
      %v1292 = vsel %vm678, %v1288, -1e+10
      %v1293 = vsel %vm681, %v1291, -inf
      %1294 = vmax.xlane.f32.xlu0 %v1293
      %v1295 = vpop.xlane.xlu0 %1294
      %v1296 = vsel %vm685, %v1292, -inf
      %1297 = vmax.xlane.f32.xlu0 %v1296
      %v1298 = vpop.xlane.xlu0 %1297
      %v1299 = vsub.f32 %v1291, %v1295
      %v1300 = vsub.f32 %v1292, %v1298
      %v1301 = vmul.f32 %v1299, 1.442695
      %v1302 = vpow.pop %v1301
      %v1303 = vmul.f32 %v1300, 1.442695
      %v1304 = vpow.pop %v1303
      %v1305 = vsel %vm681, %v1302, 0.0
      %1306 = vadd.xlane.f32.xlu0 %v1305
      %v1307 = vpop.xlane.xlu0 %1306
      %v1308 = vsel %vm685, %v1304, 0.0
      %1309 = vadd.xlane.f32.xlu0 %v1308
      %v1310 = vpop.xlane.xlu0 %1309
      %v1311 = vrcp.pop %v1307
      %v1312 = vmul.f32 %v1302, %v1311
      %v1313 = vrcp.pop %v1310
      %v1314 = vmul.f32 %v1304, %v1313
      %1315 = vrot.lane.b32.xlu0 %v570, 40
      %v1316 = vpop.permute.xlu0 %1315
      %1317 = vrot.lane.b32.xlu0 %v575, 40
      %v1318 = vpop.permute.xlu0 %1317
      %v1321 = vsel %vm681, %v1312, 0
      %v1324 = vsel %vm681, %v1314, 0
      %v1326 = vsel %vm716, %v1318, 0
      %1328 = vmatprep.subr.mxu0 0.0
      %1329 = vmatpush1.msra.mxu0 %v1316
      %1330 = vmatprep.subr.mxu0 0.0
      %1331 = vmatpush1.msra.mxu0 %v1326
      %1332 = vmatprep.subr.mxu0 0.0
      %1333 = vmatpush1.msra.mxu0 0.0
      %1334 = vmatprep.subr.mxu0 0.0
      %1335 = vmatpush1.msra.mxu0 0.0
      %1336 = vmatprep.subr.mxu0 0.0
      %1337 = vmatpush1.msra.mxu0 0.0
      %1338 = vmatprep.subr.mxu0 0.0
      %1339 = vmatpush1.msra.mxu0 0.0
      %1340 = vmatprep.subr.mxu0 0.0
      %1341 = vmatpush1.msra.mxu0 0.0
      %1342 = vmatprep.subr.mxu0 0.0
      %1343 = vmatpush1.msra.mxu0 0.0
      %1344 = vmatprep.subr.mxu0 0.0
      %1345 = vmatpush1.msra.mxu0 0.0
      %1346 = vmatprep.subr.mxu0 0.0
      %1347 = vmatpush1.msra.mxu0 0.0
      %1348 = vmatprep.subr.mxu0 0.0
      %1349 = vmatpush1.msra.mxu0 0.0
      %1350 = vmatprep.subr.mxu0 0.0
      %1351 = vmatpush1.msra.mxu0 0.0
      %1352 = vmatprep.subr.mxu0 0.0
      %1353 = vmatpush1.msra.mxu0 0.0
      %1354 = vmatprep.subr.mxu0 0.0
      %1355 = vmatpush1.msra.mxu0 0.0
      %1356 = vmatprep.subr.mxu0 0.0
      %1357 = vmatpush1.msra.mxu0 0.0
      %1358 = vmatprep.subr.mxu0 0.0
      %1359 = vmatpush1.msra.mxu0 0.0
      %1360 = vmatprep.subr.mxu0 0.0
      %1361 = vmatpush1.msra.mxu0 0.0
      %1362 = vmatprep.subr.mxu0 0.0
      %1363 = vmatpush1.msra.mxu0 0.0
      %1364 = vmatprep.subr.mxu0 0.0
      %1365 = vmatpush1.msra.mxu0 0.0
      %1366 = vmatprep.subr.mxu0 0.0
      %1367 = vmatpush1.msra.mxu0 0.0
      %1368 = vmatprep.subr.mxu0 0.0
      %1369 = vmatpush1.msra.mxu0 0.0
      %1370 = vmatprep.subr.mxu0 0.0
      %1371 = vmatpush1.msra.mxu0 0.0
      %1372 = vmatprep.subr.mxu0 0.0
      %1373 = vmatpush1.msra.mxu0 0.0
      %1374 = vmatprep.subr.mxu0 0.0
      %1375 = vmatpush1.msra.mxu0 0.0
      %1376 = vmatprep.subr.mxu0 0.0
      %1377 = vmatpush1.msra.mxu0 0.0
      %1378 = vmatprep.subr.mxu0 0.0
      %1379 = vmatpush1.msra.mxu0 0.0
      %1380 = vmatprep.subr.mxu0 0.0
      %1381 = vmatpush1.msra.mxu0 0.0
      %1382 = vmatprep.subr.mxu0 0.0
      %1383 = vmatpush1.msra.mxu0 0.0
      %1384 = vmatprep.subr.mxu0 0.0
      %1385 = vmatpush1.msra.mxu0 0.0
      %1386 = vmatprep.subr.mxu0 0.0
      %1387 = vmatpush1.msra.mxu0 0.0
      %1388 = vmatprep.subr.mxu0 0.0
      %1389 = vmatpush1.msra.mxu0 0.0
      %1390 = vmatprep.subr.mxu0 0.0
      %1391 = vmatpush1.msra.mxu0 0.0
      %1392 = vmatprep.mubr.f32.mxu0 0.0
      %1393 = vmatmul.mubr.f32.gmra.mrb[0].mxu0 %v1321
      %v1394 = vpop.f32.mrb[0].mxu0
      %v1395 = vadd.f32 0.0, %v1394
      %v1396 = vpop.f32.mrb[0].mxu0
      %1397 = vmatprep.mubr.f32.mxu0 0.0
      %1398 = vmatmul.mubr.f32.gmra.mrb[0].mxu0 %v1324
      %v1399 = vpop.f32.mrb[0].mxu0
      %v1400 = vadd.f32 0.0, %v1399
      %v1401 = vpop.f32.mrb[0].mxu0
      %1402 = vdwg.mxu0
      %1405 = vrot.lane.b32.xlu0 %v989, 8
      %v1406 = vpop.permute.xlu0 %1405
      %1407 = vrot.lane.b32.xlu0 %v994, 8
      %v1408 = vpop.permute.xlu0 %1407
      %1413 = vrot.lane.b32.xlu0 %v1192, 16
      %v1414 = vpop.permute.xlu0 %1413
      %1415 = vrot.lane.b32.xlu0 %v1197, 16
      %v1416 = vpop.permute.xlu0 %1415
      %1421 = vrot.lane.b32.xlu0 %v1395, 24
      %v1422 = vpop.permute.xlu0 %1421
      %1423 = vrot.lane.b32.xlu0 %v1400, 24
      %v1424 = vpop.permute.xlu0 %1423
      %v1427 = vsel %vm586, %v786, %v1406
      %v1428 = vsel %vm586, %v791, %v1408
      %vm1429 = vcmask 130048
      %v1430 = vsel %vm1429, %v1427, %v1414
      %v1431 = vsel %vm1429, %v1428, %v1416
      %vm1432 = vcmask 195584
      %v1433 = vsel %vm1432, %v1430, %v1422
      %v1434 = vsel %vm1432, %v1431, %v1424
      %v1435 = vld [vmem:[%s4] sm:$0xff]
      %v1436 = vld [vmem:[%s4 + $0x8] sm:$0xff]
      %v1437 = vld [vmem:[%s4 + $0x10] sm:$0xff]
      %v1438 = vld [vmem:[%s4 + $0x18] sm:$0xff]
      %v1439 = vld [vmem:[%s5] sm:$0x1]
      %v1441 = vlaneseq
      %v1442 = vshrl.u32 %v1441, 7
      %v1443 = vsub.s32 0, %v1442
      %v1444 = vrot.slane %v1439, %v1443
      %v1447 = vsel %vm496, %v1433, 0
      %v1450 = vsel %vm496, %v1434, 0
      %1452 = vmatprep.subr.mxu0 0.0
      %1453 = vmatpush1.msra.mxu0 %v1435
      %1454 = vmatprep.subr.mxu0 0.0
      %1455 = vmatpush1.msra.mxu0 %v1436
      %1456 = vmatprep.subr.mxu0 0.0
      %1457 = vmatpush1.msra.mxu0 %v1437
      %1458 = vmatprep.subr.mxu0 0.0
      %1459 = vmatpush1.msra.mxu0 %v1438
      %1460 = vmatprep.subr.mxu0 0.0
      %1461 = vmatpush1.msra.mxu0 0.0
      %1462 = vmatprep.subr.mxu0 0.0
      %1463 = vmatpush1.msra.mxu0 0.0
      %1464 = vmatprep.subr.mxu0 0.0
      %1465 = vmatpush1.msra.mxu0 0.0
      %1466 = vmatprep.subr.mxu0 0.0
      %1467 = vmatpush1.msra.mxu0 0.0
      %1468 = vmatprep.subr.mxu0 0.0
      %1469 = vmatpush1.msra.mxu0 0.0
      %1470 = vmatprep.subr.mxu0 0.0
      %1471 = vmatpush1.msra.mxu0 0.0
      %1472 = vmatprep.subr.mxu0 0.0
      %1473 = vmatpush1.msra.mxu0 0.0
      %1474 = vmatprep.subr.mxu0 0.0
      %1475 = vmatpush1.msra.mxu0 0.0
      %1476 = vmatprep.subr.mxu0 0.0
      %1477 = vmatpush1.msra.mxu0 0.0
      %1478 = vmatprep.subr.mxu0 0.0
      %1479 = vmatpush1.msra.mxu0 0.0
      %1480 = vmatprep.subr.mxu0 0.0
      %1481 = vmatpush1.msra.mxu0 0.0
      %1482 = vmatprep.subr.mxu0 0.0
      %1483 = vmatpush1.msra.mxu0 0.0
      %1484 = vmatprep.subr.mxu0 0.0
      %1485 = vmatpush1.msra.mxu0 0.0
      %1486 = vmatprep.subr.mxu0 0.0
      %1487 = vmatpush1.msra.mxu0 0.0
      %1488 = vmatprep.subr.mxu0 0.0
      %1489 = vmatpush1.msra.mxu0 0.0
      %1490 = vmatprep.subr.mxu0 0.0
      %1491 = vmatpush1.msra.mxu0 0.0
      %1492 = vmatprep.subr.mxu0 0.0
      %1493 = vmatpush1.msra.mxu0 0.0
      %1494 = vmatprep.subr.mxu0 0.0
      %1495 = vmatpush1.msra.mxu0 0.0
      %1496 = vmatprep.subr.mxu0 0.0
      %1497 = vmatpush1.msra.mxu0 0.0
      %1498 = vmatprep.subr.mxu0 0.0
      %1499 = vmatpush1.msra.mxu0 0.0
      %1500 = vmatprep.subr.mxu0 0.0
      %1501 = vmatpush1.msra.mxu0 0.0
      %1502 = vmatprep.subr.mxu0 0.0
      %1503 = vmatpush1.msra.mxu0 0.0
      %1504 = vmatprep.subr.mxu0 0.0
      %1505 = vmatpush1.msra.mxu0 0.0
      %1506 = vmatprep.subr.mxu0 0.0
      %1507 = vmatpush1.msra.mxu0 0.0
      %1508 = vmatprep.subr.mxu0 0.0
      %1509 = vmatpush1.msra.mxu0 0.0
      %1510 = vmatprep.subr.mxu0 0.0
      %1511 = vmatpush1.msra.mxu0 0.0
      %1512 = vmatprep.subr.mxu0 0.0
      %1513 = vmatpush1.msra.mxu0 0.0
      %1514 = vmatprep.subr.mxu0 0.0
      %1515 = vmatpush1.msra.mxu0 0.0
      %1516 = vmatprep.mubr.f32.mxu0 0.0
      %1517 = vmatmul.mubr.f32.gmra.mrb[0].mxu0 %v1447
      %v1518 = vpop.f32.mrb[0].mxu0
      %v1519 = vadd.f32 %v1444, %v1518
      %v1520 = vpop.f32.mrb[0].mxu0
      %1521 = vmatprep.mubr.f32.mxu0 0.0
      %1522 = vmatmul.mubr.f32.gmra.mrb[0].mxu0 %v1450
      %v1523 = vpop.f32.mrb[0].mxu0
      %v1524 = vadd.f32 %v1444, %v1523
      %v1525 = vpop.f32.mrb[0].mxu0
      %1526 = vdwg.mxu0
      %v1527 = vadd.f32 %v482, %v1519
      %v1528 = vadd.f32 %v483, %v1524
      %v1529 = vld [vmem:[%s6] sm:$0x1]
      %v1530 = vld [vmem:[%s7] sm:$0x1]
      %v1531 = vsel %vm496, %v1527, 0.0
      %1532 = vadd.xlane.f32.xlu0 %v1531
      %v1533 = vpop.xlane.xlu0 %1532
      %vm1534 = vcmask 254976
      %v1535 = vsel %vm1534, %v1528, 0.0
      %1536 = vadd.xlane.f32.xlu0 %v1535
      %v1537 = vpop.xlane.xlu0 %1536
      %v1538 = vrcp.pop 32.0
      %v1539 = vmul.f32 %v1533, %v1538
      %v1540 = vmul.f32 %v1537, %v1538
      %v1541 = vsub.f32 %v1527, %v1539
      %v1542 = vsub.f32 %v1528, %v1540
      %v1543 = vmul.f32 %v1541, %v1541
      %v1544 = vmul.f32 %v1542, %v1542
      %v1545 = vsel %vm496, %v1543, 0.0
      %1546 = vadd.xlane.f32.xlu0 %v1545
      %v1547 = vpop.xlane.xlu0 %1546
      %v1548 = vsel %vm1534, %v1544, 0.0
      %1549 = vadd.xlane.f32.xlu0 %v1548
      %v1550 = vpop.xlane.xlu0 %1549
      %v1551 = vmul.f32 %v1547, %v1538
      %v1552 = vmul.f32 %v1550, %v1538
      %v1553 = vadd.f32 %v1551, 1e-05
      %v1554 = vadd.f32 %v1552, 1e-05
      %v1555 = vrsqrt.pop %v1553
      %v1556 = vrsqrt.pop %v1554
      %v1557 = vmul.f32 %v1541, %v1555
      %v1558 = vmul.f32 %v1542, %v1556
      %v1560 = vlaneseq
      %v1561 = vshrl.u32 %v1560, 7
      %v1562 = vsub.s32 0, %v1561
      %v1563 = vrot.slane %v1529, %v1562
      %v1565 = vmul.f32 %v1557, %v1563
      %v1566 = vmul.f32 %v1558, %v1563
      %v1568 = vlaneseq
      %v1569 = vshrl.u32 %v1568, 7
      %v1570 = vsub.s32 0, %v1569
      %v1571 = vrot.slane %v1530, %v1570
      %v1573 = vadd.f32 %v1565, %v1571
      %v1574 = vadd.f32 %v1566, %v1571
      %v1575 = vld [vmem:[%s8] sm:$0xff]
      %v1576 = vld [vmem:[%s8 + $0x8] sm:$0xff]
      %v1577 = vld [vmem:[%s8 + $0x10] sm:$0xff]
      %v1578 = vld [vmem:[%s8 + $0x18] sm:$0xff]
      %v1579 = vld [vmem:[%s9] sm:$0x1]
      %v1581 = vlaneseq
      %v1582 = vshrl.u32 %v1581, 7
      %v1583 = vsub.s32 0, %v1582
      %v1584 = vrot.slane %v1579, %v1583
      %v1587 = vsel %vm496, %v1573, 0
      %v1590 = vsel %vm496, %v1574, 0
      %1592 = vmatprep.subr.mxu0 0.0
      %1593 = vmatpush1.msra.mxu0 %v1575
      %1594 = vmatprep.subr.mxu0 0.0
      %1595 = vmatpush1.msra.mxu0 %v1576
      %1596 = vmatprep.subr.mxu0 0.0
      %1597 = vmatpush1.msra.mxu0 %v1577
      %1598 = vmatprep.subr.mxu0 0.0
      %1599 = vmatpush1.msra.mxu0 %v1578
      %1600 = vmatprep.subr.mxu0 0.0
      %1601 = vmatpush1.msra.mxu0 0.0
      %1602 = vmatprep.subr.mxu0 0.0
      %1603 = vmatpush1.msra.mxu0 0.0
      %1604 = vmatprep.subr.mxu0 0.0
      %1605 = vmatpush1.msra.mxu0 0.0
      %1606 = vmatprep.subr.mxu0 0.0
      %1607 = vmatpush1.msra.mxu0 0.0
      %1608 = vmatprep.subr.mxu0 0.0
      %1609 = vmatpush1.msra.mxu0 0.0
      %1610 = vmatprep.subr.mxu0 0.0
      %1611 = vmatpush1.msra.mxu0 0.0
      %1612 = vmatprep.subr.mxu0 0.0
      %1613 = vmatpush1.msra.mxu0 0.0
      %1614 = vmatprep.subr.mxu0 0.0
      %1615 = vmatpush1.msra.mxu0 0.0
      %1616 = vmatprep.subr.mxu0 0.0
      %1617 = vmatpush1.msra.mxu0 0.0
      %1618 = vmatprep.subr.mxu0 0.0
      %1619 = vmatpush1.msra.mxu0 0.0
      %1620 = vmatprep.subr.mxu0 0.0
      %1621 = vmatpush1.msra.mxu0 0.0
      %1622 = vmatprep.subr.mxu0 0.0
      %1623 = vmatpush1.msra.mxu0 0.0
      %1624 = vmatprep.subr.mxu0 0.0
      %1625 = vmatpush1.msra.mxu0 0.0
      %1626 = vmatprep.subr.mxu0 0.0
      %1627 = vmatpush1.msra.mxu0 0.0
      %1628 = vmatprep.subr.mxu0 0.0
      %1629 = vmatpush1.msra.mxu0 0.0
      %1630 = vmatprep.subr.mxu0 0.0
      %1631 = vmatpush1.msra.mxu0 0.0
      %1632 = vmatprep.subr.mxu0 0.0
      %1633 = vmatpush1.msra.mxu0 0.0
      %1634 = vmatprep.subr.mxu0 0.0
      %1635 = vmatpush1.msra.mxu0 0.0
      %1636 = vmatprep.subr.mxu0 0.0
      %1637 = vmatpush1.msra.mxu0 0.0
      %1638 = vmatprep.subr.mxu0 0.0
      %1639 = vmatpush1.msra.mxu0 0.0
      %1640 = vmatprep.subr.mxu0 0.0
      %1641 = vmatpush1.msra.mxu0 0.0
      %1642 = vmatprep.subr.mxu0 0.0
      %1643 = vmatpush1.msra.mxu0 0.0
      %1644 = vmatprep.subr.mxu0 0.0
      %1645 = vmatpush1.msra.mxu0 0.0
      %1646 = vmatprep.subr.mxu0 0.0
      %1647 = vmatpush1.msra.mxu0 0.0
      %1648 = vmatprep.subr.mxu0 0.0
      %1649 = vmatpush1.msra.mxu0 0.0
      %1650 = vmatprep.subr.mxu0 0.0
      %1651 = vmatpush1.msra.mxu0 0.0
      %1652 = vmatprep.subr.mxu0 0.0
      %1653 = vmatpush1.msra.mxu0 0.0
      %1654 = vmatprep.subr.mxu0 0.0
      %1655 = vmatpush1.msra.mxu0 0.0
      %1656 = vmatprep.mubr.f32.mxu0 0.0
      %1657 = vmatmul.mubr.f32.gmra.mrb[0].mxu0 %v1587
      %v1658 = vpop.f32.mrb[0].mxu0
      %v1659 = vadd.f32 %v1584, %v1658
      %v1660 = vpop.f32.mrb[0].mxu0
      %1661 = vmatprep.mubr.f32.mxu0 0.0
      %1662 = vmatmul.mubr.f32.gmra.mrb[0].mxu0 %v1590
      %v1663 = vpop.f32.mrb[0].mxu0
      %v1664 = vadd.f32 %v1584, %v1663
      %v1665 = vpop.f32.mrb[0].mxu0
      %1666 = vdwg.mxu0
      %v1667 = vmax.f32 %v1659, 0.0
      %v1668 = vmax.f32 %v1664, 0.0
      %v1669 = vld [vmem:[%s10] sm:$0xff]
      %v1670 = vld [vmem:[%s10 + $0x8] sm:$0xff]
      %v1671 = vld [vmem:[%s10 + $0x10] sm:$0xff]
      %v1672 = vld [vmem:[%s10 + $0x18] sm:$0xff]
      %v1673 = vld [vmem:[%s10 + $0x20] sm:$0xff]
      %v1674 = vld [vmem:[%s10 + $0x28] sm:$0xff]
      %v1675 = vld [vmem:[%s10 + $0x30] sm:$0xff]
      %v1676 = vld [vmem:[%s10 + $0x38] sm:$0xff]
      %v1677 = vld [vmem:[%s11] sm:$0x1]
      %v1679 = vlaneseq
      %v1680 = vshrl.u32 %v1679, 7
      %v1681 = vsub.s32 0, %v1680
      %v1682 = vrot.slane %v1677, %v1681
      %vm1684 = vcmask 523264
      %v1686 = vsel %vm1684, %v1667, 0
      %v1689 = vsel %vm1684, %v1668, 0
      %1691 = vmatprep.subr.mxu0 0.0
      %1692 = vmatpush1.msra.mxu0 %v1669
      %1693 = vmatprep.subr.mxu0 0.0
      %1694 = vmatpush1.msra.mxu0 %v1670
      %1695 = vmatprep.subr.mxu0 0.0
      %1696 = vmatpush1.msra.mxu0 %v1671
      %1697 = vmatprep.subr.mxu0 0.0
      %1698 = vmatpush1.msra.mxu0 %v1672
      %1699 = vmatprep.subr.mxu0 0.0
      %1700 = vmatpush1.msra.mxu0 %v1673
      %1701 = vmatprep.subr.mxu0 0.0
      %1702 = vmatpush1.msra.mxu0 %v1674
      %1703 = vmatprep.subr.mxu0 0.0
      %1704 = vmatpush1.msra.mxu0 %v1675
      %1705 = vmatprep.subr.mxu0 0.0
      %1706 = vmatpush1.msra.mxu0 %v1676
      %1707 = vmatprep.subr.mxu0 0.0
      %1708 = vmatpush1.msra.mxu0 0.0
      %1709 = vmatprep.subr.mxu0 0.0
      %1710 = vmatpush1.msra.mxu0 0.0
      %1711 = vmatprep.subr.mxu0 0.0
      %1712 = vmatpush1.msra.mxu0 0.0
      %1713 = vmatprep.subr.mxu0 0.0
      %1714 = vmatpush1.msra.mxu0 0.0
      %1715 = vmatprep.subr.mxu0 0.0
      %1716 = vmatpush1.msra.mxu0 0.0
      %1717 = vmatprep.subr.mxu0 0.0
      %1718 = vmatpush1.msra.mxu0 0.0
      %1719 = vmatprep.subr.mxu0 0.0
      %1720 = vmatpush1.msra.mxu0 0.0
      %1721 = vmatprep.subr.mxu0 0.0
      %1722 = vmatpush1.msra.mxu0 0.0
      %1723 = vmatprep.subr.mxu0 0.0
      %1724 = vmatpush1.msra.mxu0 0.0
      %1725 = vmatprep.subr.mxu0 0.0
      %1726 = vmatpush1.msra.mxu0 0.0
      %1727 = vmatprep.subr.mxu0 0.0
      %1728 = vmatpush1.msra.mxu0 0.0
      %1729 = vmatprep.subr.mxu0 0.0
      %1730 = vmatpush1.msra.mxu0 0.0
      %1731 = vmatprep.subr.mxu0 0.0
      %1732 = vmatpush1.msra.mxu0 0.0
      %1733 = vmatprep.subr.mxu0 0.0
      %1734 = vmatpush1.msra.mxu0 0.0
      %1735 = vmatprep.subr.mxu0 0.0
      %1736 = vmatpush1.msra.mxu0 0.0
      %1737 = vmatprep.subr.mxu0 0.0
      %1738 = vmatpush1.msra.mxu0 0.0
      %1739 = vmatprep.subr.mxu0 0.0
      %1740 = vmatpush1.msra.mxu0 0.0
      %1741 = vmatprep.subr.mxu0 0.0
      %1742 = vmatpush1.msra.mxu0 0.0
      %1743 = vmatprep.subr.mxu0 0.0
      %1744 = vmatpush1.msra.mxu0 0.0
      %1745 = vmatprep.subr.mxu0 0.0
      %1746 = vmatpush1.msra.mxu0 0.0
      %1747 = vmatprep.subr.mxu0 0.0
      %1748 = vmatpush1.msra.mxu0 0.0
      %1749 = vmatprep.subr.mxu0 0.0
      %1750 = vmatpush1.msra.mxu0 0.0
      %1751 = vmatprep.subr.mxu0 0.0
      %1752 = vmatpush1.msra.mxu0 0.0
      %1753 = vmatprep.subr.mxu0 0.0
      %1754 = vmatpush1.msra.mxu0 0.0
      %1755 = vmatprep.mubr.f32.mxu0 0.0
      %1756 = vmatmul.mubr.f32.gmra.mrb[0].mxu0 %v1686
      %v1757 = vpop.f32.mrb[0].mxu0
      %v1758 = vadd.f32 %v1682, %v1757
      %v1759 = vpop.f32.mrb[0].mxu0
      %1760 = vmatprep.mubr.f32.mxu0 0.0
      %1761 = vmatmul.mubr.f32.gmra.mrb[0].mxu0 %v1689
      %v1762 = vpop.f32.mrb[0].mxu0
      %v1763 = vadd.f32 %v1682, %v1762
      %v1764 = vpop.f32.mrb[0].mxu0
      %1765 = vdwg.mxu0
      %v1766 = vadd.f32 %v1573, %v1758
      %v1767 = vadd.f32 %v1574, %v1763
      %v1768 = vld [vmem:[%s12] sm:$0x1]
      %v1769 = vld [vmem:[%s13] sm:$0x1]
      %v1770 = vsel %vm496, %v1766, 0.0
      %1771 = vadd.xlane.f32.xlu0 %v1770
      %v1772 = vpop.xlane.xlu0 %1771
      %v1773 = vsel %vm1534, %v1767, 0.0
      %1774 = vadd.xlane.f32.xlu0 %v1773
      %v1775 = vpop.xlane.xlu0 %1774
      %v1776 = vmul.f32 %v1772, %v1538
      %v1777 = vmul.f32 %v1775, %v1538
      %v1778 = vsub.f32 %v1766, %v1776
      %v1779 = vsub.f32 %v1767, %v1777
      %v1780 = vmul.f32 %v1778, %v1778
      %v1781 = vmul.f32 %v1779, %v1779
      %v1782 = vsel %vm496, %v1780, 0.0
      %1783 = vadd.xlane.f32.xlu0 %v1782
      %v1784 = vpop.xlane.xlu0 %1783
      %v1785 = vsel %vm1534, %v1781, 0.0
      %1786 = vadd.xlane.f32.xlu0 %v1785
      %v1787 = vpop.xlane.xlu0 %1786
      %v1788 = vmul.f32 %v1784, %v1538
      %v1789 = vmul.f32 %v1787, %v1538
      %v1790 = vadd.f32 %v1788, 1e-05
      %v1791 = vadd.f32 %v1789, 1e-05
      %v1792 = vrsqrt.pop %v1790
      %v1793 = vrsqrt.pop %v1791
      %v1794 = vmul.f32 %v1778, %v1792
      %v1795 = vmul.f32 %v1779, %v1793
      %v1797 = vlaneseq
      %v1798 = vshrl.u32 %v1797, 7
      %v1799 = vsub.s32 0, %v1798
      %v1800 = vrot.slane %v1768, %v1799
      %v1802 = vmul.f32 %v1794, %v1800
      %v1803 = vmul.f32 %v1795, %v1800
      %v1805 = vlaneseq
      %v1806 = vshrl.u32 %v1805, 7
      %v1807 = vsub.s32 0, %v1806
      %v1808 = vrot.slane %v1769, %v1807
      %v1810 = vadd.f32 %v1802, %v1808
      %v1811 = vadd.f32 %v1803, %v1808
      %s1812 = scalar_lea.vmem %s2, 32
      %v1813 = vld [vmem:[%s1812] sm:$0xff]
      %v1814 = vld [vmem:[%s1812 + $0x8] sm:$0xff]
      %v1815 = vld [vmem:[%s1812 + $0x10] sm:$0xff]
      %v1816 = vld [vmem:[%s1812 + $0x18] sm:$0xff]
      %s1817 = scalar_lea.vmem %s3, 1
      %v1818 = vld [vmem:[%s1817] sm:$0x1]
      %v1820 = vlaneseq
      %v1821 = vshrl.u32 %v1820, 7
      %v1822 = vsub.s32 0, %v1821
      %v1823 = vrot.slane %v1818, %v1822
      %v1826 = vsel %vm496, %v1810, 0
      %v1829 = vsel %vm496, %v1811, 0
      %1831 = vmatprep.subr.mxu0 0.0
      %1832 = vmatpush1.msra.mxu0 %v1813
      %1833 = vmatprep.subr.mxu0 0.0
      %1834 = vmatpush1.msra.mxu0 %v1814
      %1835 = vmatprep.subr.mxu0 0.0
      %1836 = vmatpush1.msra.mxu0 %v1815
      %1837 = vmatprep.subr.mxu0 0.0
      %1838 = vmatpush1.msra.mxu0 %v1816
      %1839 = vmatprep.subr.mxu0 0.0
      %1840 = vmatpush1.msra.mxu0 0.0
      %1841 = vmatprep.subr.mxu0 0.0
      %1842 = vmatpush1.msra.mxu0 0.0
      %1843 = vmatprep.subr.mxu0 0.0
      %1844 = vmatpush1.msra.mxu0 0.0
      %1845 = vmatprep.subr.mxu0 0.0
      %1846 = vmatpush1.msra.mxu0 0.0
      %1847 = vmatprep.subr.mxu0 0.0
      %1848 = vmatpush1.msra.mxu0 0.0
      %1849 = vmatprep.subr.mxu0 0.0
      %1850 = vmatpush1.msra.mxu0 0.0
      %1851 = vmatprep.subr.mxu0 0.0
      %1852 = vmatpush1.msra.mxu0 0.0
      %1853 = vmatprep.subr.mxu0 0.0
      %1854 = vmatpush1.msra.mxu0 0.0
      %1855 = vmatprep.subr.mxu0 0.0
      %1856 = vmatpush1.msra.mxu0 0.0
      %1857 = vmatprep.subr.mxu0 0.0
      %1858 = vmatpush1.msra.mxu0 0.0
      %1859 = vmatprep.subr.mxu0 0.0
      %1860 = vmatpush1.msra.mxu0 0.0
      %1861 = vmatprep.subr.mxu0 0.0
      %1862 = vmatpush1.msra.mxu0 0.0
      %1863 = vmatprep.subr.mxu0 0.0
      %1864 = vmatpush1.msra.mxu0 0.0
      %1865 = vmatprep.subr.mxu0 0.0
      %1866 = vmatpush1.msra.mxu0 0.0
      %1867 = vmatprep.subr.mxu0 0.0
      %1868 = vmatpush1.msra.mxu0 0.0
      %1869 = vmatprep.subr.mxu0 0.0
      %1870 = vmatpush1.msra.mxu0 0.0
      %1871 = vmatprep.subr.mxu0 0.0
      %1872 = vmatpush1.msra.mxu0 0.0
      %1873 = vmatprep.subr.mxu0 0.0
      %1874 = vmatpush1.msra.mxu0 0.0
      %1875 = vmatprep.subr.mxu0 0.0
      %1876 = vmatpush1.msra.mxu0 0.0
      %1877 = vmatprep.subr.mxu0 0.0
      %1878 = vmatpush1.msra.mxu0 0.0
      %1879 = vmatprep.subr.mxu0 0.0
      %1880 = vmatpush1.msra.mxu0 0.0
      %1881 = vmatprep.subr.mxu0 0.0
      %1882 = vmatpush1.msra.mxu0 0.0
      %1883 = vmatprep.subr.mxu0 0.0
      %1884 = vmatpush1.msra.mxu0 0.0
      %1885 = vmatprep.subr.mxu0 0.0
      %1886 = vmatpush1.msra.mxu0 0.0
      %1887 = vmatprep.subr.mxu0 0.0
      %1888 = vmatpush1.msra.mxu0 0.0
      %1889 = vmatprep.subr.mxu0 0.0
      %1890 = vmatpush1.msra.mxu0 0.0
      %1891 = vmatprep.subr.mxu0 0.0
      %1892 = vmatpush1.msra.mxu0 0.0
      %1893 = vmatprep.subr.mxu0 0.0
      %1894 = vmatpush1.msra.mxu0 0.0
      %1895 = vmatprep.mubr.f32.mxu0 0.0
      %1896 = vmatmul.mubr.f32.gmra.mrb[0].mxu0 %v1826
      %v1897 = vpop.f32.mrb[0].mxu0
      %v1898 = vadd.f32 %v1823, %v1897
      %v1899 = vpop.f32.mrb[0].mxu0
      %1900 = vmatprep.mubr.f32.mxu0 0.0
      %1901 = vmatmul.mubr.f32.gmra.mrb[0].mxu0 %v1829
      %v1902 = vpop.f32.mrb[0].mxu0
      %v1903 = vadd.f32 %v1823, %v1902
      %v1904 = vpop.f32.mrb[0].mxu0
      %1905 = vdwg.mxu0
      %v1906 = vmul.f32 %v1898, 0.35355338
      %v1907 = vmul.f32 %v1903, 0.35355338
      %1910 = vrot.lane.b32.xlu0 %v1898, 96
      %v1911 = vpop.permute.xlu0 %1910
      %1912 = vrot.lane.b32.xlu0 %v1903, 96
      %v1913 = vpop.permute.xlu0 %1912
      %v1915 = vsel %vm586, %v1906, 0
      %v1918 = vsel %vm586, %v1907, 0
      %v1920 = vsel %vm586, %v1911, 0
      %v1922 = vsel %vm586, %v1913, 0
      %1924 = vmatprep.subr.mxu0 0.0
      %1925 = vmatpush1.xpose.msra.mxu0 %v1920
      %1926 = vmatprep.subr.mxu0 0.0
      %1927 = vmatpush1.xpose.msra.mxu0 %v1922
      %1928 = vmatprep.subr.mxu0 0.0
      %1929 = vmatpush1.xpose.msra.mxu0 0.0
      %1930 = vmatprep.subr.mxu0 0.0
      %1931 = vmatpush1.xpose.msra.mxu0 0.0
      %1932 = vmatprep.subr.mxu0 0.0
      %1933 = vmatpush1.xpose.msra.mxu0 0.0
      %1934 = vmatprep.subr.mxu0 0.0
      %1935 = vmatpush1.xpose.msra.mxu0 0.0
      %1936 = vmatprep.subr.mxu0 0.0
      %1937 = vmatpush1.xpose.msra.mxu0 0.0
      %1938 = vmatprep.subr.mxu0 0.0
      %1939 = vmatpush1.xpose.msra.mxu0 0.0
      %1940 = vmatprep.subr.mxu0 0.0
      %1941 = vmatpush1.xpose.msra.mxu0 0.0
      %1942 = vmatprep.subr.mxu0 0.0
      %1943 = vmatpush1.xpose.msra.mxu0 0.0
      %1944 = vmatprep.subr.mxu0 0.0
      %1945 = vmatpush1.xpose.msra.mxu0 0.0
      %1946 = vmatprep.subr.mxu0 0.0
      %1947 = vmatpush1.xpose.msra.mxu0 0.0
      %1948 = vmatprep.subr.mxu0 0.0
      %1949 = vmatpush1.xpose.msra.mxu0 0.0
      %1950 = vmatprep.subr.mxu0 0.0
      %1951 = vmatpush1.xpose.msra.mxu0 0.0
      %1952 = vmatprep.subr.mxu0 0.0
      %1953 = vmatpush1.xpose.msra.mxu0 0.0
      %1954 = vmatprep.subr.mxu0 0.0
      %1955 = vmatpush1.xpose.msra.mxu0 0.0
      %1956 = vmatprep.subr.mxu0 0.0
      %1957 = vmatpush1.xpose.msra.mxu0 0.0
      %1958 = vmatprep.subr.mxu0 0.0
      %1959 = vmatpush1.xpose.msra.mxu0 0.0
      %1960 = vmatprep.subr.mxu0 0.0
      %1961 = vmatpush1.xpose.msra.mxu0 0.0
      %1962 = vmatprep.subr.mxu0 0.0
      %1963 = vmatpush1.xpose.msra.mxu0 0.0
      %1964 = vmatprep.subr.mxu0 0.0
      %1965 = vmatpush1.xpose.msra.mxu0 0.0
      %1966 = vmatprep.subr.mxu0 0.0
      %1967 = vmatpush1.xpose.msra.mxu0 0.0
      %1968 = vmatprep.subr.mxu0 0.0
      %1969 = vmatpush1.xpose.msra.mxu0 0.0
      %1970 = vmatprep.subr.mxu0 0.0
      %1971 = vmatpush1.xpose.msra.mxu0 0.0
      %1972 = vmatprep.subr.mxu0 0.0
      %1973 = vmatpush1.xpose.msra.mxu0 0.0
      %1974 = vmatprep.subr.mxu0 0.0
      %1975 = vmatpush1.xpose.msra.mxu0 0.0
      %1976 = vmatprep.subr.mxu0 0.0
      %1977 = vmatpush1.xpose.msra.mxu0 0.0
      %1978 = vmatprep.subr.mxu0 0.0
      %1979 = vmatpush1.xpose.msra.mxu0 0.0
      %1980 = vmatprep.subr.mxu0 0.0
      %1981 = vmatpush1.xpose.msra.mxu0 0.0
      %1982 = vmatprep.subr.mxu0 0.0
      %1983 = vmatpush1.xpose.msra.mxu0 0.0
      %1984 = vmatprep.subr.mxu0 0.0
      %1985 = vmatpush1.xpose.msra.mxu0 0.0
      %1986 = vmatprep.subr.mxu0 0.0
      %1987 = vmatpush1.xpose.msra.mxu0 0.0
      %1988 = vmatprep.mubr.f32.mxu0 0.0
      %1989 = vmatmul.mubr.f32.gmra.mrb[0].mxu0 %v1915
      %v1990 = vpop.f32.mrb[0].mxu0
      %v1991 = vadd.f32 0.0, %v1990
      %v1992 = vpop.f32.mrb[0].mxu0
      %1993 = vmatprep.mubr.f32.mxu0 0.0
      %1994 = vmatmul.mubr.f32.gmra.mrb[0].mxu0 %v1918
      %v1995 = vpop.f32.mrb[0].mxu0
      %v1996 = vadd.f32 0.0, %v1995
      %v1997 = vpop.f32.mrb[0].mxu0
      %1998 = vdwg.mxu0
      %v1999 = vsel %vm678, %v1991, -1e+10
      %v2000 = vsel %vm678, %v1996, -1e+10
      %v2001 = vsel %vm681, %v1999, -inf
      %2002 = vmax.xlane.f32.xlu0 %v2001
      %v2003 = vpop.xlane.xlu0 %2002
      %v2004 = vsel %vm685, %v2000, -inf
      %2005 = vmax.xlane.f32.xlu0 %v2004
      %v2006 = vpop.xlane.xlu0 %2005
      %v2007 = vsub.f32 %v1999, %v2003
      %v2008 = vsub.f32 %v2000, %v2006
      %v2009 = vmul.f32 %v2007, 1.442695
      %v2010 = vpow.pop %v2009
      %v2011 = vmul.f32 %v2008, 1.442695
      %v2012 = vpow.pop %v2011
      %v2013 = vsel %vm681, %v2010, 0.0
      %2014 = vadd.xlane.f32.xlu0 %v2013
      %v2015 = vpop.xlane.xlu0 %2014
      %v2016 = vsel %vm685, %v2012, 0.0
      %2017 = vadd.xlane.f32.xlu0 %v2016
      %v2018 = vpop.xlane.xlu0 %2017
      %v2019 = vrcp.pop %v2015
      %v2020 = vmul.f32 %v2010, %v2019
      %v2021 = vrcp.pop %v2018
      %v2022 = vmul.f32 %v2012, %v2021
      %2023 = vrot.lane.b32.xlu0 %v1898, 64
      %v2024 = vpop.permute.xlu0 %2023
      %2025 = vrot.lane.b32.xlu0 %v1903, 64
      %v2026 = vpop.permute.xlu0 %2025
      %v2029 = vsel %vm681, %v2020, 0
      %v2032 = vsel %vm681, %v2022, 0
      %v2034 = vsel %vm716, %v2026, 0
      %2036 = vmatprep.subr.mxu0 0.0
      %2037 = vmatpush1.msra.mxu0 %v2024
      %2038 = vmatprep.subr.mxu0 0.0
      %2039 = vmatpush1.msra.mxu0 %v2034
      %2040 = vmatprep.subr.mxu0 0.0
      %2041 = vmatpush1.msra.mxu0 0.0
      %2042 = vmatprep.subr.mxu0 0.0
      %2043 = vmatpush1.msra.mxu0 0.0
      %2044 = vmatprep.subr.mxu0 0.0
      %2045 = vmatpush1.msra.mxu0 0.0
      %2046 = vmatprep.subr.mxu0 0.0
      %2047 = vmatpush1.msra.mxu0 0.0
      %2048 = vmatprep.subr.mxu0 0.0
      %2049 = vmatpush1.msra.mxu0 0.0
      %2050 = vmatprep.subr.mxu0 0.0
      %2051 = vmatpush1.msra.mxu0 0.0
      %2052 = vmatprep.subr.mxu0 0.0
      %2053 = vmatpush1.msra.mxu0 0.0
      %2054 = vmatprep.subr.mxu0 0.0
      %2055 = vmatpush1.msra.mxu0 0.0
      %2056 = vmatprep.subr.mxu0 0.0
      %2057 = vmatpush1.msra.mxu0 0.0
      %2058 = vmatprep.subr.mxu0 0.0
      %2059 = vmatpush1.msra.mxu0 0.0
      %2060 = vmatprep.subr.mxu0 0.0
      %2061 = vmatpush1.msra.mxu0 0.0
      %2062 = vmatprep.subr.mxu0 0.0
      %2063 = vmatpush1.msra.mxu0 0.0
      %2064 = vmatprep.subr.mxu0 0.0
      %2065 = vmatpush1.msra.mxu0 0.0
      %2066 = vmatprep.subr.mxu0 0.0
      %2067 = vmatpush1.msra.mxu0 0.0
      %2068 = vmatprep.subr.mxu0 0.0
      %2069 = vmatpush1.msra.mxu0 0.0
      %2070 = vmatprep.subr.mxu0 0.0
      %2071 = vmatpush1.msra.mxu0 0.0
      %2072 = vmatprep.subr.mxu0 0.0
      %2073 = vmatpush1.msra.mxu0 0.0
      %2074 = vmatprep.subr.mxu0 0.0
      %2075 = vmatpush1.msra.mxu0 0.0
      %2076 = vmatprep.subr.mxu0 0.0
      %2077 = vmatpush1.msra.mxu0 0.0
      %2078 = vmatprep.subr.mxu0 0.0
      %2079 = vmatpush1.msra.mxu0 0.0
      %2080 = vmatprep.subr.mxu0 0.0
      %2081 = vmatpush1.msra.mxu0 0.0
      %2082 = vmatprep.subr.mxu0 0.0
      %2083 = vmatpush1.msra.mxu0 0.0
      %2084 = vmatprep.subr.mxu0 0.0
      %2085 = vmatpush1.msra.mxu0 0.0
      %2086 = vmatprep.subr.mxu0 0.0
      %2087 = vmatpush1.msra.mxu0 0.0
      %2088 = vmatprep.subr.mxu0 0.0
      %2089 = vmatpush1.msra.mxu0 0.0
      %2090 = vmatprep.subr.mxu0 0.0
      %2091 = vmatpush1.msra.mxu0 0.0
      %2092 = vmatprep.subr.mxu0 0.0
      %2093 = vmatpush1.msra.mxu0 0.0
      %2094 = vmatprep.subr.mxu0 0.0
      %2095 = vmatpush1.msra.mxu0 0.0
      %2096 = vmatprep.subr.mxu0 0.0
      %2097 = vmatpush1.msra.mxu0 0.0
      %2098 = vmatprep.subr.mxu0 0.0
      %2099 = vmatpush1.msra.mxu0 0.0
      %2100 = vmatprep.mubr.f32.mxu0 0.0
      %2101 = vmatmul.mubr.f32.gmra.mrb[0].mxu0 %v2029
      %v2102 = vpop.f32.mrb[0].mxu0
      %v2103 = vadd.f32 0.0, %v2102
      %v2104 = vpop.f32.mrb[0].mxu0
      %2105 = vmatprep.mubr.f32.mxu0 0.0
      %2106 = vmatmul.mubr.f32.gmra.mrb[0].mxu0 %v2032
      %v2107 = vpop.f32.mrb[0].mxu0
      %v2108 = vadd.f32 0.0, %v2107
      %v2109 = vpop.f32.mrb[0].mxu0
      %2110 = vdwg.mxu0
      %2111 = vrot.lane.b32.xlu0 %v1906, 120
      %v2112 = vpop.permute.xlu0 %2111
      %2113 = vrot.lane.b32.xlu0 %v1907, 120
      %v2114 = vpop.permute.xlu0 %2113
      %2115 = vrot.lane.b32.xlu0 %v1898, 88
      %v2116 = vpop.permute.xlu0 %2115
      %2117 = vrot.lane.b32.xlu0 %v1903, 88
      %v2118 = vpop.permute.xlu0 %2117
      %v2119 = vsel %vm586, %v2112, 0
      %v2121 = vsel %vm586, %v2114, 0
      %v2123 = vsel %vm586, %v2116, 0
      %v2125 = vsel %vm586, %v2118, 0
      %2127 = vmatprep.subr.mxu0 0.0
      %2128 = vmatpush1.xpose.msra.mxu0 %v2123
      %2129 = vmatprep.subr.mxu0 0.0
      %2130 = vmatpush1.xpose.msra.mxu0 %v2125
      %2131 = vmatprep.subr.mxu0 0.0
      %2132 = vmatpush1.xpose.msra.mxu0 0.0
      %2133 = vmatprep.subr.mxu0 0.0
      %2134 = vmatpush1.xpose.msra.mxu0 0.0
      %2135 = vmatprep.subr.mxu0 0.0
      %2136 = vmatpush1.xpose.msra.mxu0 0.0
      %2137 = vmatprep.subr.mxu0 0.0
      %2138 = vmatpush1.xpose.msra.mxu0 0.0
      %2139 = vmatprep.subr.mxu0 0.0
      %2140 = vmatpush1.xpose.msra.mxu0 0.0
      %2141 = vmatprep.subr.mxu0 0.0
      %2142 = vmatpush1.xpose.msra.mxu0 0.0
      %2143 = vmatprep.subr.mxu0 0.0
      %2144 = vmatpush1.xpose.msra.mxu0 0.0
      %2145 = vmatprep.subr.mxu0 0.0
      %2146 = vmatpush1.xpose.msra.mxu0 0.0
      %2147 = vmatprep.subr.mxu0 0.0
      %2148 = vmatpush1.xpose.msra.mxu0 0.0
      %2149 = vmatprep.subr.mxu0 0.0
      %2150 = vmatpush1.xpose.msra.mxu0 0.0
      %2151 = vmatprep.subr.mxu0 0.0
      %2152 = vmatpush1.xpose.msra.mxu0 0.0
      %2153 = vmatprep.subr.mxu0 0.0
      %2154 = vmatpush1.xpose.msra.mxu0 0.0
      %2155 = vmatprep.subr.mxu0 0.0
      %2156 = vmatpush1.xpose.msra.mxu0 0.0
      %2157 = vmatprep.subr.mxu0 0.0
      %2158 = vmatpush1.xpose.msra.mxu0 0.0
      %2159 = vmatprep.subr.mxu0 0.0
      %2160 = vmatpush1.xpose.msra.mxu0 0.0
      %2161 = vmatprep.subr.mxu0 0.0
      %2162 = vmatpush1.xpose.msra.mxu0 0.0
      %2163 = vmatprep.subr.mxu0 0.0
      %2164 = vmatpush1.xpose.msra.mxu0 0.0
      %2165 = vmatprep.subr.mxu0 0.0
      %2166 = vmatpush1.xpose.msra.mxu0 0.0
      %2167 = vmatprep.subr.mxu0 0.0
      %2168 = vmatpush1.xpose.msra.mxu0 0.0
      %2169 = vmatprep.subr.mxu0 0.0
      %2170 = vmatpush1.xpose.msra.mxu0 0.0
      %2171 = vmatprep.subr.mxu0 0.0
      %2172 = vmatpush1.xpose.msra.mxu0 0.0
      %2173 = vmatprep.subr.mxu0 0.0
      %2174 = vmatpush1.xpose.msra.mxu0 0.0
      %2175 = vmatprep.subr.mxu0 0.0
      %2176 = vmatpush1.xpose.msra.mxu0 0.0
      %2177 = vmatprep.subr.mxu0 0.0
      %2178 = vmatpush1.xpose.msra.mxu0 0.0
      %2179 = vmatprep.subr.mxu0 0.0
      %2180 = vmatpush1.xpose.msra.mxu0 0.0
      %2181 = vmatprep.subr.mxu0 0.0
      %2182 = vmatpush1.xpose.msra.mxu0 0.0
      %2183 = vmatprep.subr.mxu0 0.0
      %2184 = vmatpush1.xpose.msra.mxu0 0.0
      %2185 = vmatprep.subr.mxu0 0.0
      %2186 = vmatpush1.xpose.msra.mxu0 0.0
      %2187 = vmatprep.subr.mxu0 0.0
      %2188 = vmatpush1.xpose.msra.mxu0 0.0
      %2189 = vmatprep.subr.mxu0 0.0
      %2190 = vmatpush1.xpose.msra.mxu0 0.0
      %2191 = vmatprep.mubr.f32.mxu0 0.0
      %2192 = vmatmul.mubr.f32.gmra.mrb[0].mxu0 %v2119
      %v2193 = vpop.f32.mrb[0].mxu0
      %v2194 = vadd.f32 0.0, %v2193
      %v2195 = vpop.f32.mrb[0].mxu0
      %2196 = vmatprep.mubr.f32.mxu0 0.0
      %2197 = vmatmul.mubr.f32.gmra.mrb[0].mxu0 %v2121
      %v2198 = vpop.f32.mrb[0].mxu0
      %v2199 = vadd.f32 0.0, %v2198
      %v2200 = vpop.f32.mrb[0].mxu0
      %2201 = vdwg.mxu0
      %v2202 = vsel %vm678, %v2194, -1e+10
      %v2203 = vsel %vm678, %v2199, -1e+10
      %v2204 = vsel %vm681, %v2202, -inf
      %2205 = vmax.xlane.f32.xlu0 %v2204
      %v2206 = vpop.xlane.xlu0 %2205
      %v2207 = vsel %vm685, %v2203, -inf
      %2208 = vmax.xlane.f32.xlu0 %v2207
      %v2209 = vpop.xlane.xlu0 %2208
      %v2210 = vsub.f32 %v2202, %v2206
      %v2211 = vsub.f32 %v2203, %v2209
      %v2212 = vmul.f32 %v2210, 1.442695
      %v2213 = vpow.pop %v2212
      %v2214 = vmul.f32 %v2211, 1.442695
      %v2215 = vpow.pop %v2214
      %v2216 = vsel %vm681, %v2213, 0.0
      %2217 = vadd.xlane.f32.xlu0 %v2216
      %v2218 = vpop.xlane.xlu0 %2217
      %v2219 = vsel %vm685, %v2215, 0.0
      %2220 = vadd.xlane.f32.xlu0 %v2219
      %v2221 = vpop.xlane.xlu0 %2220
      %v2222 = vrcp.pop %v2218
      %v2223 = vmul.f32 %v2213, %v2222
      %v2224 = vrcp.pop %v2221
      %v2225 = vmul.f32 %v2215, %v2224
      %2226 = vrot.lane.b32.xlu0 %v1898, 56
      %v2227 = vpop.permute.xlu0 %2226
      %2228 = vrot.lane.b32.xlu0 %v1903, 56
      %v2229 = vpop.permute.xlu0 %2228
      %v2232 = vsel %vm681, %v2223, 0
      %v2235 = vsel %vm681, %v2225, 0
      %v2237 = vsel %vm716, %v2229, 0
      %2239 = vmatprep.subr.mxu0 0.0
      %2240 = vmatpush1.msra.mxu0 %v2227
      %2241 = vmatprep.subr.mxu0 0.0
      %2242 = vmatpush1.msra.mxu0 %v2237
      %2243 = vmatprep.subr.mxu0 0.0
      %2244 = vmatpush1.msra.mxu0 0.0
      %2245 = vmatprep.subr.mxu0 0.0
      %2246 = vmatpush1.msra.mxu0 0.0
      %2247 = vmatprep.subr.mxu0 0.0
      %2248 = vmatpush1.msra.mxu0 0.0
      %2249 = vmatprep.subr.mxu0 0.0
      %2250 = vmatpush1.msra.mxu0 0.0
      %2251 = vmatprep.subr.mxu0 0.0
      %2252 = vmatpush1.msra.mxu0 0.0
      %2253 = vmatprep.subr.mxu0 0.0
      %2254 = vmatpush1.msra.mxu0 0.0
      %2255 = vmatprep.subr.mxu0 0.0
      %2256 = vmatpush1.msra.mxu0 0.0
      %2257 = vmatprep.subr.mxu0 0.0
      %2258 = vmatpush1.msra.mxu0 0.0
      %2259 = vmatprep.subr.mxu0 0.0
      %2260 = vmatpush1.msra.mxu0 0.0
      %2261 = vmatprep.subr.mxu0 0.0
      %2262 = vmatpush1.msra.mxu0 0.0
      %2263 = vmatprep.subr.mxu0 0.0
      %2264 = vmatpush1.msra.mxu0 0.0
      %2265 = vmatprep.subr.mxu0 0.0
      %2266 = vmatpush1.msra.mxu0 0.0
      %2267 = vmatprep.subr.mxu0 0.0
      %2268 = vmatpush1.msra.mxu0 0.0
      %2269 = vmatprep.subr.mxu0 0.0
      %2270 = vmatpush1.msra.mxu0 0.0
      %2271 = vmatprep.subr.mxu0 0.0
      %2272 = vmatpush1.msra.mxu0 0.0
      %2273 = vmatprep.subr.mxu0 0.0
      %2274 = vmatpush1.msra.mxu0 0.0
      %2275 = vmatprep.subr.mxu0 0.0
      %2276 = vmatpush1.msra.mxu0 0.0
      %2277 = vmatprep.subr.mxu0 0.0
      %2278 = vmatpush1.msra.mxu0 0.0
      %2279 = vmatprep.subr.mxu0 0.0
      %2280 = vmatpush1.msra.mxu0 0.0
      %2281 = vmatprep.subr.mxu0 0.0
      %2282 = vmatpush1.msra.mxu0 0.0
      %2283 = vmatprep.subr.mxu0 0.0
      %2284 = vmatpush1.msra.mxu0 0.0
      %2285 = vmatprep.subr.mxu0 0.0
      %2286 = vmatpush1.msra.mxu0 0.0
      %2287 = vmatprep.subr.mxu0 0.0
      %2288 = vmatpush1.msra.mxu0 0.0
      %2289 = vmatprep.subr.mxu0 0.0
      %2290 = vmatpush1.msra.mxu0 0.0
      %2291 = vmatprep.subr.mxu0 0.0
      %2292 = vmatpush1.msra.mxu0 0.0
      %2293 = vmatprep.subr.mxu0 0.0
      %2294 = vmatpush1.msra.mxu0 0.0
      %2295 = vmatprep.subr.mxu0 0.0
      %2296 = vmatpush1.msra.mxu0 0.0
      %2297 = vmatprep.subr.mxu0 0.0
      %2298 = vmatpush1.msra.mxu0 0.0
      %2299 = vmatprep.subr.mxu0 0.0
      %2300 = vmatpush1.msra.mxu0 0.0
      %2301 = vmatprep.subr.mxu0 0.0
      %2302 = vmatpush1.msra.mxu0 0.0
      %2303 = vmatprep.mubr.f32.mxu0 0.0
      %2304 = vmatmul.mubr.f32.gmra.mrb[0].mxu0 %v2232
      %v2305 = vpop.f32.mrb[0].mxu0
      %v2306 = vadd.f32 0.0, %v2305
      %v2307 = vpop.f32.mrb[0].mxu0
      %2308 = vmatprep.mubr.f32.mxu0 0.0
      %2309 = vmatmul.mubr.f32.gmra.mrb[0].mxu0 %v2235
      %v2310 = vpop.f32.mrb[0].mxu0
      %v2311 = vadd.f32 0.0, %v2310
      %v2312 = vpop.f32.mrb[0].mxu0
      %2313 = vdwg.mxu0
      %2314 = vrot.lane.b32.xlu0 %v1906, 112
      %v2315 = vpop.permute.xlu0 %2314
      %2316 = vrot.lane.b32.xlu0 %v1907, 112
      %v2317 = vpop.permute.xlu0 %2316
      %2318 = vrot.lane.b32.xlu0 %v1898, 80
      %v2319 = vpop.permute.xlu0 %2318
      %2320 = vrot.lane.b32.xlu0 %v1903, 80
      %v2321 = vpop.permute.xlu0 %2320
      %v2322 = vsel %vm586, %v2315, 0
      %v2324 = vsel %vm586, %v2317, 0
      %v2326 = vsel %vm586, %v2319, 0
      %v2328 = vsel %vm586, %v2321, 0
      %2330 = vmatprep.subr.mxu0 0.0
      %2331 = vmatpush1.xpose.msra.mxu0 %v2326
      %2332 = vmatprep.subr.mxu0 0.0
      %2333 = vmatpush1.xpose.msra.mxu0 %v2328
      %2334 = vmatprep.subr.mxu0 0.0
      %2335 = vmatpush1.xpose.msra.mxu0 0.0
      %2336 = vmatprep.subr.mxu0 0.0
      %2337 = vmatpush1.xpose.msra.mxu0 0.0
      %2338 = vmatprep.subr.mxu0 0.0
      %2339 = vmatpush1.xpose.msra.mxu0 0.0
      %2340 = vmatprep.subr.mxu0 0.0
      %2341 = vmatpush1.xpose.msra.mxu0 0.0
      %2342 = vmatprep.subr.mxu0 0.0
      %2343 = vmatpush1.xpose.msra.mxu0 0.0
      %2344 = vmatprep.subr.mxu0 0.0
      %2345 = vmatpush1.xpose.msra.mxu0 0.0
      %2346 = vmatprep.subr.mxu0 0.0
      %2347 = vmatpush1.xpose.msra.mxu0 0.0
      %2348 = vmatprep.subr.mxu0 0.0
      %2349 = vmatpush1.xpose.msra.mxu0 0.0
      %2350 = vmatprep.subr.mxu0 0.0
      %2351 = vmatpush1.xpose.msra.mxu0 0.0
      %2352 = vmatprep.subr.mxu0 0.0
      %2353 = vmatpush1.xpose.msra.mxu0 0.0
      %2354 = vmatprep.subr.mxu0 0.0
      %2355 = vmatpush1.xpose.msra.mxu0 0.0
      %2356 = vmatprep.subr.mxu0 0.0
      %2357 = vmatpush1.xpose.msra.mxu0 0.0
      %2358 = vmatprep.subr.mxu0 0.0
      %2359 = vmatpush1.xpose.msra.mxu0 0.0
      %2360 = vmatprep.subr.mxu0 0.0
      %2361 = vmatpush1.xpose.msra.mxu0 0.0
      %2362 = vmatprep.subr.mxu0 0.0
      %2363 = vmatpush1.xpose.msra.mxu0 0.0
      %2364 = vmatprep.subr.mxu0 0.0
      %2365 = vmatpush1.xpose.msra.mxu0 0.0
      %2366 = vmatprep.subr.mxu0 0.0
      %2367 = vmatpush1.xpose.msra.mxu0 0.0
      %2368 = vmatprep.subr.mxu0 0.0
      %2369 = vmatpush1.xpose.msra.mxu0 0.0
      %2370 = vmatprep.subr.mxu0 0.0
      %2371 = vmatpush1.xpose.msra.mxu0 0.0
      %2372 = vmatprep.subr.mxu0 0.0
      %2373 = vmatpush1.xpose.msra.mxu0 0.0
      %2374 = vmatprep.subr.mxu0 0.0
      %2375 = vmatpush1.xpose.msra.mxu0 0.0
      %2376 = vmatprep.subr.mxu0 0.0
      %2377 = vmatpush1.xpose.msra.mxu0 0.0
      %2378 = vmatprep.subr.mxu0 0.0
      %2379 = vmatpush1.xpose.msra.mxu0 0.0
      %2380 = vmatprep.subr.mxu0 0.0
      %2381 = vmatpush1.xpose.msra.mxu0 0.0
      %2382 = vmatprep.subr.mxu0 0.0
      %2383 = vmatpush1.xpose.msra.mxu0 0.0
      %2384 = vmatprep.subr.mxu0 0.0
      %2385 = vmatpush1.xpose.msra.mxu0 0.0
      %2386 = vmatprep.subr.mxu0 0.0
      %2387 = vmatpush1.xpose.msra.mxu0 0.0
      %2388 = vmatprep.subr.mxu0 0.0
      %2389 = vmatpush1.xpose.msra.mxu0 0.0
      %2390 = vmatprep.subr.mxu0 0.0
      %2391 = vmatpush1.xpose.msra.mxu0 0.0
      %2392 = vmatprep.subr.mxu0 0.0
      %2393 = vmatpush1.xpose.msra.mxu0 0.0
      %2394 = vmatprep.mubr.f32.mxu0 0.0
      %2395 = vmatmul.mubr.f32.gmra.mrb[0].mxu0 %v2322
      %v2396 = vpop.f32.mrb[0].mxu0
      %v2397 = vadd.f32 0.0, %v2396
      %v2398 = vpop.f32.mrb[0].mxu0
      %2399 = vmatprep.mubr.f32.mxu0 0.0
      %2400 = vmatmul.mubr.f32.gmra.mrb[0].mxu0 %v2324
      %v2401 = vpop.f32.mrb[0].mxu0
      %v2402 = vadd.f32 0.0, %v2401
      %v2403 = vpop.f32.mrb[0].mxu0
      %2404 = vdwg.mxu0
      %v2405 = vsel %vm678, %v2397, -1e+10
      %v2406 = vsel %vm678, %v2402, -1e+10
      %v2407 = vsel %vm681, %v2405, -inf
      %2408 = vmax.xlane.f32.xlu0 %v2407
      %v2409 = vpop.xlane.xlu0 %2408
      %v2410 = vsel %vm685, %v2406, -inf
      %2411 = vmax.xlane.f32.xlu0 %v2410
      %v2412 = vpop.xlane.xlu0 %2411
      %v2413 = vsub.f32 %v2405, %v2409
      %v2414 = vsub.f32 %v2406, %v2412
      %v2415 = vmul.f32 %v2413, 1.442695
      %v2416 = vpow.pop %v2415
      %v2417 = vmul.f32 %v2414, 1.442695
      %v2418 = vpow.pop %v2417
      %v2419 = vsel %vm681, %v2416, 0.0
      %2420 = vadd.xlane.f32.xlu0 %v2419
      %v2421 = vpop.xlane.xlu0 %2420
      %v2422 = vsel %vm685, %v2418, 0.0
      %2423 = vadd.xlane.f32.xlu0 %v2422
      %v2424 = vpop.xlane.xlu0 %2423
      %v2425 = vrcp.pop %v2421
      %v2426 = vmul.f32 %v2416, %v2425
      %v2427 = vrcp.pop %v2424
      %v2428 = vmul.f32 %v2418, %v2427
      %2429 = vrot.lane.b32.xlu0 %v1898, 48
      %v2430 = vpop.permute.xlu0 %2429
      %2431 = vrot.lane.b32.xlu0 %v1903, 48
      %v2432 = vpop.permute.xlu0 %2431
      %v2435 = vsel %vm681, %v2426, 0
      %v2438 = vsel %vm681, %v2428, 0
      %v2440 = vsel %vm716, %v2432, 0
      %2442 = vmatprep.subr.mxu0 0.0
      %2443 = vmatpush1.msra.mxu0 %v2430
      %2444 = vmatprep.subr.mxu0 0.0
      %2445 = vmatpush1.msra.mxu0 %v2440
      %2446 = vmatprep.subr.mxu0 0.0
      %2447 = vmatpush1.msra.mxu0 0.0
      %2448 = vmatprep.subr.mxu0 0.0
      %2449 = vmatpush1.msra.mxu0 0.0
      %2450 = vmatprep.subr.mxu0 0.0
      %2451 = vmatpush1.msra.mxu0 0.0
      %2452 = vmatprep.subr.mxu0 0.0
      %2453 = vmatpush1.msra.mxu0 0.0
      %2454 = vmatprep.subr.mxu0 0.0
      %2455 = vmatpush1.msra.mxu0 0.0
      %2456 = vmatprep.subr.mxu0 0.0
      %2457 = vmatpush1.msra.mxu0 0.0
      %2458 = vmatprep.subr.mxu0 0.0
      %2459 = vmatpush1.msra.mxu0 0.0
      %2460 = vmatprep.subr.mxu0 0.0
      %2461 = vmatpush1.msra.mxu0 0.0
      %2462 = vmatprep.subr.mxu0 0.0
      %2463 = vmatpush1.msra.mxu0 0.0
      %2464 = vmatprep.subr.mxu0 0.0
      %2465 = vmatpush1.msra.mxu0 0.0
      %2466 = vmatprep.subr.mxu0 0.0
      %2467 = vmatpush1.msra.mxu0 0.0
      %2468 = vmatprep.subr.mxu0 0.0
      %2469 = vmatpush1.msra.mxu0 0.0
      %2470 = vmatprep.subr.mxu0 0.0
      %2471 = vmatpush1.msra.mxu0 0.0
      %2472 = vmatprep.subr.mxu0 0.0
      %2473 = vmatpush1.msra.mxu0 0.0
      %2474 = vmatprep.subr.mxu0 0.0
      %2475 = vmatpush1.msra.mxu0 0.0
      %2476 = vmatprep.subr.mxu0 0.0
      %2477 = vmatpush1.msra.mxu0 0.0
      %2478 = vmatprep.subr.mxu0 0.0
      %2479 = vmatpush1.msra.mxu0 0.0
      %2480 = vmatprep.subr.mxu0 0.0
      %2481 = vmatpush1.msra.mxu0 0.0
      %2482 = vmatprep.subr.mxu0 0.0
      %2483 = vmatpush1.msra.mxu0 0.0
      %2484 = vmatprep.subr.mxu0 0.0
      %2485 = vmatpush1.msra.mxu0 0.0
      %2486 = vmatprep.subr.mxu0 0.0
      %2487 = vmatpush1.msra.mxu0 0.0
      %2488 = vmatprep.subr.mxu0 0.0
      %2489 = vmatpush1.msra.mxu0 0.0
      %2490 = vmatprep.subr.mxu0 0.0
      %2491 = vmatpush1.msra.mxu0 0.0
      %2492 = vmatprep.subr.mxu0 0.0
      %2493 = vmatpush1.msra.mxu0 0.0
      %2494 = vmatprep.subr.mxu0 0.0
      %2495 = vmatpush1.msra.mxu0 0.0
      %2496 = vmatprep.subr.mxu0 0.0
      %2497 = vmatpush1.msra.mxu0 0.0
      %2498 = vmatprep.subr.mxu0 0.0
      %2499 = vmatpush1.msra.mxu0 0.0
      %2500 = vmatprep.subr.mxu0 0.0
      %2501 = vmatpush1.msra.mxu0 0.0
      %2502 = vmatprep.subr.mxu0 0.0
      %2503 = vmatpush1.msra.mxu0 0.0
      %2504 = vmatprep.subr.mxu0 0.0
      %2505 = vmatpush1.msra.mxu0 0.0
      %2506 = vmatprep.mubr.f32.mxu0 0.0
      %2507 = vmatmul.mubr.f32.gmra.mrb[0].mxu0 %v2435
      %v2508 = vpop.f32.mrb[0].mxu0
      %v2509 = vadd.f32 0.0, %v2508
      %v2510 = vpop.f32.mrb[0].mxu0
      %2511 = vmatprep.mubr.f32.mxu0 0.0
      %2512 = vmatmul.mubr.f32.gmra.mrb[0].mxu0 %v2438
      %v2513 = vpop.f32.mrb[0].mxu0
      %v2514 = vadd.f32 0.0, %v2513
      %v2515 = vpop.f32.mrb[0].mxu0
      %2516 = vdwg.mxu0
      %2517 = vrot.lane.b32.xlu0 %v1906, 104
      %v2518 = vpop.permute.xlu0 %2517
      %2519 = vrot.lane.b32.xlu0 %v1907, 104
      %v2520 = vpop.permute.xlu0 %2519
      %2521 = vrot.lane.b32.xlu0 %v1898, 72
      %v2522 = vpop.permute.xlu0 %2521
      %2523 = vrot.lane.b32.xlu0 %v1903, 72
      %v2524 = vpop.permute.xlu0 %2523
      %v2525 = vsel %vm586, %v2518, 0
      %v2527 = vsel %vm586, %v2520, 0
      %v2529 = vsel %vm586, %v2522, 0
      %v2531 = vsel %vm586, %v2524, 0
      %2533 = vmatprep.subr.mxu0 0.0
      %2534 = vmatpush1.xpose.msra.mxu0 %v2529
      %2535 = vmatprep.subr.mxu0 0.0
      %2536 = vmatpush1.xpose.msra.mxu0 %v2531
      %2537 = vmatprep.subr.mxu0 0.0
      %2538 = vmatpush1.xpose.msra.mxu0 0.0
      %2539 = vmatprep.subr.mxu0 0.0
      %2540 = vmatpush1.xpose.msra.mxu0 0.0
      %2541 = vmatprep.subr.mxu0 0.0
      %2542 = vmatpush1.xpose.msra.mxu0 0.0
      %2543 = vmatprep.subr.mxu0 0.0
      %2544 = vmatpush1.xpose.msra.mxu0 0.0
      %2545 = vmatprep.subr.mxu0 0.0
      %2546 = vmatpush1.xpose.msra.mxu0 0.0
      %2547 = vmatprep.subr.mxu0 0.0
      %2548 = vmatpush1.xpose.msra.mxu0 0.0
      %2549 = vmatprep.subr.mxu0 0.0
      %2550 = vmatpush1.xpose.msra.mxu0 0.0
      %2551 = vmatprep.subr.mxu0 0.0
      %2552 = vmatpush1.xpose.msra.mxu0 0.0
      %2553 = vmatprep.subr.mxu0 0.0
      %2554 = vmatpush1.xpose.msra.mxu0 0.0
      %2555 = vmatprep.subr.mxu0 0.0
      %2556 = vmatpush1.xpose.msra.mxu0 0.0
      %2557 = vmatprep.subr.mxu0 0.0
      %2558 = vmatpush1.xpose.msra.mxu0 0.0
      %2559 = vmatprep.subr.mxu0 0.0
      %2560 = vmatpush1.xpose.msra.mxu0 0.0
      %2561 = vmatprep.subr.mxu0 0.0
      %2562 = vmatpush1.xpose.msra.mxu0 0.0
      %2563 = vmatprep.subr.mxu0 0.0
      %2564 = vmatpush1.xpose.msra.mxu0 0.0
      %2565 = vmatprep.subr.mxu0 0.0
      %2566 = vmatpush1.xpose.msra.mxu0 0.0
      %2567 = vmatprep.subr.mxu0 0.0
      %2568 = vmatpush1.xpose.msra.mxu0 0.0
      %2569 = vmatprep.subr.mxu0 0.0
      %2570 = vmatpush1.xpose.msra.mxu0 0.0
      %2571 = vmatprep.subr.mxu0 0.0
      %2572 = vmatpush1.xpose.msra.mxu0 0.0
      %2573 = vmatprep.subr.mxu0 0.0
      %2574 = vmatpush1.xpose.msra.mxu0 0.0
      %2575 = vmatprep.subr.mxu0 0.0
      %2576 = vmatpush1.xpose.msra.mxu0 0.0
      %2577 = vmatprep.subr.mxu0 0.0
      %2578 = vmatpush1.xpose.msra.mxu0 0.0
      %2579 = vmatprep.subr.mxu0 0.0
      %2580 = vmatpush1.xpose.msra.mxu0 0.0
      %2581 = vmatprep.subr.mxu0 0.0
      %2582 = vmatpush1.xpose.msra.mxu0 0.0
      %2583 = vmatprep.subr.mxu0 0.0
      %2584 = vmatpush1.xpose.msra.mxu0 0.0
      %2585 = vmatprep.subr.mxu0 0.0
      %2586 = vmatpush1.xpose.msra.mxu0 0.0
      %2587 = vmatprep.subr.mxu0 0.0
      %2588 = vmatpush1.xpose.msra.mxu0 0.0
      %2589 = vmatprep.subr.mxu0 0.0
      %2590 = vmatpush1.xpose.msra.mxu0 0.0
      %2591 = vmatprep.subr.mxu0 0.0
      %2592 = vmatpush1.xpose.msra.mxu0 0.0
      %2593 = vmatprep.subr.mxu0 0.0
      %2594 = vmatpush1.xpose.msra.mxu0 0.0
      %2595 = vmatprep.subr.mxu0 0.0
      %2596 = vmatpush1.xpose.msra.mxu0 0.0
      %2597 = vmatprep.mubr.f32.mxu0 0.0
      %2598 = vmatmul.mubr.f32.gmra.mrb[0].mxu0 %v2525
      %v2599 = vpop.f32.mrb[0].mxu0
      %v2600 = vadd.f32 0.0, %v2599
      %v2601 = vpop.f32.mrb[0].mxu0
      %2602 = vmatprep.mubr.f32.mxu0 0.0
      %2603 = vmatmul.mubr.f32.gmra.mrb[0].mxu0 %v2527
      %v2604 = vpop.f32.mrb[0].mxu0
      %v2605 = vadd.f32 0.0, %v2604
      %v2606 = vpop.f32.mrb[0].mxu0
      %2607 = vdwg.mxu0
      %v2608 = vsel %vm678, %v2600, -1e+10
      %v2609 = vsel %vm678, %v2605, -1e+10
      %v2610 = vsel %vm681, %v2608, -inf
      %2611 = vmax.xlane.f32.xlu0 %v2610
      %v2612 = vpop.xlane.xlu0 %2611
      %v2613 = vsel %vm685, %v2609, -inf
      %2614 = vmax.xlane.f32.xlu0 %v2613
      %v2615 = vpop.xlane.xlu0 %2614
      %v2616 = vsub.f32 %v2608, %v2612
      %v2617 = vsub.f32 %v2609, %v2615
      %v2618 = vmul.f32 %v2616, 1.442695
      %v2619 = vpow.pop %v2618
      %v2620 = vmul.f32 %v2617, 1.442695
      %v2621 = vpow.pop %v2620
      %v2622 = vsel %vm681, %v2619, 0.0
      %2623 = vadd.xlane.f32.xlu0 %v2622
      %v2624 = vpop.xlane.xlu0 %2623
      %v2625 = vsel %vm685, %v2621, 0.0
      %2626 = vadd.xlane.f32.xlu0 %v2625
      %v2627 = vpop.xlane.xlu0 %2626
      %v2628 = vrcp.pop %v2624
      %v2629 = vmul.f32 %v2619, %v2628
      %v2630 = vrcp.pop %v2627
      %v2631 = vmul.f32 %v2621, %v2630
      %2632 = vrot.lane.b32.xlu0 %v1898, 40
      %v2633 = vpop.permute.xlu0 %2632
      %2634 = vrot.lane.b32.xlu0 %v1903, 40
      %v2635 = vpop.permute.xlu0 %2634
      %v2638 = vsel %vm681, %v2629, 0
      %v2641 = vsel %vm681, %v2631, 0
      %v2643 = vsel %vm716, %v2635, 0
      %2645 = vmatprep.subr.mxu0 0.0
      %2646 = vmatpush1.msra.mxu0 %v2633
      %2647 = vmatprep.subr.mxu0 0.0
      %2648 = vmatpush1.msra.mxu0 %v2643
      %2649 = vmatprep.subr.mxu0 0.0
      %2650 = vmatpush1.msra.mxu0 0.0
      %2651 = vmatprep.subr.mxu0 0.0
      %2652 = vmatpush1.msra.mxu0 0.0
      %2653 = vmatprep.subr.mxu0 0.0
      %2654 = vmatpush1.msra.mxu0 0.0
      %2655 = vmatprep.subr.mxu0 0.0
      %2656 = vmatpush1.msra.mxu0 0.0
      %2657 = vmatprep.subr.mxu0 0.0
      %2658 = vmatpush1.msra.mxu0 0.0
      %2659 = vmatprep.subr.mxu0 0.0
      %2660 = vmatpush1.msra.mxu0 0.0
      %2661 = vmatprep.subr.mxu0 0.0
      %2662 = vmatpush1.msra.mxu0 0.0
      %2663 = vmatprep.subr.mxu0 0.0
      %2664 = vmatpush1.msra.mxu0 0.0
      %2665 = vmatprep.subr.mxu0 0.0
      %2666 = vmatpush1.msra.mxu0 0.0
      %2667 = vmatprep.subr.mxu0 0.0
      %2668 = vmatpush1.msra.mxu0 0.0
      %2669 = vmatprep.subr.mxu0 0.0
      %2670 = vmatpush1.msra.mxu0 0.0
      %2671 = vmatprep.subr.mxu0 0.0
      %2672 = vmatpush1.msra.mxu0 0.0
      %2673 = vmatprep.subr.mxu0 0.0
      %2674 = vmatpush1.msra.mxu0 0.0
      %2675 = vmatprep.subr.mxu0 0.0
      %2676 = vmatpush1.msra.mxu0 0.0
      %2677 = vmatprep.subr.mxu0 0.0
      %2678 = vmatpush1.msra.mxu0 0.0
      %2679 = vmatprep.subr.mxu0 0.0
      %2680 = vmatpush1.msra.mxu0 0.0
      %2681 = vmatprep.subr.mxu0 0.0
      %2682 = vmatpush1.msra.mxu0 0.0
      %2683 = vmatprep.subr.mxu0 0.0
      %2684 = vmatpush1.msra.mxu0 0.0
      %2685 = vmatprep.subr.mxu0 0.0
      %2686 = vmatpush1.msra.mxu0 0.0
      %2687 = vmatprep.subr.mxu0 0.0
      %2688 = vmatpush1.msra.mxu0 0.0
      %2689 = vmatprep.subr.mxu0 0.0
      %2690 = vmatpush1.msra.mxu0 0.0
      %2691 = vmatprep.subr.mxu0 0.0
      %2692 = vmatpush1.msra.mxu0 0.0
      %2693 = vmatprep.subr.mxu0 0.0
      %2694 = vmatpush1.msra.mxu0 0.0
      %2695 = vmatprep.subr.mxu0 0.0
      %2696 = vmatpush1.msra.mxu0 0.0
      %2697 = vmatprep.subr.mxu0 0.0
      %2698 = vmatpush1.msra.mxu0 0.0
      %2699 = vmatprep.subr.mxu0 0.0
      %2700 = vmatpush1.msra.mxu0 0.0
      %2701 = vmatprep.subr.mxu0 0.0
      %2702 = vmatpush1.msra.mxu0 0.0
      %2703 = vmatprep.subr.mxu0 0.0
      %2704 = vmatpush1.msra.mxu0 0.0
      %2705 = vmatprep.subr.mxu0 0.0
      %2706 = vmatpush1.msra.mxu0 0.0
      %2707 = vmatprep.subr.mxu0 0.0
      %2708 = vmatpush1.msra.mxu0 0.0
      %2709 = vmatprep.mubr.f32.mxu0 0.0
      %2710 = vmatmul.mubr.f32.gmra.mrb[0].mxu0 %v2638
      %v2711 = vpop.f32.mrb[0].mxu0
      %v2712 = vadd.f32 0.0, %v2711
      %v2713 = vpop.f32.mrb[0].mxu0
      %2714 = vmatprep.mubr.f32.mxu0 0.0
      %2715 = vmatmul.mubr.f32.gmra.mrb[0].mxu0 %v2641
      %v2716 = vpop.f32.mrb[0].mxu0
      %v2717 = vadd.f32 0.0, %v2716
      %v2718 = vpop.f32.mrb[0].mxu0
      %2719 = vdwg.mxu0
      %2722 = vrot.lane.b32.xlu0 %v2306, 8
      %v2723 = vpop.permute.xlu0 %2722
      %2724 = vrot.lane.b32.xlu0 %v2311, 8
      %v2725 = vpop.permute.xlu0 %2724
      %2730 = vrot.lane.b32.xlu0 %v2509, 16
      %v2731 = vpop.permute.xlu0 %2730
      %2732 = vrot.lane.b32.xlu0 %v2514, 16
      %v2733 = vpop.permute.xlu0 %2732
      %2738 = vrot.lane.b32.xlu0 %v2712, 24
      %v2739 = vpop.permute.xlu0 %2738
      %2740 = vrot.lane.b32.xlu0 %v2717, 24
      %v2741 = vpop.permute.xlu0 %2740
      %v2744 = vsel %vm586, %v2103, %v2723
      %v2745 = vsel %vm586, %v2108, %v2725
      %v2746 = vsel %vm1429, %v2744, %v2731
      %v2747 = vsel %vm1429, %v2745, %v2733
      %v2748 = vsel %vm1432, %v2746, %v2739
      %v2749 = vsel %vm1432, %v2747, %v2741
      %s2750 = scalar_lea.vmem %s4, 32
      %v2751 = vld [vmem:[%s2750] sm:$0xff]
      %v2752 = vld [vmem:[%s2750 + $0x8] sm:$0xff]
      %v2753 = vld [vmem:[%s2750 + $0x10] sm:$0xff]
      %v2754 = vld [vmem:[%s2750 + $0x18] sm:$0xff]
      %s2755 = scalar_lea.vmem %s5, 1
      %v2756 = vld [vmem:[%s2755] sm:$0x1]
      %v2758 = vlaneseq
      %v2759 = vshrl.u32 %v2758, 7
      %v2760 = vsub.s32 0, %v2759
      %v2761 = vrot.slane %v2756, %v2760
      %v2764 = vsel %vm496, %v2748, 0
      %v2767 = vsel %vm496, %v2749, 0
      %2769 = vmatprep.subr.mxu0 0.0
      %2770 = vmatpush1.msra.mxu0 %v2751
      %2771 = vmatprep.subr.mxu0 0.0
      %2772 = vmatpush1.msra.mxu0 %v2752
      %2773 = vmatprep.subr.mxu0 0.0
      %2774 = vmatpush1.msra.mxu0 %v2753
      %2775 = vmatprep.subr.mxu0 0.0
      %2776 = vmatpush1.msra.mxu0 %v2754
      %2777 = vmatprep.subr.mxu0 0.0
      %2778 = vmatpush1.msra.mxu0 0.0
      %2779 = vmatprep.subr.mxu0 0.0
      %2780 = vmatpush1.msra.mxu0 0.0
      %2781 = vmatprep.subr.mxu0 0.0
      %2782 = vmatpush1.msra.mxu0 0.0
      %2783 = vmatprep.subr.mxu0 0.0
      %2784 = vmatpush1.msra.mxu0 0.0
      %2785 = vmatprep.subr.mxu0 0.0
      %2786 = vmatpush1.msra.mxu0 0.0
      %2787 = vmatprep.subr.mxu0 0.0
      %2788 = vmatpush1.msra.mxu0 0.0
      %2789 = vmatprep.subr.mxu0 0.0
      %2790 = vmatpush1.msra.mxu0 0.0
      %2791 = vmatprep.subr.mxu0 0.0
      %2792 = vmatpush1.msra.mxu0 0.0
      %2793 = vmatprep.subr.mxu0 0.0
      %2794 = vmatpush1.msra.mxu0 0.0
      %2795 = vmatprep.subr.mxu0 0.0
      %2796 = vmatpush1.msra.mxu0 0.0
      %2797 = vmatprep.subr.mxu0 0.0
      %2798 = vmatpush1.msra.mxu0 0.0
      %2799 = vmatprep.subr.mxu0 0.0
      %2800 = vmatpush1.msra.mxu0 0.0
      %2801 = vmatprep.subr.mxu0 0.0
      %2802 = vmatpush1.msra.mxu0 0.0
      %2803 = vmatprep.subr.mxu0 0.0
      %2804 = vmatpush1.msra.mxu0 0.0
      %2805 = vmatprep.subr.mxu0 0.0
      %2806 = vmatpush1.msra.mxu0 0.0
      %2807 = vmatprep.subr.mxu0 0.0
      %2808 = vmatpush1.msra.mxu0 0.0
      %2809 = vmatprep.subr.mxu0 0.0
      %2810 = vmatpush1.msra.mxu0 0.0
      %2811 = vmatprep.subr.mxu0 0.0
      %2812 = vmatpush1.msra.mxu0 0.0
      %2813 = vmatprep.subr.mxu0 0.0
      %2814 = vmatpush1.msra.mxu0 0.0
      %2815 = vmatprep.subr.mxu0 0.0
      %2816 = vmatpush1.msra.mxu0 0.0
      %2817 = vmatprep.subr.mxu0 0.0
      %2818 = vmatpush1.msra.mxu0 0.0
      %2819 = vmatprep.subr.mxu0 0.0
      %2820 = vmatpush1.msra.mxu0 0.0
      %2821 = vmatprep.subr.mxu0 0.0
      %2822 = vmatpush1.msra.mxu0 0.0
      %2823 = vmatprep.subr.mxu0 0.0
      %2824 = vmatpush1.msra.mxu0 0.0
      %2825 = vmatprep.subr.mxu0 0.0
      %2826 = vmatpush1.msra.mxu0 0.0
      %2827 = vmatprep.subr.mxu0 0.0
      %2828 = vmatpush1.msra.mxu0 0.0
      %2829 = vmatprep.subr.mxu0 0.0
      %2830 = vmatpush1.msra.mxu0 0.0
      %2831 = vmatprep.subr.mxu0 0.0
      %2832 = vmatpush1.msra.mxu0 0.0
      %2833 = vmatprep.mubr.f32.mxu0 0.0
      %2834 = vmatmul.mubr.f32.gmra.mrb[0].mxu0 %v2764
      %v2835 = vpop.f32.mrb[0].mxu0
      %v2836 = vadd.f32 %v2761, %v2835
      %v2837 = vpop.f32.mrb[0].mxu0
      %2838 = vmatprep.mubr.f32.mxu0 0.0
      %2839 = vmatmul.mubr.f32.gmra.mrb[0].mxu0 %v2767
      %v2840 = vpop.f32.mrb[0].mxu0
      %v2841 = vadd.f32 %v2761, %v2840
      %v2842 = vpop.f32.mrb[0].mxu0
      %2843 = vdwg.mxu0
      %v2844 = vadd.f32 %v1810, %v2836
      %v2845 = vadd.f32 %v1811, %v2841
      %s2846 = scalar_lea.vmem %s6, 1
      %v2847 = vld [vmem:[%s2846] sm:$0x1]
      %s2848 = scalar_lea.vmem %s7, 1
      %v2849 = vld [vmem:[%s2848] sm:$0x1]
      %v2850 = vsel %vm496, %v2844, 0.0
      %2851 = vadd.xlane.f32.xlu0 %v2850
      %v2852 = vpop.xlane.xlu0 %2851
      %v2853 = vsel %vm1534, %v2845, 0.0
      %2854 = vadd.xlane.f32.xlu0 %v2853
      %v2855 = vpop.xlane.xlu0 %2854
      %v2856 = vmul.f32 %v2852, %v1538
      %v2857 = vmul.f32 %v2855, %v1538
      %v2858 = vsub.f32 %v2844, %v2856
      %v2859 = vsub.f32 %v2845, %v2857
      %v2860 = vmul.f32 %v2858, %v2858
      %v2861 = vmul.f32 %v2859, %v2859
      %v2862 = vsel %vm496, %v2860, 0.0
      %2863 = vadd.xlane.f32.xlu0 %v2862
      %v2864 = vpop.xlane.xlu0 %2863
      %v2865 = vsel %vm1534, %v2861, 0.0
      %2866 = vadd.xlane.f32.xlu0 %v2865
      %v2867 = vpop.xlane.xlu0 %2866
      %v2868 = vmul.f32 %v2864, %v1538
      %v2869 = vmul.f32 %v2867, %v1538
      %v2870 = vadd.f32 %v2868, 1e-05
      %v2871 = vadd.f32 %v2869, 1e-05
      %v2872 = vrsqrt.pop %v2870
      %v2873 = vrsqrt.pop %v2871
      %v2874 = vmul.f32 %v2858, %v2872
      %v2875 = vmul.f32 %v2859, %v2873
      %v2877 = vlaneseq
      %v2878 = vshrl.u32 %v2877, 7
      %v2879 = vsub.s32 0, %v2878
      %v2880 = vrot.slane %v2847, %v2879
      %v2882 = vmul.f32 %v2874, %v2880
      %v2883 = vmul.f32 %v2875, %v2880
      %v2885 = vlaneseq
      %v2886 = vshrl.u32 %v2885, 7
      %v2887 = vsub.s32 0, %v2886
      %v2888 = vrot.slane %v2849, %v2887
      %v2890 = vadd.f32 %v2882, %v2888
      %v2891 = vadd.f32 %v2883, %v2888
      %s2892 = scalar_lea.vmem %s8, 32
      %v2893 = vld [vmem:[%s2892] sm:$0xff]
      %v2894 = vld [vmem:[%s2892 + $0x8] sm:$0xff]
      %v2895 = vld [vmem:[%s2892 + $0x10] sm:$0xff]
      %v2896 = vld [vmem:[%s2892 + $0x18] sm:$0xff]
      %s2897 = scalar_lea.vmem %s9, 1
      %v2898 = vld [vmem:[%s2897] sm:$0x1]
      %v2900 = vlaneseq
      %v2901 = vshrl.u32 %v2900, 7
      %v2902 = vsub.s32 0, %v2901
      %v2903 = vrot.slane %v2898, %v2902
      %v2906 = vsel %vm496, %v2890, 0
      %v2909 = vsel %vm496, %v2891, 0
      %2911 = vmatprep.subr.mxu0 0.0
      %2912 = vmatpush1.msra.mxu0 %v2893
      %2913 = vmatprep.subr.mxu0 0.0
      %2914 = vmatpush1.msra.mxu0 %v2894
      %2915 = vmatprep.subr.mxu0 0.0
      %2916 = vmatpush1.msra.mxu0 %v2895
      %2917 = vmatprep.subr.mxu0 0.0
      %2918 = vmatpush1.msra.mxu0 %v2896
      %2919 = vmatprep.subr.mxu0 0.0
      %2920 = vmatpush1.msra.mxu0 0.0
      %2921 = vmatprep.subr.mxu0 0.0
      %2922 = vmatpush1.msra.mxu0 0.0
      %2923 = vmatprep.subr.mxu0 0.0
      %2924 = vmatpush1.msra.mxu0 0.0
      %2925 = vmatprep.subr.mxu0 0.0
      %2926 = vmatpush1.msra.mxu0 0.0
      %2927 = vmatprep.subr.mxu0 0.0
      %2928 = vmatpush1.msra.mxu0 0.0
      %2929 = vmatprep.subr.mxu0 0.0
      %2930 = vmatpush1.msra.mxu0 0.0
      %2931 = vmatprep.subr.mxu0 0.0
      %2932 = vmatpush1.msra.mxu0 0.0
      %2933 = vmatprep.subr.mxu0 0.0
      %2934 = vmatpush1.msra.mxu0 0.0
      %2935 = vmatprep.subr.mxu0 0.0
      %2936 = vmatpush1.msra.mxu0 0.0
      %2937 = vmatprep.subr.mxu0 0.0
      %2938 = vmatpush1.msra.mxu0 0.0
      %2939 = vmatprep.subr.mxu0 0.0
      %2940 = vmatpush1.msra.mxu0 0.0
      %2941 = vmatprep.subr.mxu0 0.0
      %2942 = vmatpush1.msra.mxu0 0.0
      %2943 = vmatprep.subr.mxu0 0.0
      %2944 = vmatpush1.msra.mxu0 0.0
      %2945 = vmatprep.subr.mxu0 0.0
      %2946 = vmatpush1.msra.mxu0 0.0
      %2947 = vmatprep.subr.mxu0 0.0
      %2948 = vmatpush1.msra.mxu0 0.0
      %2949 = vmatprep.subr.mxu0 0.0
      %2950 = vmatpush1.msra.mxu0 0.0
      %2951 = vmatprep.subr.mxu0 0.0
      %2952 = vmatpush1.msra.mxu0 0.0
      %2953 = vmatprep.subr.mxu0 0.0
      %2954 = vmatpush1.msra.mxu0 0.0
      %2955 = vmatprep.subr.mxu0 0.0
      %2956 = vmatpush1.msra.mxu0 0.0
      %2957 = vmatprep.subr.mxu0 0.0
      %2958 = vmatpush1.msra.mxu0 0.0
      %2959 = vmatprep.subr.mxu0 0.0
      %2960 = vmatpush1.msra.mxu0 0.0
      %2961 = vmatprep.subr.mxu0 0.0
      %2962 = vmatpush1.msra.mxu0 0.0
      %2963 = vmatprep.subr.mxu0 0.0
      %2964 = vmatpush1.msra.mxu0 0.0
      %2965 = vmatprep.subr.mxu0 0.0
      %2966 = vmatpush1.msra.mxu0 0.0
      %2967 = vmatprep.subr.mxu0 0.0
      %2968 = vmatpush1.msra.mxu0 0.0
      %2969 = vmatprep.subr.mxu0 0.0
      %2970 = vmatpush1.msra.mxu0 0.0
      %2971 = vmatprep.subr.mxu0 0.0
      %2972 = vmatpush1.msra.mxu0 0.0
      %2973 = vmatprep.subr.mxu0 0.0
      %2974 = vmatpush1.msra.mxu0 0.0
      %2975 = vmatprep.mubr.f32.mxu0 0.0
      %2976 = vmatmul.mubr.f32.gmra.mrb[0].mxu0 %v2906
      %v2977 = vpop.f32.mrb[0].mxu0
      %v2978 = vadd.f32 %v2903, %v2977
      %v2979 = vpop.f32.mrb[0].mxu0
      %2980 = vmatprep.mubr.f32.mxu0 0.0
      %2981 = vmatmul.mubr.f32.gmra.mrb[0].mxu0 %v2909
      %v2982 = vpop.f32.mrb[0].mxu0
      %v2983 = vadd.f32 %v2903, %v2982
      %v2984 = vpop.f32.mrb[0].mxu0
      %2985 = vdwg.mxu0
      %v2986 = vmax.f32 %v2978, 0.0
      %v2987 = vmax.f32 %v2983, 0.0
      %s2988 = scalar_lea.vmem %s10, 64
      %v2989 = vld [vmem:[%s2988] sm:$0xff]
      %v2990 = vld [vmem:[%s2988 + $0x8] sm:$0xff]
      %v2991 = vld [vmem:[%s2988 + $0x10] sm:$0xff]
      %v2992 = vld [vmem:[%s2988 + $0x18] sm:$0xff]
      %v2993 = vld [vmem:[%s2988 + $0x20] sm:$0xff]
      %v2994 = vld [vmem:[%s2988 + $0x28] sm:$0xff]
      %v2995 = vld [vmem:[%s2988 + $0x30] sm:$0xff]
      %v2996 = vld [vmem:[%s2988 + $0x38] sm:$0xff]
      %s2997 = scalar_lea.vmem %s11, 1
      %v2998 = vld [vmem:[%s2997] sm:$0x1]
      %v3000 = vlaneseq
      %v3001 = vshrl.u32 %v3000, 7
      %v3002 = vsub.s32 0, %v3001
      %v3003 = vrot.slane %v2998, %v3002
      %v3006 = vsel %vm1684, %v2986, 0
      %v3009 = vsel %vm1684, %v2987, 0
      %3011 = vmatprep.subr.mxu0 0.0
      %3012 = vmatpush1.msra.mxu0 %v2989
      %3013 = vmatprep.subr.mxu0 0.0
      %3014 = vmatpush1.msra.mxu0 %v2990
      %3015 = vmatprep.subr.mxu0 0.0
      %3016 = vmatpush1.msra.mxu0 %v2991
      %3017 = vmatprep.subr.mxu0 0.0
      %3018 = vmatpush1.msra.mxu0 %v2992
      %3019 = vmatprep.subr.mxu0 0.0
      %3020 = vmatpush1.msra.mxu0 %v2993
      %3021 = vmatprep.subr.mxu0 0.0
      %3022 = vmatpush1.msra.mxu0 %v2994
      %3023 = vmatprep.subr.mxu0 0.0
      %3024 = vmatpush1.msra.mxu0 %v2995
      %3025 = vmatprep.subr.mxu0 0.0
      %3026 = vmatpush1.msra.mxu0 %v2996
      %3027 = vmatprep.subr.mxu0 0.0
      %3028 = vmatpush1.msra.mxu0 0.0
      %3029 = vmatprep.subr.mxu0 0.0
      %3030 = vmatpush1.msra.mxu0 0.0
      %3031 = vmatprep.subr.mxu0 0.0
      %3032 = vmatpush1.msra.mxu0 0.0
      %3033 = vmatprep.subr.mxu0 0.0
      %3034 = vmatpush1.msra.mxu0 0.0
      %3035 = vmatprep.subr.mxu0 0.0
      %3036 = vmatpush1.msra.mxu0 0.0
      %3037 = vmatprep.subr.mxu0 0.0
      %3038 = vmatpush1.msra.mxu0 0.0
      %3039 = vmatprep.subr.mxu0 0.0
      %3040 = vmatpush1.msra.mxu0 0.0
      %3041 = vmatprep.subr.mxu0 0.0
      %3042 = vmatpush1.msra.mxu0 0.0
      %3043 = vmatprep.subr.mxu0 0.0
      %3044 = vmatpush1.msra.mxu0 0.0
      %3045 = vmatprep.subr.mxu0 0.0
      %3046 = vmatpush1.msra.mxu0 0.0
      %3047 = vmatprep.subr.mxu0 0.0
      %3048 = vmatpush1.msra.mxu0 0.0
      %3049 = vmatprep.subr.mxu0 0.0
      %3050 = vmatpush1.msra.mxu0 0.0
      %3051 = vmatprep.subr.mxu0 0.0
      %3052 = vmatpush1.msra.mxu0 0.0
      %3053 = vmatprep.subr.mxu0 0.0
      %3054 = vmatpush1.msra.mxu0 0.0
      %3055 = vmatprep.subr.mxu0 0.0
      %3056 = vmatpush1.msra.mxu0 0.0
      %3057 = vmatprep.subr.mxu0 0.0
      %3058 = vmatpush1.msra.mxu0 0.0
      %3059 = vmatprep.subr.mxu0 0.0
      %3060 = vmatpush1.msra.mxu0 0.0
      %3061 = vmatprep.subr.mxu0 0.0
      %3062 = vmatpush1.msra.mxu0 0.0
      %3063 = vmatprep.subr.mxu0 0.0
      %3064 = vmatpush1.msra.mxu0 0.0
      %3065 = vmatprep.subr.mxu0 0.0
      %3066 = vmatpush1.msra.mxu0 0.0
      %3067 = vmatprep.subr.mxu0 0.0
      %3068 = vmatpush1.msra.mxu0 0.0
      %3069 = vmatprep.subr.mxu0 0.0
      %3070 = vmatpush1.msra.mxu0 0.0
      %3071 = vmatprep.subr.mxu0 0.0
      %3072 = vmatpush1.msra.mxu0 0.0
      %3073 = vmatprep.subr.mxu0 0.0
      %3074 = vmatpush1.msra.mxu0 0.0
      %3075 = vmatprep.mubr.f32.mxu0 0.0
      %3076 = vmatmul.mubr.f32.gmra.mrb[0].mxu0 %v3006
      %v3077 = vpop.f32.mrb[0].mxu0
      %v3078 = vadd.f32 %v3003, %v3077
      %v3079 = vpop.f32.mrb[0].mxu0
      %3080 = vmatprep.mubr.f32.mxu0 0.0
      %3081 = vmatmul.mubr.f32.gmra.mrb[0].mxu0 %v3009
      %v3082 = vpop.f32.mrb[0].mxu0
      %v3083 = vadd.f32 %v3003, %v3082
      %v3084 = vpop.f32.mrb[0].mxu0
      %3085 = vdwg.mxu0
      %v3086 = vadd.f32 %v2890, %v3078
      %v3087 = vadd.f32 %v2891, %v3083
      %s3088 = scalar_lea.vmem %s12, 1
      %v3089 = vld [vmem:[%s3088] sm:$0x1]
      %s3090 = scalar_lea.vmem %s13, 1
      %v3091 = vld [vmem:[%s3090] sm:$0x1]
      %v3092 = vsel %vm496, %v3086, 0.0
      %3093 = vadd.xlane.f32.xlu0 %v3092
      %v3094 = vpop.xlane.xlu0 %3093
      %v3095 = vsel %vm1534, %v3087, 0.0
      %3096 = vadd.xlane.f32.xlu0 %v3095
      %v3097 = vpop.xlane.xlu0 %3096
      %v3098 = vmul.f32 %v3094, %v1538
      %v3099 = vmul.f32 %v3097, %v1538
      %v3100 = vsub.f32 %v3086, %v3098
      %v3101 = vsub.f32 %v3087, %v3099
      %v3102 = vmul.f32 %v3100, %v3100
      %v3103 = vmul.f32 %v3101, %v3101
      %v3104 = vsel %vm496, %v3102, 0.0
      %3105 = vadd.xlane.f32.xlu0 %v3104
      %v3106 = vpop.xlane.xlu0 %3105
      %v3107 = vsel %vm1534, %v3103, 0.0
      %3108 = vadd.xlane.f32.xlu0 %v3107
      %v3109 = vpop.xlane.xlu0 %3108
      %v3110 = vmul.f32 %v3106, %v1538
      %v3111 = vmul.f32 %v3109, %v1538
      %v3112 = vadd.f32 %v3110, 1e-05
      %v3113 = vadd.f32 %v3111, 1e-05
      %v3114 = vrsqrt.pop %v3112
      %v3115 = vrsqrt.pop %v3113
      %v3116 = vmul.f32 %v3100, %v3114
      %v3117 = vmul.f32 %v3101, %v3115
      %v3119 = vlaneseq
      %v3120 = vshrl.u32 %v3119, 7
      %v3121 = vsub.s32 0, %v3120
      %v3122 = vrot.slane %v3089, %v3121
      %v3124 = vmul.f32 %v3116, %v3122
      %v3125 = vmul.f32 %v3117, %v3122
      %v3127 = vlaneseq
      %v3128 = vshrl.u32 %v3127, 7
      %v3129 = vsub.s32 0, %v3128
      %v3130 = vrot.slane %v3091, %v3129
      %v3132 = vadd.f32 %v3124, %v3130
      %v3133 = vadd.f32 %v3125, %v3130
      %3134 = vst.msk [vmem:[%s481] sm:$0xff] %vm496, %v3132
      %3135 = vst.msk [vmem:[%s481 + $0x8] sm:$0x3] %vm1534, %v3133
      %p3136 = scmp.lt.s32.totalorder %s25, 1
      %s3137 = scalar_select %p3136, %s25, 1
      %s3138 = smul.addr %s3137, 2
      %s3139 = smul.addr %s3138, 8
      %s3140 = scalar_lea.vmem %s14, %s3139
      // Predicated region
      $region77: #{seq2seq_forward.2} parent=75 // pred_check
        %p3141 = pneg %p347
      $region78: #{seq2seq_forward.2} parent=75 // pred_check_branch
        %3143 = sbr.rel (%p3141) target = $region80
      $region79: #{seq2seq_forward.2} parent=75 // pred_region
        _
      $region80: #{seq2seq_forward.2} parent=75 // pred_fallthru
        _
    $region76: #{seq2seq_forward.2} parent=5 // pred_fallthru
      _
    %p3144 = scmp.le.s32.totalorder 2, %s20
    // Predicated region
    $region81: #{seq2seq_forward.2} parent=5 // pred_check
      %p3145 = pneg %p3144
    $region82: #{seq2seq_forward.2} parent=5 // pred_check_branch
      %3147 = sbr.rel (%p3145) target = $region84
    $region83: #{seq2seq_forward.2} parent=5 // pred_region
      %s3148 = ssub.s32 %s20, 2
      // Predicated region
      $region85: #{seq2seq_forward.2} parent=83 // pred_check
        %p3149 = pneg %p353
      $region86: #{seq2seq_forward.2} parent=83 // pred_check_branch
        %3151 = sbr.rel (%p3149) target = $region88
      $region87: #{seq2seq_forward.2} parent=83 // pred_region
        %p3152 = scmp.lt.s32.totalorder %s26, 1
        %s3153 = scalar_select %p3152, %s26, 1
        %s3154 = smul.addr %s3153, 2
        %s3155 = smul.addr %s3154, 8
        %s3156 = scalar_lea.vmem %s14, %s3155
      $region88: #{seq2seq_forward.2} parent=83 // pred_fallthru
        _
    $region84: #{seq2seq_forward.2} parent=5 // pred_fallthru
      _
  $region6: #{seq2seq_forward.2} parent=0 // loop_footer
    %s24 = sadd.s32 1, %s20
  $region7: #{seq2seq_forward.2} parent=0 // loop_footer_branch
    %19 = sbr.rel target = $region3
  $region8: #{seq2seq_forward.2} parent=0 // loop_exit
    _

// kernel: seq2seq_forward.3
$region0: #{seq2seq_forward.3}
  #allocation0 [shape = 'u32[]', space=smem, size = 0x4, offset = 0x4, fixed_abs, tag = 'smem constant byte address 0x4 - core index']
  #allocation1 [shape = 'u32[144,128]{1,0:T(1,128)}', space=vmem, size = 0x12000, scoped, tag = 'internal scratch']
  %s0 = inlined_call_operand.vmem [shape: f32[2,8,32], index: 0, kind: input, shape index: {}]
  %s1 = inlined_call_operand.vmem [shape: f32[2,10,32], index: 1, kind: input, shape index: {}]
  %s2 = inlined_call_operand.vmem [shape: s32[2,8,8], index: 2, kind: input, shape index: {}]
  %s3 = inlined_call_operand.vmem [shape: s32[2,1,10], index: 3, kind: input, shape index: {}]
  %s4 = inlined_call_operand.vmem [shape: f32[2,32,96], index: 4, kind: input, shape index: {}]
  %s5 = inlined_call_operand.vmem [shape: f32[2,1,96], index: 5, kind: input, shape index: {}]
  %s6 = inlined_call_operand.vmem [shape: f32[2,32,32], index: 6, kind: input, shape index: {}]
  %s7 = inlined_call_operand.vmem [shape: f32[2,1,32], index: 7, kind: input, shape index: {}]
  %s8 = inlined_call_operand.vmem [shape: f32[2,1,32], index: 8, kind: input, shape index: {}]
  %s9 = inlined_call_operand.vmem [shape: f32[2,1,32], index: 9, kind: input, shape index: {}]
  %s10 = inlined_call_operand.vmem [shape: f32[2,32,32], index: 10, kind: input, shape index: {}]
  %s11 = inlined_call_operand.vmem [shape: f32[2,1,32], index: 11, kind: input, shape index: {}]
  %s12 = inlined_call_operand.vmem [shape: f32[2,32,64], index: 12, kind: input, shape index: {}]
  %s13 = inlined_call_operand.vmem [shape: f32[2,1,64], index: 13, kind: input, shape index: {}]
  %s14 = inlined_call_operand.vmem [shape: f32[2,32,32], index: 14, kind: input, shape index: {}]
  %s15 = inlined_call_operand.vmem [shape: f32[2,1,32], index: 15, kind: input, shape index: {}]
  %s16 = inlined_call_operand.vmem [shape: f32[2,1,32], index: 16, kind: input, shape index: {}]
  %s17 = inlined_call_operand.vmem [shape: f32[2,1,32], index: 17, kind: input, shape index: {}]
  %s18 = inlined_call_operand.vmem [shape: f32[2,32,64], index: 18, kind: input, shape index: {}]
  %s19 = inlined_call_operand.vmem [shape: f32[2,1,64], index: 19, kind: input, shape index: {}]
  %s20 = inlined_call_operand.vmem [shape: f32[2,64,32], index: 20, kind: input, shape index: {}]
  %s21 = inlined_call_operand.vmem [shape: f32[2,1,32], index: 21, kind: input, shape index: {}]
  %s22 = inlined_call_operand.vmem [shape: f32[2,1,32], index: 22, kind: input, shape index: {}]
  %s23 = inlined_call_operand.vmem [shape: f32[2,1,32], index: 23, kind: input, shape index: {}]
  %s24 = inlined_call_operand.vmem [shape: f32[32,18], index: 24, kind: input, shape index: {}]
  %s25 = inlined_call_operand.vmem [shape: f32[1,18], index: 25, kind: input, shape index: {}]
  %s26 = inlined_call_operand.hbm [shape: f32[2,8,18], index: 26, kind: output, shape index: {0}]
  %s27 = inlined_call_operand.hbm [shape: f32[2,4,8,10], index: 27, kind: output, shape index: {1}]
  %28 = xla_tuple %s26, %s27
  %s29 = sld [smem:[#allocation0]]
  $region145: #{seq2seq_forward.3} parent=0
    _
  %s31 = ssub.s32 1, %s29
  %s32 = scalar_select 0, %s31, %s29
  $region1: #{seq2seq_forward.3} parent=0
    #allocation2 [shape = 'u8[8192]{0}', space=vmem, size = 0x2000, scoped, tag = 'output window, operand 0']
    #allocation3 [shape = 's32[2]{0}', space=sflag, size = 0x8, scoped, tag = 'scoped memory for seq2seq_forward.3']
    #allocation4 [shape = 'u8[32768]{0}', space=vmem, size = 0x8000, scoped, tag = 'output window, operand 1']
    #allocation5 [shape = 's32[2]{0}', space=sflag, size = 0x8, scoped, tag = 'scoped memory for seq2seq_forward.3']
    %33 = vsyncpa [#allocation3], 0
    %s34 = scalar_lea.sflag [#allocation3], 1
    %35 = vsyncpa %s34, 0
    %36 = vsyncpa [#allocation5], 0
    %s37 = scalar_lea.sflag [#allocation5], 1
    %38 = vsyncpa %s37, 0
    loop: start=0, step=1, limit=4
    $region2: #{seq2seq_forward.3} parent=1 // loop_pre_header
      _
    $region3: #{seq2seq_forward.3} parent=1 // loop_header
      %s40 = sphi 0, %s44
      %p41 = scmp.ge.s32.totalorder %s40, 4
      %s50 = sphi 0, %s52
      %s53 = sphi 0, %s50
      %s54 = sphi 0, %s53
      %s70 = sphi 0, %s54
      %s76 = sphi 0, %s78
      %s79 = sphi 0, %s76
      %s80 = sphi 0, %s79
      %s96 = sphi 0, %s80
      %s102 = sphi 0, %s104
      %s105 = sphi 0, %s102
      %s106 = sphi 0, %s105
      %s122 = sphi 0, %s106
      %s128 = sphi 0, %s130
      %s131 = sphi 0, %s128
      %s132 = sphi 0, %s131
      %s148 = sphi 0, %s132
      %s152 = sphi 0, %s152
      %s154 = sphi 0, %s152
      %s155 = sphi 0, %s154
      %s169 = sphi 0, %s155
      %s173 = sphi 0, %s173
      %s175 = sphi 0, %s173
      %s176 = sphi 0, %s175
      %s190 = sphi 0, %s176
      %s194 = sphi 0, %s194
      %s196 = sphi 0, %s194
      %s197 = sphi 0, %s196
      %s211 = sphi 0, %s197
      %s215 = sphi 0, %s215
      %s217 = sphi 0, %s215
      %s218 = sphi 0, %s217
      %s232 = sphi 0, %s218
      %s236 = sphi 0, %s236
      %s238 = sphi 0, %s236
      %s239 = sphi 0, %s238
      %s253 = sphi 0, %s239
      %s257 = sphi 0, %s257
      %s259 = sphi 0, %s257
      %s260 = sphi 0, %s259
      %s274 = sphi 0, %s260
      %s278 = sphi 0, %s278
      %s280 = sphi 0, %s278
      %s281 = sphi 0, %s280
      %s295 = sphi 0, %s281
      %s299 = sphi 0, %s299
      %s301 = sphi 0, %s299
      %s302 = sphi 0, %s301
      %s316 = sphi 0, %s302
      %s320 = sphi 0, %s320
      %s322 = sphi 0, %s320
      %s323 = sphi 0, %s322
      %s337 = sphi 0, %s323
      %s341 = sphi 0, %s341
      %s343 = sphi 0, %s341
      %s344 = sphi 0, %s343
      %s358 = sphi 0, %s344
      %s362 = sphi 0, %s362
      %s364 = sphi 0, %s362
      %s365 = sphi 0, %s364
      %s379 = sphi 0, %s365
      %s383 = sphi 0, %s383
      %s385 = sphi 0, %s383
      %s386 = sphi 0, %s385
      %s400 = sphi 0, %s386
      %s404 = sphi 0, %s404
      %s406 = sphi 0, %s404
      %s407 = sphi 0, %s406
      %s421 = sphi 0, %s407
      %s425 = sphi 0, %s425
      %s427 = sphi 0, %s425
      %s428 = sphi 0, %s427
      %s442 = sphi 0, %s428
      %s446 = sphi 0, %s446
      %s448 = sphi 0, %s446
      %s449 = sphi 0, %s448
      %s463 = sphi 0, %s449
      %s467 = sphi 0, %s467
      %s469 = sphi 0, %s467
      %s470 = sphi 0, %s469
      %s484 = sphi 0, %s470
      %s488 = sphi 0, %s488
      %s490 = sphi 0, %s488
      %s491 = sphi 0, %s490
      %s505 = sphi 0, %s491
      %s509 = sphi 0, %s509
      %s511 = sphi 0, %s509
      %s512 = sphi 0, %s511
      %s526 = sphi 0, %s512
      %s530 = sphi 0, %s530
      %s532 = sphi 0, %s530
      %s533 = sphi 0, %s532
      %s547 = sphi 0, %s533
      %s551 = sphi 0, %s551
      %s553 = sphi 0, %s551
      %s554 = sphi 0, %s553
      %s568 = sphi 0, %s554
      %s572 = sphi 0, %s572
      %s574 = sphi 0, %s572
      %s575 = sphi 0, %s574
      %s589 = sphi 0, %s575
      %s593 = sphi 0, %s593
      %s595 = sphi 0, %s593
      %s596 = sphi 0, %s595
      %s610 = sphi 0, %s596
      %s616 = sphi 0, %s618
      %s619 = sphi 0, %s616
      %s620 = sphi 0, %s619
      %s636 = sphi 0, %s620
      %s642 = sphi 0, %s644
      %s645 = sphi 0, %s642
      %s646 = sphi 0, %s645
      %s662 = sphi 0, %s646
    $region4: #{seq2seq_forward.3} parent=1 // loop_header_branch
      %43 = sbr.rel (%p41) target = $region8
    $region5: #{seq2seq_forward.3} parent=1 // loop_body
      %s45 = ssub.s32 %s40, 1
      %s46 = ssub.s32 %s40, 2
      %s47 = sadd.s32 %s40, 1
      %s48 = ssub.s32 %s40, %s47
      %p49 = scmp.eq.s32.totalorder %s48, 0
      %s51 = sadd.s32 %s50, 1
      %s52 = scalar_select %p49, %s50, %s51
      %p55 = pneg %p49
      %p56 = scmp.eq.s32.totalorder %s40, 1
      %p57 = por %p55, %p56
      %p58 = scmp.ne.s32.totalorder %s50, %s53
      %p59 = scmp.eq.s32.totalorder %s40, 0
      %p60 = por %p58, %p59
      %p61 = scmp.ne.s32.totalorder %s50, %s53
      %p62 = scmp.eq.s32.totalorder %s45, 1
      %p63 = por %p61, %p62
      %p64 = scmp.ne.s32.totalorder %s53, %s54
      %p65 = scmp.eq.s32.totalorder %s45, 0
      %p66 = por %p64, %p65
      %p67 = scmp.ne.s32.totalorder %s53, %s54
      %p68 = scmp.eq.s32.totalorder %s46, 1
      %p69 = por %p67, %p68
      %p71 = scmp.ne.s32.totalorder %s54, %s70
      %p72 = scmp.eq.s32.totalorder %s46, 0
      %p73 = por %p71, %p72
      %s74 = ssub.s32 %s40, %s47
      %p75 = scmp.eq.s32.totalorder %s74, 0
      %s77 = sadd.s32 %s76, 1
      %s78 = scalar_select %p75, %s76, %s77
      %p81 = pneg %p75
      %p82 = scmp.eq.s32.totalorder %s40, 1
      %p83 = por %p81, %p82
      %p84 = scmp.ne.s32.totalorder %s76, %s79
      %p85 = scmp.eq.s32.totalorder %s40, 0
      %p86 = por %p84, %p85
      %p87 = scmp.ne.s32.totalorder %s76, %s79
      %p88 = scmp.eq.s32.totalorder %s45, 1
      %p89 = por %p87, %p88
      %p90 = scmp.ne.s32.totalorder %s79, %s80
      %p91 = scmp.eq.s32.totalorder %s45, 0
      %p92 = por %p90, %p91
      %p93 = scmp.ne.s32.totalorder %s79, %s80
      %p94 = scmp.eq.s32.totalorder %s46, 1
      %p95 = por %p93, %p94
      %p97 = scmp.ne.s32.totalorder %s80, %s96
      %p98 = scmp.eq.s32.totalorder %s46, 0
      %p99 = por %p97, %p98
      %s100 = ssub.s32 %s40, %s47
      %p101 = scmp.eq.s32.totalorder %s100, 0
      %s103 = sadd.s32 %s102, 1
      %s104 = scalar_select %p101, %s102, %s103
      %p107 = pneg %p101
      %p108 = scmp.eq.s32.totalorder %s40, 1
      %p109 = por %p107, %p108
      %p110 = scmp.ne.s32.totalorder %s102, %s105
      %p111 = scmp.eq.s32.totalorder %s40, 0
      %p112 = por %p110, %p111
      %p113 = scmp.ne.s32.totalorder %s102, %s105
      %p114 = scmp.eq.s32.totalorder %s45, 1
      %p115 = por %p113, %p114
      %p116 = scmp.ne.s32.totalorder %s105, %s106
      %p117 = scmp.eq.s32.totalorder %s45, 0
      %p118 = por %p116, %p117
      %p119 = scmp.ne.s32.totalorder %s105, %s106
      %p120 = scmp.eq.s32.totalorder %s46, 1
      %p121 = por %p119, %p120
      %p123 = scmp.ne.s32.totalorder %s106, %s122
      %p124 = scmp.eq.s32.totalorder %s46, 0
      %p125 = por %p123, %p124
      %s126 = ssub.s32 %s40, %s47
      %p127 = scmp.eq.s32.totalorder %s126, 0
      %s129 = sadd.s32 %s128, 1
      %s130 = scalar_select %p127, %s128, %s129
      %p133 = pneg %p127
      %p134 = scmp.eq.s32.totalorder %s40, 1
      %p135 = por %p133, %p134
      %p136 = scmp.ne.s32.totalorder %s128, %s131
      %p137 = scmp.eq.s32.totalorder %s40, 0
      %p138 = por %p136, %p137
      %p139 = scmp.ne.s32.totalorder %s128, %s131
      %p140 = scmp.eq.s32.totalorder %s45, 1
      %p141 = por %p139, %p140
      %p142 = scmp.ne.s32.totalorder %s131, %s132
      %p143 = scmp.eq.s32.totalorder %s45, 0
      %p144 = por %p142, %p143
      %p145 = scmp.ne.s32.totalorder %s131, %s132
      %p146 = scmp.eq.s32.totalorder %s46, 1
      %p147 = por %p145, %p146
      %p149 = scmp.ne.s32.totalorder %s132, %s148
      %p150 = scmp.eq.s32.totalorder %s46, 0
      %p151 = por %p149, %p150
      %s153 = sadd.s32 %s152, 1
      %p156 = scmp.eq.s32.totalorder %s40, 1
      %p157 = scmp.ne.s32.totalorder %s152, %s154
      %p158 = scmp.eq.s32.totalorder %s40, 0
      %p159 = por %p157, %p158
      %p160 = scmp.ne.s32.totalorder %s152, %s154
      %p161 = scmp.eq.s32.totalorder %s45, 1
      %p162 = por %p160, %p161
      %p163 = scmp.ne.s32.totalorder %s154, %s155
      %p164 = scmp.eq.s32.totalorder %s45, 0
      %p165 = por %p163, %p164
      %p166 = scmp.ne.s32.totalorder %s154, %s155
      %p167 = scmp.eq.s32.totalorder %s46, 1
      %p168 = por %p166, %p167
      %p170 = scmp.ne.s32.totalorder %s155, %s169
      %p171 = scmp.eq.s32.totalorder %s46, 0
      %p172 = por %p170, %p171
      %s174 = sadd.s32 %s173, 1
      %p177 = scmp.eq.s32.totalorder %s40, 1
      %p178 = scmp.ne.s32.totalorder %s173, %s175
      %p179 = scmp.eq.s32.totalorder %s40, 0
      %p180 = por %p178, %p179
      %p181 = scmp.ne.s32.totalorder %s173, %s175
      %p182 = scmp.eq.s32.totalorder %s45, 1
      %p183 = por %p181, %p182
      %p184 = scmp.ne.s32.totalorder %s175, %s176
      %p185 = scmp.eq.s32.totalorder %s45, 0
      %p186 = por %p184, %p185
      %p187 = scmp.ne.s32.totalorder %s175, %s176
      %p188 = scmp.eq.s32.totalorder %s46, 1
      %p189 = por %p187, %p188
      %p191 = scmp.ne.s32.totalorder %s176, %s190
      %p192 = scmp.eq.s32.totalorder %s46, 0
      %p193 = por %p191, %p192
      %s195 = sadd.s32 %s194, 1
      %p198 = scmp.eq.s32.totalorder %s40, 1
      %p199 = scmp.ne.s32.totalorder %s194, %s196
      %p200 = scmp.eq.s32.totalorder %s40, 0
      %p201 = por %p199, %p200
      %p202 = scmp.ne.s32.totalorder %s194, %s196
      %p203 = scmp.eq.s32.totalorder %s45, 1
      %p204 = por %p202, %p203
      %p205 = scmp.ne.s32.totalorder %s196, %s197
      %p206 = scmp.eq.s32.totalorder %s45, 0
      %p207 = por %p205, %p206
      %p208 = scmp.ne.s32.totalorder %s196, %s197
      %p209 = scmp.eq.s32.totalorder %s46, 1
      %p210 = por %p208, %p209
      %p212 = scmp.ne.s32.totalorder %s197, %s211
      %p213 = scmp.eq.s32.totalorder %s46, 0
      %p214 = por %p212, %p213
      %s216 = sadd.s32 %s215, 1
      %p219 = scmp.eq.s32.totalorder %s40, 1
      %p220 = scmp.ne.s32.totalorder %s215, %s217
      %p221 = scmp.eq.s32.totalorder %s40, 0
      %p222 = por %p220, %p221
      %p223 = scmp.ne.s32.totalorder %s215, %s217
      %p224 = scmp.eq.s32.totalorder %s45, 1
      %p225 = por %p223, %p224
      %p226 = scmp.ne.s32.totalorder %s217, %s218
      %p227 = scmp.eq.s32.totalorder %s45, 0
      %p228 = por %p226, %p227
      %p229 = scmp.ne.s32.totalorder %s217, %s218
      %p230 = scmp.eq.s32.totalorder %s46, 1
      %p231 = por %p229, %p230
      %p233 = scmp.ne.s32.totalorder %s218, %s232
      %p234 = scmp.eq.s32.totalorder %s46, 0
      %p235 = por %p233, %p234
      %s237 = sadd.s32 %s236, 1
      %p240 = scmp.eq.s32.totalorder %s40, 1
      %p241 = scmp.ne.s32.totalorder %s236, %s238
      %p242 = scmp.eq.s32.totalorder %s40, 0
      %p243 = por %p241, %p242
      %p244 = scmp.ne.s32.totalorder %s236, %s238
      %p245 = scmp.eq.s32.totalorder %s45, 1
      %p246 = por %p244, %p245
      %p247 = scmp.ne.s32.totalorder %s238, %s239
      %p248 = scmp.eq.s32.totalorder %s45, 0
      %p249 = por %p247, %p248
      %p250 = scmp.ne.s32.totalorder %s238, %s239
      %p251 = scmp.eq.s32.totalorder %s46, 1
      %p252 = por %p250, %p251
      %p254 = scmp.ne.s32.totalorder %s239, %s253
      %p255 = scmp.eq.s32.totalorder %s46, 0
      %p256 = por %p254, %p255
      %s258 = sadd.s32 %s257, 1
      %p261 = scmp.eq.s32.totalorder %s40, 1
      %p262 = scmp.ne.s32.totalorder %s257, %s259
      %p263 = scmp.eq.s32.totalorder %s40, 0
      %p264 = por %p262, %p263
      %p265 = scmp.ne.s32.totalorder %s257, %s259
      %p266 = scmp.eq.s32.totalorder %s45, 1
      %p267 = por %p265, %p266
      %p268 = scmp.ne.s32.totalorder %s259, %s260
      %p269 = scmp.eq.s32.totalorder %s45, 0
      %p270 = por %p268, %p269
      %p271 = scmp.ne.s32.totalorder %s259, %s260
      %p272 = scmp.eq.s32.totalorder %s46, 1
      %p273 = por %p271, %p272
      %p275 = scmp.ne.s32.totalorder %s260, %s274
      %p276 = scmp.eq.s32.totalorder %s46, 0
      %p277 = por %p275, %p276
      %s279 = sadd.s32 %s278, 1
      %p282 = scmp.eq.s32.totalorder %s40, 1
      %p283 = scmp.ne.s32.totalorder %s278, %s280
      %p284 = scmp.eq.s32.totalorder %s40, 0
      %p285 = por %p283, %p284
      %p286 = scmp.ne.s32.totalorder %s278, %s280
      %p287 = scmp.eq.s32.totalorder %s45, 1
      %p288 = por %p286, %p287
      %p289 = scmp.ne.s32.totalorder %s280, %s281
      %p290 = scmp.eq.s32.totalorder %s45, 0
      %p291 = por %p289, %p290
      %p292 = scmp.ne.s32.totalorder %s280, %s281
      %p293 = scmp.eq.s32.totalorder %s46, 1
      %p294 = por %p292, %p293
      %p296 = scmp.ne.s32.totalorder %s281, %s295
      %p297 = scmp.eq.s32.totalorder %s46, 0
      %p298 = por %p296, %p297
      %s300 = sadd.s32 %s299, 1
      %p303 = scmp.eq.s32.totalorder %s40, 1
      %p304 = scmp.ne.s32.totalorder %s299, %s301
      %p305 = scmp.eq.s32.totalorder %s40, 0
      %p306 = por %p304, %p305
      %p307 = scmp.ne.s32.totalorder %s299, %s301
      %p308 = scmp.eq.s32.totalorder %s45, 1
      %p309 = por %p307, %p308
      %p310 = scmp.ne.s32.totalorder %s301, %s302
      %p311 = scmp.eq.s32.totalorder %s45, 0
      %p312 = por %p310, %p311
      %p313 = scmp.ne.s32.totalorder %s301, %s302
      %p314 = scmp.eq.s32.totalorder %s46, 1
      %p315 = por %p313, %p314
      %p317 = scmp.ne.s32.totalorder %s302, %s316
      %p318 = scmp.eq.s32.totalorder %s46, 0
      %p319 = por %p317, %p318
      %s321 = sadd.s32 %s320, 1
      %p324 = scmp.eq.s32.totalorder %s40, 1
      %p325 = scmp.ne.s32.totalorder %s320, %s322
      %p326 = scmp.eq.s32.totalorder %s40, 0
      %p327 = por %p325, %p326
      %p328 = scmp.ne.s32.totalorder %s320, %s322
      %p329 = scmp.eq.s32.totalorder %s45, 1
      %p330 = por %p328, %p329
      %p331 = scmp.ne.s32.totalorder %s322, %s323
      %p332 = scmp.eq.s32.totalorder %s45, 0
      %p333 = por %p331, %p332
      %p334 = scmp.ne.s32.totalorder %s322, %s323
      %p335 = scmp.eq.s32.totalorder %s46, 1
      %p336 = por %p334, %p335
      %p338 = scmp.ne.s32.totalorder %s323, %s337
      %p339 = scmp.eq.s32.totalorder %s46, 0
      %p340 = por %p338, %p339
      %s342 = sadd.s32 %s341, 1
      %p345 = scmp.eq.s32.totalorder %s40, 1
      %p346 = scmp.ne.s32.totalorder %s341, %s343
      %p347 = scmp.eq.s32.totalorder %s40, 0
      %p348 = por %p346, %p347
      %p349 = scmp.ne.s32.totalorder %s341, %s343
      %p350 = scmp.eq.s32.totalorder %s45, 1
      %p351 = por %p349, %p350
      %p352 = scmp.ne.s32.totalorder %s343, %s344
      %p353 = scmp.eq.s32.totalorder %s45, 0
      %p354 = por %p352, %p353
      %p355 = scmp.ne.s32.totalorder %s343, %s344
      %p356 = scmp.eq.s32.totalorder %s46, 1
      %p357 = por %p355, %p356
      %p359 = scmp.ne.s32.totalorder %s344, %s358
      %p360 = scmp.eq.s32.totalorder %s46, 0
      %p361 = por %p359, %p360
      %s363 = sadd.s32 %s362, 1
      %p366 = scmp.eq.s32.totalorder %s40, 1
      %p367 = scmp.ne.s32.totalorder %s362, %s364
      %p368 = scmp.eq.s32.totalorder %s40, 0
      %p369 = por %p367, %p368
      %p370 = scmp.ne.s32.totalorder %s362, %s364
      %p371 = scmp.eq.s32.totalorder %s45, 1
      %p372 = por %p370, %p371
      %p373 = scmp.ne.s32.totalorder %s364, %s365
      %p374 = scmp.eq.s32.totalorder %s45, 0
      %p375 = por %p373, %p374
      %p376 = scmp.ne.s32.totalorder %s364, %s365
      %p377 = scmp.eq.s32.totalorder %s46, 1
      %p378 = por %p376, %p377
      %p380 = scmp.ne.s32.totalorder %s365, %s379
      %p381 = scmp.eq.s32.totalorder %s46, 0
      %p382 = por %p380, %p381
      %s384 = sadd.s32 %s383, 1
      %p387 = scmp.eq.s32.totalorder %s40, 1
      %p388 = scmp.ne.s32.totalorder %s383, %s385
      %p389 = scmp.eq.s32.totalorder %s40, 0
      %p390 = por %p388, %p389
      %p391 = scmp.ne.s32.totalorder %s383, %s385
      %p392 = scmp.eq.s32.totalorder %s45, 1
      %p393 = por %p391, %p392
      %p394 = scmp.ne.s32.totalorder %s385, %s386
      %p395 = scmp.eq.s32.totalorder %s45, 0
      %p396 = por %p394, %p395
      %p397 = scmp.ne.s32.totalorder %s385, %s386
      %p398 = scmp.eq.s32.totalorder %s46, 1
      %p399 = por %p397, %p398
      %p401 = scmp.ne.s32.totalorder %s386, %s400
      %p402 = scmp.eq.s32.totalorder %s46, 0
      %p403 = por %p401, %p402
      %s405 = sadd.s32 %s404, 1
      %p408 = scmp.eq.s32.totalorder %s40, 1
      %p409 = scmp.ne.s32.totalorder %s404, %s406
      %p410 = scmp.eq.s32.totalorder %s40, 0
      %p411 = por %p409, %p410
      %p412 = scmp.ne.s32.totalorder %s404, %s406
      %p413 = scmp.eq.s32.totalorder %s45, 1
      %p414 = por %p412, %p413
      %p415 = scmp.ne.s32.totalorder %s406, %s407
      %p416 = scmp.eq.s32.totalorder %s45, 0
      %p417 = por %p415, %p416
      %p418 = scmp.ne.s32.totalorder %s406, %s407
      %p419 = scmp.eq.s32.totalorder %s46, 1
      %p420 = por %p418, %p419
      %p422 = scmp.ne.s32.totalorder %s407, %s421
      %p423 = scmp.eq.s32.totalorder %s46, 0
      %p424 = por %p422, %p423
      %s426 = sadd.s32 %s425, 1
      %p429 = scmp.eq.s32.totalorder %s40, 1
      %p430 = scmp.ne.s32.totalorder %s425, %s427
      %p431 = scmp.eq.s32.totalorder %s40, 0
      %p432 = por %p430, %p431
      %p433 = scmp.ne.s32.totalorder %s425, %s427
      %p434 = scmp.eq.s32.totalorder %s45, 1
      %p435 = por %p433, %p434
      %p436 = scmp.ne.s32.totalorder %s427, %s428
      %p437 = scmp.eq.s32.totalorder %s45, 0
      %p438 = por %p436, %p437
      %p439 = scmp.ne.s32.totalorder %s427, %s428
      %p440 = scmp.eq.s32.totalorder %s46, 1
      %p441 = por %p439, %p440
      %p443 = scmp.ne.s32.totalorder %s428, %s442
      %p444 = scmp.eq.s32.totalorder %s46, 0
      %p445 = por %p443, %p444
      %s447 = sadd.s32 %s446, 1
      %p450 = scmp.eq.s32.totalorder %s40, 1
      %p451 = scmp.ne.s32.totalorder %s446, %s448
      %p452 = scmp.eq.s32.totalorder %s40, 0
      %p453 = por %p451, %p452
      %p454 = scmp.ne.s32.totalorder %s446, %s448
      %p455 = scmp.eq.s32.totalorder %s45, 1
      %p456 = por %p454, %p455
      %p457 = scmp.ne.s32.totalorder %s448, %s449
      %p458 = scmp.eq.s32.totalorder %s45, 0
      %p459 = por %p457, %p458
      %p460 = scmp.ne.s32.totalorder %s448, %s449
      %p461 = scmp.eq.s32.totalorder %s46, 1
      %p462 = por %p460, %p461
      %p464 = scmp.ne.s32.totalorder %s449, %s463
      %p465 = scmp.eq.s32.totalorder %s46, 0
      %p466 = por %p464, %p465
      %s468 = sadd.s32 %s467, 1
      %p471 = scmp.eq.s32.totalorder %s40, 1
      %p472 = scmp.ne.s32.totalorder %s467, %s469
      %p473 = scmp.eq.s32.totalorder %s40, 0
      %p474 = por %p472, %p473
      %p475 = scmp.ne.s32.totalorder %s467, %s469
      %p476 = scmp.eq.s32.totalorder %s45, 1
      %p477 = por %p475, %p476
      %p478 = scmp.ne.s32.totalorder %s469, %s470
      %p479 = scmp.eq.s32.totalorder %s45, 0
      %p480 = por %p478, %p479
      %p481 = scmp.ne.s32.totalorder %s469, %s470
      %p482 = scmp.eq.s32.totalorder %s46, 1
      %p483 = por %p481, %p482
      %p485 = scmp.ne.s32.totalorder %s470, %s484
      %p486 = scmp.eq.s32.totalorder %s46, 0
      %p487 = por %p485, %p486
      %s489 = sadd.s32 %s488, 1
      %p492 = scmp.eq.s32.totalorder %s40, 1
      %p493 = scmp.ne.s32.totalorder %s488, %s490
      %p494 = scmp.eq.s32.totalorder %s40, 0
      %p495 = por %p493, %p494
      %p496 = scmp.ne.s32.totalorder %s488, %s490
      %p497 = scmp.eq.s32.totalorder %s45, 1
      %p498 = por %p496, %p497
      %p499 = scmp.ne.s32.totalorder %s490, %s491
      %p500 = scmp.eq.s32.totalorder %s45, 0
      %p501 = por %p499, %p500
      %p502 = scmp.ne.s32.totalorder %s490, %s491
      %p503 = scmp.eq.s32.totalorder %s46, 1
      %p504 = por %p502, %p503
      %p506 = scmp.ne.s32.totalorder %s491, %s505
      %p507 = scmp.eq.s32.totalorder %s46, 0
      %p508 = por %p506, %p507
      %s510 = sadd.s32 %s509, 1
      %p513 = scmp.eq.s32.totalorder %s40, 1
      %p514 = scmp.ne.s32.totalorder %s509, %s511
      %p515 = scmp.eq.s32.totalorder %s40, 0
      %p516 = por %p514, %p515
      %p517 = scmp.ne.s32.totalorder %s509, %s511
      %p518 = scmp.eq.s32.totalorder %s45, 1
      %p519 = por %p517, %p518
      %p520 = scmp.ne.s32.totalorder %s511, %s512
      %p521 = scmp.eq.s32.totalorder %s45, 0
      %p522 = por %p520, %p521
      %p523 = scmp.ne.s32.totalorder %s511, %s512
      %p524 = scmp.eq.s32.totalorder %s46, 1
      %p525 = por %p523, %p524
      %p527 = scmp.ne.s32.totalorder %s512, %s526
      %p528 = scmp.eq.s32.totalorder %s46, 0
      %p529 = por %p527, %p528
      %s531 = sadd.s32 %s530, 1
      %p534 = scmp.eq.s32.totalorder %s40, 1
      %p535 = scmp.ne.s32.totalorder %s530, %s532
      %p536 = scmp.eq.s32.totalorder %s40, 0
      %p537 = por %p535, %p536
      %p538 = scmp.ne.s32.totalorder %s530, %s532
      %p539 = scmp.eq.s32.totalorder %s45, 1
      %p540 = por %p538, %p539
      %p541 = scmp.ne.s32.totalorder %s532, %s533
      %p542 = scmp.eq.s32.totalorder %s45, 0
      %p543 = por %p541, %p542
      %p544 = scmp.ne.s32.totalorder %s532, %s533
      %p545 = scmp.eq.s32.totalorder %s46, 1
      %p546 = por %p544, %p545
      %p548 = scmp.ne.s32.totalorder %s533, %s547
      %p549 = scmp.eq.s32.totalorder %s46, 0
      %p550 = por %p548, %p549
      %s552 = sadd.s32 %s551, 1
      %p555 = scmp.eq.s32.totalorder %s40, 1
      %p556 = scmp.ne.s32.totalorder %s551, %s553
      %p557 = scmp.eq.s32.totalorder %s40, 0
      %p558 = por %p556, %p557
      %p559 = scmp.ne.s32.totalorder %s551, %s553
      %p560 = scmp.eq.s32.totalorder %s45, 1
      %p561 = por %p559, %p560
      %p562 = scmp.ne.s32.totalorder %s553, %s554
      %p563 = scmp.eq.s32.totalorder %s45, 0
      %p564 = por %p562, %p563
      %p565 = scmp.ne.s32.totalorder %s553, %s554
      %p566 = scmp.eq.s32.totalorder %s46, 1
      %p567 = por %p565, %p566
      %p569 = scmp.ne.s32.totalorder %s554, %s568
      %p570 = scmp.eq.s32.totalorder %s46, 0
      %p571 = por %p569, %p570
      %s573 = sadd.s32 %s572, 1
      %p576 = scmp.eq.s32.totalorder %s40, 1
      %p577 = scmp.ne.s32.totalorder %s572, %s574
      %p578 = scmp.eq.s32.totalorder %s40, 0
      %p579 = por %p577, %p578
      %p580 = scmp.ne.s32.totalorder %s572, %s574
      %p581 = scmp.eq.s32.totalorder %s45, 1
      %p582 = por %p580, %p581
      %p583 = scmp.ne.s32.totalorder %s574, %s575
      %p584 = scmp.eq.s32.totalorder %s45, 0
      %p585 = por %p583, %p584
      %p586 = scmp.ne.s32.totalorder %s574, %s575
      %p587 = scmp.eq.s32.totalorder %s46, 1
      %p588 = por %p586, %p587
      %p590 = scmp.ne.s32.totalorder %s575, %s589
      %p591 = scmp.eq.s32.totalorder %s46, 0
      %p592 = por %p590, %p591
      %s594 = sadd.s32 %s593, 1
      %p597 = scmp.eq.s32.totalorder %s40, 1
      %p598 = scmp.ne.s32.totalorder %s593, %s595
      %p599 = scmp.eq.s32.totalorder %s40, 0
      %p600 = por %p598, %p599
      %p601 = scmp.ne.s32.totalorder %s593, %s595
      %p602 = scmp.eq.s32.totalorder %s45, 1
      %p603 = por %p601, %p602
      %p604 = scmp.ne.s32.totalorder %s595, %s596
      %p605 = scmp.eq.s32.totalorder %s45, 0
      %p606 = por %p604, %p605
      %p607 = scmp.ne.s32.totalorder %s595, %s596
      %p608 = scmp.eq.s32.totalorder %s46, 1
      %p609 = por %p607, %p608
      %p611 = scmp.ne.s32.totalorder %s596, %s610
      %p612 = scmp.eq.s32.totalorder %s46, 0
      %p613 = por %p611, %p612
      %s614 = ssub.s32 %s40, %s47
      %p615 = scmp.eq.s32.totalorder %s614, 0
      %s617 = sadd.s32 %s616, 1
      %s618 = scalar_select %p615, %s616, %s617
      %p621 = pneg %p615
      %p622 = scmp.eq.s32.totalorder %s40, 1
      %p623 = por %p621, %p622
      %p624 = scmp.ne.s32.totalorder %s616, %s619
      %p625 = scmp.eq.s32.totalorder %s40, 0
      %p626 = por %p624, %p625
      %p627 = scmp.ne.s32.totalorder %s616, %s619
      %p628 = scmp.eq.s32.totalorder %s45, 1
      %p629 = por %p627, %p628
      %p630 = scmp.ne.s32.totalorder %s619, %s620
      %p631 = scmp.eq.s32.totalorder %s45, 0
      %p632 = por %p630, %p631
      %p633 = scmp.ne.s32.totalorder %s619, %s620
      %p634 = scmp.eq.s32.totalorder %s46, 1
      %p635 = por %p633, %p634
      %p637 = scmp.ne.s32.totalorder %s620, %s636
      %p638 = scmp.eq.s32.totalorder %s46, 0
      %p639 = por %p637, %p638
      %s640 = ssub.s32 %s40, %s47
      %p641 = scmp.eq.s32.totalorder %s640, 0
      %s643 = sadd.s32 %s642, 1
      %s644 = scalar_select %p641, %s642, %s643
      %p647 = pneg %p641
      %p648 = scmp.eq.s32.totalorder %s40, 1
      %p649 = por %p647, %p648
      %p650 = scmp.ne.s32.totalorder %s642, %s645
      %p651 = scmp.eq.s32.totalorder %s40, 0
      %p652 = por %p650, %p651
      %p653 = scmp.ne.s32.totalorder %s642, %s645
      %p654 = scmp.eq.s32.totalorder %s45, 1
      %p655 = por %p653, %p654
      %p656 = scmp.ne.s32.totalorder %s645, %s646
      %p657 = scmp.eq.s32.totalorder %s45, 0
      %p658 = por %p656, %p657
      %p659 = scmp.ne.s32.totalorder %s645, %s646
      %p660 = scmp.eq.s32.totalorder %s46, 1
      %p661 = por %p659, %p660
      %p663 = scmp.ne.s32.totalorder %s646, %s662
      %p664 = scmp.eq.s32.totalorder %s46, 0
      %p665 = por %p663, %p664
      %p666 = scmp.le.s32.totalorder 1, %s40
      %p667 = scmp.lt.s32.totalorder %s40, 3
      %p668 = pnand %p666, %p667
      %p669 = pneg %p668
      // Predicated region
      $region9: #{seq2seq_forward.3} parent=5 // pred_check
        _
      $region10: #{seq2seq_forward.3} parent=5 // pred_check_branch
        %671 = sbr.rel (%p668) target = $region12
      $region11: #{seq2seq_forward.3} parent=5 // pred_region
        %s672 = ssub.s32 %s40, 1
        // Predicated region
        $region13: #{seq2seq_forward.3} parent=11 // pred_check
          %p673 = pneg %p165
        $region14: #{seq2seq_forward.3} parent=11 // pred_check_branch
          %675 = sbr.rel (%p673) target = $region16
        $region15: #{seq2seq_forward.3} parent=11 // pred_region
          _
        $region16: #{seq2seq_forward.3} parent=11 // pred_fallthru
          _
        // Predicated region
        $region17: #{seq2seq_forward.3} parent=11 // pred_check
          %p676 = pneg %p186
        $region18: #{seq2seq_forward.3} parent=11 // pred_check_branch
          %678 = sbr.rel (%p676) target = $region20
        $region19: #{seq2seq_forward.3} parent=11 // pred_region
          _
        $region20: #{seq2seq_forward.3} parent=11 // pred_fallthru
          _
        // Predicated region
        $region21: #{seq2seq_forward.3} parent=11 // pred_check
          %p679 = pneg %p207
        $region22: #{seq2seq_forward.3} parent=11 // pred_check_branch
          %681 = sbr.rel (%p679) target = $region24
        $region23: #{seq2seq_forward.3} parent=11 // pred_region
          _
        $region24: #{seq2seq_forward.3} parent=11 // pred_fallthru
          _
        // Predicated region
        $region25: #{seq2seq_forward.3} parent=11 // pred_check
          %p682 = pneg %p228
        $region26: #{seq2seq_forward.3} parent=11 // pred_check_branch
          %684 = sbr.rel (%p682) target = $region28
        $region27: #{seq2seq_forward.3} parent=11 // pred_region
          _
        $region28: #{seq2seq_forward.3} parent=11 // pred_fallthru
          _
        // Predicated region
        $region29: #{seq2seq_forward.3} parent=11 // pred_check
          %p685 = pneg %p249
        $region30: #{seq2seq_forward.3} parent=11 // pred_check_branch
          %687 = sbr.rel (%p685) target = $region32
        $region31: #{seq2seq_forward.3} parent=11 // pred_region
          _
        $region32: #{seq2seq_forward.3} parent=11 // pred_fallthru
          _
        // Predicated region
        $region33: #{seq2seq_forward.3} parent=11 // pred_check
          %p688 = pneg %p270
        $region34: #{seq2seq_forward.3} parent=11 // pred_check_branch
          %690 = sbr.rel (%p688) target = $region36
        $region35: #{seq2seq_forward.3} parent=11 // pred_region
          _
        $region36: #{seq2seq_forward.3} parent=11 // pred_fallthru
          _
        // Predicated region
        $region37: #{seq2seq_forward.3} parent=11 // pred_check
          %p691 = pneg %p291
        $region38: #{seq2seq_forward.3} parent=11 // pred_check_branch
          %693 = sbr.rel (%p691) target = $region40
        $region39: #{seq2seq_forward.3} parent=11 // pred_region
          _
        $region40: #{seq2seq_forward.3} parent=11 // pred_fallthru
          _
        // Predicated region
        $region41: #{seq2seq_forward.3} parent=11 // pred_check
          %p694 = pneg %p312
        $region42: #{seq2seq_forward.3} parent=11 // pred_check_branch
          %696 = sbr.rel (%p694) target = $region44
        $region43: #{seq2seq_forward.3} parent=11 // pred_region
          _
        $region44: #{seq2seq_forward.3} parent=11 // pred_fallthru
          _
        // Predicated region
        $region45: #{seq2seq_forward.3} parent=11 // pred_check
          %p697 = pneg %p333
        $region46: #{seq2seq_forward.3} parent=11 // pred_check_branch
          %699 = sbr.rel (%p697) target = $region48
        $region47: #{seq2seq_forward.3} parent=11 // pred_region
          _
        $region48: #{seq2seq_forward.3} parent=11 // pred_fallthru
          _
        // Predicated region
        $region49: #{seq2seq_forward.3} parent=11 // pred_check
          %p700 = pneg %p354
        $region50: #{seq2seq_forward.3} parent=11 // pred_check_branch
          %702 = sbr.rel (%p700) target = $region52
        $region51: #{seq2seq_forward.3} parent=11 // pred_region
          _
        $region52: #{seq2seq_forward.3} parent=11 // pred_fallthru
          _
        // Predicated region
        $region53: #{seq2seq_forward.3} parent=11 // pred_check
          %p703 = pneg %p375
        $region54: #{seq2seq_forward.3} parent=11 // pred_check_branch
          %705 = sbr.rel (%p703) target = $region56
        $region55: #{seq2seq_forward.3} parent=11 // pred_region
          _
        $region56: #{seq2seq_forward.3} parent=11 // pred_fallthru
          _
        // Predicated region
        $region57: #{seq2seq_forward.3} parent=11 // pred_check
          %p706 = pneg %p396
        $region58: #{seq2seq_forward.3} parent=11 // pred_check_branch
          %708 = sbr.rel (%p706) target = $region60
        $region59: #{seq2seq_forward.3} parent=11 // pred_region
          _
        $region60: #{seq2seq_forward.3} parent=11 // pred_fallthru
          _
        // Predicated region
        $region61: #{seq2seq_forward.3} parent=11 // pred_check
          %p709 = pneg %p417
        $region62: #{seq2seq_forward.3} parent=11 // pred_check_branch
          %711 = sbr.rel (%p709) target = $region64
        $region63: #{seq2seq_forward.3} parent=11 // pred_region
          _
        $region64: #{seq2seq_forward.3} parent=11 // pred_fallthru
          _
        // Predicated region
        $region65: #{seq2seq_forward.3} parent=11 // pred_check
          %p712 = pneg %p438
        $region66: #{seq2seq_forward.3} parent=11 // pred_check_branch
          %714 = sbr.rel (%p712) target = $region68
        $region67: #{seq2seq_forward.3} parent=11 // pred_region
          _
        $region68: #{seq2seq_forward.3} parent=11 // pred_fallthru
          _
        // Predicated region
        $region69: #{seq2seq_forward.3} parent=11 // pred_check
          %p715 = pneg %p459
        $region70: #{seq2seq_forward.3} parent=11 // pred_check_branch
          %717 = sbr.rel (%p715) target = $region72
        $region71: #{seq2seq_forward.3} parent=11 // pred_region
          _
        $region72: #{seq2seq_forward.3} parent=11 // pred_fallthru
          _
        // Predicated region
        $region73: #{seq2seq_forward.3} parent=11 // pred_check
          %p718 = pneg %p480
        $region74: #{seq2seq_forward.3} parent=11 // pred_check_branch
          %720 = sbr.rel (%p718) target = $region76
        $region75: #{seq2seq_forward.3} parent=11 // pred_region
          _
        $region76: #{seq2seq_forward.3} parent=11 // pred_fallthru
          _
        // Predicated region
        $region77: #{seq2seq_forward.3} parent=11 // pred_check
          %p721 = pneg %p501
        $region78: #{seq2seq_forward.3} parent=11 // pred_check_branch
          %723 = sbr.rel (%p721) target = $region80
        $region79: #{seq2seq_forward.3} parent=11 // pred_region
          _
        $region80: #{seq2seq_forward.3} parent=11 // pred_fallthru
          _
        // Predicated region
        $region81: #{seq2seq_forward.3} parent=11 // pred_check
          %p724 = pneg %p522
        $region82: #{seq2seq_forward.3} parent=11 // pred_check_branch
          %726 = sbr.rel (%p724) target = $region84
        $region83: #{seq2seq_forward.3} parent=11 // pred_region
          _
        $region84: #{seq2seq_forward.3} parent=11 // pred_fallthru
          _
        // Predicated region
        $region85: #{seq2seq_forward.3} parent=11 // pred_check
          %p727 = pneg %p543
        $region86: #{seq2seq_forward.3} parent=11 // pred_check_branch
          %729 = sbr.rel (%p727) target = $region88
        $region87: #{seq2seq_forward.3} parent=11 // pred_region
          _
        $region88: #{seq2seq_forward.3} parent=11 // pred_fallthru
          _
        // Predicated region
        $region89: #{seq2seq_forward.3} parent=11 // pred_check
          %p730 = pneg %p564
        $region90: #{seq2seq_forward.3} parent=11 // pred_check_branch
          %732 = sbr.rel (%p730) target = $region92
        $region91: #{seq2seq_forward.3} parent=11 // pred_region
          _
        $region92: #{seq2seq_forward.3} parent=11 // pred_fallthru
          _
        // Predicated region
        $region93: #{seq2seq_forward.3} parent=11 // pred_check
          %p733 = pneg %p585
        $region94: #{seq2seq_forward.3} parent=11 // pred_check_branch
          %735 = sbr.rel (%p733) target = $region96
        $region95: #{seq2seq_forward.3} parent=11 // pred_region
          _
        $region96: #{seq2seq_forward.3} parent=11 // pred_fallthru
          _
        // Predicated region
        $region97: #{seq2seq_forward.3} parent=11 // pred_check
          %p736 = pneg %p606
        $region98: #{seq2seq_forward.3} parent=11 // pred_check_branch
          %738 = sbr.rel (%p736) target = $region100
        $region99: #{seq2seq_forward.3} parent=11 // pred_region
          _
        $region100: #{seq2seq_forward.3} parent=11 // pred_fallthru
          _
      $region12: #{seq2seq_forward.3} parent=5 // pred_fallthru
        _
      %p739 = scmp.lt.s32.totalorder %s40, 2
      // Predicated region
      $region101: #{seq2seq_forward.3} parent=5 // pred_check
        %p740 = pneg %p739
      $region102: #{seq2seq_forward.3} parent=5 // pred_check_branch
        %742 = sbr.rel (%p740) target = $region104
      $region103: #{seq2seq_forward.3} parent=5 // pred_region
        // Predicated region
        $region105: #{seq2seq_forward.3} parent=103 // pred_check
          %p743 = pneg %p60
        $region106: #{seq2seq_forward.3} parent=103 // pred_check_branch
          %745 = sbr.rel (%p743) target = $region108
        $region107: #{seq2seq_forward.3} parent=103 // pred_region
          %p746 = scmp.lt.s32.totalorder %s40, 1
          %s747 = scalar_select %p746, %s40, 1
          %s748 = smul.addr %s747, 8
          %s749 = scalar_lea.vmem %s0, %s748
        $region108: #{seq2seq_forward.3} parent=103 // pred_fallthru
          _
        // Predicated region
        $region109: #{seq2seq_forward.3} parent=103 // pred_check
          %p750 = pneg %p86
        $region110: #{seq2seq_forward.3} parent=103 // pred_check_branch
          %752 = sbr.rel (%p750) target = $region112
        $region111: #{seq2seq_forward.3} parent=103 // pred_region
          %p753 = scmp.lt.s32.totalorder %s40, 1
          %s754 = scalar_select %p753, %s40, 1
          %s755 = smul.addr %s754, 2
          %s756 = smul.addr %s755, 8
          %s757 = scalar_lea.vmem %s1, %s756
        $region112: #{seq2seq_forward.3} parent=103 // pred_fallthru
          _
        // Predicated region
        $region113: #{seq2seq_forward.3} parent=103 // pred_check
          %p758 = pneg %p112
        $region114: #{seq2seq_forward.3} parent=103 // pred_check_branch
          %760 = sbr.rel (%p758) target = $region116
        $region115: #{seq2seq_forward.3} parent=103 // pred_region
          %p761 = scmp.lt.s32.totalorder %s40, 1
          %s762 = scalar_select %p761, %s40, 1
          %s763 = smul.addr %s762, 8
          %s764 = scalar_lea.vmem %s2, %s763
        $region116: #{seq2seq_forward.3} parent=103 // pred_fallthru
          _
        // Predicated region
        $region117: #{seq2seq_forward.3} parent=103 // pred_check
          %p765 = pneg %p138
        $region118: #{seq2seq_forward.3} parent=103 // pred_check_branch
          %767 = sbr.rel (%p765) target = $region120
        $region119: #{seq2seq_forward.3} parent=103 // pred_region
          %p768 = scmp.lt.s32.totalorder %s40, 1
          %s769 = scalar_select %p768, %s40, 1
          %s770 = scalar_lea.vmem %s3, %s769
        $region120: #{seq2seq_forward.3} parent=103 // pred_fallthru
          _
      $region104: #{seq2seq_forward.3} parent=5 // pred_fallthru
        _
      %p771 = scmp.le.s32.totalorder 1, %s40
      %p772 = scmp.lt.s32.totalorder %s40, 3
      %p773 = pnand %p771, %p772
      %p774 = pneg %p773
      // Predicated region
      $region121: #{seq2seq_forward.3} parent=5 // pred_check
        _
      $region122: #{seq2seq_forward.3} parent=5 // pred_check_branch
        %776 = sbr.rel (%p773) target = $region124
      $region123: #{seq2seq_forward.3} parent=5 // pred_region
        %s777 = ssub.s32 %s40, 1
        %p778 = scmp.lt.s32.totalorder %s45, 1
        %s779 = scalar_select %p778, %s45, 1
        %s780 = smul.addr %s779, 8
        %s781 = scalar_lea.vmem %s0, %s780
        %p782 = pneg %p66
        %p783 = pneg %p63
        %p784 = scmp.lt.s32.totalorder %s45, 1
        %s785 = scalar_select %p784, %s45, 1
        %s786 = smul.addr %s785, 2
        %s787 = smul.addr %s786, 8
        %s788 = scalar_lea.vmem %s1, %s787
        %p789 = pneg %p92
        %p790 = pneg %p89
        %p791 = scmp.lt.s32.totalorder %s45, 1
        %s792 = scalar_select %p791, %s45, 1
        %s793 = smul.addr %s792, 8
        %s794 = scalar_lea.vmem %s2, %s793
        %p795 = pneg %p118
        %p796 = pneg %p115
        %p797 = scmp.lt.s32.totalorder %s45, 1
        %s798 = scalar_select %p797, %s45, 1
        %s799 = scalar_lea.vmem %s3, %s798
        %p800 = pneg %p144
        %p801 = pneg %p141
        %p802 = pneg %p165
        %p803 = pneg %p162
        %p804 = pneg %p186
        %p805 = pneg %p183
        %p806 = pneg %p207
        %p807 = pneg %p204
        %p808 = pneg %p228
        %p809 = pneg %p225
        %p810 = pneg %p249
        %p811 = pneg %p246
        %p812 = pneg %p270
        %p813 = pneg %p267
        %p814 = pneg %p291
        %p815 = pneg %p288
        %p816 = pneg %p312
        %p817 = pneg %p309
        %p818 = pneg %p333
        %p819 = pneg %p330
        %p820 = pneg %p354
        %p821 = pneg %p351
        %p822 = pneg %p375
        %p823 = pneg %p372
        %p824 = pneg %p396
        %p825 = pneg %p393
        %p826 = pneg %p417
        %p827 = pneg %p414
        %p828 = pneg %p438
        %p829 = pneg %p435
        %p830 = pneg %p459
        %p831 = pneg %p456
        %p832 = pneg %p480
        %p833 = pneg %p477
        %p834 = pneg %p501
        %p835 = pneg %p498
        %p836 = pneg %p522
        %p837 = pneg %p519
        %p838 = pneg %p543
        %p839 = pneg %p540
        %p840 = pneg %p564
        %p841 = pneg %p561
        %p842 = pneg %p585
        %p843 = pneg %p582
        %p844 = pneg %p606
        %p845 = pneg %p603
        %p846 = pneg %p632
        %p847 = pneg %p629
        %s848 = sand.u32 %s619, 1
        %s849 = scalar_lea.sflag [#allocation3], %s848
        %s850 = sand.u32 %s619, 1
        %s851 = smul.addr %s850, 8
        %s852 = scalar_lea.vmem [#allocation2], %s851
        %p853 = pneg %p658
        %p854 = pneg %p655
        %s855 = sand.u32 %s645, 1
        %s856 = scalar_lea.sflag [#allocation5], %s855
        %s857 = sand.u32 %s645, 1
        %s858 = smul.addr %s857, 32
        %s859 = scalar_lea.vmem [#allocation4], %s858
        %p860 = scmp.lt.s32.totalorder %s45, 1
        %s861 = scalar_select %p860, %s45, 1
        %s862 = smul.addr %s861, 8
        %s863 = scalar_lea.vmem %s0, %s862
        %p864 = scmp.lt.s32.totalorder %s45, 1
        %s865 = scalar_select %p864, %s45, 1
        %s866 = smul.addr %s865, 2
        %s867 = smul.addr %s866, 8
        %s868 = scalar_lea.vmem %s1, %s867
        %p869 = scmp.lt.s32.totalorder %s45, 1
        %s870 = scalar_select %p869, %s45, 1
        %s871 = smul.addr %s870, 8
        %s872 = scalar_lea.vmem %s2, %s871
        %p873 = scmp.lt.s32.totalorder %s45, 1
        %s874 = scalar_select %p873, %s45, 1
        %s875 = scalar_lea.vmem %s3, %s874
        %v876 = vld [vmem:[%s863] sm:$0xff]
        %v877 = vld [vmem:[%s868] sm:$0xff]
        %v878 = vld [vmem:[%s868 + $0x8] sm:$0x3]
        %v879 = vld [vmem:[%s872] sm:$0xff]
        %v880 = vld [vmem:[%s875] sm:$0x1]
        %v881 = vld [vmem:[%s4] sm:$0xff]
        %v882 = vld [vmem:[%s4 + $0x8] sm:$0xff]
        %v883 = vld [vmem:[%s4 + $0x10] sm:$0xff]
        %v884 = vld [vmem:[%s4 + $0x18] sm:$0xff]
        %v885 = vld [vmem:[%s5] sm:$0x1]
        %v887 = vlaneseq
        %v888 = vshrl.u32 %v887, 7
        %v889 = vsub.s32 0, %v888
        %v890 = vrot.slane %v885, %v889
        %vm892 = vcmask 261120
        %v894 = vsel %vm892, %v876, 0
        %896 = vmatprep.subr.mxu0 0.0
        %897 = vmatpush1.msra.mxu0 %v881
        %898 = vmatprep.subr.mxu0 0.0
        %899 = vmatpush1.msra.mxu0 %v882
        %900 = vmatprep.subr.mxu0 0.0
        %901 = vmatpush1.msra.mxu0 %v883
        %902 = vmatprep.subr.mxu0 0.0
        %903 = vmatpush1.msra.mxu0 %v884
        %904 = vmatprep.subr.mxu0 0.0
        %905 = vmatpush1.msra.mxu0 0.0
        %906 = vmatprep.subr.mxu0 0.0
        %907 = vmatpush1.msra.mxu0 0.0
        %908 = vmatprep.subr.mxu0 0.0
        %909 = vmatpush1.msra.mxu0 0.0
        %910 = vmatprep.subr.mxu0 0.0
        %911 = vmatpush1.msra.mxu0 0.0
        %912 = vmatprep.subr.mxu0 0.0
        %913 = vmatpush1.msra.mxu0 0.0
        %914 = vmatprep.subr.mxu0 0.0
        %915 = vmatpush1.msra.mxu0 0.0
        %916 = vmatprep.subr.mxu0 0.0
        %917 = vmatpush1.msra.mxu0 0.0
        %918 = vmatprep.subr.mxu0 0.0
        %919 = vmatpush1.msra.mxu0 0.0
        %920 = vmatprep.subr.mxu0 0.0
        %921 = vmatpush1.msra.mxu0 0.0
        %922 = vmatprep.subr.mxu0 0.0
        %923 = vmatpush1.msra.mxu0 0.0
        %924 = vmatprep.subr.mxu0 0.0
        %925 = vmatpush1.msra.mxu0 0.0
        %926 = vmatprep.subr.mxu0 0.0
        %927 = vmatpush1.msra.mxu0 0.0
        %928 = vmatprep.subr.mxu0 0.0
        %929 = vmatpush1.msra.mxu0 0.0
        %930 = vmatprep.subr.mxu0 0.0
        %931 = vmatpush1.msra.mxu0 0.0
        %932 = vmatprep.subr.mxu0 0.0
        %933 = vmatpush1.msra.mxu0 0.0
        %934 = vmatprep.subr.mxu0 0.0
        %935 = vmatpush1.msra.mxu0 0.0
        %936 = vmatprep.subr.mxu0 0.0
        %937 = vmatpush1.msra.mxu0 0.0
        %938 = vmatprep.subr.mxu0 0.0
        %939 = vmatpush1.msra.mxu0 0.0
        %940 = vmatprep.subr.mxu0 0.0
        %941 = vmatpush1.msra.mxu0 0.0
        %942 = vmatprep.subr.mxu0 0.0
        %943 = vmatpush1.msra.mxu0 0.0
        %944 = vmatprep.subr.mxu0 0.0
        %945 = vmatpush1.msra.mxu0 0.0
        %946 = vmatprep.subr.mxu0 0.0
        %947 = vmatpush1.msra.mxu0 0.0
        %948 = vmatprep.subr.mxu0 0.0
        %949 = vmatpush1.msra.mxu0 0.0
        %950 = vmatprep.subr.mxu0 0.0
        %951 = vmatpush1.msra.mxu0 0.0
        %952 = vmatprep.subr.mxu0 0.0
        %953 = vmatpush1.msra.mxu0 0.0
        %954 = vmatprep.subr.mxu0 0.0
        %955 = vmatpush1.msra.mxu0 0.0
        %956 = vmatprep.subr.mxu0 0.0
        %957 = vmatpush1.msra.mxu0 0.0
        %958 = vmatprep.subr.mxu0 0.0
        %959 = vmatpush1.msra.mxu0 0.0
        %960 = vmatprep.mubr.f32.mxu0 0.0
        %961 = vmatmul.mubr.f32.gmra.mrb[0].mxu0 %v894
        %v962 = vpop.f32.mrb[0].mxu0
        %v963 = vadd.f32 %v890, %v962
        %v964 = vpop.f32.mrb[0].mxu0
        %965 = vdwg.mxu0
        %v966 = vmul.f32 %v963, 0.35355338
        %968 = vrot.lane.b32.xlu0 %v963, 96
        %v969 = vpop.permute.xlu0 %968
        %vm970 = vcmask 64512
        %v972 = vsel %vm970, %v966, 0
        %v974 = vsel %vm970, %v969, 0
        %976 = vmatprep.subr.mxu0 0.0
        %977 = vmatpush1.xpose.msra.mxu0 %v974
        %978 = vmatprep.subr.mxu0 0.0
        %979 = vmatpush1.xpose.msra.mxu0 0.0
        %980 = vmatprep.subr.mxu0 0.0
        %981 = vmatpush1.xpose.msra.mxu0 0.0
        %982 = vmatprep.subr.mxu0 0.0
        %983 = vmatpush1.xpose.msra.mxu0 0.0
        %984 = vmatprep.subr.mxu0 0.0
        %985 = vmatpush1.xpose.msra.mxu0 0.0
        %986 = vmatprep.subr.mxu0 0.0
        %987 = vmatpush1.xpose.msra.mxu0 0.0
        %988 = vmatprep.subr.mxu0 0.0
        %989 = vmatpush1.xpose.msra.mxu0 0.0
        %990 = vmatprep.subr.mxu0 0.0
        %991 = vmatpush1.xpose.msra.mxu0 0.0
        %992 = vmatprep.subr.mxu0 0.0
        %993 = vmatpush1.xpose.msra.mxu0 0.0
        %994 = vmatprep.subr.mxu0 0.0
        %995 = vmatpush1.xpose.msra.mxu0 0.0
        %996 = vmatprep.subr.mxu0 0.0
        %997 = vmatpush1.xpose.msra.mxu0 0.0
        %998 = vmatprep.subr.mxu0 0.0
        %999 = vmatpush1.xpose.msra.mxu0 0.0
        %1000 = vmatprep.subr.mxu0 0.0
        %1001 = vmatpush1.xpose.msra.mxu0 0.0
        %1002 = vmatprep.subr.mxu0 0.0
        %1003 = vmatpush1.xpose.msra.mxu0 0.0
        %1004 = vmatprep.subr.mxu0 0.0
        %1005 = vmatpush1.xpose.msra.mxu0 0.0
        %1006 = vmatprep.subr.mxu0 0.0
        %1007 = vmatpush1.xpose.msra.mxu0 0.0
        %1008 = vmatprep.subr.mxu0 0.0
        %1009 = vmatpush1.xpose.msra.mxu0 0.0
        %1010 = vmatprep.subr.mxu0 0.0
        %1011 = vmatpush1.xpose.msra.mxu0 0.0
        %1012 = vmatprep.subr.mxu0 0.0
        %1013 = vmatpush1.xpose.msra.mxu0 0.0
        %1014 = vmatprep.subr.mxu0 0.0
        %1015 = vmatpush1.xpose.msra.mxu0 0.0
        %1016 = vmatprep.subr.mxu0 0.0
        %1017 = vmatpush1.xpose.msra.mxu0 0.0
        %1018 = vmatprep.subr.mxu0 0.0
        %1019 = vmatpush1.xpose.msra.mxu0 0.0
        %1020 = vmatprep.subr.mxu0 0.0
        %1021 = vmatpush1.xpose.msra.mxu0 0.0
        %1022 = vmatprep.subr.mxu0 0.0
        %1023 = vmatpush1.xpose.msra.mxu0 0.0
        %1024 = vmatprep.subr.mxu0 0.0
        %1025 = vmatpush1.xpose.msra.mxu0 0.0
        %1026 = vmatprep.subr.mxu0 0.0
        %1027 = vmatpush1.xpose.msra.mxu0 0.0
        %1028 = vmatprep.subr.mxu0 0.0
        %1029 = vmatpush1.xpose.msra.mxu0 0.0
        %1030 = vmatprep.subr.mxu0 0.0
        %1031 = vmatpush1.xpose.msra.mxu0 0.0
        %1032 = vmatprep.subr.mxu0 0.0
        %1033 = vmatpush1.xpose.msra.mxu0 0.0
        %1034 = vmatprep.subr.mxu0 0.0
        %1035 = vmatpush1.xpose.msra.mxu0 0.0
        %1036 = vmatprep.subr.mxu0 0.0
        %1037 = vmatpush1.xpose.msra.mxu0 0.0
        %1038 = vmatprep.subr.mxu0 0.0
        %1039 = vmatpush1.xpose.msra.mxu0 0.0
        %1040 = vmatprep.mubr.f32.mxu0 0.0
        %1041 = vmatmul.mubr.f32.gmra.mrb[0].mxu0 %v972
        %v1042 = vpop.f32.mrb[0].mxu0
        %v1043 = vadd.f32 0.0, %v1042
        %v1044 = vpop.f32.mrb[0].mxu0
        %1045 = vdwg.mxu0
        %vm1046 = vcmp.ne.s32.totalorder %v879, 0
        %v1047 = vsel %vm1046, %v1043, -1e+10
        %v1048 = vsel %vm970, %v1047, -inf
        %1049 = vmax.xlane.f32.xlu0 %v1048
        %v1050 = vpop.xlane.xlu0 %1049
        %v1051 = vsub.f32 %v1047, %v1050
        %v1052 = vmul.f32 %v1051, 1.442695
        %v1053 = vpow.pop %v1052
        %v1054 = vsel %vm970, %v1053, 0.0
        %1055 = vadd.xlane.f32.xlu0 %v1054
        %v1056 = vpop.xlane.xlu0 %1055
        %v1057 = vrcp.pop %v1056
        %v1058 = vmul.f32 %v1053, %v1057
        %1059 = vrot.lane.b32.xlu0 %v963, 64
        %v1060 = vpop.permute.xlu0 %1059
        %v1063 = vsel %vm970, %v1058, 0
        %1065 = vmatprep.subr.mxu0 0.0
        %1066 = vmatpush1.msra.mxu0 %v1060
        %1067 = vmatprep.subr.mxu0 0.0
        %1068 = vmatpush1.msra.mxu0 0.0
        %1069 = vmatprep.subr.mxu0 0.0
        %1070 = vmatpush1.msra.mxu0 0.0
        %1071 = vmatprep.subr.mxu0 0.0
        %1072 = vmatpush1.msra.mxu0 0.0
        %1073 = vmatprep.subr.mxu0 0.0
        %1074 = vmatpush1.msra.mxu0 0.0
        %1075 = vmatprep.subr.mxu0 0.0
        %1076 = vmatpush1.msra.mxu0 0.0
        %1077 = vmatprep.subr.mxu0 0.0
        %1078 = vmatpush1.msra.mxu0 0.0
        %1079 = vmatprep.subr.mxu0 0.0
        %1080 = vmatpush1.msra.mxu0 0.0
        %1081 = vmatprep.subr.mxu0 0.0
        %1082 = vmatpush1.msra.mxu0 0.0
        %1083 = vmatprep.subr.mxu0 0.0
        %1084 = vmatpush1.msra.mxu0 0.0
        %1085 = vmatprep.subr.mxu0 0.0
        %1086 = vmatpush1.msra.mxu0 0.0
        %1087 = vmatprep.subr.mxu0 0.0
        %1088 = vmatpush1.msra.mxu0 0.0
        %1089 = vmatprep.subr.mxu0 0.0
        %1090 = vmatpush1.msra.mxu0 0.0
        %1091 = vmatprep.subr.mxu0 0.0
        %1092 = vmatpush1.msra.mxu0 0.0
        %1093 = vmatprep.subr.mxu0 0.0
        %1094 = vmatpush1.msra.mxu0 0.0
        %1095 = vmatprep.subr.mxu0 0.0
        %1096 = vmatpush1.msra.mxu0 0.0
        %1097 = vmatprep.subr.mxu0 0.0
        %1098 = vmatpush1.msra.mxu0 0.0
        %1099 = vmatprep.subr.mxu0 0.0
        %1100 = vmatpush1.msra.mxu0 0.0
        %1101 = vmatprep.subr.mxu0 0.0
        %1102 = vmatpush1.msra.mxu0 0.0
        %1103 = vmatprep.subr.mxu0 0.0
        %1104 = vmatpush1.msra.mxu0 0.0
        %1105 = vmatprep.subr.mxu0 0.0
        %1106 = vmatpush1.msra.mxu0 0.0
        %1107 = vmatprep.subr.mxu0 0.0
        %1108 = vmatpush1.msra.mxu0 0.0
        %1109 = vmatprep.subr.mxu0 0.0
        %1110 = vmatpush1.msra.mxu0 0.0
        %1111 = vmatprep.subr.mxu0 0.0
        %1112 = vmatpush1.msra.mxu0 0.0
        %1113 = vmatprep.subr.mxu0 0.0
        %1114 = vmatpush1.msra.mxu0 0.0
        %1115 = vmatprep.subr.mxu0 0.0
        %1116 = vmatpush1.msra.mxu0 0.0
        %1117 = vmatprep.subr.mxu0 0.0
        %1118 = vmatpush1.msra.mxu0 0.0
        %1119 = vmatprep.subr.mxu0 0.0
        %1120 = vmatpush1.msra.mxu0 0.0
        %1121 = vmatprep.subr.mxu0 0.0
        %1122 = vmatpush1.msra.mxu0 0.0
        %1123 = vmatprep.subr.mxu0 0.0
        %1124 = vmatpush1.msra.mxu0 0.0
        %1125 = vmatprep.subr.mxu0 0.0
        %1126 = vmatpush1.msra.mxu0 0.0
        %1127 = vmatprep.subr.mxu0 0.0
        %1128 = vmatpush1.msra.mxu0 0.0
        %1129 = vmatprep.mubr.f32.mxu0 0.0
        %1130 = vmatmul.mubr.f32.gmra.mrb[0].mxu0 %v1063
        %v1131 = vpop.f32.mrb[0].mxu0
        %v1132 = vadd.f32 0.0, %v1131
        %v1133 = vpop.f32.mrb[0].mxu0
        %1134 = vdwg.mxu0
        %1135 = vrot.lane.b32.xlu0 %v966, 120
        %v1136 = vpop.permute.xlu0 %1135
        %1137 = vrot.lane.b32.xlu0 %v963, 88
        %v1138 = vpop.permute.xlu0 %1137
        %v1139 = vsel %vm970, %v1136, 0
        %v1141 = vsel %vm970, %v1138, 0
        %1143 = vmatprep.subr.mxu0 0.0
        %1144 = vmatpush1.xpose.msra.mxu0 %v1141
        %1145 = vmatprep.subr.mxu0 0.0
        %1146 = vmatpush1.xpose.msra.mxu0 0.0
        %1147 = vmatprep.subr.mxu0 0.0
        %1148 = vmatpush1.xpose.msra.mxu0 0.0
        %1149 = vmatprep.subr.mxu0 0.0
        %1150 = vmatpush1.xpose.msra.mxu0 0.0
        %1151 = vmatprep.subr.mxu0 0.0
        %1152 = vmatpush1.xpose.msra.mxu0 0.0
        %1153 = vmatprep.subr.mxu0 0.0
        %1154 = vmatpush1.xpose.msra.mxu0 0.0
        %1155 = vmatprep.subr.mxu0 0.0
        %1156 = vmatpush1.xpose.msra.mxu0 0.0
        %1157 = vmatprep.subr.mxu0 0.0
        %1158 = vmatpush1.xpose.msra.mxu0 0.0
        %1159 = vmatprep.subr.mxu0 0.0
        %1160 = vmatpush1.xpose.msra.mxu0 0.0
        %1161 = vmatprep.subr.mxu0 0.0
        %1162 = vmatpush1.xpose.msra.mxu0 0.0
        %1163 = vmatprep.subr.mxu0 0.0
        %1164 = vmatpush1.xpose.msra.mxu0 0.0
        %1165 = vmatprep.subr.mxu0 0.0
        %1166 = vmatpush1.xpose.msra.mxu0 0.0
        %1167 = vmatprep.subr.mxu0 0.0
        %1168 = vmatpush1.xpose.msra.mxu0 0.0
        %1169 = vmatprep.subr.mxu0 0.0
        %1170 = vmatpush1.xpose.msra.mxu0 0.0
        %1171 = vmatprep.subr.mxu0 0.0
        %1172 = vmatpush1.xpose.msra.mxu0 0.0
        %1173 = vmatprep.subr.mxu0 0.0
        %1174 = vmatpush1.xpose.msra.mxu0 0.0
        %1175 = vmatprep.subr.mxu0 0.0
        %1176 = vmatpush1.xpose.msra.mxu0 0.0
        %1177 = vmatprep.subr.mxu0 0.0
        %1178 = vmatpush1.xpose.msra.mxu0 0.0
        %1179 = vmatprep.subr.mxu0 0.0
        %1180 = vmatpush1.xpose.msra.mxu0 0.0
        %1181 = vmatprep.subr.mxu0 0.0
        %1182 = vmatpush1.xpose.msra.mxu0 0.0
        %1183 = vmatprep.subr.mxu0 0.0
        %1184 = vmatpush1.xpose.msra.mxu0 0.0
        %1185 = vmatprep.subr.mxu0 0.0
        %1186 = vmatpush1.xpose.msra.mxu0 0.0
        %1187 = vmatprep.subr.mxu0 0.0
        %1188 = vmatpush1.xpose.msra.mxu0 0.0
        %1189 = vmatprep.subr.mxu0 0.0
        %1190 = vmatpush1.xpose.msra.mxu0 0.0
        %1191 = vmatprep.subr.mxu0 0.0
        %1192 = vmatpush1.xpose.msra.mxu0 0.0
        %1193 = vmatprep.subr.mxu0 0.0
        %1194 = vmatpush1.xpose.msra.mxu0 0.0
        %1195 = vmatprep.subr.mxu0 0.0
        %1196 = vmatpush1.xpose.msra.mxu0 0.0
        %1197 = vmatprep.subr.mxu0 0.0
        %1198 = vmatpush1.xpose.msra.mxu0 0.0
        %1199 = vmatprep.subr.mxu0 0.0
        %1200 = vmatpush1.xpose.msra.mxu0 0.0
        %1201 = vmatprep.subr.mxu0 0.0
        %1202 = vmatpush1.xpose.msra.mxu0 0.0
        %1203 = vmatprep.subr.mxu0 0.0
        %1204 = vmatpush1.xpose.msra.mxu0 0.0
        %1205 = vmatprep.subr.mxu0 0.0
        %1206 = vmatpush1.xpose.msra.mxu0 0.0
        %1207 = vmatprep.mubr.f32.mxu0 0.0
        %1208 = vmatmul.mubr.f32.gmra.mrb[0].mxu0 %v1139
        %v1209 = vpop.f32.mrb[0].mxu0
        %v1210 = vadd.f32 0.0, %v1209
        %v1211 = vpop.f32.mrb[0].mxu0
        %1212 = vdwg.mxu0
        %v1213 = vsel %vm1046, %v1210, -1e+10
        %v1214 = vsel %vm970, %v1213, -inf
        %1215 = vmax.xlane.f32.xlu0 %v1214
        %v1216 = vpop.xlane.xlu0 %1215
        %v1217 = vsub.f32 %v1213, %v1216
        %v1218 = vmul.f32 %v1217, 1.442695
        %v1219 = vpow.pop %v1218
        %v1220 = vsel %vm970, %v1219, 0.0
        %1221 = vadd.xlane.f32.xlu0 %v1220
        %v1222 = vpop.xlane.xlu0 %1221
        %v1223 = vrcp.pop %v1222
        %v1224 = vmul.f32 %v1219, %v1223
        %1225 = vrot.lane.b32.xlu0 %v963, 56
        %v1226 = vpop.permute.xlu0 %1225
        %v1229 = vsel %vm970, %v1224, 0
        %1231 = vmatprep.subr.mxu0 0.0
        %1232 = vmatpush1.msra.mxu0 %v1226
        %1233 = vmatprep.subr.mxu0 0.0
        %1234 = vmatpush1.msra.mxu0 0.0
        %1235 = vmatprep.subr.mxu0 0.0
        %1236 = vmatpush1.msra.mxu0 0.0
        %1237 = vmatprep.subr.mxu0 0.0
        %1238 = vmatpush1.msra.mxu0 0.0
        %1239 = vmatprep.subr.mxu0 0.0
        %1240 = vmatpush1.msra.mxu0 0.0
        %1241 = vmatprep.subr.mxu0 0.0
        %1242 = vmatpush1.msra.mxu0 0.0
        %1243 = vmatprep.subr.mxu0 0.0
        %1244 = vmatpush1.msra.mxu0 0.0
        %1245 = vmatprep.subr.mxu0 0.0
        %1246 = vmatpush1.msra.mxu0 0.0
        %1247 = vmatprep.subr.mxu0 0.0
        %1248 = vmatpush1.msra.mxu0 0.0
        %1249 = vmatprep.subr.mxu0 0.0
        %1250 = vmatpush1.msra.mxu0 0.0
        %1251 = vmatprep.subr.mxu0 0.0
        %1252 = vmatpush1.msra.mxu0 0.0
        %1253 = vmatprep.subr.mxu0 0.0
        %1254 = vmatpush1.msra.mxu0 0.0
        %1255 = vmatprep.subr.mxu0 0.0
        %1256 = vmatpush1.msra.mxu0 0.0
        %1257 = vmatprep.subr.mxu0 0.0
        %1258 = vmatpush1.msra.mxu0 0.0
        %1259 = vmatprep.subr.mxu0 0.0
        %1260 = vmatpush1.msra.mxu0 0.0
        %1261 = vmatprep.subr.mxu0 0.0
        %1262 = vmatpush1.msra.mxu0 0.0
        %1263 = vmatprep.subr.mxu0 0.0
        %1264 = vmatpush1.msra.mxu0 0.0
        %1265 = vmatprep.subr.mxu0 0.0
        %1266 = vmatpush1.msra.mxu0 0.0
        %1267 = vmatprep.subr.mxu0 0.0
        %1268 = vmatpush1.msra.mxu0 0.0
        %1269 = vmatprep.subr.mxu0 0.0
        %1270 = vmatpush1.msra.mxu0 0.0
        %1271 = vmatprep.subr.mxu0 0.0
        %1272 = vmatpush1.msra.mxu0 0.0
        %1273 = vmatprep.subr.mxu0 0.0
        %1274 = vmatpush1.msra.mxu0 0.0
        %1275 = vmatprep.subr.mxu0 0.0
        %1276 = vmatpush1.msra.mxu0 0.0
        %1277 = vmatprep.subr.mxu0 0.0
        %1278 = vmatpush1.msra.mxu0 0.0
        %1279 = vmatprep.subr.mxu0 0.0
        %1280 = vmatpush1.msra.mxu0 0.0
        %1281 = vmatprep.subr.mxu0 0.0
        %1282 = vmatpush1.msra.mxu0 0.0
        %1283 = vmatprep.subr.mxu0 0.0
        %1284 = vmatpush1.msra.mxu0 0.0
        %1285 = vmatprep.subr.mxu0 0.0
        %1286 = vmatpush1.msra.mxu0 0.0
        %1287 = vmatprep.subr.mxu0 0.0
        %1288 = vmatpush1.msra.mxu0 0.0
        %1289 = vmatprep.subr.mxu0 0.0
        %1290 = vmatpush1.msra.mxu0 0.0
        %1291 = vmatprep.subr.mxu0 0.0
        %1292 = vmatpush1.msra.mxu0 0.0
        %1293 = vmatprep.subr.mxu0 0.0
        %1294 = vmatpush1.msra.mxu0 0.0
        %1295 = vmatprep.mubr.f32.mxu0 0.0
        %1296 = vmatmul.mubr.f32.gmra.mrb[0].mxu0 %v1229
        %v1297 = vpop.f32.mrb[0].mxu0
        %v1298 = vadd.f32 0.0, %v1297
        %v1299 = vpop.f32.mrb[0].mxu0
        %1300 = vdwg.mxu0
        %1301 = vrot.lane.b32.xlu0 %v966, 112
        %v1302 = vpop.permute.xlu0 %1301
        %1303 = vrot.lane.b32.xlu0 %v963, 80
        %v1304 = vpop.permute.xlu0 %1303
        %v1305 = vsel %vm970, %v1302, 0
        %v1307 = vsel %vm970, %v1304, 0
        %1309 = vmatprep.subr.mxu0 0.0
        %1310 = vmatpush1.xpose.msra.mxu0 %v1307
        %1311 = vmatprep.subr.mxu0 0.0
        %1312 = vmatpush1.xpose.msra.mxu0 0.0
        %1313 = vmatprep.subr.mxu0 0.0
        %1314 = vmatpush1.xpose.msra.mxu0 0.0
        %1315 = vmatprep.subr.mxu0 0.0
        %1316 = vmatpush1.xpose.msra.mxu0 0.0
        %1317 = vmatprep.subr.mxu0 0.0
        %1318 = vmatpush1.xpose.msra.mxu0 0.0
        %1319 = vmatprep.subr.mxu0 0.0
        %1320 = vmatpush1.xpose.msra.mxu0 0.0
        %1321 = vmatprep.subr.mxu0 0.0
        %1322 = vmatpush1.xpose.msra.mxu0 0.0
        %1323 = vmatprep.subr.mxu0 0.0
        %1324 = vmatpush1.xpose.msra.mxu0 0.0
        %1325 = vmatprep.subr.mxu0 0.0
        %1326 = vmatpush1.xpose.msra.mxu0 0.0
        %1327 = vmatprep.subr.mxu0 0.0
        %1328 = vmatpush1.xpose.msra.mxu0 0.0
        %1329 = vmatprep.subr.mxu0 0.0
        %1330 = vmatpush1.xpose.msra.mxu0 0.0
        %1331 = vmatprep.subr.mxu0 0.0
        %1332 = vmatpush1.xpose.msra.mxu0 0.0
        %1333 = vmatprep.subr.mxu0 0.0
        %1334 = vmatpush1.xpose.msra.mxu0 0.0
        %1335 = vmatprep.subr.mxu0 0.0
        %1336 = vmatpush1.xpose.msra.mxu0 0.0
        %1337 = vmatprep.subr.mxu0 0.0
        %1338 = vmatpush1.xpose.msra.mxu0 0.0
        %1339 = vmatprep.subr.mxu0 0.0
        %1340 = vmatpush1.xpose.msra.mxu0 0.0
        %1341 = vmatprep.subr.mxu0 0.0
        %1342 = vmatpush1.xpose.msra.mxu0 0.0
        %1343 = vmatprep.subr.mxu0 0.0
        %1344 = vmatpush1.xpose.msra.mxu0 0.0
        %1345 = vmatprep.subr.mxu0 0.0
        %1346 = vmatpush1.xpose.msra.mxu0 0.0
        %1347 = vmatprep.subr.mxu0 0.0
        %1348 = vmatpush1.xpose.msra.mxu0 0.0
        %1349 = vmatprep.subr.mxu0 0.0
        %1350 = vmatpush1.xpose.msra.mxu0 0.0
        %1351 = vmatprep.subr.mxu0 0.0
        %1352 = vmatpush1.xpose.msra.mxu0 0.0
        %1353 = vmatprep.subr.mxu0 0.0
        %1354 = vmatpush1.xpose.msra.mxu0 0.0
        %1355 = vmatprep.subr.mxu0 0.0
        %1356 = vmatpush1.xpose.msra.mxu0 0.0
        %1357 = vmatprep.subr.mxu0 0.0
        %1358 = vmatpush1.xpose.msra.mxu0 0.0
        %1359 = vmatprep.subr.mxu0 0.0
        %1360 = vmatpush1.xpose.msra.mxu0 0.0
        %1361 = vmatprep.subr.mxu0 0.0
        %1362 = vmatpush1.xpose.msra.mxu0 0.0
        %1363 = vmatprep.subr.mxu0 0.0
        %1364 = vmatpush1.xpose.msra.mxu0 0.0
        %1365 = vmatprep.subr.mxu0 0.0
        %1366 = vmatpush1.xpose.msra.mxu0 0.0
        %1367 = vmatprep.subr.mxu0 0.0
        %1368 = vmatpush1.xpose.msra.mxu0 0.0
        %1369 = vmatprep.subr.mxu0 0.0
        %1370 = vmatpush1.xpose.msra.mxu0 0.0
        %1371 = vmatprep.subr.mxu0 0.0
        %1372 = vmatpush1.xpose.msra.mxu0 0.0
        %1373 = vmatprep.mubr.f32.mxu0 0.0
        %1374 = vmatmul.mubr.f32.gmra.mrb[0].mxu0 %v1305
        %v1375 = vpop.f32.mrb[0].mxu0
        %v1376 = vadd.f32 0.0, %v1375
        %v1377 = vpop.f32.mrb[0].mxu0
        %1378 = vdwg.mxu0
        %v1379 = vsel %vm1046, %v1376, -1e+10
        %v1380 = vsel %vm970, %v1379, -inf
        %1381 = vmax.xlane.f32.xlu0 %v1380
        %v1382 = vpop.xlane.xlu0 %1381
        %v1383 = vsub.f32 %v1379, %v1382
        %v1384 = vmul.f32 %v1383, 1.442695
        %v1385 = vpow.pop %v1384
        %v1386 = vsel %vm970, %v1385, 0.0
        %1387 = vadd.xlane.f32.xlu0 %v1386
        %v1388 = vpop.xlane.xlu0 %1387
        %v1389 = vrcp.pop %v1388
        %v1390 = vmul.f32 %v1385, %v1389
        %1391 = vrot.lane.b32.xlu0 %v963, 48
        %v1392 = vpop.permute.xlu0 %1391
        %v1395 = vsel %vm970, %v1390, 0
        %1397 = vmatprep.subr.mxu0 0.0
        %1398 = vmatpush1.msra.mxu0 %v1392
        %1399 = vmatprep.subr.mxu0 0.0
        %1400 = vmatpush1.msra.mxu0 0.0
        %1401 = vmatprep.subr.mxu0 0.0
        %1402 = vmatpush1.msra.mxu0 0.0
        %1403 = vmatprep.subr.mxu0 0.0
        %1404 = vmatpush1.msra.mxu0 0.0
        %1405 = vmatprep.subr.mxu0 0.0
        %1406 = vmatpush1.msra.mxu0 0.0
        %1407 = vmatprep.subr.mxu0 0.0
        %1408 = vmatpush1.msra.mxu0 0.0
        %1409 = vmatprep.subr.mxu0 0.0
        %1410 = vmatpush1.msra.mxu0 0.0
        %1411 = vmatprep.subr.mxu0 0.0
        %1412 = vmatpush1.msra.mxu0 0.0
        %1413 = vmatprep.subr.mxu0 0.0
        %1414 = vmatpush1.msra.mxu0 0.0
        %1415 = vmatprep.subr.mxu0 0.0
        %1416 = vmatpush1.msra.mxu0 0.0
        %1417 = vmatprep.subr.mxu0 0.0
        %1418 = vmatpush1.msra.mxu0 0.0
        %1419 = vmatprep.subr.mxu0 0.0
        %1420 = vmatpush1.msra.mxu0 0.0
        %1421 = vmatprep.subr.mxu0 0.0
        %1422 = vmatpush1.msra.mxu0 0.0
        %1423 = vmatprep.subr.mxu0 0.0
        %1424 = vmatpush1.msra.mxu0 0.0
        %1425 = vmatprep.subr.mxu0 0.0
        %1426 = vmatpush1.msra.mxu0 0.0
        %1427 = vmatprep.subr.mxu0 0.0
        %1428 = vmatpush1.msra.mxu0 0.0
        %1429 = vmatprep.subr.mxu0 0.0
        %1430 = vmatpush1.msra.mxu0 0.0
        %1431 = vmatprep.subr.mxu0 0.0
        %1432 = vmatpush1.msra.mxu0 0.0
        %1433 = vmatprep.subr.mxu0 0.0
        %1434 = vmatpush1.msra.mxu0 0.0
        %1435 = vmatprep.subr.mxu0 0.0
        %1436 = vmatpush1.msra.mxu0 0.0
        %1437 = vmatprep.subr.mxu0 0.0
        %1438 = vmatpush1.msra.mxu0 0.0
        %1439 = vmatprep.subr.mxu0 0.0
        %1440 = vmatpush1.msra.mxu0 0.0
        %1441 = vmatprep.subr.mxu0 0.0
        %1442 = vmatpush1.msra.mxu0 0.0
        %1443 = vmatprep.subr.mxu0 0.0
        %1444 = vmatpush1.msra.mxu0 0.0
        %1445 = vmatprep.subr.mxu0 0.0
        %1446 = vmatpush1.msra.mxu0 0.0
        %1447 = vmatprep.subr.mxu0 0.0
        %1448 = vmatpush1.msra.mxu0 0.0
        %1449 = vmatprep.subr.mxu0 0.0
        %1450 = vmatpush1.msra.mxu0 0.0
        %1451 = vmatprep.subr.mxu0 0.0
        %1452 = vmatpush1.msra.mxu0 0.0
        %1453 = vmatprep.subr.mxu0 0.0
        %1454 = vmatpush1.msra.mxu0 0.0
        %1455 = vmatprep.subr.mxu0 0.0
        %1456 = vmatpush1.msra.mxu0 0.0
        %1457 = vmatprep.subr.mxu0 0.0
        %1458 = vmatpush1.msra.mxu0 0.0
        %1459 = vmatprep.subr.mxu0 0.0
        %1460 = vmatpush1.msra.mxu0 0.0
        %1461 = vmatprep.mubr.f32.mxu0 0.0
        %1462 = vmatmul.mubr.f32.gmra.mrb[0].mxu0 %v1395
        %v1463 = vpop.f32.mrb[0].mxu0
        %v1464 = vadd.f32 0.0, %v1463
        %v1465 = vpop.f32.mrb[0].mxu0
        %1466 = vdwg.mxu0
        %1467 = vrot.lane.b32.xlu0 %v966, 104
        %v1468 = vpop.permute.xlu0 %1467
        %1469 = vrot.lane.b32.xlu0 %v963, 72
        %v1470 = vpop.permute.xlu0 %1469
        %v1471 = vsel %vm970, %v1468, 0
        %v1473 = vsel %vm970, %v1470, 0
        %1475 = vmatprep.subr.mxu0 0.0
        %1476 = vmatpush1.xpose.msra.mxu0 %v1473
        %1477 = vmatprep.subr.mxu0 0.0
        %1478 = vmatpush1.xpose.msra.mxu0 0.0
        %1479 = vmatprep.subr.mxu0 0.0
        %1480 = vmatpush1.xpose.msra.mxu0 0.0
        %1481 = vmatprep.subr.mxu0 0.0
        %1482 = vmatpush1.xpose.msra.mxu0 0.0
        %1483 = vmatprep.subr.mxu0 0.0
        %1484 = vmatpush1.xpose.msra.mxu0 0.0
        %1485 = vmatprep.subr.mxu0 0.0
        %1486 = vmatpush1.xpose.msra.mxu0 0.0
        %1487 = vmatprep.subr.mxu0 0.0
        %1488 = vmatpush1.xpose.msra.mxu0 0.0
        %1489 = vmatprep.subr.mxu0 0.0
        %1490 = vmatpush1.xpose.msra.mxu0 0.0
        %1491 = vmatprep.subr.mxu0 0.0
        %1492 = vmatpush1.xpose.msra.mxu0 0.0
        %1493 = vmatprep.subr.mxu0 0.0
        %1494 = vmatpush1.xpose.msra.mxu0 0.0
        %1495 = vmatprep.subr.mxu0 0.0
        %1496 = vmatpush1.xpose.msra.mxu0 0.0
        %1497 = vmatprep.subr.mxu0 0.0
        %1498 = vmatpush1.xpose.msra.mxu0 0.0
        %1499 = vmatprep.subr.mxu0 0.0
        %1500 = vmatpush1.xpose.msra.mxu0 0.0
        %1501 = vmatprep.subr.mxu0 0.0
        %1502 = vmatpush1.xpose.msra.mxu0 0.0
        %1503 = vmatprep.subr.mxu0 0.0
        %1504 = vmatpush1.xpose.msra.mxu0 0.0
        %1505 = vmatprep.subr.mxu0 0.0
        %1506 = vmatpush1.xpose.msra.mxu0 0.0
        %1507 = vmatprep.subr.mxu0 0.0
        %1508 = vmatpush1.xpose.msra.mxu0 0.0
        %1509 = vmatprep.subr.mxu0 0.0
        %1510 = vmatpush1.xpose.msra.mxu0 0.0
        %1511 = vmatprep.subr.mxu0 0.0
        %1512 = vmatpush1.xpose.msra.mxu0 0.0
        %1513 = vmatprep.subr.mxu0 0.0
        %1514 = vmatpush1.xpose.msra.mxu0 0.0
        %1515 = vmatprep.subr.mxu0 0.0
        %1516 = vmatpush1.xpose.msra.mxu0 0.0
        %1517 = vmatprep.subr.mxu0 0.0
        %1518 = vmatpush1.xpose.msra.mxu0 0.0
        %1519 = vmatprep.subr.mxu0 0.0
        %1520 = vmatpush1.xpose.msra.mxu0 0.0
        %1521 = vmatprep.subr.mxu0 0.0
        %1522 = vmatpush1.xpose.msra.mxu0 0.0
        %1523 = vmatprep.subr.mxu0 0.0
        %1524 = vmatpush1.xpose.msra.mxu0 0.0
        %1525 = vmatprep.subr.mxu0 0.0
        %1526 = vmatpush1.xpose.msra.mxu0 0.0
        %1527 = vmatprep.subr.mxu0 0.0
        %1528 = vmatpush1.xpose.msra.mxu0 0.0
        %1529 = vmatprep.subr.mxu0 0.0
        %1530 = vmatpush1.xpose.msra.mxu0 0.0
        %1531 = vmatprep.subr.mxu0 0.0
        %1532 = vmatpush1.xpose.msra.mxu0 0.0
        %1533 = vmatprep.subr.mxu0 0.0
        %1534 = vmatpush1.xpose.msra.mxu0 0.0
        %1535 = vmatprep.subr.mxu0 0.0
        %1536 = vmatpush1.xpose.msra.mxu0 0.0
        %1537 = vmatprep.subr.mxu0 0.0
        %1538 = vmatpush1.xpose.msra.mxu0 0.0
        %1539 = vmatprep.mubr.f32.mxu0 0.0
        %1540 = vmatmul.mubr.f32.gmra.mrb[0].mxu0 %v1471
        %v1541 = vpop.f32.mrb[0].mxu0
        %v1542 = vadd.f32 0.0, %v1541
        %v1543 = vpop.f32.mrb[0].mxu0
        %1544 = vdwg.mxu0
        %v1545 = vsel %vm1046, %v1542, -1e+10
        %v1546 = vsel %vm970, %v1545, -inf
        %1547 = vmax.xlane.f32.xlu0 %v1546
        %v1548 = vpop.xlane.xlu0 %1547
        %v1549 = vsub.f32 %v1545, %v1548
        %v1550 = vmul.f32 %v1549, 1.442695
        %v1551 = vpow.pop %v1550
        %v1552 = vsel %vm970, %v1551, 0.0
        %1553 = vadd.xlane.f32.xlu0 %v1552
        %v1554 = vpop.xlane.xlu0 %1553
        %v1555 = vrcp.pop %v1554
        %v1556 = vmul.f32 %v1551, %v1555
        %1557 = vrot.lane.b32.xlu0 %v963, 40
        %v1558 = vpop.permute.xlu0 %1557
        %v1561 = vsel %vm970, %v1556, 0
        %1563 = vmatprep.subr.mxu0 0.0
        %1564 = vmatpush1.msra.mxu0 %v1558
        %1565 = vmatprep.subr.mxu0 0.0
        %1566 = vmatpush1.msra.mxu0 0.0
        %1567 = vmatprep.subr.mxu0 0.0
        %1568 = vmatpush1.msra.mxu0 0.0
        %1569 = vmatprep.subr.mxu0 0.0
        %1570 = vmatpush1.msra.mxu0 0.0
        %1571 = vmatprep.subr.mxu0 0.0
        %1572 = vmatpush1.msra.mxu0 0.0
        %1573 = vmatprep.subr.mxu0 0.0
        %1574 = vmatpush1.msra.mxu0 0.0
        %1575 = vmatprep.subr.mxu0 0.0
        %1576 = vmatpush1.msra.mxu0 0.0
        %1577 = vmatprep.subr.mxu0 0.0
        %1578 = vmatpush1.msra.mxu0 0.0
        %1579 = vmatprep.subr.mxu0 0.0
        %1580 = vmatpush1.msra.mxu0 0.0
        %1581 = vmatprep.subr.mxu0 0.0
        %1582 = vmatpush1.msra.mxu0 0.0
        %1583 = vmatprep.subr.mxu0 0.0
        %1584 = vmatpush1.msra.mxu0 0.0
        %1585 = vmatprep.subr.mxu0 0.0
        %1586 = vmatpush1.msra.mxu0 0.0
        %1587 = vmatprep.subr.mxu0 0.0
        %1588 = vmatpush1.msra.mxu0 0.0
        %1589 = vmatprep.subr.mxu0 0.0
        %1590 = vmatpush1.msra.mxu0 0.0
        %1591 = vmatprep.subr.mxu0 0.0
        %1592 = vmatpush1.msra.mxu0 0.0
        %1593 = vmatprep.subr.mxu0 0.0
        %1594 = vmatpush1.msra.mxu0 0.0
        %1595 = vmatprep.subr.mxu0 0.0
        %1596 = vmatpush1.msra.mxu0 0.0
        %1597 = vmatprep.subr.mxu0 0.0
        %1598 = vmatpush1.msra.mxu0 0.0
        %1599 = vmatprep.subr.mxu0 0.0
        %1600 = vmatpush1.msra.mxu0 0.0
        %1601 = vmatprep.subr.mxu0 0.0
        %1602 = vmatpush1.msra.mxu0 0.0
        %1603 = vmatprep.subr.mxu0 0.0
        %1604 = vmatpush1.msra.mxu0 0.0
        %1605 = vmatprep.subr.mxu0 0.0
        %1606 = vmatpush1.msra.mxu0 0.0
        %1607 = vmatprep.subr.mxu0 0.0
        %1608 = vmatpush1.msra.mxu0 0.0
        %1609 = vmatprep.subr.mxu0 0.0
        %1610 = vmatpush1.msra.mxu0 0.0
        %1611 = vmatprep.subr.mxu0 0.0
        %1612 = vmatpush1.msra.mxu0 0.0
        %1613 = vmatprep.subr.mxu0 0.0
        %1614 = vmatpush1.msra.mxu0 0.0
        %1615 = vmatprep.subr.mxu0 0.0
        %1616 = vmatpush1.msra.mxu0 0.0
        %1617 = vmatprep.subr.mxu0 0.0
        %1618 = vmatpush1.msra.mxu0 0.0
        %1619 = vmatprep.subr.mxu0 0.0
        %1620 = vmatpush1.msra.mxu0 0.0
        %1621 = vmatprep.subr.mxu0 0.0
        %1622 = vmatpush1.msra.mxu0 0.0
        %1623 = vmatprep.subr.mxu0 0.0
        %1624 = vmatpush1.msra.mxu0 0.0
        %1625 = vmatprep.subr.mxu0 0.0
        %1626 = vmatpush1.msra.mxu0 0.0
        %1627 = vmatprep.mubr.f32.mxu0 0.0
        %1628 = vmatmul.mubr.f32.gmra.mrb[0].mxu0 %v1561
        %v1629 = vpop.f32.mrb[0].mxu0
        %v1630 = vadd.f32 0.0, %v1629
        %v1631 = vpop.f32.mrb[0].mxu0
        %1632 = vdwg.mxu0
        %1634 = vrot.lane.b32.xlu0 %v1298, 8
        %v1635 = vpop.permute.xlu0 %1634
        %1638 = vrot.lane.b32.xlu0 %v1464, 16
        %v1639 = vpop.permute.xlu0 %1638
        %1642 = vrot.lane.b32.xlu0 %v1630, 24
        %v1643 = vpop.permute.xlu0 %1642
        %v1645 = vsel %vm970, %v1132, %v1635
        %vm1646 = vcmask 130048
        %v1647 = vsel %vm1646, %v1645, %v1639
        %vm1648 = vcmask 195584
        %v1649 = vsel %vm1648, %v1647, %v1643
        %v1650 = vld [vmem:[%s6] sm:$0xff]
        %v1651 = vld [vmem:[%s6 + $0x8] sm:$0xff]
        %v1652 = vld [vmem:[%s6 + $0x10] sm:$0xff]
        %v1653 = vld [vmem:[%s6 + $0x18] sm:$0xff]
        %v1654 = vld [vmem:[%s7] sm:$0x1]
        %v1656 = vlaneseq
        %v1657 = vshrl.u32 %v1656, 7
        %v1658 = vsub.s32 0, %v1657
        %v1659 = vrot.slane %v1654, %v1658
        %v1662 = vsel %vm892, %v1649, 0
        %1664 = vmatprep.subr.mxu0 0.0
        %1665 = vmatpush1.msra.mxu0 %v1650
        %1666 = vmatprep.subr.mxu0 0.0
        %1667 = vmatpush1.msra.mxu0 %v1651
        %1668 = vmatprep.subr.mxu0 0.0
        %1669 = vmatpush1.msra.mxu0 %v1652
        %1670 = vmatprep.subr.mxu0 0.0
        %1671 = vmatpush1.msra.mxu0 %v1653
        %1672 = vmatprep.subr.mxu0 0.0
        %1673 = vmatpush1.msra.mxu0 0.0
        %1674 = vmatprep.subr.mxu0 0.0
        %1675 = vmatpush1.msra.mxu0 0.0
        %1676 = vmatprep.subr.mxu0 0.0
        %1677 = vmatpush1.msra.mxu0 0.0
        %1678 = vmatprep.subr.mxu0 0.0
        %1679 = vmatpush1.msra.mxu0 0.0
        %1680 = vmatprep.subr.mxu0 0.0
        %1681 = vmatpush1.msra.mxu0 0.0
        %1682 = vmatprep.subr.mxu0 0.0
        %1683 = vmatpush1.msra.mxu0 0.0
        %1684 = vmatprep.subr.mxu0 0.0
        %1685 = vmatpush1.msra.mxu0 0.0
        %1686 = vmatprep.subr.mxu0 0.0
        %1687 = vmatpush1.msra.mxu0 0.0
        %1688 = vmatprep.subr.mxu0 0.0
        %1689 = vmatpush1.msra.mxu0 0.0
        %1690 = vmatprep.subr.mxu0 0.0
        %1691 = vmatpush1.msra.mxu0 0.0
        %1692 = vmatprep.subr.mxu0 0.0
        %1693 = vmatpush1.msra.mxu0 0.0
        %1694 = vmatprep.subr.mxu0 0.0
        %1695 = vmatpush1.msra.mxu0 0.0
        %1696 = vmatprep.subr.mxu0 0.0
        %1697 = vmatpush1.msra.mxu0 0.0
        %1698 = vmatprep.subr.mxu0 0.0
        %1699 = vmatpush1.msra.mxu0 0.0
        %1700 = vmatprep.subr.mxu0 0.0
        %1701 = vmatpush1.msra.mxu0 0.0
        %1702 = vmatprep.subr.mxu0 0.0
        %1703 = vmatpush1.msra.mxu0 0.0
        %1704 = vmatprep.subr.mxu0 0.0
        %1705 = vmatpush1.msra.mxu0 0.0
        %1706 = vmatprep.subr.mxu0 0.0
        %1707 = vmatpush1.msra.mxu0 0.0
        %1708 = vmatprep.subr.mxu0 0.0
        %1709 = vmatpush1.msra.mxu0 0.0
        %1710 = vmatprep.subr.mxu0 0.0
        %1711 = vmatpush1.msra.mxu0 0.0
        %1712 = vmatprep.subr.mxu0 0.0
        %1713 = vmatpush1.msra.mxu0 0.0
        %1714 = vmatprep.subr.mxu0 0.0
        %1715 = vmatpush1.msra.mxu0 0.0
        %1716 = vmatprep.subr.mxu0 0.0
        %1717 = vmatpush1.msra.mxu0 0.0
        %1718 = vmatprep.subr.mxu0 0.0
        %1719 = vmatpush1.msra.mxu0 0.0
        %1720 = vmatprep.subr.mxu0 0.0
        %1721 = vmatpush1.msra.mxu0 0.0
        %1722 = vmatprep.subr.mxu0 0.0
        %1723 = vmatpush1.msra.mxu0 0.0
        %1724 = vmatprep.subr.mxu0 0.0
        %1725 = vmatpush1.msra.mxu0 0.0
        %1726 = vmatprep.subr.mxu0 0.0
        %1727 = vmatpush1.msra.mxu0 0.0
        %1728 = vmatprep.mubr.f32.mxu0 0.0
        %1729 = vmatmul.mubr.f32.gmra.mrb[0].mxu0 %v1662
        %v1730 = vpop.f32.mrb[0].mxu0
        %v1731 = vadd.f32 %v1659, %v1730
        %v1732 = vpop.f32.mrb[0].mxu0
        %1733 = vdwg.mxu0
        %v1734 = vadd.f32 %v876, %v1731
        %v1735 = vld [vmem:[%s8] sm:$0x1]
        %v1736 = vld [vmem:[%s9] sm:$0x1]
        %v1737 = vsel %vm892, %v1734, 0.0
        %1738 = vadd.xlane.f32.xlu0 %v1737
        %v1739 = vpop.xlane.xlu0 %1738
        %v1740 = vrcp.pop 32.0
        %v1741 = vmul.f32 %v1739, %v1740
        %v1742 = vsub.f32 %v1734, %v1741
        %v1743 = vmul.f32 %v1742, %v1742
        %v1744 = vsel %vm892, %v1743, 0.0
        %1745 = vadd.xlane.f32.xlu0 %v1744
        %v1746 = vpop.xlane.xlu0 %1745
        %v1747 = vmul.f32 %v1746, %v1740
        %v1748 = vadd.f32 %v1747, 1e-05
        %v1749 = vrsqrt.pop %v1748
        %v1750 = vmul.f32 %v1742, %v1749
        %v1752 = vlaneseq
        %v1753 = vshrl.u32 %v1752, 7
        %v1754 = vsub.s32 0, %v1753
        %v1755 = vrot.slane %v1735, %v1754
        %v1757 = vmul.f32 %v1750, %v1755
        %v1759 = vlaneseq
        %v1760 = vshrl.u32 %v1759, 7
        %v1761 = vsub.s32 0, %v1760
        %v1762 = vrot.slane %v1736, %v1761
        %v1764 = vadd.f32 %v1757, %v1762
        %v1765 = vld [vmem:[%s10] sm:$0xff]
        %v1766 = vld [vmem:[%s10 + $0x8] sm:$0xff]
        %v1767 = vld [vmem:[%s10 + $0x10] sm:$0xff]
        %v1768 = vld [vmem:[%s10 + $0x18] sm:$0xff]
        %v1769 = vld [vmem:[%s11] sm:$0x1]
        %v1771 = vlaneseq
        %v1772 = vshrl.u32 %v1771, 7
        %v1773 = vsub.s32 0, %v1772
        %v1774 = vrot.slane %v1769, %v1773
        %v1777 = vsel %vm892, %v1764, 0
        %1779 = vmatprep.subr.mxu0 0.0
        %1780 = vmatpush1.msra.mxu0 %v1765
        %1781 = vmatprep.subr.mxu0 0.0
        %1782 = vmatpush1.msra.mxu0 %v1766
        %1783 = vmatprep.subr.mxu0 0.0
        %1784 = vmatpush1.msra.mxu0 %v1767
        %1785 = vmatprep.subr.mxu0 0.0
        %1786 = vmatpush1.msra.mxu0 %v1768
        %1787 = vmatprep.subr.mxu0 0.0
        %1788 = vmatpush1.msra.mxu0 0.0
        %1789 = vmatprep.subr.mxu0 0.0
        %1790 = vmatpush1.msra.mxu0 0.0
        %1791 = vmatprep.subr.mxu0 0.0
        %1792 = vmatpush1.msra.mxu0 0.0
        %1793 = vmatprep.subr.mxu0 0.0
        %1794 = vmatpush1.msra.mxu0 0.0
        %1795 = vmatprep.subr.mxu0 0.0
        %1796 = vmatpush1.msra.mxu0 0.0
        %1797 = vmatprep.subr.mxu0 0.0
        %1798 = vmatpush1.msra.mxu0 0.0
        %1799 = vmatprep.subr.mxu0 0.0
        %1800 = vmatpush1.msra.mxu0 0.0
        %1801 = vmatprep.subr.mxu0 0.0
        %1802 = vmatpush1.msra.mxu0 0.0
        %1803 = vmatprep.subr.mxu0 0.0
        %1804 = vmatpush1.msra.mxu0 0.0
        %1805 = vmatprep.subr.mxu0 0.0
        %1806 = vmatpush1.msra.mxu0 0.0
        %1807 = vmatprep.subr.mxu0 0.0
        %1808 = vmatpush1.msra.mxu0 0.0
        %1809 = vmatprep.subr.mxu0 0.0
        %1810 = vmatpush1.msra.mxu0 0.0
        %1811 = vmatprep.subr.mxu0 0.0
        %1812 = vmatpush1.msra.mxu0 0.0
        %1813 = vmatprep.subr.mxu0 0.0
        %1814 = vmatpush1.msra.mxu0 0.0
        %1815 = vmatprep.subr.mxu0 0.0
        %1816 = vmatpush1.msra.mxu0 0.0
        %1817 = vmatprep.subr.mxu0 0.0
        %1818 = vmatpush1.msra.mxu0 0.0
        %1819 = vmatprep.subr.mxu0 0.0
        %1820 = vmatpush1.msra.mxu0 0.0
        %1821 = vmatprep.subr.mxu0 0.0
        %1822 = vmatpush1.msra.mxu0 0.0
        %1823 = vmatprep.subr.mxu0 0.0
        %1824 = vmatpush1.msra.mxu0 0.0
        %1825 = vmatprep.subr.mxu0 0.0
        %1826 = vmatpush1.msra.mxu0 0.0
        %1827 = vmatprep.subr.mxu0 0.0
        %1828 = vmatpush1.msra.mxu0 0.0
        %1829 = vmatprep.subr.mxu0 0.0
        %1830 = vmatpush1.msra.mxu0 0.0
        %1831 = vmatprep.subr.mxu0 0.0
        %1832 = vmatpush1.msra.mxu0 0.0
        %1833 = vmatprep.subr.mxu0 0.0
        %1834 = vmatpush1.msra.mxu0 0.0
        %1835 = vmatprep.subr.mxu0 0.0
        %1836 = vmatpush1.msra.mxu0 0.0
        %1837 = vmatprep.subr.mxu0 0.0
        %1838 = vmatpush1.msra.mxu0 0.0
        %1839 = vmatprep.subr.mxu0 0.0
        %1840 = vmatpush1.msra.mxu0 0.0
        %1841 = vmatprep.subr.mxu0 0.0
        %1842 = vmatpush1.msra.mxu0 0.0
        %1843 = vmatprep.mubr.f32.mxu0 0.0
        %1844 = vmatmul.mubr.f32.gmra.mrb[0].mxu0 %v1777
        %v1845 = vpop.f32.mrb[0].mxu0
        %v1846 = vadd.f32 %v1774, %v1845
        %v1847 = vpop.f32.mrb[0].mxu0
        %1848 = vdwg.mxu0
        %v1849 = vmul.f32 %v1846, 0.35355338
        %v1850 = vld [vmem:[%s12] sm:$0xff]
        %v1851 = vld [vmem:[%s12 + $0x8] sm:$0xff]
        %v1852 = vld [vmem:[%s12 + $0x10] sm:$0xff]
        %v1853 = vld [vmem:[%s12 + $0x18] sm:$0xff]
        %v1854 = vld [vmem:[%s13] sm:$0x1]
        %v1856 = vlaneseq
        %v1857 = vshrl.u32 %v1856, 7
        %v1858 = vsub.s32 0, %v1857
        %v1859 = vrot.slane %v1854, %v1858
        %v1862 = vsel %vm892, %v877, 0
        %v1865 = vsel %vm892, %v878, 0
        %1867 = vmatprep.subr.mxu0 0.0
        %1868 = vmatpush1.msra.mxu0 %v1850
        %1869 = vmatprep.subr.mxu0 0.0
        %1870 = vmatpush1.msra.mxu0 %v1851
        %1871 = vmatprep.subr.mxu0 0.0
        %1872 = vmatpush1.msra.mxu0 %v1852
        %1873 = vmatprep.subr.mxu0 0.0
        %1874 = vmatpush1.msra.mxu0 %v1853
        %1875 = vmatprep.subr.mxu0 0.0
        %1876 = vmatpush1.msra.mxu0 0.0
        %1877 = vmatprep.subr.mxu0 0.0
        %1878 = vmatpush1.msra.mxu0 0.0
        %1879 = vmatprep.subr.mxu0 0.0
        %1880 = vmatpush1.msra.mxu0 0.0
        %1881 = vmatprep.subr.mxu0 0.0
        %1882 = vmatpush1.msra.mxu0 0.0
        %1883 = vmatprep.subr.mxu0 0.0
        %1884 = vmatpush1.msra.mxu0 0.0
        %1885 = vmatprep.subr.mxu0 0.0
        %1886 = vmatpush1.msra.mxu0 0.0
        %1887 = vmatprep.subr.mxu0 0.0
        %1888 = vmatpush1.msra.mxu0 0.0
        %1889 = vmatprep.subr.mxu0 0.0
        %1890 = vmatpush1.msra.mxu0 0.0
        %1891 = vmatprep.subr.mxu0 0.0
        %1892 = vmatpush1.msra.mxu0 0.0
        %1893 = vmatprep.subr.mxu0 0.0
        %1894 = vmatpush1.msra.mxu0 0.0
        %1895 = vmatprep.subr.mxu0 0.0
        %1896 = vmatpush1.msra.mxu0 0.0
        %1897 = vmatprep.subr.mxu0 0.0
        %1898 = vmatpush1.msra.mxu0 0.0
        %1899 = vmatprep.subr.mxu0 0.0
        %1900 = vmatpush1.msra.mxu0 0.0
        %1901 = vmatprep.subr.mxu0 0.0
        %1902 = vmatpush1.msra.mxu0 0.0
        %1903 = vmatprep.subr.mxu0 0.0
        %1904 = vmatpush1.msra.mxu0 0.0
        %1905 = vmatprep.subr.mxu0 0.0
        %1906 = vmatpush1.msra.mxu0 0.0
        %1907 = vmatprep.subr.mxu0 0.0
        %1908 = vmatpush1.msra.mxu0 0.0
        %1909 = vmatprep.subr.mxu0 0.0
        %1910 = vmatpush1.msra.mxu0 0.0
        %1911 = vmatprep.subr.mxu0 0.0
        %1912 = vmatpush1.msra.mxu0 0.0
        %1913 = vmatprep.subr.mxu0 0.0
        %1914 = vmatpush1.msra.mxu0 0.0
        %1915 = vmatprep.subr.mxu0 0.0
        %1916 = vmatpush1.msra.mxu0 0.0
        %1917 = vmatprep.subr.mxu0 0.0
        %1918 = vmatpush1.msra.mxu0 0.0
        %1919 = vmatprep.subr.mxu0 0.0
        %1920 = vmatpush1.msra.mxu0 0.0
        %1921 = vmatprep.subr.mxu0 0.0
        %1922 = vmatpush1.msra.mxu0 0.0
        %1923 = vmatprep.subr.mxu0 0.0
        %1924 = vmatpush1.msra.mxu0 0.0
        %1925 = vmatprep.subr.mxu0 0.0
        %1926 = vmatpush1.msra.mxu0 0.0
        %1927 = vmatprep.subr.mxu0 0.0
        %1928 = vmatpush1.msra.mxu0 0.0
        %1929 = vmatprep.subr.mxu0 0.0
        %1930 = vmatpush1.msra.mxu0 0.0
        %1931 = vmatprep.mubr.f32.mxu0 0.0
        %1932 = vmatmul.mubr.f32.gmra.mrb[0].mxu0 %v1862
        %v1933 = vpop.f32.mrb[0].mxu0
        %v1934 = vadd.f32 %v1859, %v1933
        %v1935 = vpop.f32.mrb[0].mxu0
        %1936 = vmatprep.mubr.f32.mxu0 0.0
        %1937 = vmatmul.mubr.f32.gmra.mrb[0].mxu0 %v1865
        %v1938 = vpop.f32.mrb[0].mxu0
        %v1939 = vadd.f32 %v1859, %v1938
        %v1940 = vpop.f32.mrb[0].mxu0
        %1941 = vdwg.mxu0
        %v1943 = vsel %vm970, %v1849, 0
        %v1946 = vsel %vm970, %v1934, 0
        %v1949 = vsel %vm970, %v1939, 0
        %1951 = vmatprep.subr.mxu0 0.0
        %1952 = vmatpush1.xpose.msra.mxu0 %v1946
        %1953 = vmatprep.subr.mxu0 0.0
        %1954 = vmatpush1.xpose.msra.mxu0 %v1949
        %1955 = vmatprep.subr.mxu0 0.0
        %1956 = vmatpush1.xpose.msra.mxu0 0.0
        %1957 = vmatprep.subr.mxu0 0.0
        %1958 = vmatpush1.xpose.msra.mxu0 0.0
        %1959 = vmatprep.subr.mxu0 0.0
        %1960 = vmatpush1.xpose.msra.mxu0 0.0
        %1961 = vmatprep.subr.mxu0 0.0
        %1962 = vmatpush1.xpose.msra.mxu0 0.0
        %1963 = vmatprep.subr.mxu0 0.0
        %1964 = vmatpush1.xpose.msra.mxu0 0.0
        %1965 = vmatprep.subr.mxu0 0.0
        %1966 = vmatpush1.xpose.msra.mxu0 0.0
        %1967 = vmatprep.subr.mxu0 0.0
        %1968 = vmatpush1.xpose.msra.mxu0 0.0
        %1969 = vmatprep.subr.mxu0 0.0
        %1970 = vmatpush1.xpose.msra.mxu0 0.0
        %1971 = vmatprep.subr.mxu0 0.0
        %1972 = vmatpush1.xpose.msra.mxu0 0.0
        %1973 = vmatprep.subr.mxu0 0.0
        %1974 = vmatpush1.xpose.msra.mxu0 0.0
        %1975 = vmatprep.subr.mxu0 0.0
        %1976 = vmatpush1.xpose.msra.mxu0 0.0
        %1977 = vmatprep.subr.mxu0 0.0
        %1978 = vmatpush1.xpose.msra.mxu0 0.0
        %1979 = vmatprep.subr.mxu0 0.0
        %1980 = vmatpush1.xpose.msra.mxu0 0.0
        %1981 = vmatprep.subr.mxu0 0.0
        %1982 = vmatpush1.xpose.msra.mxu0 0.0
        %1983 = vmatprep.subr.mxu0 0.0
        %1984 = vmatpush1.xpose.msra.mxu0 0.0
        %1985 = vmatprep.subr.mxu0 0.0
        %1986 = vmatpush1.xpose.msra.mxu0 0.0
        %1987 = vmatprep.subr.mxu0 0.0
        %1988 = vmatpush1.xpose.msra.mxu0 0.0
        %1989 = vmatprep.subr.mxu0 0.0
        %1990 = vmatpush1.xpose.msra.mxu0 0.0
        %1991 = vmatprep.subr.mxu0 0.0
        %1992 = vmatpush1.xpose.msra.mxu0 0.0
        %1993 = vmatprep.subr.mxu0 0.0
        %1994 = vmatpush1.xpose.msra.mxu0 0.0
        %1995 = vmatprep.subr.mxu0 0.0
        %1996 = vmatpush1.xpose.msra.mxu0 0.0
        %1997 = vmatprep.subr.mxu0 0.0
        %1998 = vmatpush1.xpose.msra.mxu0 0.0
        %1999 = vmatprep.subr.mxu0 0.0
        %2000 = vmatpush1.xpose.msra.mxu0 0.0
        %2001 = vmatprep.subr.mxu0 0.0
        %2002 = vmatpush1.xpose.msra.mxu0 0.0
        %2003 = vmatprep.subr.mxu0 0.0
        %2004 = vmatpush1.xpose.msra.mxu0 0.0
        %2005 = vmatprep.subr.mxu0 0.0
        %2006 = vmatpush1.xpose.msra.mxu0 0.0
        %2007 = vmatprep.subr.mxu0 0.0
        %2008 = vmatpush1.xpose.msra.mxu0 0.0
        %2009 = vmatprep.subr.mxu0 0.0
        %2010 = vmatpush1.xpose.msra.mxu0 0.0
        %2011 = vmatprep.subr.mxu0 0.0
        %2012 = vmatpush1.xpose.msra.mxu0 0.0
        %2013 = vmatprep.subr.mxu0 0.0
        %2014 = vmatpush1.xpose.msra.mxu0 0.0
        %2015 = vmatprep.mubr.f32.mxu0 0.0
        %2016 = vmatmul.mubr.f32.gmra.mrb[0].mxu0 %v1943
        %v2017 = vpop.f32.mrb[0].mxu0
        %v2018 = vadd.f32 0.0, %v2017
        %v2019 = vpop.f32.mrb[0].mxu0
        %2020 = vdwg.mxu0
        %vm2021 = vcmp.ne.s32.totalorder %v880, 0
        %v2022 = vsel %vm2021, 1, 0
        %v2023 = vlaneseq
        %v2024 = vshrl.u32 %v2023, 7
        %v2025 = vsub.s32 0, %v2024
        %v2026 = vrot.slane %v2022, %v2025
        %vm2027 = vcmp.eq.s32.totalorder %v2026, 1
        %v2028 = vsel %vm2027, %v2018, -1e+10
        %vm2029 = vcmask 80896
        %v2030 = vsel %vm2029, %v2028, -inf
        %2031 = vmax.xlane.f32.xlu0 %v2030
        %v2032 = vpop.xlane.xlu0 %2031
        %v2033 = vsub.f32 %v2028, %v2032
        %v2034 = vmul.f32 %v2033, 1.442695
        %v2035 = vpow.pop %v2034
        %v2036 = vsel %vm2029, %v2035, 0.0
        %2037 = vadd.xlane.f32.xlu0 %v2036
        %v2038 = vpop.xlane.xlu0 %2037
        %v2039 = vrcp.pop %v2038
        %v2040 = vmul.f32 %v2035, %v2039
        %2041 = vrot.lane.b32.xlu0 %v1934, 96
        %v2042 = vpop.permute.xlu0 %2041
        %2043 = vrot.lane.b32.xlu0 %v1939, 96
        %v2044 = vpop.permute.xlu0 %2043
        %v2047 = vsel %vm2029, %v2040, 0
        %vm2049 = vcmask 1041408
        %v2050 = vsel %vm2049, %v2044, 0
        %2052 = vmatprep.subr.mxu0 0.0
        %2053 = vmatpush1.msra.mxu0 %v2042
        %2054 = vmatprep.subr.mxu0 0.0
        %2055 = vmatpush1.msra.mxu0 %v2050
        %2056 = vmatprep.subr.mxu0 0.0
        %2057 = vmatpush1.msra.mxu0 0.0
        %2058 = vmatprep.subr.mxu0 0.0
        %2059 = vmatpush1.msra.mxu0 0.0
        %2060 = vmatprep.subr.mxu0 0.0
        %2061 = vmatpush1.msra.mxu0 0.0
        %2062 = vmatprep.subr.mxu0 0.0
        %2063 = vmatpush1.msra.mxu0 0.0
        %2064 = vmatprep.subr.mxu0 0.0
        %2065 = vmatpush1.msra.mxu0 0.0
        %2066 = vmatprep.subr.mxu0 0.0
        %2067 = vmatpush1.msra.mxu0 0.0
        %2068 = vmatprep.subr.mxu0 0.0
        %2069 = vmatpush1.msra.mxu0 0.0
        %2070 = vmatprep.subr.mxu0 0.0
        %2071 = vmatpush1.msra.mxu0 0.0
        %2072 = vmatprep.subr.mxu0 0.0
        %2073 = vmatpush1.msra.mxu0 0.0
        %2074 = vmatprep.subr.mxu0 0.0
        %2075 = vmatpush1.msra.mxu0 0.0
        %2076 = vmatprep.subr.mxu0 0.0
        %2077 = vmatpush1.msra.mxu0 0.0
        %2078 = vmatprep.subr.mxu0 0.0
        %2079 = vmatpush1.msra.mxu0 0.0
        %2080 = vmatprep.subr.mxu0 0.0
        %2081 = vmatpush1.msra.mxu0 0.0
        %2082 = vmatprep.subr.mxu0 0.0
        %2083 = vmatpush1.msra.mxu0 0.0
        %2084 = vmatprep.subr.mxu0 0.0
        %2085 = vmatpush1.msra.mxu0 0.0
        %2086 = vmatprep.subr.mxu0 0.0
        %2087 = vmatpush1.msra.mxu0 0.0
        %2088 = vmatprep.subr.mxu0 0.0
        %2089 = vmatpush1.msra.mxu0 0.0
        %2090 = vmatprep.subr.mxu0 0.0
        %2091 = vmatpush1.msra.mxu0 0.0
        %2092 = vmatprep.subr.mxu0 0.0
        %2093 = vmatpush1.msra.mxu0 0.0
        %2094 = vmatprep.subr.mxu0 0.0
        %2095 = vmatpush1.msra.mxu0 0.0
        %2096 = vmatprep.subr.mxu0 0.0
        %2097 = vmatpush1.msra.mxu0 0.0
        %2098 = vmatprep.subr.mxu0 0.0
        %2099 = vmatpush1.msra.mxu0 0.0
        %2100 = vmatprep.subr.mxu0 0.0
        %2101 = vmatpush1.msra.mxu0 0.0
        %2102 = vmatprep.subr.mxu0 0.0
        %2103 = vmatpush1.msra.mxu0 0.0
        %2104 = vmatprep.subr.mxu0 0.0
        %2105 = vmatpush1.msra.mxu0 0.0
        %2106 = vmatprep.subr.mxu0 0.0
        %2107 = vmatpush1.msra.mxu0 0.0
        %2108 = vmatprep.subr.mxu0 0.0
        %2109 = vmatpush1.msra.mxu0 0.0
        %2110 = vmatprep.subr.mxu0 0.0
        %2111 = vmatpush1.msra.mxu0 0.0
        %2112 = vmatprep.subr.mxu0 0.0
        %2113 = vmatpush1.msra.mxu0 0.0
        %2114 = vmatprep.subr.mxu0 0.0
        %2115 = vmatpush1.msra.mxu0 0.0
        %2116 = vmatprep.mubr.f32.mxu0 0.0
        %2117 = vmatmul.mubr.f32.gmra.mrb[0].mxu0 %v2047
        %v2118 = vpop.f32.mrb[0].mxu0
        %v2119 = vadd.f32 0.0, %v2118
        %v2120 = vpop.f32.mrb[0].mxu0
        %2121 = vdwg.mxu0
        %2122 = vrot.lane.b32.xlu0 %v1849, 120
        %v2123 = vpop.permute.xlu0 %2122
        %2124 = vrot.lane.b32.xlu0 %v1934, 120
        %v2125 = vpop.permute.xlu0 %2124
        %2126 = vrot.lane.b32.xlu0 %v1939, 120
        %v2127 = vpop.permute.xlu0 %2126
        %v2128 = vsel %vm970, %v2123, 0
        %v2130 = vsel %vm970, %v2125, 0
        %v2132 = vsel %vm970, %v2127, 0
        %2134 = vmatprep.subr.mxu0 0.0
        %2135 = vmatpush1.xpose.msra.mxu0 %v2130
        %2136 = vmatprep.subr.mxu0 0.0
        %2137 = vmatpush1.xpose.msra.mxu0 %v2132
        %2138 = vmatprep.subr.mxu0 0.0
        %2139 = vmatpush1.xpose.msra.mxu0 0.0
        %2140 = vmatprep.subr.mxu0 0.0
        %2141 = vmatpush1.xpose.msra.mxu0 0.0
        %2142 = vmatprep.subr.mxu0 0.0
        %2143 = vmatpush1.xpose.msra.mxu0 0.0
        %2144 = vmatprep.subr.mxu0 0.0
        %2145 = vmatpush1.xpose.msra.mxu0 0.0
        %2146 = vmatprep.subr.mxu0 0.0
        %2147 = vmatpush1.xpose.msra.mxu0 0.0
        %2148 = vmatprep.subr.mxu0 0.0
        %2149 = vmatpush1.xpose.msra.mxu0 0.0
        %2150 = vmatprep.subr.mxu0 0.0
        %2151 = vmatpush1.xpose.msra.mxu0 0.0
        %2152 = vmatprep.subr.mxu0 0.0
        %2153 = vmatpush1.xpose.msra.mxu0 0.0
        %2154 = vmatprep.subr.mxu0 0.0
        %2155 = vmatpush1.xpose.msra.mxu0 0.0
        %2156 = vmatprep.subr.mxu0 0.0
        %2157 = vmatpush1.xpose.msra.mxu0 0.0
        %2158 = vmatprep.subr.mxu0 0.0
        %2159 = vmatpush1.xpose.msra.mxu0 0.0
        %2160 = vmatprep.subr.mxu0 0.0
        %2161 = vmatpush1.xpose.msra.mxu0 0.0
        %2162 = vmatprep.subr.mxu0 0.0
        %2163 = vmatpush1.xpose.msra.mxu0 0.0
        %2164 = vmatprep.subr.mxu0 0.0
        %2165 = vmatpush1.xpose.msra.mxu0 0.0
        %2166 = vmatprep.subr.mxu0 0.0
        %2167 = vmatpush1.xpose.msra.mxu0 0.0
        %2168 = vmatprep.subr.mxu0 0.0
        %2169 = vmatpush1.xpose.msra.mxu0 0.0
        %2170 = vmatprep.subr.mxu0 0.0
        %2171 = vmatpush1.xpose.msra.mxu0 0.0
        %2172 = vmatprep.subr.mxu0 0.0
        %2173 = vmatpush1.xpose.msra.mxu0 0.0
        %2174 = vmatprep.subr.mxu0 0.0
        %2175 = vmatpush1.xpose.msra.mxu0 0.0
        %2176 = vmatprep.subr.mxu0 0.0
        %2177 = vmatpush1.xpose.msra.mxu0 0.0
        %2178 = vmatprep.subr.mxu0 0.0
        %2179 = vmatpush1.xpose.msra.mxu0 0.0
        %2180 = vmatprep.subr.mxu0 0.0
        %2181 = vmatpush1.xpose.msra.mxu0 0.0
        %2182 = vmatprep.subr.mxu0 0.0
        %2183 = vmatpush1.xpose.msra.mxu0 0.0
        %2184 = vmatprep.subr.mxu0 0.0
        %2185 = vmatpush1.xpose.msra.mxu0 0.0
        %2186 = vmatprep.subr.mxu0 0.0
        %2187 = vmatpush1.xpose.msra.mxu0 0.0
        %2188 = vmatprep.subr.mxu0 0.0
        %2189 = vmatpush1.xpose.msra.mxu0 0.0
        %2190 = vmatprep.subr.mxu0 0.0
        %2191 = vmatpush1.xpose.msra.mxu0 0.0
        %2192 = vmatprep.subr.mxu0 0.0
        %2193 = vmatpush1.xpose.msra.mxu0 0.0
        %2194 = vmatprep.subr.mxu0 0.0
        %2195 = vmatpush1.xpose.msra.mxu0 0.0
        %2196 = vmatprep.subr.mxu0 0.0
        %2197 = vmatpush1.xpose.msra.mxu0 0.0
        %2198 = vmatprep.mubr.f32.mxu0 0.0
        %2199 = vmatmul.mubr.f32.gmra.mrb[0].mxu0 %v2128
        %v2200 = vpop.f32.mrb[0].mxu0
        %v2201 = vadd.f32 0.0, %v2200
        %v2202 = vpop.f32.mrb[0].mxu0
        %2203 = vdwg.mxu0
        %v2204 = vsel %vm2027, %v2201, -1e+10
        %v2205 = vsel %vm2029, %v2204, -inf
        %2206 = vmax.xlane.f32.xlu0 %v2205
        %v2207 = vpop.xlane.xlu0 %2206
        %v2208 = vsub.f32 %v2204, %v2207
        %v2209 = vmul.f32 %v2208, 1.442695
        %v2210 = vpow.pop %v2209
        %v2211 = vsel %vm2029, %v2210, 0.0
        %2212 = vadd.xlane.f32.xlu0 %v2211
        %v2213 = vpop.xlane.xlu0 %2212
        %v2214 = vrcp.pop %v2213
        %v2215 = vmul.f32 %v2210, %v2214
        %2216 = vrot.lane.b32.xlu0 %v1934, 88
        %v2217 = vpop.permute.xlu0 %2216
        %2218 = vrot.lane.b32.xlu0 %v1939, 88
        %v2219 = vpop.permute.xlu0 %2218
        %v2222 = vsel %vm2029, %v2215, 0
        %v2224 = vsel %vm2049, %v2219, 0
        %2226 = vmatprep.subr.mxu0 0.0
        %2227 = vmatpush1.msra.mxu0 %v2217
        %2228 = vmatprep.subr.mxu0 0.0
        %2229 = vmatpush1.msra.mxu0 %v2224
        %2230 = vmatprep.subr.mxu0 0.0
        %2231 = vmatpush1.msra.mxu0 0.0
        %2232 = vmatprep.subr.mxu0 0.0
        %2233 = vmatpush1.msra.mxu0 0.0
        %2234 = vmatprep.subr.mxu0 0.0
        %2235 = vmatpush1.msra.mxu0 0.0
        %2236 = vmatprep.subr.mxu0 0.0
        %2237 = vmatpush1.msra.mxu0 0.0
        %2238 = vmatprep.subr.mxu0 0.0
        %2239 = vmatpush1.msra.mxu0 0.0
        %2240 = vmatprep.subr.mxu0 0.0
        %2241 = vmatpush1.msra.mxu0 0.0
        %2242 = vmatprep.subr.mxu0 0.0
        %2243 = vmatpush1.msra.mxu0 0.0
        %2244 = vmatprep.subr.mxu0 0.0
        %2245 = vmatpush1.msra.mxu0 0.0
        %2246 = vmatprep.subr.mxu0 0.0
        %2247 = vmatpush1.msra.mxu0 0.0
        %2248 = vmatprep.subr.mxu0 0.0
        %2249 = vmatpush1.msra.mxu0 0.0
        %2250 = vmatprep.subr.mxu0 0.0
        %2251 = vmatpush1.msra.mxu0 0.0
        %2252 = vmatprep.subr.mxu0 0.0
        %2253 = vmatpush1.msra.mxu0 0.0
        %2254 = vmatprep.subr.mxu0 0.0
        %2255 = vmatpush1.msra.mxu0 0.0
        %2256 = vmatprep.subr.mxu0 0.0
        %2257 = vmatpush1.msra.mxu0 0.0
        %2258 = vmatprep.subr.mxu0 0.0
        %2259 = vmatpush1.msra.mxu0 0.0
        %2260 = vmatprep.subr.mxu0 0.0
        %2261 = vmatpush1.msra.mxu0 0.0
        %2262 = vmatprep.subr.mxu0 0.0
        %2263 = vmatpush1.msra.mxu0 0.0
        %2264 = vmatprep.subr.mxu0 0.0
        %2265 = vmatpush1.msra.mxu0 0.0
        %2266 = vmatprep.subr.mxu0 0.0
        %2267 = vmatpush1.msra.mxu0 0.0
        %2268 = vmatprep.subr.mxu0 0.0
        %2269 = vmatpush1.msra.mxu0 0.0
        %2270 = vmatprep.subr.mxu0 0.0
        %2271 = vmatpush1.msra.mxu0 0.0
        %2272 = vmatprep.subr.mxu0 0.0
        %2273 = vmatpush1.msra.mxu0 0.0
        %2274 = vmatprep.subr.mxu0 0.0
        %2275 = vmatpush1.msra.mxu0 0.0
        %2276 = vmatprep.subr.mxu0 0.0
        %2277 = vmatpush1.msra.mxu0 0.0
        %2278 = vmatprep.subr.mxu0 0.0
        %2279 = vmatpush1.msra.mxu0 0.0
        %2280 = vmatprep.subr.mxu0 0.0
        %2281 = vmatpush1.msra.mxu0 0.0
        %2282 = vmatprep.subr.mxu0 0.0
        %2283 = vmatpush1.msra.mxu0 0.0
        %2284 = vmatprep.subr.mxu0 0.0
        %2285 = vmatpush1.msra.mxu0 0.0
        %2286 = vmatprep.subr.mxu0 0.0
        %2287 = vmatpush1.msra.mxu0 0.0
        %2288 = vmatprep.subr.mxu0 0.0
        %2289 = vmatpush1.msra.mxu0 0.0
        %2290 = vmatprep.mubr.f32.mxu0 0.0
        %2291 = vmatmul.mubr.f32.gmra.mrb[0].mxu0 %v2222
        %v2292 = vpop.f32.mrb[0].mxu0
        %v2293 = vadd.f32 0.0, %v2292
        %v2294 = vpop.f32.mrb[0].mxu0
        %2295 = vdwg.mxu0
        %2296 = vrot.lane.b32.xlu0 %v1849, 112
        %v2297 = vpop.permute.xlu0 %2296
        %2298 = vrot.lane.b32.xlu0 %v1934, 112
        %v2299 = vpop.permute.xlu0 %2298
        %2300 = vrot.lane.b32.xlu0 %v1939, 112
        %v2301 = vpop.permute.xlu0 %2300
        %v2302 = vsel %vm970, %v2297, 0
        %v2304 = vsel %vm970, %v2299, 0
        %v2306 = vsel %vm970, %v2301, 0
        %2308 = vmatprep.subr.mxu0 0.0
        %2309 = vmatpush1.xpose.msra.mxu0 %v2304
        %2310 = vmatprep.subr.mxu0 0.0
        %2311 = vmatpush1.xpose.msra.mxu0 %v2306
        %2312 = vmatprep.subr.mxu0 0.0
        %2313 = vmatpush1.xpose.msra.mxu0 0.0
        %2314 = vmatprep.subr.mxu0 0.0
        %2315 = vmatpush1.xpose.msra.mxu0 0.0
        %2316 = vmatprep.subr.mxu0 0.0
        %2317 = vmatpush1.xpose.msra.mxu0 0.0
        %2318 = vmatprep.subr.mxu0 0.0
        %2319 = vmatpush1.xpose.msra.mxu0 0.0
        %2320 = vmatprep.subr.mxu0 0.0
        %2321 = vmatpush1.xpose.msra.mxu0 0.0
        %2322 = vmatprep.subr.mxu0 0.0
        %2323 = vmatpush1.xpose.msra.mxu0 0.0
        %2324 = vmatprep.subr.mxu0 0.0
        %2325 = vmatpush1.xpose.msra.mxu0 0.0
        %2326 = vmatprep.subr.mxu0 0.0
        %2327 = vmatpush1.xpose.msra.mxu0 0.0
        %2328 = vmatprep.subr.mxu0 0.0
        %2329 = vmatpush1.xpose.msra.mxu0 0.0
        %2330 = vmatprep.subr.mxu0 0.0
        %2331 = vmatpush1.xpose.msra.mxu0 0.0
        %2332 = vmatprep.subr.mxu0 0.0
        %2333 = vmatpush1.xpose.msra.mxu0 0.0
        %2334 = vmatprep.subr.mxu0 0.0
        %2335 = vmatpush1.xpose.msra.mxu0 0.0
        %2336 = vmatprep.subr.mxu0 0.0
        %2337 = vmatpush1.xpose.msra.mxu0 0.0
        %2338 = vmatprep.subr.mxu0 0.0
        %2339 = vmatpush1.xpose.msra.mxu0 0.0
        %2340 = vmatprep.subr.mxu0 0.0
        %2341 = vmatpush1.xpose.msra.mxu0 0.0
        %2342 = vmatprep.subr.mxu0 0.0
        %2343 = vmatpush1.xpose.msra.mxu0 0.0
        %2344 = vmatprep.subr.mxu0 0.0
        %2345 = vmatpush1.xpose.msra.mxu0 0.0
        %2346 = vmatprep.subr.mxu0 0.0
        %2347 = vmatpush1.xpose.msra.mxu0 0.0
        %2348 = vmatprep.subr.mxu0 0.0
        %2349 = vmatpush1.xpose.msra.mxu0 0.0
        %2350 = vmatprep.subr.mxu0 0.0
        %2351 = vmatpush1.xpose.msra.mxu0 0.0
        %2352 = vmatprep.subr.mxu0 0.0
        %2353 = vmatpush1.xpose.msra.mxu0 0.0
        %2354 = vmatprep.subr.mxu0 0.0
        %2355 = vmatpush1.xpose.msra.mxu0 0.0
        %2356 = vmatprep.subr.mxu0 0.0
        %2357 = vmatpush1.xpose.msra.mxu0 0.0
        %2358 = vmatprep.subr.mxu0 0.0
        %2359 = vmatpush1.xpose.msra.mxu0 0.0
        %2360 = vmatprep.subr.mxu0 0.0
        %2361 = vmatpush1.xpose.msra.mxu0 0.0
        %2362 = vmatprep.subr.mxu0 0.0
        %2363 = vmatpush1.xpose.msra.mxu0 0.0
        %2364 = vmatprep.subr.mxu0 0.0
        %2365 = vmatpush1.xpose.msra.mxu0 0.0
        %2366 = vmatprep.subr.mxu0 0.0
        %2367 = vmatpush1.xpose.msra.mxu0 0.0
        %2368 = vmatprep.subr.mxu0 0.0
        %2369 = vmatpush1.xpose.msra.mxu0 0.0
        %2370 = vmatprep.subr.mxu0 0.0
        %2371 = vmatpush1.xpose.msra.mxu0 0.0
        %2372 = vmatprep.mubr.f32.mxu0 0.0
        %2373 = vmatmul.mubr.f32.gmra.mrb[0].mxu0 %v2302
        %v2374 = vpop.f32.mrb[0].mxu0
        %v2375 = vadd.f32 0.0, %v2374
        %v2376 = vpop.f32.mrb[0].mxu0
        %2377 = vdwg.mxu0
        %v2378 = vsel %vm2027, %v2375, -1e+10
        %v2379 = vsel %vm2029, %v2378, -inf
        %2380 = vmax.xlane.f32.xlu0 %v2379
        %v2381 = vpop.xlane.xlu0 %2380
        %v2382 = vsub.f32 %v2378, %v2381
        %v2383 = vmul.f32 %v2382, 1.442695
        %v2384 = vpow.pop %v2383
        %v2385 = vsel %vm2029, %v2384, 0.0
        %2386 = vadd.xlane.f32.xlu0 %v2385
        %v2387 = vpop.xlane.xlu0 %2386
        %v2388 = vrcp.pop %v2387
        %v2389 = vmul.f32 %v2384, %v2388
        %2390 = vrot.lane.b32.xlu0 %v1934, 80
        %v2391 = vpop.permute.xlu0 %2390
        %2392 = vrot.lane.b32.xlu0 %v1939, 80
        %v2393 = vpop.permute.xlu0 %2392
        %v2396 = vsel %vm2029, %v2389, 0
        %v2398 = vsel %vm2049, %v2393, 0
        %2400 = vmatprep.subr.mxu0 0.0
        %2401 = vmatpush1.msra.mxu0 %v2391
        %2402 = vmatprep.subr.mxu0 0.0
        %2403 = vmatpush1.msra.mxu0 %v2398
        %2404 = vmatprep.subr.mxu0 0.0
        %2405 = vmatpush1.msra.mxu0 0.0
        %2406 = vmatprep.subr.mxu0 0.0
        %2407 = vmatpush1.msra.mxu0 0.0
        %2408 = vmatprep.subr.mxu0 0.0
        %2409 = vmatpush1.msra.mxu0 0.0
        %2410 = vmatprep.subr.mxu0 0.0
        %2411 = vmatpush1.msra.mxu0 0.0
        %2412 = vmatprep.subr.mxu0 0.0
        %2413 = vmatpush1.msra.mxu0 0.0
        %2414 = vmatprep.subr.mxu0 0.0
        %2415 = vmatpush1.msra.mxu0 0.0
        %2416 = vmatprep.subr.mxu0 0.0
        %2417 = vmatpush1.msra.mxu0 0.0
        %2418 = vmatprep.subr.mxu0 0.0
        %2419 = vmatpush1.msra.mxu0 0.0
        %2420 = vmatprep.subr.mxu0 0.0
        %2421 = vmatpush1.msra.mxu0 0.0
        %2422 = vmatprep.subr.mxu0 0.0
        %2423 = vmatpush1.msra.mxu0 0.0
        %2424 = vmatprep.subr.mxu0 0.0
        %2425 = vmatpush1.msra.mxu0 0.0
        %2426 = vmatprep.subr.mxu0 0.0
        %2427 = vmatpush1.msra.mxu0 0.0
        %2428 = vmatprep.subr.mxu0 0.0
        %2429 = vmatpush1.msra.mxu0 0.0
        %2430 = vmatprep.subr.mxu0 0.0
        %2431 = vmatpush1.msra.mxu0 0.0
        %2432 = vmatprep.subr.mxu0 0.0
        %2433 = vmatpush1.msra.mxu0 0.0
        %2434 = vmatprep.subr.mxu0 0.0
        %2435 = vmatpush1.msra.mxu0 0.0
        %2436 = vmatprep.subr.mxu0 0.0
        %2437 = vmatpush1.msra.mxu0 0.0
        %2438 = vmatprep.subr.mxu0 0.0
        %2439 = vmatpush1.msra.mxu0 0.0
        %2440 = vmatprep.subr.mxu0 0.0
        %2441 = vmatpush1.msra.mxu0 0.0
        %2442 = vmatprep.subr.mxu0 0.0
        %2443 = vmatpush1.msra.mxu0 0.0
        %2444 = vmatprep.subr.mxu0 0.0
        %2445 = vmatpush1.msra.mxu0 0.0
        %2446 = vmatprep.subr.mxu0 0.0
        %2447 = vmatpush1.msra.mxu0 0.0
        %2448 = vmatprep.subr.mxu0 0.0
        %2449 = vmatpush1.msra.mxu0 0.0
        %2450 = vmatprep.subr.mxu0 0.0
        %2451 = vmatpush1.msra.mxu0 0.0
        %2452 = vmatprep.subr.mxu0 0.0
        %2453 = vmatpush1.msra.mxu0 0.0
        %2454 = vmatprep.subr.mxu0 0.0
        %2455 = vmatpush1.msra.mxu0 0.0
        %2456 = vmatprep.subr.mxu0 0.0
        %2457 = vmatpush1.msra.mxu0 0.0
        %2458 = vmatprep.subr.mxu0 0.0
        %2459 = vmatpush1.msra.mxu0 0.0
        %2460 = vmatprep.subr.mxu0 0.0
        %2461 = vmatpush1.msra.mxu0 0.0
        %2462 = vmatprep.subr.mxu0 0.0
        %2463 = vmatpush1.msra.mxu0 0.0
        %2464 = vmatprep.mubr.f32.mxu0 0.0
        %2465 = vmatmul.mubr.f32.gmra.mrb[0].mxu0 %v2396
        %v2466 = vpop.f32.mrb[0].mxu0
        %v2467 = vadd.f32 0.0, %v2466
        %v2468 = vpop.f32.mrb[0].mxu0
        %2469 = vdwg.mxu0
        %2470 = vrot.lane.b32.xlu0 %v1849, 104
        %v2471 = vpop.permute.xlu0 %2470
        %2472 = vrot.lane.b32.xlu0 %v1934, 104
        %v2473 = vpop.permute.xlu0 %2472
        %2474 = vrot.lane.b32.xlu0 %v1939, 104
        %v2475 = vpop.permute.xlu0 %2474
        %v2476 = vsel %vm970, %v2471, 0
        %v2478 = vsel %vm970, %v2473, 0
        %v2480 = vsel %vm970, %v2475, 0
        %2482 = vmatprep.subr.mxu0 0.0
        %2483 = vmatpush1.xpose.msra.mxu0 %v2478
        %2484 = vmatprep.subr.mxu0 0.0
        %2485 = vmatpush1.xpose.msra.mxu0 %v2480
        %2486 = vmatprep.subr.mxu0 0.0
        %2487 = vmatpush1.xpose.msra.mxu0 0.0
        %2488 = vmatprep.subr.mxu0 0.0
        %2489 = vmatpush1.xpose.msra.mxu0 0.0
        %2490 = vmatprep.subr.mxu0 0.0
        %2491 = vmatpush1.xpose.msra.mxu0 0.0
        %2492 = vmatprep.subr.mxu0 0.0
        %2493 = vmatpush1.xpose.msra.mxu0 0.0
        %2494 = vmatprep.subr.mxu0 0.0
        %2495 = vmatpush1.xpose.msra.mxu0 0.0
        %2496 = vmatprep.subr.mxu0 0.0
        %2497 = vmatpush1.xpose.msra.mxu0 0.0
        %2498 = vmatprep.subr.mxu0 0.0
        %2499 = vmatpush1.xpose.msra.mxu0 0.0
        %2500 = vmatprep.subr.mxu0 0.0
        %2501 = vmatpush1.xpose.msra.mxu0 0.0
        %2502 = vmatprep.subr.mxu0 0.0
        %2503 = vmatpush1.xpose.msra.mxu0 0.0
        %2504 = vmatprep.subr.mxu0 0.0
        %2505 = vmatpush1.xpose.msra.mxu0 0.0
        %2506 = vmatprep.subr.mxu0 0.0
        %2507 = vmatpush1.xpose.msra.mxu0 0.0
        %2508 = vmatprep.subr.mxu0 0.0
        %2509 = vmatpush1.xpose.msra.mxu0 0.0
        %2510 = vmatprep.subr.mxu0 0.0
        %2511 = vmatpush1.xpose.msra.mxu0 0.0
        %2512 = vmatprep.subr.mxu0 0.0
        %2513 = vmatpush1.xpose.msra.mxu0 0.0
        %2514 = vmatprep.subr.mxu0 0.0
        %2515 = vmatpush1.xpose.msra.mxu0 0.0
        %2516 = vmatprep.subr.mxu0 0.0
        %2517 = vmatpush1.xpose.msra.mxu0 0.0
        %2518 = vmatprep.subr.mxu0 0.0
        %2519 = vmatpush1.xpose.msra.mxu0 0.0
        %2520 = vmatprep.subr.mxu0 0.0
        %2521 = vmatpush1.xpose.msra.mxu0 0.0
        %2522 = vmatprep.subr.mxu0 0.0
        %2523 = vmatpush1.xpose.msra.mxu0 0.0
        %2524 = vmatprep.subr.mxu0 0.0
        %2525 = vmatpush1.xpose.msra.mxu0 0.0
        %2526 = vmatprep.subr.mxu0 0.0
        %2527 = vmatpush1.xpose.msra.mxu0 0.0
        %2528 = vmatprep.subr.mxu0 0.0
        %2529 = vmatpush1.xpose.msra.mxu0 0.0
        %2530 = vmatprep.subr.mxu0 0.0
        %2531 = vmatpush1.xpose.msra.mxu0 0.0
        %2532 = vmatprep.subr.mxu0 0.0
        %2533 = vmatpush1.xpose.msra.mxu0 0.0
        %2534 = vmatprep.subr.mxu0 0.0
        %2535 = vmatpush1.xpose.msra.mxu0 0.0
        %2536 = vmatprep.subr.mxu0 0.0
        %2537 = vmatpush1.xpose.msra.mxu0 0.0
        %2538 = vmatprep.subr.mxu0 0.0
        %2539 = vmatpush1.xpose.msra.mxu0 0.0
        %2540 = vmatprep.subr.mxu0 0.0
        %2541 = vmatpush1.xpose.msra.mxu0 0.0
        %2542 = vmatprep.subr.mxu0 0.0
        %2543 = vmatpush1.xpose.msra.mxu0 0.0
        %2544 = vmatprep.subr.mxu0 0.0
        %2545 = vmatpush1.xpose.msra.mxu0 0.0
        %2546 = vmatprep.mubr.f32.mxu0 0.0
        %2547 = vmatmul.mubr.f32.gmra.mrb[0].mxu0 %v2476
        %v2548 = vpop.f32.mrb[0].mxu0
        %v2549 = vadd.f32 0.0, %v2548
        %v2550 = vpop.f32.mrb[0].mxu0
        %2551 = vdwg.mxu0
        %v2552 = vsel %vm2027, %v2549, -1e+10
        %v2553 = vsel %vm2029, %v2552, -inf
        %2554 = vmax.xlane.f32.xlu0 %v2553
        %v2555 = vpop.xlane.xlu0 %2554
        %v2556 = vsub.f32 %v2552, %v2555
        %v2557 = vmul.f32 %v2556, 1.442695
        %v2558 = vpow.pop %v2557
        %v2559 = vsel %vm2029, %v2558, 0.0
        %2560 = vadd.xlane.f32.xlu0 %v2559
        %v2561 = vpop.xlane.xlu0 %2560
        %v2562 = vrcp.pop %v2561
        %v2563 = vmul.f32 %v2558, %v2562
        %2564 = vrot.lane.b32.xlu0 %v1934, 72
        %v2565 = vpop.permute.xlu0 %2564
        %2566 = vrot.lane.b32.xlu0 %v1939, 72
        %v2567 = vpop.permute.xlu0 %2566
        %v2570 = vsel %vm2029, %v2563, 0
        %v2572 = vsel %vm2049, %v2567, 0
        %2574 = vmatprep.subr.mxu0 0.0
        %2575 = vmatpush1.msra.mxu0 %v2565
        %2576 = vmatprep.subr.mxu0 0.0
        %2577 = vmatpush1.msra.mxu0 %v2572
        %2578 = vmatprep.subr.mxu0 0.0
        %2579 = vmatpush1.msra.mxu0 0.0
        %2580 = vmatprep.subr.mxu0 0.0
        %2581 = vmatpush1.msra.mxu0 0.0
        %2582 = vmatprep.subr.mxu0 0.0
        %2583 = vmatpush1.msra.mxu0 0.0
        %2584 = vmatprep.subr.mxu0 0.0
        %2585 = vmatpush1.msra.mxu0 0.0
        %2586 = vmatprep.subr.mxu0 0.0
        %2587 = vmatpush1.msra.mxu0 0.0
        %2588 = vmatprep.subr.mxu0 0.0
        %2589 = vmatpush1.msra.mxu0 0.0
        %2590 = vmatprep.subr.mxu0 0.0
        %2591 = vmatpush1.msra.mxu0 0.0
        %2592 = vmatprep.subr.mxu0 0.0
        %2593 = vmatpush1.msra.mxu0 0.0
        %2594 = vmatprep.subr.mxu0 0.0
        %2595 = vmatpush1.msra.mxu0 0.0
        %2596 = vmatprep.subr.mxu0 0.0
        %2597 = vmatpush1.msra.mxu0 0.0
        %2598 = vmatprep.subr.mxu0 0.0
        %2599 = vmatpush1.msra.mxu0 0.0
        %2600 = vmatprep.subr.mxu0 0.0
        %2601 = vmatpush1.msra.mxu0 0.0
        %2602 = vmatprep.subr.mxu0 0.0
        %2603 = vmatpush1.msra.mxu0 0.0
        %2604 = vmatprep.subr.mxu0 0.0
        %2605 = vmatpush1.msra.mxu0 0.0
        %2606 = vmatprep.subr.mxu0 0.0
        %2607 = vmatpush1.msra.mxu0 0.0
        %2608 = vmatprep.subr.mxu0 0.0
        %2609 = vmatpush1.msra.mxu0 0.0
        %2610 = vmatprep.subr.mxu0 0.0
        %2611 = vmatpush1.msra.mxu0 0.0
        %2612 = vmatprep.subr.mxu0 0.0
        %2613 = vmatpush1.msra.mxu0 0.0
        %2614 = vmatprep.subr.mxu0 0.0
        %2615 = vmatpush1.msra.mxu0 0.0
        %2616 = vmatprep.subr.mxu0 0.0
        %2617 = vmatpush1.msra.mxu0 0.0
        %2618 = vmatprep.subr.mxu0 0.0
        %2619 = vmatpush1.msra.mxu0 0.0
        %2620 = vmatprep.subr.mxu0 0.0
        %2621 = vmatpush1.msra.mxu0 0.0
        %2622 = vmatprep.subr.mxu0 0.0
        %2623 = vmatpush1.msra.mxu0 0.0
        %2624 = vmatprep.subr.mxu0 0.0
        %2625 = vmatpush1.msra.mxu0 0.0
        %2626 = vmatprep.subr.mxu0 0.0
        %2627 = vmatpush1.msra.mxu0 0.0
        %2628 = vmatprep.subr.mxu0 0.0
        %2629 = vmatpush1.msra.mxu0 0.0
        %2630 = vmatprep.subr.mxu0 0.0
        %2631 = vmatpush1.msra.mxu0 0.0
        %2632 = vmatprep.subr.mxu0 0.0
        %2633 = vmatpush1.msra.mxu0 0.0
        %2634 = vmatprep.subr.mxu0 0.0
        %2635 = vmatpush1.msra.mxu0 0.0
        %2636 = vmatprep.subr.mxu0 0.0
        %2637 = vmatpush1.msra.mxu0 0.0
        %2638 = vmatprep.mubr.f32.mxu0 0.0
        %2639 = vmatmul.mubr.f32.gmra.mrb[0].mxu0 %v2570
        %v2640 = vpop.f32.mrb[0].mxu0
        %v2641 = vadd.f32 0.0, %v2640
        %v2642 = vpop.f32.mrb[0].mxu0
        %2643 = vdwg.mxu0
        %2645 = vrot.lane.b32.xlu0 %v2293, 8
        %v2646 = vpop.permute.xlu0 %2645
        %2649 = vrot.lane.b32.xlu0 %v2467, 16
        %v2650 = vpop.permute.xlu0 %2649
        %2653 = vrot.lane.b32.xlu0 %v2641, 24
        %v2654 = vpop.permute.xlu0 %2653
        %v2656 = vsel %vm970, %v2119, %v2646
        %v2657 = vsel %vm1646, %v2656, %v2650
        %v2658 = vsel %vm1648, %v2657, %v2654
        %v2659 = vld [vmem:[%s14] sm:$0xff]
        %v2660 = vld [vmem:[%s14 + $0x8] sm:$0xff]
        %v2661 = vld [vmem:[%s14 + $0x10] sm:$0xff]
        %v2662 = vld [vmem:[%s14 + $0x18] sm:$0xff]
        %v2663 = vld [vmem:[%s15] sm:$0x1]
        %v2665 = vlaneseq
        %v2666 = vshrl.u32 %v2665, 7
        %v2667 = vsub.s32 0, %v2666
        %v2668 = vrot.slane %v2663, %v2667
        %v2671 = vsel %vm892, %v2658, 0
        %2673 = vmatprep.subr.mxu0 0.0
        %2674 = vmatpush1.msra.mxu0 %v2659
        %2675 = vmatprep.subr.mxu0 0.0
        %2676 = vmatpush1.msra.mxu0 %v2660
        %2677 = vmatprep.subr.mxu0 0.0
        %2678 = vmatpush1.msra.mxu0 %v2661
        %2679 = vmatprep.subr.mxu0 0.0
        %2680 = vmatpush1.msra.mxu0 %v2662
        %2681 = vmatprep.subr.mxu0 0.0
        %2682 = vmatpush1.msra.mxu0 0.0
        %2683 = vmatprep.subr.mxu0 0.0
        %2684 = vmatpush1.msra.mxu0 0.0
        %2685 = vmatprep.subr.mxu0 0.0
        %2686 = vmatpush1.msra.mxu0 0.0
        %2687 = vmatprep.subr.mxu0 0.0
        %2688 = vmatpush1.msra.mxu0 0.0
        %2689 = vmatprep.subr.mxu0 0.0
        %2690 = vmatpush1.msra.mxu0 0.0
        %2691 = vmatprep.subr.mxu0 0.0
        %2692 = vmatpush1.msra.mxu0 0.0
        %2693 = vmatprep.subr.mxu0 0.0
        %2694 = vmatpush1.msra.mxu0 0.0
        %2695 = vmatprep.subr.mxu0 0.0
        %2696 = vmatpush1.msra.mxu0 0.0
        %2697 = vmatprep.subr.mxu0 0.0
        %2698 = vmatpush1.msra.mxu0 0.0
        %2699 = vmatprep.subr.mxu0 0.0
        %2700 = vmatpush1.msra.mxu0 0.0
        %2701 = vmatprep.subr.mxu0 0.0
        %2702 = vmatpush1.msra.mxu0 0.0
        %2703 = vmatprep.subr.mxu0 0.0
        %2704 = vmatpush1.msra.mxu0 0.0
        %2705 = vmatprep.subr.mxu0 0.0
        %2706 = vmatpush1.msra.mxu0 0.0
        %2707 = vmatprep.subr.mxu0 0.0
        %2708 = vmatpush1.msra.mxu0 0.0
        %2709 = vmatprep.subr.mxu0 0.0
        %2710 = vmatpush1.msra.mxu0 0.0
        %2711 = vmatprep.subr.mxu0 0.0
        %2712 = vmatpush1.msra.mxu0 0.0
        %2713 = vmatprep.subr.mxu0 0.0
        %2714 = vmatpush1.msra.mxu0 0.0
        %2715 = vmatprep.subr.mxu0 0.0
        %2716 = vmatpush1.msra.mxu0 0.0
        %2717 = vmatprep.subr.mxu0 0.0
        %2718 = vmatpush1.msra.mxu0 0.0
        %2719 = vmatprep.subr.mxu0 0.0
        %2720 = vmatpush1.msra.mxu0 0.0
        %2721 = vmatprep.subr.mxu0 0.0
        %2722 = vmatpush1.msra.mxu0 0.0
        %2723 = vmatprep.subr.mxu0 0.0
        %2724 = vmatpush1.msra.mxu0 0.0
        %2725 = vmatprep.subr.mxu0 0.0
        %2726 = vmatpush1.msra.mxu0 0.0
        %2727 = vmatprep.subr.mxu0 0.0
        %2728 = vmatpush1.msra.mxu0 0.0
        %2729 = vmatprep.subr.mxu0 0.0
        %2730 = vmatpush1.msra.mxu0 0.0
        %2731 = vmatprep.subr.mxu0 0.0
        %2732 = vmatpush1.msra.mxu0 0.0
        %2733 = vmatprep.subr.mxu0 0.0
        %2734 = vmatpush1.msra.mxu0 0.0
        %2735 = vmatprep.subr.mxu0 0.0
        %2736 = vmatpush1.msra.mxu0 0.0
        %2737 = vmatprep.mubr.f32.mxu0 0.0
        %2738 = vmatmul.mubr.f32.gmra.mrb[0].mxu0 %v2671
        %v2739 = vpop.f32.mrb[0].mxu0
        %v2740 = vadd.f32 %v2668, %v2739
        %v2741 = vpop.f32.mrb[0].mxu0
        %2742 = vdwg.mxu0
        %v2743 = vadd.f32 %v1764, %v2740
        %v2744 = vld [vmem:[%s16] sm:$0x1]
        %v2745 = vld [vmem:[%s17] sm:$0x1]
        %v2746 = vsel %vm892, %v2743, 0.0
        %2747 = vadd.xlane.f32.xlu0 %v2746
        %v2748 = vpop.xlane.xlu0 %2747
        %v2749 = vmul.f32 %v2748, %v1740
        %v2750 = vsub.f32 %v2743, %v2749
        %v2751 = vmul.f32 %v2750, %v2750
        %v2752 = vsel %vm892, %v2751, 0.0
        %2753 = vadd.xlane.f32.xlu0 %v2752
        %v2754 = vpop.xlane.xlu0 %2753
        %v2755 = vmul.f32 %v2754, %v1740
        %v2756 = vadd.f32 %v2755, 1e-05
        %v2757 = vrsqrt.pop %v2756
        %v2758 = vmul.f32 %v2750, %v2757
        %v2760 = vlaneseq
        %v2761 = vshrl.u32 %v2760, 7
        %v2762 = vsub.s32 0, %v2761
        %v2763 = vrot.slane %v2744, %v2762
        %v2765 = vmul.f32 %v2758, %v2763
        %v2767 = vlaneseq
        %v2768 = vshrl.u32 %v2767, 7
        %v2769 = vsub.s32 0, %v2768
        %v2770 = vrot.slane %v2745, %v2769
        %v2772 = vadd.f32 %v2765, %v2770
        %v2773 = vld [vmem:[%s18] sm:$0xff]
        %v2774 = vld [vmem:[%s18 + $0x8] sm:$0xff]
        %v2775 = vld [vmem:[%s18 + $0x10] sm:$0xff]
        %v2776 = vld [vmem:[%s18 + $0x18] sm:$0xff]
        %v2777 = vld [vmem:[%s19] sm:$0x1]
        %v2779 = vlaneseq
        %v2780 = vshrl.u32 %v2779, 7
        %v2781 = vsub.s32 0, %v2780
        %v2782 = vrot.slane %v2777, %v2781
        %v2785 = vsel %vm892, %v2772, 0
        %2787 = vmatprep.subr.mxu0 0.0
        %2788 = vmatpush1.msra.mxu0 %v2773
        %2789 = vmatprep.subr.mxu0 0.0
        %2790 = vmatpush1.msra.mxu0 %v2774
        %2791 = vmatprep.subr.mxu0 0.0
        %2792 = vmatpush1.msra.mxu0 %v2775
        %2793 = vmatprep.subr.mxu0 0.0
        %2794 = vmatpush1.msra.mxu0 %v2776
        %2795 = vmatprep.subr.mxu0 0.0
        %2796 = vmatpush1.msra.mxu0 0.0
        %2797 = vmatprep.subr.mxu0 0.0
        %2798 = vmatpush1.msra.mxu0 0.0
        %2799 = vmatprep.subr.mxu0 0.0
        %2800 = vmatpush1.msra.mxu0 0.0
        %2801 = vmatprep.subr.mxu0 0.0
        %2802 = vmatpush1.msra.mxu0 0.0
        %2803 = vmatprep.subr.mxu0 0.0
        %2804 = vmatpush1.msra.mxu0 0.0
        %2805 = vmatprep.subr.mxu0 0.0
        %2806 = vmatpush1.msra.mxu0 0.0
        %2807 = vmatprep.subr.mxu0 0.0
        %2808 = vmatpush1.msra.mxu0 0.0
        %2809 = vmatprep.subr.mxu0 0.0
        %2810 = vmatpush1.msra.mxu0 0.0
        %2811 = vmatprep.subr.mxu0 0.0
        %2812 = vmatpush1.msra.mxu0 0.0
        %2813 = vmatprep.subr.mxu0 0.0
        %2814 = vmatpush1.msra.mxu0 0.0
        %2815 = vmatprep.subr.mxu0 0.0
        %2816 = vmatpush1.msra.mxu0 0.0
        %2817 = vmatprep.subr.mxu0 0.0
        %2818 = vmatpush1.msra.mxu0 0.0
        %2819 = vmatprep.subr.mxu0 0.0
        %2820 = vmatpush1.msra.mxu0 0.0
        %2821 = vmatprep.subr.mxu0 0.0
        %2822 = vmatpush1.msra.mxu0 0.0
        %2823 = vmatprep.subr.mxu0 0.0
        %2824 = vmatpush1.msra.mxu0 0.0
        %2825 = vmatprep.subr.mxu0 0.0
        %2826 = vmatpush1.msra.mxu0 0.0
        %2827 = vmatprep.subr.mxu0 0.0
        %2828 = vmatpush1.msra.mxu0 0.0
        %2829 = vmatprep.subr.mxu0 0.0
        %2830 = vmatpush1.msra.mxu0 0.0
        %2831 = vmatprep.subr.mxu0 0.0
        %2832 = vmatpush1.msra.mxu0 0.0
        %2833 = vmatprep.subr.mxu0 0.0
        %2834 = vmatpush1.msra.mxu0 0.0
        %2835 = vmatprep.subr.mxu0 0.0
        %2836 = vmatpush1.msra.mxu0 0.0
        %2837 = vmatprep.subr.mxu0 0.0
        %2838 = vmatpush1.msra.mxu0 0.0
        %2839 = vmatprep.subr.mxu0 0.0
        %2840 = vmatpush1.msra.mxu0 0.0
        %2841 = vmatprep.subr.mxu0 0.0
        %2842 = vmatpush1.msra.mxu0 0.0
        %2843 = vmatprep.subr.mxu0 0.0
        %2844 = vmatpush1.msra.mxu0 0.0
        %2845 = vmatprep.subr.mxu0 0.0
        %2846 = vmatpush1.msra.mxu0 0.0
        %2847 = vmatprep.subr.mxu0 0.0
        %2848 = vmatpush1.msra.mxu0 0.0
        %2849 = vmatprep.subr.mxu0 0.0
        %2850 = vmatpush1.msra.mxu0 0.0
        %2851 = vmatprep.mubr.f32.mxu0 0.0
        %2852 = vmatmul.mubr.f32.gmra.mrb[0].mxu0 %v2785
        %v2853 = vpop.f32.mrb[0].mxu0
        %v2854 = vadd.f32 %v2782, %v2853
        %v2855 = vpop.f32.mrb[0].mxu0
        %2856 = vdwg.mxu0
        %v2857 = vmax.f32 %v2854, 0.0
        %v2858 = vld [vmem:[%s20] sm:$0xff]
        %v2859 = vld [vmem:[%s20 + $0x8] sm:$0xff]
        %v2860 = vld [vmem:[%s20 + $0x10] sm:$0xff]
        %v2861 = vld [vmem:[%s20 + $0x18] sm:$0xff]
        %v2862 = vld [vmem:[%s20 + $0x20] sm:$0xff]
        %v2863 = vld [vmem:[%s20 + $0x28] sm:$0xff]
        %v2864 = vld [vmem:[%s20 + $0x30] sm:$0xff]
        %v2865 = vld [vmem:[%s20 + $0x38] sm:$0xff]
        %v2866 = vld [vmem:[%s21] sm:$0x1]
        %v2868 = vlaneseq
        %v2869 = vshrl.u32 %v2868, 7
        %v2870 = vsub.s32 0, %v2869
        %v2871 = vrot.slane %v2866, %v2870
        %vm2873 = vcmask 523264
        %v2875 = vsel %vm2873, %v2857, 0
        %2877 = vmatprep.subr.mxu0 0.0
        %2878 = vmatpush1.msra.mxu0 %v2858
        %2879 = vmatprep.subr.mxu0 0.0
        %2880 = vmatpush1.msra.mxu0 %v2859
        %2881 = vmatprep.subr.mxu0 0.0
        %2882 = vmatpush1.msra.mxu0 %v2860
        %2883 = vmatprep.subr.mxu0 0.0
        %2884 = vmatpush1.msra.mxu0 %v2861
        %2885 = vmatprep.subr.mxu0 0.0
        %2886 = vmatpush1.msra.mxu0 %v2862
        %2887 = vmatprep.subr.mxu0 0.0
        %2888 = vmatpush1.msra.mxu0 %v2863
        %2889 = vmatprep.subr.mxu0 0.0
        %2890 = vmatpush1.msra.mxu0 %v2864
        %2891 = vmatprep.subr.mxu0 0.0
        %2892 = vmatpush1.msra.mxu0 %v2865
        %2893 = vmatprep.subr.mxu0 0.0
        %2894 = vmatpush1.msra.mxu0 0.0
        %2895 = vmatprep.subr.mxu0 0.0
        %2896 = vmatpush1.msra.mxu0 0.0
        %2897 = vmatprep.subr.mxu0 0.0
        %2898 = vmatpush1.msra.mxu0 0.0
        %2899 = vmatprep.subr.mxu0 0.0
        %2900 = vmatpush1.msra.mxu0 0.0
        %2901 = vmatprep.subr.mxu0 0.0
        %2902 = vmatpush1.msra.mxu0 0.0
        %2903 = vmatprep.subr.mxu0 0.0
        %2904 = vmatpush1.msra.mxu0 0.0
        %2905 = vmatprep.subr.mxu0 0.0
        %2906 = vmatpush1.msra.mxu0 0.0
        %2907 = vmatprep.subr.mxu0 0.0
        %2908 = vmatpush1.msra.mxu0 0.0
        %2909 = vmatprep.subr.mxu0 0.0
        %2910 = vmatpush1.msra.mxu0 0.0
        %2911 = vmatprep.subr.mxu0 0.0
        %2912 = vmatpush1.msra.mxu0 0.0
        %2913 = vmatprep.subr.mxu0 0.0
        %2914 = vmatpush1.msra.mxu0 0.0
        %2915 = vmatprep.subr.mxu0 0.0
        %2916 = vmatpush1.msra.mxu0 0.0
        %2917 = vmatprep.subr.mxu0 0.0
        %2918 = vmatpush1.msra.mxu0 0.0
        %2919 = vmatprep.subr.mxu0 0.0
        %2920 = vmatpush1.msra.mxu0 0.0
        %2921 = vmatprep.subr.mxu0 0.0
        %2922 = vmatpush1.msra.mxu0 0.0
        %2923 = vmatprep.subr.mxu0 0.0
        %2924 = vmatpush1.msra.mxu0 0.0
        %2925 = vmatprep.subr.mxu0 0.0
        %2926 = vmatpush1.msra.mxu0 0.0
        %2927 = vmatprep.subr.mxu0 0.0
        %2928 = vmatpush1.msra.mxu0 0.0
        %2929 = vmatprep.subr.mxu0 0.0
        %2930 = vmatpush1.msra.mxu0 0.0
        %2931 = vmatprep.subr.mxu0 0.0
        %2932 = vmatpush1.msra.mxu0 0.0
        %2933 = vmatprep.subr.mxu0 0.0
        %2934 = vmatpush1.msra.mxu0 0.0
        %2935 = vmatprep.subr.mxu0 0.0
        %2936 = vmatpush1.msra.mxu0 0.0
        %2937 = vmatprep.subr.mxu0 0.0
        %2938 = vmatpush1.msra.mxu0 0.0
        %2939 = vmatprep.subr.mxu0 0.0
        %2940 = vmatpush1.msra.mxu0 0.0
        %2941 = vmatprep.mubr.f32.mxu0 0.0
        %2942 = vmatmul.mubr.f32.gmra.mrb[0].mxu0 %v2875
        %v2943 = vpop.f32.mrb[0].mxu0
        %v2944 = vadd.f32 %v2871, %v2943
        %v2945 = vpop.f32.mrb[0].mxu0
        %2946 = vdwg.mxu0
        %v2947 = vadd.f32 %v2772, %v2944
        %v2948 = vld [vmem:[%s22] sm:$0x1]
        %v2949 = vld [vmem:[%s23] sm:$0x1]
        %v2950 = vsel %vm892, %v2947, 0.0
        %2951 = vadd.xlane.f32.xlu0 %v2950
        %v2952 = vpop.xlane.xlu0 %2951
        %v2953 = vmul.f32 %v2952, %v1740
        %v2954 = vsub.f32 %v2947, %v2953
        %v2955 = vmul.f32 %v2954, %v2954
        %v2956 = vsel %vm892, %v2955, 0.0
        %2957 = vadd.xlane.f32.xlu0 %v2956
        %v2958 = vpop.xlane.xlu0 %2957
        %v2959 = vmul.f32 %v2958, %v1740
        %v2960 = vadd.f32 %v2959, 1e-05
        %v2961 = vrsqrt.pop %v2960
        %v2962 = vmul.f32 %v2954, %v2961
        %v2964 = vlaneseq
        %v2965 = vshrl.u32 %v2964, 7
        %v2966 = vsub.s32 0, %v2965
        %v2967 = vrot.slane %v2948, %v2966
        %v2969 = vmul.f32 %v2962, %v2967
        %v2971 = vlaneseq
        %v2972 = vshrl.u32 %v2971, 7
        %v2973 = vsub.s32 0, %v2972
        %v2974 = vrot.slane %v2949, %v2973
        %v2976 = vadd.f32 %v2969, %v2974
        %s2977 = scalar_lea.vmem %s4, 32
        %v2978 = vld [vmem:[%s2977] sm:$0xff]
        %v2979 = vld [vmem:[%s2977 + $0x8] sm:$0xff]
        %v2980 = vld [vmem:[%s2977 + $0x10] sm:$0xff]
        %v2981 = vld [vmem:[%s2977 + $0x18] sm:$0xff]
        %s2982 = scalar_lea.vmem %s5, 1
        %v2983 = vld [vmem:[%s2982] sm:$0x1]
        %v2985 = vlaneseq
        %v2986 = vshrl.u32 %v2985, 7
        %v2987 = vsub.s32 0, %v2986
        %v2988 = vrot.slane %v2983, %v2987
        %v2991 = vsel %vm892, %v2976, 0
        %2993 = vmatprep.subr.mxu0 0.0
        %2994 = vmatpush1.msra.mxu0 %v2978
        %2995 = vmatprep.subr.mxu0 0.0
        %2996 = vmatpush1.msra.mxu0 %v2979
        %2997 = vmatprep.subr.mxu0 0.0
        %2998 = vmatpush1.msra.mxu0 %v2980
        %2999 = vmatprep.subr.mxu0 0.0
        %3000 = vmatpush1.msra.mxu0 %v2981
        %3001 = vmatprep.subr.mxu0 0.0
        %3002 = vmatpush1.msra.mxu0 0.0
        %3003 = vmatprep.subr.mxu0 0.0
        %3004 = vmatpush1.msra.mxu0 0.0
        %3005 = vmatprep.subr.mxu0 0.0
        %3006 = vmatpush1.msra.mxu0 0.0
        %3007 = vmatprep.subr.mxu0 0.0
        %3008 = vmatpush1.msra.mxu0 0.0
        %3009 = vmatprep.subr.mxu0 0.0
        %3010 = vmatpush1.msra.mxu0 0.0
        %3011 = vmatprep.subr.mxu0 0.0
        %3012 = vmatpush1.msra.mxu0 0.0
        %3013 = vmatprep.subr.mxu0 0.0
        %3014 = vmatpush1.msra.mxu0 0.0
        %3015 = vmatprep.subr.mxu0 0.0
        %3016 = vmatpush1.msra.mxu0 0.0
        %3017 = vmatprep.subr.mxu0 0.0
        %3018 = vmatpush1.msra.mxu0 0.0
        %3019 = vmatprep.subr.mxu0 0.0
        %3020 = vmatpush1.msra.mxu0 0.0
        %3021 = vmatprep.subr.mxu0 0.0
        %3022 = vmatpush1.msra.mxu0 0.0
        %3023 = vmatprep.subr.mxu0 0.0
        %3024 = vmatpush1.msra.mxu0 0.0
        %3025 = vmatprep.subr.mxu0 0.0
        %3026 = vmatpush1.msra.mxu0 0.0
        %3027 = vmatprep.subr.mxu0 0.0
        %3028 = vmatpush1.msra.mxu0 0.0
        %3029 = vmatprep.subr.mxu0 0.0
        %3030 = vmatpush1.msra.mxu0 0.0
        %3031 = vmatprep.subr.mxu0 0.0
        %3032 = vmatpush1.msra.mxu0 0.0
        %3033 = vmatprep.subr.mxu0 0.0
        %3034 = vmatpush1.msra.mxu0 0.0
        %3035 = vmatprep.subr.mxu0 0.0
        %3036 = vmatpush1.msra.mxu0 0.0
        %3037 = vmatprep.subr.mxu0 0.0
        %3038 = vmatpush1.msra.mxu0 0.0
        %3039 = vmatprep.subr.mxu0 0.0
        %3040 = vmatpush1.msra.mxu0 0.0
        %3041 = vmatprep.subr.mxu0 0.0
        %3042 = vmatpush1.msra.mxu0 0.0
        %3043 = vmatprep.subr.mxu0 0.0
        %3044 = vmatpush1.msra.mxu0 0.0
        %3045 = vmatprep.subr.mxu0 0.0
        %3046 = vmatpush1.msra.mxu0 0.0
        %3047 = vmatprep.subr.mxu0 0.0
        %3048 = vmatpush1.msra.mxu0 0.0
        %3049 = vmatprep.subr.mxu0 0.0
        %3050 = vmatpush1.msra.mxu0 0.0
        %3051 = vmatprep.subr.mxu0 0.0
        %3052 = vmatpush1.msra.mxu0 0.0
        %3053 = vmatprep.subr.mxu0 0.0
        %3054 = vmatpush1.msra.mxu0 0.0
        %3055 = vmatprep.subr.mxu0 0.0
        %3056 = vmatpush1.msra.mxu0 0.0
        %3057 = vmatprep.mubr.f32.mxu0 0.0
        %3058 = vmatmul.mubr.f32.gmra.mrb[0].mxu0 %v2991
        %v3059 = vpop.f32.mrb[0].mxu0
        %v3060 = vadd.f32 %v2988, %v3059
        %v3061 = vpop.f32.mrb[0].mxu0
        %3062 = vdwg.mxu0
        %v3063 = vmul.f32 %v3060, 0.35355338
        %3065 = vrot.lane.b32.xlu0 %v3060, 96
        %v3066 = vpop.permute.xlu0 %3065
        %v3068 = vsel %vm970, %v3063, 0
        %v3070 = vsel %vm970, %v3066, 0
        %3072 = vmatprep.subr.mxu0 0.0
        %3073 = vmatpush1.xpose.msra.mxu0 %v3070
        %3074 = vmatprep.subr.mxu0 0.0
        %3075 = vmatpush1.xpose.msra.mxu0 0.0
        %3076 = vmatprep.subr.mxu0 0.0
        %3077 = vmatpush1.xpose.msra.mxu0 0.0
        %3078 = vmatprep.subr.mxu0 0.0
        %3079 = vmatpush1.xpose.msra.mxu0 0.0
        %3080 = vmatprep.subr.mxu0 0.0
        %3081 = vmatpush1.xpose.msra.mxu0 0.0
        %3082 = vmatprep.subr.mxu0 0.0
        %3083 = vmatpush1.xpose.msra.mxu0 0.0
        %3084 = vmatprep.subr.mxu0 0.0
        %3085 = vmatpush1.xpose.msra.mxu0 0.0
        %3086 = vmatprep.subr.mxu0 0.0
        %3087 = vmatpush1.xpose.msra.mxu0 0.0
        %3088 = vmatprep.subr.mxu0 0.0
        %3089 = vmatpush1.xpose.msra.mxu0 0.0
        %3090 = vmatprep.subr.mxu0 0.0
        %3091 = vmatpush1.xpose.msra.mxu0 0.0
        %3092 = vmatprep.subr.mxu0 0.0
        %3093 = vmatpush1.xpose.msra.mxu0 0.0
        %3094 = vmatprep.subr.mxu0 0.0
        %3095 = vmatpush1.xpose.msra.mxu0 0.0
        %3096 = vmatprep.subr.mxu0 0.0
        %3097 = vmatpush1.xpose.msra.mxu0 0.0
        %3098 = vmatprep.subr.mxu0 0.0
        %3099 = vmatpush1.xpose.msra.mxu0 0.0
        %3100 = vmatprep.subr.mxu0 0.0
        %3101 = vmatpush1.xpose.msra.mxu0 0.0
        %3102 = vmatprep.subr.mxu0 0.0
        %3103 = vmatpush1.xpose.msra.mxu0 0.0
        %3104 = vmatprep.subr.mxu0 0.0
        %3105 = vmatpush1.xpose.msra.mxu0 0.0
        %3106 = vmatprep.subr.mxu0 0.0
        %3107 = vmatpush1.xpose.msra.mxu0 0.0
        %3108 = vmatprep.subr.mxu0 0.0
        %3109 = vmatpush1.xpose.msra.mxu0 0.0
        %3110 = vmatprep.subr.mxu0 0.0
        %3111 = vmatpush1.xpose.msra.mxu0 0.0
        %3112 = vmatprep.subr.mxu0 0.0
        %3113 = vmatpush1.xpose.msra.mxu0 0.0
        %3114 = vmatprep.subr.mxu0 0.0
        %3115 = vmatpush1.xpose.msra.mxu0 0.0
        %3116 = vmatprep.subr.mxu0 0.0
        %3117 = vmatpush1.xpose.msra.mxu0 0.0
        %3118 = vmatprep.subr.mxu0 0.0
        %3119 = vmatpush1.xpose.msra.mxu0 0.0
        %3120 = vmatprep.subr.mxu0 0.0
        %3121 = vmatpush1.xpose.msra.mxu0 0.0
        %3122 = vmatprep.subr.mxu0 0.0
        %3123 = vmatpush1.xpose.msra.mxu0 0.0
        %3124 = vmatprep.subr.mxu0 0.0
        %3125 = vmatpush1.xpose.msra.mxu0 0.0
        %3126 = vmatprep.subr.mxu0 0.0
        %3127 = vmatpush1.xpose.msra.mxu0 0.0
        %3128 = vmatprep.subr.mxu0 0.0
        %3129 = vmatpush1.xpose.msra.mxu0 0.0
        %3130 = vmatprep.subr.mxu0 0.0
        %3131 = vmatpush1.xpose.msra.mxu0 0.0
        %3132 = vmatprep.subr.mxu0 0.0
        %3133 = vmatpush1.xpose.msra.mxu0 0.0
        %3134 = vmatprep.subr.mxu0 0.0
        %3135 = vmatpush1.xpose.msra.mxu0 0.0
        %3136 = vmatprep.mubr.f32.mxu0 0.0
        %3137 = vmatmul.mubr.f32.gmra.mrb[0].mxu0 %v3068
        %v3138 = vpop.f32.mrb[0].mxu0
        %v3139 = vadd.f32 0.0, %v3138
        %v3140 = vpop.f32.mrb[0].mxu0
        %3141 = vdwg.mxu0
        %v3142 = vsel %vm1046, %v3139, -1e+10
        %v3143 = vsel %vm970, %v3142, -inf
        %3144 = vmax.xlane.f32.xlu0 %v3143
        %v3145 = vpop.xlane.xlu0 %3144
        %v3146 = vsub.f32 %v3142, %v3145
        %v3147 = vmul.f32 %v3146, 1.442695
        %v3148 = vpow.pop %v3147
        %v3149 = vsel %vm970, %v3148, 0.0
        %3150 = vadd.xlane.f32.xlu0 %v3149
        %v3151 = vpop.xlane.xlu0 %3150
        %v3152 = vrcp.pop %v3151
        %v3153 = vmul.f32 %v3148, %v3152
        %3154 = vrot.lane.b32.xlu0 %v3060, 64
        %v3155 = vpop.permute.xlu0 %3154
        %v3158 = vsel %vm970, %v3153, 0
        %3160 = vmatprep.subr.mxu0 0.0
        %3161 = vmatpush1.msra.mxu0 %v3155
        %3162 = vmatprep.subr.mxu0 0.0
        %3163 = vmatpush1.msra.mxu0 0.0
        %3164 = vmatprep.subr.mxu0 0.0
        %3165 = vmatpush1.msra.mxu0 0.0
        %3166 = vmatprep.subr.mxu0 0.0
        %3167 = vmatpush1.msra.mxu0 0.0
        %3168 = vmatprep.subr.mxu0 0.0
        %3169 = vmatpush1.msra.mxu0 0.0
        %3170 = vmatprep.subr.mxu0 0.0
        %3171 = vmatpush1.msra.mxu0 0.0
        %3172 = vmatprep.subr.mxu0 0.0
        %3173 = vmatpush1.msra.mxu0 0.0
        %3174 = vmatprep.subr.mxu0 0.0
        %3175 = vmatpush1.msra.mxu0 0.0
        %3176 = vmatprep.subr.mxu0 0.0
        %3177 = vmatpush1.msra.mxu0 0.0
        %3178 = vmatprep.subr.mxu0 0.0
        %3179 = vmatpush1.msra.mxu0 0.0
        %3180 = vmatprep.subr.mxu0 0.0
        %3181 = vmatpush1.msra.mxu0 0.0
        %3182 = vmatprep.subr.mxu0 0.0
        %3183 = vmatpush1.msra.mxu0 0.0
        %3184 = vmatprep.subr.mxu0 0.0
        %3185 = vmatpush1.msra.mxu0 0.0
        %3186 = vmatprep.subr.mxu0 0.0
        %3187 = vmatpush1.msra.mxu0 0.0
        %3188 = vmatprep.subr.mxu0 0.0
        %3189 = vmatpush1.msra.mxu0 0.0
        %3190 = vmatprep.subr.mxu0 0.0
        %3191 = vmatpush1.msra.mxu0 0.0
        %3192 = vmatprep.subr.mxu0 0.0
        %3193 = vmatpush1.msra.mxu0 0.0
        %3194 = vmatprep.subr.mxu0 0.0
        %3195 = vmatpush1.msra.mxu0 0.0
        %3196 = vmatprep.subr.mxu0 0.0
        %3197 = vmatpush1.msra.mxu0 0.0
        %3198 = vmatprep.subr.mxu0 0.0
        %3199 = vmatpush1.msra.mxu0 0.0
        %3200 = vmatprep.subr.mxu0 0.0
        %3201 = vmatpush1.msra.mxu0 0.0
        %3202 = vmatprep.subr.mxu0 0.0
        %3203 = vmatpush1.msra.mxu0 0.0
        %3204 = vmatprep.subr.mxu0 0.0
        %3205 = vmatpush1.msra.mxu0 0.0
        %3206 = vmatprep.subr.mxu0 0.0
        %3207 = vmatpush1.msra.mxu0 0.0
        %3208 = vmatprep.subr.mxu0 0.0
        %3209 = vmatpush1.msra.mxu0 0.0
        %3210 = vmatprep.subr.mxu0 0.0
        %3211 = vmatpush1.msra.mxu0 0.0
        %3212 = vmatprep.subr.mxu0 0.0
        %3213 = vmatpush1.msra.mxu0 0.0
        %3214 = vmatprep.subr.mxu0 0.0
        %3215 = vmatpush1.msra.mxu0 0.0
        %3216 = vmatprep.subr.mxu0 0.0
        %3217 = vmatpush1.msra.mxu0 0.0
        %3218 = vmatprep.subr.mxu0 0.0
        %3219 = vmatpush1.msra.mxu0 0.0
        %3220 = vmatprep.subr.mxu0 0.0
        %3221 = vmatpush1.msra.mxu0 0.0
        %3222 = vmatprep.subr.mxu0 0.0
        %3223 = vmatpush1.msra.mxu0 0.0
        %3224 = vmatprep.mubr.f32.mxu0 0.0
        %3225 = vmatmul.mubr.f32.gmra.mrb[0].mxu0 %v3158
        %v3226 = vpop.f32.mrb[0].mxu0
        %v3227 = vadd.f32 0.0, %v3226
        %v3228 = vpop.f32.mrb[0].mxu0
        %3229 = vdwg.mxu0
        %3230 = vrot.lane.b32.xlu0 %v3063, 120
        %v3231 = vpop.permute.xlu0 %3230
        %3232 = vrot.lane.b32.xlu0 %v3060, 88
        %v3233 = vpop.permute.xlu0 %3232
        %v3234 = vsel %vm970, %v3231, 0
        %v3236 = vsel %vm970, %v3233, 0
        %3238 = vmatprep.subr.mxu0 0.0
        %3239 = vmatpush1.xpose.msra.mxu0 %v3236
        %3240 = vmatprep.subr.mxu0 0.0
        %3241 = vmatpush1.xpose.msra.mxu0 0.0
        %3242 = vmatprep.subr.mxu0 0.0
        %3243 = vmatpush1.xpose.msra.mxu0 0.0
        %3244 = vmatprep.subr.mxu0 0.0
        %3245 = vmatpush1.xpose.msra.mxu0 0.0
        %3246 = vmatprep.subr.mxu0 0.0
        %3247 = vmatpush1.xpose.msra.mxu0 0.0
        %3248 = vmatprep.subr.mxu0 0.0
        %3249 = vmatpush1.xpose.msra.mxu0 0.0
        %3250 = vmatprep.subr.mxu0 0.0
        %3251 = vmatpush1.xpose.msra.mxu0 0.0
        %3252 = vmatprep.subr.mxu0 0.0
        %3253 = vmatpush1.xpose.msra.mxu0 0.0
        %3254 = vmatprep.subr.mxu0 0.0
        %3255 = vmatpush1.xpose.msra.mxu0 0.0
        %3256 = vmatprep.subr.mxu0 0.0
        %3257 = vmatpush1.xpose.msra.mxu0 0.0
        %3258 = vmatprep.subr.mxu0 0.0
        %3259 = vmatpush1.xpose.msra.mxu0 0.0
        %3260 = vmatprep.subr.mxu0 0.0
        %3261 = vmatpush1.xpose.msra.mxu0 0.0
        %3262 = vmatprep.subr.mxu0 0.0
        %3263 = vmatpush1.xpose.msra.mxu0 0.0
        %3264 = vmatprep.subr.mxu0 0.0
        %3265 = vmatpush1.xpose.msra.mxu0 0.0
        %3266 = vmatprep.subr.mxu0 0.0
        %3267 = vmatpush1.xpose.msra.mxu0 0.0
        %3268 = vmatprep.subr.mxu0 0.0
        %3269 = vmatpush1.xpose.msra.mxu0 0.0
        %3270 = vmatprep.subr.mxu0 0.0
        %3271 = vmatpush1.xpose.msra.mxu0 0.0
        %3272 = vmatprep.subr.mxu0 0.0
        %3273 = vmatpush1.xpose.msra.mxu0 0.0
        %3274 = vmatprep.subr.mxu0 0.0
        %3275 = vmatpush1.xpose.msra.mxu0 0.0
        %3276 = vmatprep.subr.mxu0 0.0
        %3277 = vmatpush1.xpose.msra.mxu0 0.0
        %3278 = vmatprep.subr.mxu0 0.0
        %3279 = vmatpush1.xpose.msra.mxu0 0.0
        %3280 = vmatprep.subr.mxu0 0.0
        %3281 = vmatpush1.xpose.msra.mxu0 0.0
        %3282 = vmatprep.subr.mxu0 0.0
        %3283 = vmatpush1.xpose.msra.mxu0 0.0
        %3284 = vmatprep.subr.mxu0 0.0
        %3285 = vmatpush1.xpose.msra.mxu0 0.0
        %3286 = vmatprep.subr.mxu0 0.0
        %3287 = vmatpush1.xpose.msra.mxu0 0.0
        %3288 = vmatprep.subr.mxu0 0.0
        %3289 = vmatpush1.xpose.msra.mxu0 0.0
        %3290 = vmatprep.subr.mxu0 0.0
        %3291 = vmatpush1.xpose.msra.mxu0 0.0
        %3292 = vmatprep.subr.mxu0 0.0
        %3293 = vmatpush1.xpose.msra.mxu0 0.0
        %3294 = vmatprep.subr.mxu0 0.0
        %3295 = vmatpush1.xpose.msra.mxu0 0.0
        %3296 = vmatprep.subr.mxu0 0.0
        %3297 = vmatpush1.xpose.msra.mxu0 0.0
        %3298 = vmatprep.subr.mxu0 0.0
        %3299 = vmatpush1.xpose.msra.mxu0 0.0
        %3300 = vmatprep.subr.mxu0 0.0
        %3301 = vmatpush1.xpose.msra.mxu0 0.0
        %3302 = vmatprep.mubr.f32.mxu0 0.0
        %3303 = vmatmul.mubr.f32.gmra.mrb[0].mxu0 %v3234
        %v3304 = vpop.f32.mrb[0].mxu0
        %v3305 = vadd.f32 0.0, %v3304
        %v3306 = vpop.f32.mrb[0].mxu0
        %3307 = vdwg.mxu0
        %v3308 = vsel %vm1046, %v3305, -1e+10
        %v3309 = vsel %vm970, %v3308, -inf
        %3310 = vmax.xlane.f32.xlu0 %v3309
        %v3311 = vpop.xlane.xlu0 %3310
        %v3312 = vsub.f32 %v3308, %v3311
        %v3313 = vmul.f32 %v3312, 1.442695
        %v3314 = vpow.pop %v3313
        %v3315 = vsel %vm970, %v3314, 0.0
        %3316 = vadd.xlane.f32.xlu0 %v3315
        %v3317 = vpop.xlane.xlu0 %3316
        %v3318 = vrcp.pop %v3317
        %v3319 = vmul.f32 %v3314, %v3318
        %3320 = vrot.lane.b32.xlu0 %v3060, 56
        %v3321 = vpop.permute.xlu0 %3320
        %v3324 = vsel %vm970, %v3319, 0
        %3326 = vmatprep.subr.mxu0 0.0
        %3327 = vmatpush1.msra.mxu0 %v3321
        %3328 = vmatprep.subr.mxu0 0.0
        %3329 = vmatpush1.msra.mxu0 0.0
        %3330 = vmatprep.subr.mxu0 0.0
        %3331 = vmatpush1.msra.mxu0 0.0
        %3332 = vmatprep.subr.mxu0 0.0
        %3333 = vmatpush1.msra.mxu0 0.0
        %3334 = vmatprep.subr.mxu0 0.0
        %3335 = vmatpush1.msra.mxu0 0.0
        %3336 = vmatprep.subr.mxu0 0.0
        %3337 = vmatpush1.msra.mxu0 0.0
        %3338 = vmatprep.subr.mxu0 0.0
        %3339 = vmatpush1.msra.mxu0 0.0
        %3340 = vmatprep.subr.mxu0 0.0
        %3341 = vmatpush1.msra.mxu0 0.0
        %3342 = vmatprep.subr.mxu0 0.0
        %3343 = vmatpush1.msra.mxu0 0.0
        %3344 = vmatprep.subr.mxu0 0.0
        %3345 = vmatpush1.msra.mxu0 0.0
        %3346 = vmatprep.subr.mxu0 0.0
        %3347 = vmatpush1.msra.mxu0 0.0
        %3348 = vmatprep.subr.mxu0 0.0
        %3349 = vmatpush1.msra.mxu0 0.0
        %3350 = vmatprep.subr.mxu0 0.0
        %3351 = vmatpush1.msra.mxu0 0.0
        %3352 = vmatprep.subr.mxu0 0.0
        %3353 = vmatpush1.msra.mxu0 0.0
        %3354 = vmatprep.subr.mxu0 0.0
        %3355 = vmatpush1.msra.mxu0 0.0
        %3356 = vmatprep.subr.mxu0 0.0
        %3357 = vmatpush1.msra.mxu0 0.0
        %3358 = vmatprep.subr.mxu0 0.0
        %3359 = vmatpush1.msra.mxu0 0.0
        %3360 = vmatprep.subr.mxu0 0.0
        %3361 = vmatpush1.msra.mxu0 0.0
        %3362 = vmatprep.subr.mxu0 0.0
        %3363 = vmatpush1.msra.mxu0 0.0
        %3364 = vmatprep.subr.mxu0 0.0
        %3365 = vmatpush1.msra.mxu0 0.0
        %3366 = vmatprep.subr.mxu0 0.0
        %3367 = vmatpush1.msra.mxu0 0.0
        %3368 = vmatprep.subr.mxu0 0.0
        %3369 = vmatpush1.msra.mxu0 0.0
        %3370 = vmatprep.subr.mxu0 0.0
        %3371 = vmatpush1.msra.mxu0 0.0
        %3372 = vmatprep.subr.mxu0 0.0
        %3373 = vmatpush1.msra.mxu0 0.0
        %3374 = vmatprep.subr.mxu0 0.0
        %3375 = vmatpush1.msra.mxu0 0.0
        %3376 = vmatprep.subr.mxu0 0.0
        %3377 = vmatpush1.msra.mxu0 0.0
        %3378 = vmatprep.subr.mxu0 0.0
        %3379 = vmatpush1.msra.mxu0 0.0
        %3380 = vmatprep.subr.mxu0 0.0
        %3381 = vmatpush1.msra.mxu0 0.0
        %3382 = vmatprep.subr.mxu0 0.0
        %3383 = vmatpush1.msra.mxu0 0.0
        %3384 = vmatprep.subr.mxu0 0.0
        %3385 = vmatpush1.msra.mxu0 0.0
        %3386 = vmatprep.subr.mxu0 0.0
        %3387 = vmatpush1.msra.mxu0 0.0
        %3388 = vmatprep.subr.mxu0 0.0
        %3389 = vmatpush1.msra.mxu0 0.0
        %3390 = vmatprep.mubr.f32.mxu0 0.0
        %3391 = vmatmul.mubr.f32.gmra.mrb[0].mxu0 %v3324
        %v3392 = vpop.f32.mrb[0].mxu0
        %v3393 = vadd.f32 0.0, %v3392
        %v3394 = vpop.f32.mrb[0].mxu0
        %3395 = vdwg.mxu0
        %3396 = vrot.lane.b32.xlu0 %v3063, 112
        %v3397 = vpop.permute.xlu0 %3396
        %3398 = vrot.lane.b32.xlu0 %v3060, 80
        %v3399 = vpop.permute.xlu0 %3398
        %v3400 = vsel %vm970, %v3397, 0
        %v3402 = vsel %vm970, %v3399, 0
        %3404 = vmatprep.subr.mxu0 0.0
        %3405 = vmatpush1.xpose.msra.mxu0 %v3402
        %3406 = vmatprep.subr.mxu0 0.0
        %3407 = vmatpush1.xpose.msra.mxu0 0.0
        %3408 = vmatprep.subr.mxu0 0.0
        %3409 = vmatpush1.xpose.msra.mxu0 0.0
        %3410 = vmatprep.subr.mxu0 0.0
        %3411 = vmatpush1.xpose.msra.mxu0 0.0
        %3412 = vmatprep.subr.mxu0 0.0
        %3413 = vmatpush1.xpose.msra.mxu0 0.0
        %3414 = vmatprep.subr.mxu0 0.0
        %3415 = vmatpush1.xpose.msra.mxu0 0.0
        %3416 = vmatprep.subr.mxu0 0.0
        %3417 = vmatpush1.xpose.msra.mxu0 0.0
        %3418 = vmatprep.subr.mxu0 0.0
        %3419 = vmatpush1.xpose.msra.mxu0 0.0
        %3420 = vmatprep.subr.mxu0 0.0
        %3421 = vmatpush1.xpose.msra.mxu0 0.0
        %3422 = vmatprep.subr.mxu0 0.0
        %3423 = vmatpush1.xpose.msra.mxu0 0.0
        %3424 = vmatprep.subr.mxu0 0.0
        %3425 = vmatpush1.xpose.msra.mxu0 0.0
        %3426 = vmatprep.subr.mxu0 0.0
        %3427 = vmatpush1.xpose.msra.mxu0 0.0
        %3428 = vmatprep.subr.mxu0 0.0
        %3429 = vmatpush1.xpose.msra.mxu0 0.0
        %3430 = vmatprep.subr.mxu0 0.0
        %3431 = vmatpush1.xpose.msra.mxu0 0.0
        %3432 = vmatprep.subr.mxu0 0.0
        %3433 = vmatpush1.xpose.msra.mxu0 0.0
        %3434 = vmatprep.subr.mxu0 0.0
        %3435 = vmatpush1.xpose.msra.mxu0 0.0
        %3436 = vmatprep.subr.mxu0 0.0
        %3437 = vmatpush1.xpose.msra.mxu0 0.0
        %3438 = vmatprep.subr.mxu0 0.0
        %3439 = vmatpush1.xpose.msra.mxu0 0.0
        %3440 = vmatprep.subr.mxu0 0.0
        %3441 = vmatpush1.xpose.msra.mxu0 0.0
        %3442 = vmatprep.subr.mxu0 0.0
        %3443 = vmatpush1.xpose.msra.mxu0 0.0
        %3444 = vmatprep.subr.mxu0 0.0
        %3445 = vmatpush1.xpose.msra.mxu0 0.0
        %3446 = vmatprep.subr.mxu0 0.0
        %3447 = vmatpush1.xpose.msra.mxu0 0.0
        %3448 = vmatprep.subr.mxu0 0.0
        %3449 = vmatpush1.xpose.msra.mxu0 0.0
        %3450 = vmatprep.subr.mxu0 0.0
        %3451 = vmatpush1.xpose.msra.mxu0 0.0
        %3452 = vmatprep.subr.mxu0 0.0
        %3453 = vmatpush1.xpose.msra.mxu0 0.0
        %3454 = vmatprep.subr.mxu0 0.0
        %3455 = vmatpush1.xpose.msra.mxu0 0.0
        %3456 = vmatprep.subr.mxu0 0.0
        %3457 = vmatpush1.xpose.msra.mxu0 0.0
        %3458 = vmatprep.subr.mxu0 0.0
        %3459 = vmatpush1.xpose.msra.mxu0 0.0
        %3460 = vmatprep.subr.mxu0 0.0
        %3461 = vmatpush1.xpose.msra.mxu0 0.0
        %3462 = vmatprep.subr.mxu0 0.0
        %3463 = vmatpush1.xpose.msra.mxu0 0.0
        %3464 = vmatprep.subr.mxu0 0.0
        %3465 = vmatpush1.xpose.msra.mxu0 0.0
        %3466 = vmatprep.subr.mxu0 0.0
        %3467 = vmatpush1.xpose.msra.mxu0 0.0
        %3468 = vmatprep.mubr.f32.mxu0 0.0
        %3469 = vmatmul.mubr.f32.gmra.mrb[0].mxu0 %v3400
        %v3470 = vpop.f32.mrb[0].mxu0
        %v3471 = vadd.f32 0.0, %v3470
        %v3472 = vpop.f32.mrb[0].mxu0
        %3473 = vdwg.mxu0
        %v3474 = vsel %vm1046, %v3471, -1e+10
        %v3475 = vsel %vm970, %v3474, -inf
        %3476 = vmax.xlane.f32.xlu0 %v3475
        %v3477 = vpop.xlane.xlu0 %3476
        %v3478 = vsub.f32 %v3474, %v3477
        %v3479 = vmul.f32 %v3478, 1.442695
        %v3480 = vpow.pop %v3479
        %v3481 = vsel %vm970, %v3480, 0.0
        %3482 = vadd.xlane.f32.xlu0 %v3481
        %v3483 = vpop.xlane.xlu0 %3482
        %v3484 = vrcp.pop %v3483
        %v3485 = vmul.f32 %v3480, %v3484
        %3486 = vrot.lane.b32.xlu0 %v3060, 48
        %v3487 = vpop.permute.xlu0 %3486
        %v3490 = vsel %vm970, %v3485, 0
        %3492 = vmatprep.subr.mxu0 0.0
        %3493 = vmatpush1.msra.mxu0 %v3487
        %3494 = vmatprep.subr.mxu0 0.0
        %3495 = vmatpush1.msra.mxu0 0.0
        %3496 = vmatprep.subr.mxu0 0.0
        %3497 = vmatpush1.msra.mxu0 0.0
        %3498 = vmatprep.subr.mxu0 0.0
        %3499 = vmatpush1.msra.mxu0 0.0
        %3500 = vmatprep.subr.mxu0 0.0
        %3501 = vmatpush1.msra.mxu0 0.0
        %3502 = vmatprep.subr.mxu0 0.0
        %3503 = vmatpush1.msra.mxu0 0.0
        %3504 = vmatprep.subr.mxu0 0.0
        %3505 = vmatpush1.msra.mxu0 0.0
        %3506 = vmatprep.subr.mxu0 0.0
        %3507 = vmatpush1.msra.mxu0 0.0
        %3508 = vmatprep.subr.mxu0 0.0
        %3509 = vmatpush1.msra.mxu0 0.0
        %3510 = vmatprep.subr.mxu0 0.0
        %3511 = vmatpush1.msra.mxu0 0.0
        %3512 = vmatprep.subr.mxu0 0.0
        %3513 = vmatpush1.msra.mxu0 0.0
        %3514 = vmatprep.subr.mxu0 0.0
        %3515 = vmatpush1.msra.mxu0 0.0
        %3516 = vmatprep.subr.mxu0 0.0
        %3517 = vmatpush1.msra.mxu0 0.0
        %3518 = vmatprep.subr.mxu0 0.0
        %3519 = vmatpush1.msra.mxu0 0.0
        %3520 = vmatprep.subr.mxu0 0.0
        %3521 = vmatpush1.msra.mxu0 0.0
        %3522 = vmatprep.subr.mxu0 0.0
        %3523 = vmatpush1.msra.mxu0 0.0
        %3524 = vmatprep.subr.mxu0 0.0
        %3525 = vmatpush1.msra.mxu0 0.0
        %3526 = vmatprep.subr.mxu0 0.0
        %3527 = vmatpush1.msra.mxu0 0.0
        %3528 = vmatprep.subr.mxu0 0.0
        %3529 = vmatpush1.msra.mxu0 0.0
        %3530 = vmatprep.subr.mxu0 0.0
        %3531 = vmatpush1.msra.mxu0 0.0
        %3532 = vmatprep.subr.mxu0 0.0
        %3533 = vmatpush1.msra.mxu0 0.0
        %3534 = vmatprep.subr.mxu0 0.0
        %3535 = vmatpush1.msra.mxu0 0.0
        %3536 = vmatprep.subr.mxu0 0.0
        %3537 = vmatpush1.msra.mxu0 0.0
        %3538 = vmatprep.subr.mxu0 0.0
        %3539 = vmatpush1.msra.mxu0 0.0
        %3540 = vmatprep.subr.mxu0 0.0
        %3541 = vmatpush1.msra.mxu0 0.0
        %3542 = vmatprep.subr.mxu0 0.0
        %3543 = vmatpush1.msra.mxu0 0.0
        %3544 = vmatprep.subr.mxu0 0.0
        %3545 = vmatpush1.msra.mxu0 0.0
        %3546 = vmatprep.subr.mxu0 0.0
        %3547 = vmatpush1.msra.mxu0 0.0
        %3548 = vmatprep.subr.mxu0 0.0
        %3549 = vmatpush1.msra.mxu0 0.0
        %3550 = vmatprep.subr.mxu0 0.0
        %3551 = vmatpush1.msra.mxu0 0.0
        %3552 = vmatprep.subr.mxu0 0.0
        %3553 = vmatpush1.msra.mxu0 0.0
        %3554 = vmatprep.subr.mxu0 0.0
        %3555 = vmatpush1.msra.mxu0 0.0
        %3556 = vmatprep.mubr.f32.mxu0 0.0
        %3557 = vmatmul.mubr.f32.gmra.mrb[0].mxu0 %v3490
        %v3558 = vpop.f32.mrb[0].mxu0
        %v3559 = vadd.f32 0.0, %v3558
        %v3560 = vpop.f32.mrb[0].mxu0
        %3561 = vdwg.mxu0
        %3562 = vrot.lane.b32.xlu0 %v3063, 104
        %v3563 = vpop.permute.xlu0 %3562
        %3564 = vrot.lane.b32.xlu0 %v3060, 72
        %v3565 = vpop.permute.xlu0 %3564
        %v3566 = vsel %vm970, %v3563, 0
        %v3568 = vsel %vm970, %v3565, 0
        %3570 = vmatprep.subr.mxu0 0.0
        %3571 = vmatpush1.xpose.msra.mxu0 %v3568
        %3572 = vmatprep.subr.mxu0 0.0
        %3573 = vmatpush1.xpose.msra.mxu0 0.0
        %3574 = vmatprep.subr.mxu0 0.0
        %3575 = vmatpush1.xpose.msra.mxu0 0.0
        %3576 = vmatprep.subr.mxu0 0.0
        %3577 = vmatpush1.xpose.msra.mxu0 0.0
        %3578 = vmatprep.subr.mxu0 0.0
        %3579 = vmatpush1.xpose.msra.mxu0 0.0
        %3580 = vmatprep.subr.mxu0 0.0
        %3581 = vmatpush1.xpose.msra.mxu0 0.0
        %3582 = vmatprep.subr.mxu0 0.0
        %3583 = vmatpush1.xpose.msra.mxu0 0.0
        %3584 = vmatprep.subr.mxu0 0.0
        %3585 = vmatpush1.xpose.msra.mxu0 0.0
        %3586 = vmatprep.subr.mxu0 0.0
        %3587 = vmatpush1.xpose.msra.mxu0 0.0
        %3588 = vmatprep.subr.mxu0 0.0
        %3589 = vmatpush1.xpose.msra.mxu0 0.0
        %3590 = vmatprep.subr.mxu0 0.0
        %3591 = vmatpush1.xpose.msra.mxu0 0.0
        %3592 = vmatprep.subr.mxu0 0.0
        %3593 = vmatpush1.xpose.msra.mxu0 0.0
        %3594 = vmatprep.subr.mxu0 0.0
        %3595 = vmatpush1.xpose.msra.mxu0 0.0
        %3596 = vmatprep.subr.mxu0 0.0
        %3597 = vmatpush1.xpose.msra.mxu0 0.0
        %3598 = vmatprep.subr.mxu0 0.0
        %3599 = vmatpush1.xpose.msra.mxu0 0.0
        %3600 = vmatprep.subr.mxu0 0.0
        %3601 = vmatpush1.xpose.msra.mxu0 0.0
        %3602 = vmatprep.subr.mxu0 0.0
        %3603 = vmatpush1.xpose.msra.mxu0 0.0
        %3604 = vmatprep.subr.mxu0 0.0
        %3605 = vmatpush1.xpose.msra.mxu0 0.0
        %3606 = vmatprep.subr.mxu0 0.0
        %3607 = vmatpush1.xpose.msra.mxu0 0.0
        %3608 = vmatprep.subr.mxu0 0.0
        %3609 = vmatpush1.xpose.msra.mxu0 0.0
        %3610 = vmatprep.subr.mxu0 0.0
        %3611 = vmatpush1.xpose.msra.mxu0 0.0
        %3612 = vmatprep.subr.mxu0 0.0
        %3613 = vmatpush1.xpose.msra.mxu0 0.0
        %3614 = vmatprep.subr.mxu0 0.0
        %3615 = vmatpush1.xpose.msra.mxu0 0.0
        %3616 = vmatprep.subr.mxu0 0.0
        %3617 = vmatpush1.xpose.msra.mxu0 0.0
        %3618 = vmatprep.subr.mxu0 0.0
        %3619 = vmatpush1.xpose.msra.mxu0 0.0
        %3620 = vmatprep.subr.mxu0 0.0
        %3621 = vmatpush1.xpose.msra.mxu0 0.0
        %3622 = vmatprep.subr.mxu0 0.0
        %3623 = vmatpush1.xpose.msra.mxu0 0.0
        %3624 = vmatprep.subr.mxu0 0.0
        %3625 = vmatpush1.xpose.msra.mxu0 0.0
        %3626 = vmatprep.subr.mxu0 0.0
        %3627 = vmatpush1.xpose.msra.mxu0 0.0
        %3628 = vmatprep.subr.mxu0 0.0
        %3629 = vmatpush1.xpose.msra.mxu0 0.0
        %3630 = vmatprep.subr.mxu0 0.0
        %3631 = vmatpush1.xpose.msra.mxu0 0.0
        %3632 = vmatprep.subr.mxu0 0.0
        %3633 = vmatpush1.xpose.msra.mxu0 0.0
        %3634 = vmatprep.mubr.f32.mxu0 0.0
        %3635 = vmatmul.mubr.f32.gmra.mrb[0].mxu0 %v3566
        %v3636 = vpop.f32.mrb[0].mxu0
        %v3637 = vadd.f32 0.0, %v3636
        %v3638 = vpop.f32.mrb[0].mxu0
        %3639 = vdwg.mxu0
        %v3640 = vsel %vm1046, %v3637, -1e+10
        %v3641 = vsel %vm970, %v3640, -inf
        %3642 = vmax.xlane.f32.xlu0 %v3641
        %v3643 = vpop.xlane.xlu0 %3642
        %v3644 = vsub.f32 %v3640, %v3643
        %v3645 = vmul.f32 %v3644, 1.442695
        %v3646 = vpow.pop %v3645
        %v3647 = vsel %vm970, %v3646, 0.0
        %3648 = vadd.xlane.f32.xlu0 %v3647
        %v3649 = vpop.xlane.xlu0 %3648
        %v3650 = vrcp.pop %v3649
        %v3651 = vmul.f32 %v3646, %v3650
        %3652 = vrot.lane.b32.xlu0 %v3060, 40
        %v3653 = vpop.permute.xlu0 %3652
        %v3656 = vsel %vm970, %v3651, 0
        %3658 = vmatprep.subr.mxu0 0.0
        %3659 = vmatpush1.msra.mxu0 %v3653
        %3660 = vmatprep.subr.mxu0 0.0
        %3661 = vmatpush1.msra.mxu0 0.0
        %3662 = vmatprep.subr.mxu0 0.0
        %3663 = vmatpush1.msra.mxu0 0.0
        %3664 = vmatprep.subr.mxu0 0.0
        %3665 = vmatpush1.msra.mxu0 0.0
        %3666 = vmatprep.subr.mxu0 0.0
        %3667 = vmatpush1.msra.mxu0 0.0
        %3668 = vmatprep.subr.mxu0 0.0
        %3669 = vmatpush1.msra.mxu0 0.0
        %3670 = vmatprep.subr.mxu0 0.0
        %3671 = vmatpush1.msra.mxu0 0.0
        %3672 = vmatprep.subr.mxu0 0.0
        %3673 = vmatpush1.msra.mxu0 0.0
        %3674 = vmatprep.subr.mxu0 0.0
        %3675 = vmatpush1.msra.mxu0 0.0
        %3676 = vmatprep.subr.mxu0 0.0
        %3677 = vmatpush1.msra.mxu0 0.0
        %3678 = vmatprep.subr.mxu0 0.0
        %3679 = vmatpush1.msra.mxu0 0.0
        %3680 = vmatprep.subr.mxu0 0.0
        %3681 = vmatpush1.msra.mxu0 0.0
        %3682 = vmatprep.subr.mxu0 0.0
        %3683 = vmatpush1.msra.mxu0 0.0
        %3684 = vmatprep.subr.mxu0 0.0
        %3685 = vmatpush1.msra.mxu0 0.0
        %3686 = vmatprep.subr.mxu0 0.0
        %3687 = vmatpush1.msra.mxu0 0.0
        %3688 = vmatprep.subr.mxu0 0.0
        %3689 = vmatpush1.msra.mxu0 0.0
        %3690 = vmatprep.subr.mxu0 0.0
        %3691 = vmatpush1.msra.mxu0 0.0
        %3692 = vmatprep.subr.mxu0 0.0
        %3693 = vmatpush1.msra.mxu0 0.0
        %3694 = vmatprep.subr.mxu0 0.0
        %3695 = vmatpush1.msra.mxu0 0.0
        %3696 = vmatprep.subr.mxu0 0.0
        %3697 = vmatpush1.msra.mxu0 0.0
        %3698 = vmatprep.subr.mxu0 0.0
        %3699 = vmatpush1.msra.mxu0 0.0
        %3700 = vmatprep.subr.mxu0 0.0
        %3701 = vmatpush1.msra.mxu0 0.0
        %3702 = vmatprep.subr.mxu0 0.0
        %3703 = vmatpush1.msra.mxu0 0.0
        %3704 = vmatprep.subr.mxu0 0.0
        %3705 = vmatpush1.msra.mxu0 0.0
        %3706 = vmatprep.subr.mxu0 0.0
        %3707 = vmatpush1.msra.mxu0 0.0
        %3708 = vmatprep.subr.mxu0 0.0
        %3709 = vmatpush1.msra.mxu0 0.0
        %3710 = vmatprep.subr.mxu0 0.0
        %3711 = vmatpush1.msra.mxu0 0.0
        %3712 = vmatprep.subr.mxu0 0.0
        %3713 = vmatpush1.msra.mxu0 0.0
        %3714 = vmatprep.subr.mxu0 0.0
        %3715 = vmatpush1.msra.mxu0 0.0
        %3716 = vmatprep.subr.mxu0 0.0
        %3717 = vmatpush1.msra.mxu0 0.0
        %3718 = vmatprep.subr.mxu0 0.0
        %3719 = vmatpush1.msra.mxu0 0.0
        %3720 = vmatprep.subr.mxu0 0.0
        %3721 = vmatpush1.msra.mxu0 0.0
        %3722 = vmatprep.mubr.f32.mxu0 0.0
        %3723 = vmatmul.mubr.f32.gmra.mrb[0].mxu0 %v3656
        %v3724 = vpop.f32.mrb[0].mxu0
        %v3725 = vadd.f32 0.0, %v3724
        %v3726 = vpop.f32.mrb[0].mxu0
        %3727 = vdwg.mxu0
        %3729 = vrot.lane.b32.xlu0 %v3393, 8
        %v3730 = vpop.permute.xlu0 %3729
        %3733 = vrot.lane.b32.xlu0 %v3559, 16
        %v3734 = vpop.permute.xlu0 %3733
        %3737 = vrot.lane.b32.xlu0 %v3725, 24
        %v3738 = vpop.permute.xlu0 %3737
        %v3740 = vsel %vm970, %v3227, %v3730
        %v3741 = vsel %vm1646, %v3740, %v3734
        %v3742 = vsel %vm1648, %v3741, %v3738
        %s3743 = scalar_lea.vmem %s6, 32
        %v3744 = vld [vmem:[%s3743] sm:$0xff]
        %v3745 = vld [vmem:[%s3743 + $0x8] sm:$0xff]
        %v3746 = vld [vmem:[%s3743 + $0x10] sm:$0xff]
        %v3747 = vld [vmem:[%s3743 + $0x18] sm:$0xff]
        %s3748 = scalar_lea.vmem %s7, 1
        %v3749 = vld [vmem:[%s3748] sm:$0x1]
        %v3751 = vlaneseq
        %v3752 = vshrl.u32 %v3751, 7
        %v3753 = vsub.s32 0, %v3752
        %v3754 = vrot.slane %v3749, %v3753
        %v3757 = vsel %vm892, %v3742, 0
        %3759 = vmatprep.subr.mxu0 0.0
        %3760 = vmatpush1.msra.mxu0 %v3744
        %3761 = vmatprep.subr.mxu0 0.0
        %3762 = vmatpush1.msra.mxu0 %v3745
        %3763 = vmatprep.subr.mxu0 0.0
        %3764 = vmatpush1.msra.mxu0 %v3746
        %3765 = vmatprep.subr.mxu0 0.0
        %3766 = vmatpush1.msra.mxu0 %v3747
        %3767 = vmatprep.subr.mxu0 0.0
        %3768 = vmatpush1.msra.mxu0 0.0
        %3769 = vmatprep.subr.mxu0 0.0
        %3770 = vmatpush1.msra.mxu0 0.0
        %3771 = vmatprep.subr.mxu0 0.0
        %3772 = vmatpush1.msra.mxu0 0.0
        %3773 = vmatprep.subr.mxu0 0.0
        %3774 = vmatpush1.msra.mxu0 0.0
        %3775 = vmatprep.subr.mxu0 0.0
        %3776 = vmatpush1.msra.mxu0 0.0
        %3777 = vmatprep.subr.mxu0 0.0
        %3778 = vmatpush1.msra.mxu0 0.0
        %3779 = vmatprep.subr.mxu0 0.0
        %3780 = vmatpush1.msra.mxu0 0.0
        %3781 = vmatprep.subr.mxu0 0.0
        %3782 = vmatpush1.msra.mxu0 0.0
        %3783 = vmatprep.subr.mxu0 0.0
        %3784 = vmatpush1.msra.mxu0 0.0
        %3785 = vmatprep.subr.mxu0 0.0
        %3786 = vmatpush1.msra.mxu0 0.0
        %3787 = vmatprep.subr.mxu0 0.0
        %3788 = vmatpush1.msra.mxu0 0.0
        %3789 = vmatprep.subr.mxu0 0.0
        %3790 = vmatpush1.msra.mxu0 0.0
        %3791 = vmatprep.subr.mxu0 0.0
        %3792 = vmatpush1.msra.mxu0 0.0
        %3793 = vmatprep.subr.mxu0 0.0
        %3794 = vmatpush1.msra.mxu0 0.0
        %3795 = vmatprep.subr.mxu0 0.0
        %3796 = vmatpush1.msra.mxu0 0.0
        %3797 = vmatprep.subr.mxu0 0.0
        %3798 = vmatpush1.msra.mxu0 0.0
        %3799 = vmatprep.subr.mxu0 0.0
        %3800 = vmatpush1.msra.mxu0 0.0
        %3801 = vmatprep.subr.mxu0 0.0
        %3802 = vmatpush1.msra.mxu0 0.0
        %3803 = vmatprep.subr.mxu0 0.0
        %3804 = vmatpush1.msra.mxu0 0.0
        %3805 = vmatprep.subr.mxu0 0.0
        %3806 = vmatpush1.msra.mxu0 0.0
        %3807 = vmatprep.subr.mxu0 0.0
        %3808 = vmatpush1.msra.mxu0 0.0
        %3809 = vmatprep.subr.mxu0 0.0
        %3810 = vmatpush1.msra.mxu0 0.0
        %3811 = vmatprep.subr.mxu0 0.0
        %3812 = vmatpush1.msra.mxu0 0.0
        %3813 = vmatprep.subr.mxu0 0.0
        %3814 = vmatpush1.msra.mxu0 0.0
        %3815 = vmatprep.subr.mxu0 0.0
        %3816 = vmatpush1.msra.mxu0 0.0
        %3817 = vmatprep.subr.mxu0 0.0
        %3818 = vmatpush1.msra.mxu0 0.0
        %3819 = vmatprep.subr.mxu0 0.0
        %3820 = vmatpush1.msra.mxu0 0.0
        %3821 = vmatprep.subr.mxu0 0.0
        %3822 = vmatpush1.msra.mxu0 0.0
        %3823 = vmatprep.mubr.f32.mxu0 0.0
        %3824 = vmatmul.mubr.f32.gmra.mrb[0].mxu0 %v3757
        %v3825 = vpop.f32.mrb[0].mxu0
        %v3826 = vadd.f32 %v3754, %v3825
        %v3827 = vpop.f32.mrb[0].mxu0
        %3828 = vdwg.mxu0
        %v3829 = vadd.f32 %v2976, %v3826
        %s3830 = scalar_lea.vmem %s8, 1
        %v3831 = vld [vmem:[%s3830] sm:$0x1]
        %s3832 = scalar_lea.vmem %s9, 1
        %v3833 = vld [vmem:[%s3832] sm:$0x1]
        %v3834 = vsel %vm892, %v3829, 0.0
        %3835 = vadd.xlane.f32.xlu0 %v3834
        %v3836 = vpop.xlane.xlu0 %3835
        %v3837 = vmul.f32 %v3836, %v1740
        %v3838 = vsub.f32 %v3829, %v3837
        %v3839 = vmul.f32 %v3838, %v3838
        %v3840 = vsel %vm892, %v3839, 0.0
        %3841 = vadd.xlane.f32.xlu0 %v3840
        %v3842 = vpop.xlane.xlu0 %3841
        %v3843 = vmul.f32 %v3842, %v1740
        %v3844 = vadd.f32 %v3843, 1e-05
        %v3845 = vrsqrt.pop %v3844
        %v3846 = vmul.f32 %v3838, %v3845
        %v3848 = vlaneseq
        %v3849 = vshrl.u32 %v3848, 7
        %v3850 = vsub.s32 0, %v3849
        %v3851 = vrot.slane %v3831, %v3850
        %v3853 = vmul.f32 %v3846, %v3851
        %v3855 = vlaneseq
        %v3856 = vshrl.u32 %v3855, 7
        %v3857 = vsub.s32 0, %v3856
        %v3858 = vrot.slane %v3833, %v3857
        %v3860 = vadd.f32 %v3853, %v3858
        %s3861 = scalar_lea.vmem %s10, 32
        %v3862 = vld [vmem:[%s3861] sm:$0xff]
        %v3863 = vld [vmem:[%s3861 + $0x8] sm:$0xff]
        %v3864 = vld [vmem:[%s3861 + $0x10] sm:$0xff]
        %v3865 = vld [vmem:[%s3861 + $0x18] sm:$0xff]
        %s3866 = scalar_lea.vmem %s11, 1
        %v3867 = vld [vmem:[%s3866] sm:$0x1]
        %v3869 = vlaneseq
        %v3870 = vshrl.u32 %v3869, 7
        %v3871 = vsub.s32 0, %v3870
        %v3872 = vrot.slane %v3867, %v3871
        %v3875 = vsel %vm892, %v3860, 0
        %3877 = vmatprep.subr.mxu0 0.0
        %3878 = vmatpush1.msra.mxu0 %v3862
        %3879 = vmatprep.subr.mxu0 0.0
        %3880 = vmatpush1.msra.mxu0 %v3863
        %3881 = vmatprep.subr.mxu0 0.0
        %3882 = vmatpush1.msra.mxu0 %v3864
        %3883 = vmatprep.subr.mxu0 0.0
        %3884 = vmatpush1.msra.mxu0 %v3865
        %3885 = vmatprep.subr.mxu0 0.0
        %3886 = vmatpush1.msra.mxu0 0.0
        %3887 = vmatprep.subr.mxu0 0.0
        %3888 = vmatpush1.msra.mxu0 0.0
        %3889 = vmatprep.subr.mxu0 0.0
        %3890 = vmatpush1.msra.mxu0 0.0
        %3891 = vmatprep.subr.mxu0 0.0
        %3892 = vmatpush1.msra.mxu0 0.0
        %3893 = vmatprep.subr.mxu0 0.0
        %3894 = vmatpush1.msra.mxu0 0.0
        %3895 = vmatprep.subr.mxu0 0.0
        %3896 = vmatpush1.msra.mxu0 0.0
        %3897 = vmatprep.subr.mxu0 0.0
        %3898 = vmatpush1.msra.mxu0 0.0
        %3899 = vmatprep.subr.mxu0 0.0
        %3900 = vmatpush1.msra.mxu0 0.0
        %3901 = vmatprep.subr.mxu0 0.0
        %3902 = vmatpush1.msra.mxu0 0.0
        %3903 = vmatprep.subr.mxu0 0.0
        %3904 = vmatpush1.msra.mxu0 0.0
        %3905 = vmatprep.subr.mxu0 0.0
        %3906 = vmatpush1.msra.mxu0 0.0
        %3907 = vmatprep.subr.mxu0 0.0
        %3908 = vmatpush1.msra.mxu0 0.0
        %3909 = vmatprep.subr.mxu0 0.0
        %3910 = vmatpush1.msra.mxu0 0.0
        %3911 = vmatprep.subr.mxu0 0.0
        %3912 = vmatpush1.msra.mxu0 0.0
        %3913 = vmatprep.subr.mxu0 0.0
        %3914 = vmatpush1.msra.mxu0 0.0
        %3915 = vmatprep.subr.mxu0 0.0
        %3916 = vmatpush1.msra.mxu0 0.0
        %3917 = vmatprep.subr.mxu0 0.0
        %3918 = vmatpush1.msra.mxu0 0.0
        %3919 = vmatprep.subr.mxu0 0.0
        %3920 = vmatpush1.msra.mxu0 0.0
        %3921 = vmatprep.subr.mxu0 0.0
        %3922 = vmatpush1.msra.mxu0 0.0
        %3923 = vmatprep.subr.mxu0 0.0
        %3924 = vmatpush1.msra.mxu0 0.0
        %3925 = vmatprep.subr.mxu0 0.0
        %3926 = vmatpush1.msra.mxu0 0.0
        %3927 = vmatprep.subr.mxu0 0.0
        %3928 = vmatpush1.msra.mxu0 0.0
        %3929 = vmatprep.subr.mxu0 0.0
        %3930 = vmatpush1.msra.mxu0 0.0
        %3931 = vmatprep.subr.mxu0 0.0
        %3932 = vmatpush1.msra.mxu0 0.0
        %3933 = vmatprep.subr.mxu0 0.0
        %3934 = vmatpush1.msra.mxu0 0.0
        %3935 = vmatprep.subr.mxu0 0.0
        %3936 = vmatpush1.msra.mxu0 0.0
        %3937 = vmatprep.subr.mxu0 0.0
        %3938 = vmatpush1.msra.mxu0 0.0
        %3939 = vmatprep.subr.mxu0 0.0
        %3940 = vmatpush1.msra.mxu0 0.0
        %3941 = vmatprep.mubr.f32.mxu0 0.0
        %3942 = vmatmul.mubr.f32.gmra.mrb[0].mxu0 %v3875
        %v3943 = vpop.f32.mrb[0].mxu0
        %v3944 = vadd.f32 %v3872, %v3943
        %v3945 = vpop.f32.mrb[0].mxu0
        %3946 = vdwg.mxu0
        %v3947 = vmul.f32 %v3944, 0.35355338
        %s3948 = scalar_lea.vmem %s12, 32
        %v3949 = vld [vmem:[%s3948] sm:$0xff]
        %v3950 = vld [vmem:[%s3948 + $0x8] sm:$0xff]
        %v3951 = vld [vmem:[%s3948 + $0x10] sm:$0xff]
        %v3952 = vld [vmem:[%s3948 + $0x18] sm:$0xff]
        %s3953 = scalar_lea.vmem %s13, 1
        %v3954 = vld [vmem:[%s3953] sm:$0x1]
        %v3956 = vlaneseq
        %v3957 = vshrl.u32 %v3956, 7
        %v3958 = vsub.s32 0, %v3957
        %v3959 = vrot.slane %v3954, %v3958
        %3961 = vmatprep.subr.mxu0 0.0
        %3962 = vmatpush1.msra.mxu0 %v3949
        %3963 = vmatprep.subr.mxu0 0.0
        %3964 = vmatpush1.msra.mxu0 %v3950
        %3965 = vmatprep.subr.mxu0 0.0
        %3966 = vmatpush1.msra.mxu0 %v3951
        %3967 = vmatprep.subr.mxu0 0.0
        %3968 = vmatpush1.msra.mxu0 %v3952
        %3969 = vmatprep.subr.mxu0 0.0
        %3970 = vmatpush1.msra.mxu0 0.0
        %3971 = vmatprep.subr.mxu0 0.0
        %3972 = vmatpush1.msra.mxu0 0.0
        %3973 = vmatprep.subr.mxu0 0.0
        %3974 = vmatpush1.msra.mxu0 0.0
        %3975 = vmatprep.subr.mxu0 0.0
        %3976 = vmatpush1.msra.mxu0 0.0
        %3977 = vmatprep.subr.mxu0 0.0
        %3978 = vmatpush1.msra.mxu0 0.0
        %3979 = vmatprep.subr.mxu0 0.0
        %3980 = vmatpush1.msra.mxu0 0.0
        %3981 = vmatprep.subr.mxu0 0.0
        %3982 = vmatpush1.msra.mxu0 0.0
        %3983 = vmatprep.subr.mxu0 0.0
        %3984 = vmatpush1.msra.mxu0 0.0
        %3985 = vmatprep.subr.mxu0 0.0
        %3986 = vmatpush1.msra.mxu0 0.0
        %3987 = vmatprep.subr.mxu0 0.0
        %3988 = vmatpush1.msra.mxu0 0.0
        %3989 = vmatprep.subr.mxu0 0.0
        %3990 = vmatpush1.msra.mxu0 0.0
        %3991 = vmatprep.subr.mxu0 0.0
        %3992 = vmatpush1.msra.mxu0 0.0
        %3993 = vmatprep.subr.mxu0 0.0
        %3994 = vmatpush1.msra.mxu0 0.0
        %3995 = vmatprep.subr.mxu0 0.0
        %3996 = vmatpush1.msra.mxu0 0.0
        %3997 = vmatprep.subr.mxu0 0.0
        %3998 = vmatpush1.msra.mxu0 0.0
        %3999 = vmatprep.subr.mxu0 0.0
        %4000 = vmatpush1.msra.mxu0 0.0
        %4001 = vmatprep.subr.mxu0 0.0
        %4002 = vmatpush1.msra.mxu0 0.0
        %4003 = vmatprep.subr.mxu0 0.0
        %4004 = vmatpush1.msra.mxu0 0.0
        %4005 = vmatprep.subr.mxu0 0.0
        %4006 = vmatpush1.msra.mxu0 0.0
        %4007 = vmatprep.subr.mxu0 0.0
        %4008 = vmatpush1.msra.mxu0 0.0
        %4009 = vmatprep.subr.mxu0 0.0
        %4010 = vmatpush1.msra.mxu0 0.0
        %4011 = vmatprep.subr.mxu0 0.0
        %4012 = vmatpush1.msra.mxu0 0.0
        %4013 = vmatprep.subr.mxu0 0.0
        %4014 = vmatpush1.msra.mxu0 0.0
        %4015 = vmatprep.subr.mxu0 0.0
        %4016 = vmatpush1.msra.mxu0 0.0
        %4017 = vmatprep.subr.mxu0 0.0
        %4018 = vmatpush1.msra.mxu0 0.0
        %4019 = vmatprep.subr.mxu0 0.0
        %4020 = vmatpush1.msra.mxu0 0.0
        %4021 = vmatprep.subr.mxu0 0.0
        %4022 = vmatpush1.msra.mxu0 0.0
        %4023 = vmatprep.subr.mxu0 0.0
        %4024 = vmatpush1.msra.mxu0 0.0
        %4025 = vmatprep.mubr.f32.mxu0 0.0
        %4026 = vmatmul.mubr.f32.gmra.mrb[0].mxu0 %v1862
        %v4027 = vpop.f32.mrb[0].mxu0
        %v4028 = vadd.f32 %v3959, %v4027
        %v4029 = vpop.f32.mrb[0].mxu0
        %4030 = vmatprep.mubr.f32.mxu0 0.0
        %4031 = vmatmul.mubr.f32.gmra.mrb[0].mxu0 %v1865
        %v4032 = vpop.f32.mrb[0].mxu0
        %v4033 = vadd.f32 %v3959, %v4032
        %v4034 = vpop.f32.mrb[0].mxu0
        %4035 = vdwg.mxu0
        %v4037 = vsel %vm970, %v3947, 0
        %v4040 = vsel %vm970, %v4028, 0
        %v4043 = vsel %vm970, %v4033, 0
        %4045 = vmatprep.subr.mxu0 0.0
        %4046 = vmatpush1.xpose.msra.mxu0 %v4040
        %4047 = vmatprep.subr.mxu0 0.0
        %4048 = vmatpush1.xpose.msra.mxu0 %v4043
        %4049 = vmatprep.subr.mxu0 0.0
        %4050 = vmatpush1.xpose.msra.mxu0 0.0
        %4051 = vmatprep.subr.mxu0 0.0
        %4052 = vmatpush1.xpose.msra.mxu0 0.0
        %4053 = vmatprep.subr.mxu0 0.0
        %4054 = vmatpush1.xpose.msra.mxu0 0.0
        %4055 = vmatprep.subr.mxu0 0.0
        %4056 = vmatpush1.xpose.msra.mxu0 0.0
        %4057 = vmatprep.subr.mxu0 0.0
        %4058 = vmatpush1.xpose.msra.mxu0 0.0
        %4059 = vmatprep.subr.mxu0 0.0
        %4060 = vmatpush1.xpose.msra.mxu0 0.0
        %4061 = vmatprep.subr.mxu0 0.0
        %4062 = vmatpush1.xpose.msra.mxu0 0.0
        %4063 = vmatprep.subr.mxu0 0.0
        %4064 = vmatpush1.xpose.msra.mxu0 0.0
        %4065 = vmatprep.subr.mxu0 0.0
        %4066 = vmatpush1.xpose.msra.mxu0 0.0
        %4067 = vmatprep.subr.mxu0 0.0
        %4068 = vmatpush1.xpose.msra.mxu0 0.0
        %4069 = vmatprep.subr.mxu0 0.0
        %4070 = vmatpush1.xpose.msra.mxu0 0.0
        %4071 = vmatprep.subr.mxu0 0.0
        %4072 = vmatpush1.xpose.msra.mxu0 0.0
        %4073 = vmatprep.subr.mxu0 0.0
        %4074 = vmatpush1.xpose.msra.mxu0 0.0
        %4075 = vmatprep.subr.mxu0 0.0
        %4076 = vmatpush1.xpose.msra.mxu0 0.0
        %4077 = vmatprep.subr.mxu0 0.0
        %4078 = vmatpush1.xpose.msra.mxu0 0.0
        %4079 = vmatprep.subr.mxu0 0.0
        %4080 = vmatpush1.xpose.msra.mxu0 0.0
        %4081 = vmatprep.subr.mxu0 0.0
        %4082 = vmatpush1.xpose.msra.mxu0 0.0
        %4083 = vmatprep.subr.mxu0 0.0
        %4084 = vmatpush1.xpose.msra.mxu0 0.0
        %4085 = vmatprep.subr.mxu0 0.0
        %4086 = vmatpush1.xpose.msra.mxu0 0.0
        %4087 = vmatprep.subr.mxu0 0.0
        %4088 = vmatpush1.xpose.msra.mxu0 0.0
        %4089 = vmatprep.subr.mxu0 0.0
        %4090 = vmatpush1.xpose.msra.mxu0 0.0
        %4091 = vmatprep.subr.mxu0 0.0
        %4092 = vmatpush1.xpose.msra.mxu0 0.0
        %4093 = vmatprep.subr.mxu0 0.0
        %4094 = vmatpush1.xpose.msra.mxu0 0.0
        %4095 = vmatprep.subr.mxu0 0.0
        %4096 = vmatpush1.xpose.msra.mxu0 0.0
        %4097 = vmatprep.subr.mxu0 0.0
        %4098 = vmatpush1.xpose.msra.mxu0 0.0
        %4099 = vmatprep.subr.mxu0 0.0
        %4100 = vmatpush1.xpose.msra.mxu0 0.0
        %4101 = vmatprep.subr.mxu0 0.0
        %4102 = vmatpush1.xpose.msra.mxu0 0.0
        %4103 = vmatprep.subr.mxu0 0.0
        %4104 = vmatpush1.xpose.msra.mxu0 0.0
        %4105 = vmatprep.subr.mxu0 0.0
        %4106 = vmatpush1.xpose.msra.mxu0 0.0
        %4107 = vmatprep.subr.mxu0 0.0
        %4108 = vmatpush1.xpose.msra.mxu0 0.0
        %4109 = vmatprep.mubr.f32.mxu0 0.0
        %4110 = vmatmul.mubr.f32.gmra.mrb[0].mxu0 %v4037
        %v4111 = vpop.f32.mrb[0].mxu0
        %v4112 = vadd.f32 0.0, %v4111
        %v4113 = vpop.f32.mrb[0].mxu0
        %4114 = vdwg.mxu0
        %v4115 = vsel %vm2027, %v4112, -1e+10
        %v4116 = vsel %vm2029, %v4115, -inf
        %4117 = vmax.xlane.f32.xlu0 %v4116
        %v4118 = vpop.xlane.xlu0 %4117
        %v4119 = vsub.f32 %v4115, %v4118
        %v4120 = vmul.f32 %v4119, 1.442695
        %v4121 = vpow.pop %v4120
        %v4122 = vsel %vm2029, %v4121, 0.0
        %4123 = vadd.xlane.f32.xlu0 %v4122
        %v4124 = vpop.xlane.xlu0 %4123
        %v4125 = vrcp.pop %v4124
        %v4126 = vmul.f32 %v4121, %v4125
        %4127 = vrot.lane.b32.xlu0 %v4028, 96
        %v4128 = vpop.permute.xlu0 %4127
        %4129 = vrot.lane.b32.xlu0 %v4033, 96
        %v4130 = vpop.permute.xlu0 %4129
        %v4133 = vsel %vm2029, %v4126, 0
        %v4135 = vsel %vm2049, %v4130, 0
        %4137 = vmatprep.subr.mxu0 0.0
        %4138 = vmatpush1.msra.mxu0 %v4128
        %4139 = vmatprep.subr.mxu0 0.0
        %4140 = vmatpush1.msra.mxu0 %v4135
        %4141 = vmatprep.subr.mxu0 0.0
        %4142 = vmatpush1.msra.mxu0 0.0
        %4143 = vmatprep.subr.mxu0 0.0
        %4144 = vmatpush1.msra.mxu0 0.0
        %4145 = vmatprep.subr.mxu0 0.0
        %4146 = vmatpush1.msra.mxu0 0.0
        %4147 = vmatprep.subr.mxu0 0.0
        %4148 = vmatpush1.msra.mxu0 0.0
        %4149 = vmatprep.subr.mxu0 0.0
        %4150 = vmatpush1.msra.mxu0 0.0
        %4151 = vmatprep.subr.mxu0 0.0
        %4152 = vmatpush1.msra.mxu0 0.0
        %4153 = vmatprep.subr.mxu0 0.0
        %4154 = vmatpush1.msra.mxu0 0.0
        %4155 = vmatprep.subr.mxu0 0.0
        %4156 = vmatpush1.msra.mxu0 0.0
        %4157 = vmatprep.subr.mxu0 0.0
        %4158 = vmatpush1.msra.mxu0 0.0
        %4159 = vmatprep.subr.mxu0 0.0
        %4160 = vmatpush1.msra.mxu0 0.0
        %4161 = vmatprep.subr.mxu0 0.0
        %4162 = vmatpush1.msra.mxu0 0.0
        %4163 = vmatprep.subr.mxu0 0.0
        %4164 = vmatpush1.msra.mxu0 0.0
        %4165 = vmatprep.subr.mxu0 0.0
        %4166 = vmatpush1.msra.mxu0 0.0
        %4167 = vmatprep.subr.mxu0 0.0
        %4168 = vmatpush1.msra.mxu0 0.0
        %4169 = vmatprep.subr.mxu0 0.0
        %4170 = vmatpush1.msra.mxu0 0.0
        %4171 = vmatprep.subr.mxu0 0.0
        %4172 = vmatpush1.msra.mxu0 0.0
        %4173 = vmatprep.subr.mxu0 0.0
        %4174 = vmatpush1.msra.mxu0 0.0
        %4175 = vmatprep.subr.mxu0 0.0
        %4176 = vmatpush1.msra.mxu0 0.0
        %4177 = vmatprep.subr.mxu0 0.0
        %4178 = vmatpush1.msra.mxu0 0.0
        %4179 = vmatprep.subr.mxu0 0.0
        %4180 = vmatpush1.msra.mxu0 0.0
        %4181 = vmatprep.subr.mxu0 0.0
        %4182 = vmatpush1.msra.mxu0 0.0
        %4183 = vmatprep.subr.mxu0 0.0
        %4184 = vmatpush1.msra.mxu0 0.0
        %4185 = vmatprep.subr.mxu0 0.0
        %4186 = vmatpush1.msra.mxu0 0.0
        %4187 = vmatprep.subr.mxu0 0.0
        %4188 = vmatpush1.msra.mxu0 0.0
        %4189 = vmatprep.subr.mxu0 0.0
        %4190 = vmatpush1.msra.mxu0 0.0
        %4191 = vmatprep.subr.mxu0 0.0
        %4192 = vmatpush1.msra.mxu0 0.0
        %4193 = vmatprep.subr.mxu0 0.0
        %4194 = vmatpush1.msra.mxu0 0.0
        %4195 = vmatprep.subr.mxu0 0.0
        %4196 = vmatpush1.msra.mxu0 0.0
        %4197 = vmatprep.subr.mxu0 0.0
        %4198 = vmatpush1.msra.mxu0 0.0
        %4199 = vmatprep.subr.mxu0 0.0
        %4200 = vmatpush1.msra.mxu0 0.0
        %4201 = vmatprep.mubr.f32.mxu0 0.0
        %4202 = vmatmul.mubr.f32.gmra.mrb[0].mxu0 %v4133
        %v4203 = vpop.f32.mrb[0].mxu0
        %v4204 = vadd.f32 0.0, %v4203
        %v4205 = vpop.f32.mrb[0].mxu0
        %4206 = vdwg.mxu0
        %4207 = vrot.lane.b32.xlu0 %v3947, 120
        %v4208 = vpop.permute.xlu0 %4207
        %4209 = vrot.lane.b32.xlu0 %v4028, 120
        %v4210 = vpop.permute.xlu0 %4209
        %4211 = vrot.lane.b32.xlu0 %v4033, 120
        %v4212 = vpop.permute.xlu0 %4211
        %v4213 = vsel %vm970, %v4208, 0
        %v4215 = vsel %vm970, %v4210, 0
        %v4217 = vsel %vm970, %v4212, 0
        %4219 = vmatprep.subr.mxu0 0.0
        %4220 = vmatpush1.xpose.msra.mxu0 %v4215
        %4221 = vmatprep.subr.mxu0 0.0
        %4222 = vmatpush1.xpose.msra.mxu0 %v4217
        %4223 = vmatprep.subr.mxu0 0.0
        %4224 = vmatpush1.xpose.msra.mxu0 0.0
        %4225 = vmatprep.subr.mxu0 0.0
        %4226 = vmatpush1.xpose.msra.mxu0 0.0
        %4227 = vmatprep.subr.mxu0 0.0
        %4228 = vmatpush1.xpose.msra.mxu0 0.0
        %4229 = vmatprep.subr.mxu0 0.0
        %4230 = vmatpush1.xpose.msra.mxu0 0.0
        %4231 = vmatprep.subr.mxu0 0.0
        %4232 = vmatpush1.xpose.msra.mxu0 0.0
        %4233 = vmatprep.subr.mxu0 0.0
        %4234 = vmatpush1.xpose.msra.mxu0 0.0
        %4235 = vmatprep.subr.mxu0 0.0
        %4236 = vmatpush1.xpose.msra.mxu0 0.0
        %4237 = vmatprep.subr.mxu0 0.0
        %4238 = vmatpush1.xpose.msra.mxu0 0.0
        %4239 = vmatprep.subr.mxu0 0.0
        %4240 = vmatpush1.xpose.msra.mxu0 0.0
        %4241 = vmatprep.subr.mxu0 0.0
        %4242 = vmatpush1.xpose.msra.mxu0 0.0
        %4243 = vmatprep.subr.mxu0 0.0
        %4244 = vmatpush1.xpose.msra.mxu0 0.0
        %4245 = vmatprep.subr.mxu0 0.0
        %4246 = vmatpush1.xpose.msra.mxu0 0.0
        %4247 = vmatprep.subr.mxu0 0.0
        %4248 = vmatpush1.xpose.msra.mxu0 0.0
        %4249 = vmatprep.subr.mxu0 0.0
        %4250 = vmatpush1.xpose.msra.mxu0 0.0
        %4251 = vmatprep.subr.mxu0 0.0
        %4252 = vmatpush1.xpose.msra.mxu0 0.0
        %4253 = vmatprep.subr.mxu0 0.0
        %4254 = vmatpush1.xpose.msra.mxu0 0.0
        %4255 = vmatprep.subr.mxu0 0.0
        %4256 = vmatpush1.xpose.msra.mxu0 0.0
        %4257 = vmatprep.subr.mxu0 0.0
        %4258 = vmatpush1.xpose.msra.mxu0 0.0
        %4259 = vmatprep.subr.mxu0 0.0
        %4260 = vmatpush1.xpose.msra.mxu0 0.0
        %4261 = vmatprep.subr.mxu0 0.0
        %4262 = vmatpush1.xpose.msra.mxu0 0.0
        %4263 = vmatprep.subr.mxu0 0.0
        %4264 = vmatpush1.xpose.msra.mxu0 0.0
        %4265 = vmatprep.subr.mxu0 0.0
        %4266 = vmatpush1.xpose.msra.mxu0 0.0
        %4267 = vmatprep.subr.mxu0 0.0
        %4268 = vmatpush1.xpose.msra.mxu0 0.0
        %4269 = vmatprep.subr.mxu0 0.0
        %4270 = vmatpush1.xpose.msra.mxu0 0.0
        %4271 = vmatprep.subr.mxu0 0.0
        %4272 = vmatpush1.xpose.msra.mxu0 0.0
        %4273 = vmatprep.subr.mxu0 0.0
        %4274 = vmatpush1.xpose.msra.mxu0 0.0
        %4275 = vmatprep.subr.mxu0 0.0
        %4276 = vmatpush1.xpose.msra.mxu0 0.0
        %4277 = vmatprep.subr.mxu0 0.0
        %4278 = vmatpush1.xpose.msra.mxu0 0.0
        %4279 = vmatprep.subr.mxu0 0.0
        %4280 = vmatpush1.xpose.msra.mxu0 0.0
        %4281 = vmatprep.subr.mxu0 0.0
        %4282 = vmatpush1.xpose.msra.mxu0 0.0
        %4283 = vmatprep.mubr.f32.mxu0 0.0
        %4284 = vmatmul.mubr.f32.gmra.mrb[0].mxu0 %v4213
        %v4285 = vpop.f32.mrb[0].mxu0
        %v4286 = vadd.f32 0.0, %v4285
        %v4287 = vpop.f32.mrb[0].mxu0
        %4288 = vdwg.mxu0
        %v4289 = vsel %vm2027, %v4286, -1e+10
        %v4290 = vsel %vm2029, %v4289, -inf
        %4291 = vmax.xlane.f32.xlu0 %v4290
        %v4292 = vpop.xlane.xlu0 %4291
        %v4293 = vsub.f32 %v4289, %v4292
        %v4294 = vmul.f32 %v4293, 1.442695
        %v4295 = vpow.pop %v4294
        %v4296 = vsel %vm2029, %v4295, 0.0
        %4297 = vadd.xlane.f32.xlu0 %v4296
        %v4298 = vpop.xlane.xlu0 %4297
        %v4299 = vrcp.pop %v4298
        %v4300 = vmul.f32 %v4295, %v4299
        %4301 = vrot.lane.b32.xlu0 %v4028, 88
        %v4302 = vpop.permute.xlu0 %4301
        %4303 = vrot.lane.b32.xlu0 %v4033, 88
        %v4304 = vpop.permute.xlu0 %4303
        %v4307 = vsel %vm2029, %v4300, 0
        %v4309 = vsel %vm2049, %v4304, 0
        %4311 = vmatprep.subr.mxu0 0.0
        %4312 = vmatpush1.msra.mxu0 %v4302
        %4313 = vmatprep.subr.mxu0 0.0
        %4314 = vmatpush1.msra.mxu0 %v4309
        %4315 = vmatprep.subr.mxu0 0.0
        %4316 = vmatpush1.msra.mxu0 0.0
        %4317 = vmatprep.subr.mxu0 0.0
        %4318 = vmatpush1.msra.mxu0 0.0
        %4319 = vmatprep.subr.mxu0 0.0
        %4320 = vmatpush1.msra.mxu0 0.0
        %4321 = vmatprep.subr.mxu0 0.0
        %4322 = vmatpush1.msra.mxu0 0.0
        %4323 = vmatprep.subr.mxu0 0.0
        %4324 = vmatpush1.msra.mxu0 0.0
        %4325 = vmatprep.subr.mxu0 0.0
        %4326 = vmatpush1.msra.mxu0 0.0
        %4327 = vmatprep.subr.mxu0 0.0
        %4328 = vmatpush1.msra.mxu0 0.0
        %4329 = vmatprep.subr.mxu0 0.0
        %4330 = vmatpush1.msra.mxu0 0.0
        %4331 = vmatprep.subr.mxu0 0.0
        %4332 = vmatpush1.msra.mxu0 0.0
        %4333 = vmatprep.subr.mxu0 0.0
        %4334 = vmatpush1.msra.mxu0 0.0
        %4335 = vmatprep.subr.mxu0 0.0
        %4336 = vmatpush1.msra.mxu0 0.0
        %4337 = vmatprep.subr.mxu0 0.0
        %4338 = vmatpush1.msra.mxu0 0.0
        %4339 = vmatprep.subr.mxu0 0.0
        %4340 = vmatpush1.msra.mxu0 0.0
        %4341 = vmatprep.subr.mxu0 0.0
        %4342 = vmatpush1.msra.mxu0 0.0
        %4343 = vmatprep.subr.mxu0 0.0
        %4344 = vmatpush1.msra.mxu0 0.0
        %4345 = vmatprep.subr.mxu0 0.0
        %4346 = vmatpush1.msra.mxu0 0.0
        %4347 = vmatprep.subr.mxu0 0.0
        %4348 = vmatpush1.msra.mxu0 0.0
        %4349 = vmatprep.subr.mxu0 0.0
        %4350 = vmatpush1.msra.mxu0 0.0
        %4351 = vmatprep.subr.mxu0 0.0
        %4352 = vmatpush1.msra.mxu0 0.0
        %4353 = vmatprep.subr.mxu0 0.0
        %4354 = vmatpush1.msra.mxu0 0.0
        %4355 = vmatprep.subr.mxu0 0.0
        %4356 = vmatpush1.msra.mxu0 0.0
        %4357 = vmatprep.subr.mxu0 0.0
        %4358 = vmatpush1.msra.mxu0 0.0
        %4359 = vmatprep.subr.mxu0 0.0
        %4360 = vmatpush1.msra.mxu0 0.0
        %4361 = vmatprep.subr.mxu0 0.0
        %4362 = vmatpush1.msra.mxu0 0.0
        %4363 = vmatprep.subr.mxu0 0.0
        %4364 = vmatpush1.msra.mxu0 0.0
        %4365 = vmatprep.subr.mxu0 0.0
        %4366 = vmatpush1.msra.mxu0 0.0
        %4367 = vmatprep.subr.mxu0 0.0
        %4368 = vmatpush1.msra.mxu0 0.0
        %4369 = vmatprep.subr.mxu0 0.0
        %4370 = vmatpush1.msra.mxu0 0.0
        %4371 = vmatprep.subr.mxu0 0.0
        %4372 = vmatpush1.msra.mxu0 0.0
        %4373 = vmatprep.subr.mxu0 0.0
        %4374 = vmatpush1.msra.mxu0 0.0
        %4375 = vmatprep.mubr.f32.mxu0 0.0
        %4376 = vmatmul.mubr.f32.gmra.mrb[0].mxu0 %v4307
        %v4377 = vpop.f32.mrb[0].mxu0
        %v4378 = vadd.f32 0.0, %v4377
        %v4379 = vpop.f32.mrb[0].mxu0
        %4380 = vdwg.mxu0
        %4381 = vrot.lane.b32.xlu0 %v3947, 112
        %v4382 = vpop.permute.xlu0 %4381
        %4383 = vrot.lane.b32.xlu0 %v4028, 112
        %v4384 = vpop.permute.xlu0 %4383
        %4385 = vrot.lane.b32.xlu0 %v4033, 112
        %v4386 = vpop.permute.xlu0 %4385
        %v4387 = vsel %vm970, %v4382, 0
        %v4389 = vsel %vm970, %v4384, 0
        %v4391 = vsel %vm970, %v4386, 0
        %4393 = vmatprep.subr.mxu0 0.0
        %4394 = vmatpush1.xpose.msra.mxu0 %v4389
        %4395 = vmatprep.subr.mxu0 0.0
        %4396 = vmatpush1.xpose.msra.mxu0 %v4391
        %4397 = vmatprep.subr.mxu0 0.0
        %4398 = vmatpush1.xpose.msra.mxu0 0.0
        %4399 = vmatprep.subr.mxu0 0.0
        %4400 = vmatpush1.xpose.msra.mxu0 0.0
        %4401 = vmatprep.subr.mxu0 0.0
        %4402 = vmatpush1.xpose.msra.mxu0 0.0
        %4403 = vmatprep.subr.mxu0 0.0
        %4404 = vmatpush1.xpose.msra.mxu0 0.0
        %4405 = vmatprep.subr.mxu0 0.0
        %4406 = vmatpush1.xpose.msra.mxu0 0.0
        %4407 = vmatprep.subr.mxu0 0.0
        %4408 = vmatpush1.xpose.msra.mxu0 0.0
        %4409 = vmatprep.subr.mxu0 0.0
        %4410 = vmatpush1.xpose.msra.mxu0 0.0
        %4411 = vmatprep.subr.mxu0 0.0
        %4412 = vmatpush1.xpose.msra.mxu0 0.0
        %4413 = vmatprep.subr.mxu0 0.0
        %4414 = vmatpush1.xpose.msra.mxu0 0.0
        %4415 = vmatprep.subr.mxu0 0.0
        %4416 = vmatpush1.xpose.msra.mxu0 0.0
        %4417 = vmatprep.subr.mxu0 0.0
        %4418 = vmatpush1.xpose.msra.mxu0 0.0
        %4419 = vmatprep.subr.mxu0 0.0
        %4420 = vmatpush1.xpose.msra.mxu0 0.0
        %4421 = vmatprep.subr.mxu0 0.0
        %4422 = vmatpush1.xpose.msra.mxu0 0.0
        %4423 = vmatprep.subr.mxu0 0.0
        %4424 = vmatpush1.xpose.msra.mxu0 0.0
        %4425 = vmatprep.subr.mxu0 0.0
        %4426 = vmatpush1.xpose.msra.mxu0 0.0
        %4427 = vmatprep.subr.mxu0 0.0
        %4428 = vmatpush1.xpose.msra.mxu0 0.0
        %4429 = vmatprep.subr.mxu0 0.0
        %4430 = vmatpush1.xpose.msra.mxu0 0.0
        %4431 = vmatprep.subr.mxu0 0.0
        %4432 = vmatpush1.xpose.msra.mxu0 0.0
        %4433 = vmatprep.subr.mxu0 0.0
        %4434 = vmatpush1.xpose.msra.mxu0 0.0
        %4435 = vmatprep.subr.mxu0 0.0
        %4436 = vmatpush1.xpose.msra.mxu0 0.0
        %4437 = vmatprep.subr.mxu0 0.0
        %4438 = vmatpush1.xpose.msra.mxu0 0.0
        %4439 = vmatprep.subr.mxu0 0.0
        %4440 = vmatpush1.xpose.msra.mxu0 0.0
        %4441 = vmatprep.subr.mxu0 0.0
        %4442 = vmatpush1.xpose.msra.mxu0 0.0
        %4443 = vmatprep.subr.mxu0 0.0
        %4444 = vmatpush1.xpose.msra.mxu0 0.0
        %4445 = vmatprep.subr.mxu0 0.0
        %4446 = vmatpush1.xpose.msra.mxu0 0.0
        %4447 = vmatprep.subr.mxu0 0.0
        %4448 = vmatpush1.xpose.msra.mxu0 0.0
        %4449 = vmatprep.subr.mxu0 0.0
        %4450 = vmatpush1.xpose.msra.mxu0 0.0
        %4451 = vmatprep.subr.mxu0 0.0
        %4452 = vmatpush1.xpose.msra.mxu0 0.0
        %4453 = vmatprep.subr.mxu0 0.0
        %4454 = vmatpush1.xpose.msra.mxu0 0.0
        %4455 = vmatprep.subr.mxu0 0.0
        %4456 = vmatpush1.xpose.msra.mxu0 0.0
        %4457 = vmatprep.mubr.f32.mxu0 0.0
        %4458 = vmatmul.mubr.f32.gmra.mrb[0].mxu0 %v4387
        %v4459 = vpop.f32.mrb[0].mxu0
        %v4460 = vadd.f32 0.0, %v4459
        %v4461 = vpop.f32.mrb[0].mxu0
        %4462 = vdwg.mxu0
        %v4463 = vsel %vm2027, %v4460, -1e+10
        %v4464 = vsel %vm2029, %v4463, -inf
        %4465 = vmax.xlane.f32.xlu0 %v4464
        %v4466 = vpop.xlane.xlu0 %4465
        %v4467 = vsub.f32 %v4463, %v4466
        %v4468 = vmul.f32 %v4467, 1.442695
        %v4469 = vpow.pop %v4468
        %v4470 = vsel %vm2029, %v4469, 0.0
        %4471 = vadd.xlane.f32.xlu0 %v4470
        %v4472 = vpop.xlane.xlu0 %4471
        %v4473 = vrcp.pop %v4472
        %v4474 = vmul.f32 %v4469, %v4473
        %4475 = vrot.lane.b32.xlu0 %v4028, 80
        %v4476 = vpop.permute.xlu0 %4475
        %4477 = vrot.lane.b32.xlu0 %v4033, 80
        %v4478 = vpop.permute.xlu0 %4477
        %v4481 = vsel %vm2029, %v4474, 0
        %v4483 = vsel %vm2049, %v4478, 0
        %4485 = vmatprep.subr.mxu0 0.0
        %4486 = vmatpush1.msra.mxu0 %v4476
        %4487 = vmatprep.subr.mxu0 0.0
        %4488 = vmatpush1.msra.mxu0 %v4483
        %4489 = vmatprep.subr.mxu0 0.0
        %4490 = vmatpush1.msra.mxu0 0.0
        %4491 = vmatprep.subr.mxu0 0.0
        %4492 = vmatpush1.msra.mxu0 0.0
        %4493 = vmatprep.subr.mxu0 0.0
        %4494 = vmatpush1.msra.mxu0 0.0
        %4495 = vmatprep.subr.mxu0 0.0
        %4496 = vmatpush1.msra.mxu0 0.0
        %4497 = vmatprep.subr.mxu0 0.0
        %4498 = vmatpush1.msra.mxu0 0.0
        %4499 = vmatprep.subr.mxu0 0.0
        %4500 = vmatpush1.msra.mxu0 0.0
        %4501 = vmatprep.subr.mxu0 0.0
        %4502 = vmatpush1.msra.mxu0 0.0
        %4503 = vmatprep.subr.mxu0 0.0
        %4504 = vmatpush1.msra.mxu0 0.0
        %4505 = vmatprep.subr.mxu0 0.0
        %4506 = vmatpush1.msra.mxu0 0.0
        %4507 = vmatprep.subr.mxu0 0.0
        %4508 = vmatpush1.msra.mxu0 0.0
        %4509 = vmatprep.subr.mxu0 0.0
        %4510 = vmatpush1.msra.mxu0 0.0
        %4511 = vmatprep.subr.mxu0 0.0
        %4512 = vmatpush1.msra.mxu0 0.0
        %4513 = vmatprep.subr.mxu0 0.0
        %4514 = vmatpush1.msra.mxu0 0.0
        %4515 = vmatprep.subr.mxu0 0.0
        %4516 = vmatpush1.msra.mxu0 0.0
        %4517 = vmatprep.subr.mxu0 0.0
        %4518 = vmatpush1.msra.mxu0 0.0
        %4519 = vmatprep.subr.mxu0 0.0
        %4520 = vmatpush1.msra.mxu0 0.0
        %4521 = vmatprep.subr.mxu0 0.0
        %4522 = vmatpush1.msra.mxu0 0.0
        %4523 = vmatprep.subr.mxu0 0.0
        %4524 = vmatpush1.msra.mxu0 0.0
        %4525 = vmatprep.subr.mxu0 0.0
        %4526 = vmatpush1.msra.mxu0 0.0
        %4527 = vmatprep.subr.mxu0 0.0
        %4528 = vmatpush1.msra.mxu0 0.0
        %4529 = vmatprep.subr.mxu0 0.0
        %4530 = vmatpush1.msra.mxu0 0.0
        %4531 = vmatprep.subr.mxu0 0.0
        %4532 = vmatpush1.msra.mxu0 0.0
        %4533 = vmatprep.subr.mxu0 0.0
        %4534 = vmatpush1.msra.mxu0 0.0
        %4535 = vmatprep.subr.mxu0 0.0
        %4536 = vmatpush1.msra.mxu0 0.0
        %4537 = vmatprep.subr.mxu0 0.0
        %4538 = vmatpush1.msra.mxu0 0.0
        %4539 = vmatprep.subr.mxu0 0.0
        %4540 = vmatpush1.msra.mxu0 0.0
        %4541 = vmatprep.subr.mxu0 0.0
        %4542 = vmatpush1.msra.mxu0 0.0
        %4543 = vmatprep.subr.mxu0 0.0
        %4544 = vmatpush1.msra.mxu0 0.0
        %4545 = vmatprep.subr.mxu0 0.0
        %4546 = vmatpush1.msra.mxu0 0.0
        %4547 = vmatprep.subr.mxu0 0.0
        %4548 = vmatpush1.msra.mxu0 0.0
        %4549 = vmatprep.mubr.f32.mxu0 0.0
        %4550 = vmatmul.mubr.f32.gmra.mrb[0].mxu0 %v4481
        %v4551 = vpop.f32.mrb[0].mxu0
        %v4552 = vadd.f32 0.0, %v4551
        %v4553 = vpop.f32.mrb[0].mxu0
        %4554 = vdwg.mxu0
        %4555 = vrot.lane.b32.xlu0 %v3947, 104
        %v4556 = vpop.permute.xlu0 %4555
        %4557 = vrot.lane.b32.xlu0 %v4028, 104
        %v4558 = vpop.permute.xlu0 %4557
        %4559 = vrot.lane.b32.xlu0 %v4033, 104
        %v4560 = vpop.permute.xlu0 %4559
        %v4561 = vsel %vm970, %v4556, 0
        %v4563 = vsel %vm970, %v4558, 0
        %v4565 = vsel %vm970, %v4560, 0
        %4567 = vmatprep.subr.mxu0 0.0
        %4568 = vmatpush1.xpose.msra.mxu0 %v4563
        %4569 = vmatprep.subr.mxu0 0.0
        %4570 = vmatpush1.xpose.msra.mxu0 %v4565
        %4571 = vmatprep.subr.mxu0 0.0
        %4572 = vmatpush1.xpose.msra.mxu0 0.0
        %4573 = vmatprep.subr.mxu0 0.0
        %4574 = vmatpush1.xpose.msra.mxu0 0.0
        %4575 = vmatprep.subr.mxu0 0.0
        %4576 = vmatpush1.xpose.msra.mxu0 0.0
        %4577 = vmatprep.subr.mxu0 0.0
        %4578 = vmatpush1.xpose.msra.mxu0 0.0
        %4579 = vmatprep.subr.mxu0 0.0
        %4580 = vmatpush1.xpose.msra.mxu0 0.0
        %4581 = vmatprep.subr.mxu0 0.0
        %4582 = vmatpush1.xpose.msra.mxu0 0.0
        %4583 = vmatprep.subr.mxu0 0.0
        %4584 = vmatpush1.xpose.msra.mxu0 0.0
        %4585 = vmatprep.subr.mxu0 0.0
        %4586 = vmatpush1.xpose.msra.mxu0 0.0
        %4587 = vmatprep.subr.mxu0 0.0
        %4588 = vmatpush1.xpose.msra.mxu0 0.0
        %4589 = vmatprep.subr.mxu0 0.0
        %4590 = vmatpush1.xpose.msra.mxu0 0.0
        %4591 = vmatprep.subr.mxu0 0.0
        %4592 = vmatpush1.xpose.msra.mxu0 0.0
        %4593 = vmatprep.subr.mxu0 0.0
        %4594 = vmatpush1.xpose.msra.mxu0 0.0
        %4595 = vmatprep.subr.mxu0 0.0
        %4596 = vmatpush1.xpose.msra.mxu0 0.0
        %4597 = vmatprep.subr.mxu0 0.0
        %4598 = vmatpush1.xpose.msra.mxu0 0.0
        %4599 = vmatprep.subr.mxu0 0.0
        %4600 = vmatpush1.xpose.msra.mxu0 0.0
        %4601 = vmatprep.subr.mxu0 0.0
        %4602 = vmatpush1.xpose.msra.mxu0 0.0
        %4603 = vmatprep.subr.mxu0 0.0
        %4604 = vmatpush1.xpose.msra.mxu0 0.0
        %4605 = vmatprep.subr.mxu0 0.0
        %4606 = vmatpush1.xpose.msra.mxu0 0.0
        %4607 = vmatprep.subr.mxu0 0.0
        %4608 = vmatpush1.xpose.msra.mxu0 0.0
        %4609 = vmatprep.subr.mxu0 0.0
        %4610 = vmatpush1.xpose.msra.mxu0 0.0
        %4611 = vmatprep.subr.mxu0 0.0
        %4612 = vmatpush1.xpose.msra.mxu0 0.0
        %4613 = vmatprep.subr.mxu0 0.0
        %4614 = vmatpush1.xpose.msra.mxu0 0.0
        %4615 = vmatprep.subr.mxu0 0.0
        %4616 = vmatpush1.xpose.msra.mxu0 0.0
        %4617 = vmatprep.subr.mxu0 0.0
        %4618 = vmatpush1.xpose.msra.mxu0 0.0
        %4619 = vmatprep.subr.mxu0 0.0
        %4620 = vmatpush1.xpose.msra.mxu0 0.0
        %4621 = vmatprep.subr.mxu0 0.0
        %4622 = vmatpush1.xpose.msra.mxu0 0.0
        %4623 = vmatprep.subr.mxu0 0.0
        %4624 = vmatpush1.xpose.msra.mxu0 0.0
        %4625 = vmatprep.subr.mxu0 0.0
        %4626 = vmatpush1.xpose.msra.mxu0 0.0
        %4627 = vmatprep.subr.mxu0 0.0
        %4628 = vmatpush1.xpose.msra.mxu0 0.0
        %4629 = vmatprep.subr.mxu0 0.0
        %4630 = vmatpush1.xpose.msra.mxu0 0.0
        %4631 = vmatprep.mubr.f32.mxu0 0.0
        %4632 = vmatmul.mubr.f32.gmra.mrb[0].mxu0 %v4561
        %v4633 = vpop.f32.mrb[0].mxu0
        %v4634 = vadd.f32 0.0, %v4633
        %v4635 = vpop.f32.mrb[0].mxu0
        %4636 = vdwg.mxu0
        %v4637 = vsel %vm2027, %v4634, -1e+10
        %v4638 = vsel %vm2029, %v4637, -inf
        %4639 = vmax.xlane.f32.xlu0 %v4638
        %v4640 = vpop.xlane.xlu0 %4639
        %v4641 = vsub.f32 %v4637, %v4640
        %v4642 = vmul.f32 %v4641, 1.442695
        %v4643 = vpow.pop %v4642
        %v4644 = vsel %vm2029, %v4643, 0.0
        %4645 = vadd.xlane.f32.xlu0 %v4644
        %v4646 = vpop.xlane.xlu0 %4645
        %v4647 = vrcp.pop %v4646
        %v4648 = vmul.f32 %v4643, %v4647
        %4649 = vrot.lane.b32.xlu0 %v4028, 72
        %v4650 = vpop.permute.xlu0 %4649
        %4651 = vrot.lane.b32.xlu0 %v4033, 72
        %v4652 = vpop.permute.xlu0 %4651
        %v4655 = vsel %vm2029, %v4648, 0
        %v4657 = vsel %vm2049, %v4652, 0
        %4659 = vmatprep.subr.mxu0 0.0
        %4660 = vmatpush1.msra.mxu0 %v4650
        %4661 = vmatprep.subr.mxu0 0.0
        %4662 = vmatpush1.msra.mxu0 %v4657
        %4663 = vmatprep.subr.mxu0 0.0
        %4664 = vmatpush1.msra.mxu0 0.0
        %4665 = vmatprep.subr.mxu0 0.0
        %4666 = vmatpush1.msra.mxu0 0.0
        %4667 = vmatprep.subr.mxu0 0.0
        %4668 = vmatpush1.msra.mxu0 0.0
        %4669 = vmatprep.subr.mxu0 0.0
        %4670 = vmatpush1.msra.mxu0 0.0
        %4671 = vmatprep.subr.mxu0 0.0
        %4672 = vmatpush1.msra.mxu0 0.0
        %4673 = vmatprep.subr.mxu0 0.0
        %4674 = vmatpush1.msra.mxu0 0.0
        %4675 = vmatprep.subr.mxu0 0.0
        %4676 = vmatpush1.msra.mxu0 0.0
        %4677 = vmatprep.subr.mxu0 0.0
        %4678 = vmatpush1.msra.mxu0 0.0
        %4679 = vmatprep.subr.mxu0 0.0
        %4680 = vmatpush1.msra.mxu0 0.0
        %4681 = vmatprep.subr.mxu0 0.0
        %4682 = vmatpush1.msra.mxu0 0.0
        %4683 = vmatprep.subr.mxu0 0.0
        %4684 = vmatpush1.msra.mxu0 0.0
        %4685 = vmatprep.subr.mxu0 0.0
        %4686 = vmatpush1.msra.mxu0 0.0
        %4687 = vmatprep.subr.mxu0 0.0
        %4688 = vmatpush1.msra.mxu0 0.0
        %4689 = vmatprep.subr.mxu0 0.0
        %4690 = vmatpush1.msra.mxu0 0.0
        %4691 = vmatprep.subr.mxu0 0.0
        %4692 = vmatpush1.msra.mxu0 0.0
        %4693 = vmatprep.subr.mxu0 0.0
        %4694 = vmatpush1.msra.mxu0 0.0
        %4695 = vmatprep.subr.mxu0 0.0
        %4696 = vmatpush1.msra.mxu0 0.0
        %4697 = vmatprep.subr.mxu0 0.0
        %4698 = vmatpush1.msra.mxu0 0.0
        %4699 = vmatprep.subr.mxu0 0.0
        %4700 = vmatpush1.msra.mxu0 0.0
        %4701 = vmatprep.subr.mxu0 0.0
        %4702 = vmatpush1.msra.mxu0 0.0
        %4703 = vmatprep.subr.mxu0 0.0
        %4704 = vmatpush1.msra.mxu0 0.0
        %4705 = vmatprep.subr.mxu0 0.0
        %4706 = vmatpush1.msra.mxu0 0.0
        %4707 = vmatprep.subr.mxu0 0.0
        %4708 = vmatpush1.msra.mxu0 0.0
        %4709 = vmatprep.subr.mxu0 0.0
        %4710 = vmatpush1.msra.mxu0 0.0
        %4711 = vmatprep.subr.mxu0 0.0
        %4712 = vmatpush1.msra.mxu0 0.0
        %4713 = vmatprep.subr.mxu0 0.0
        %4714 = vmatpush1.msra.mxu0 0.0
        %4715 = vmatprep.subr.mxu0 0.0
        %4716 = vmatpush1.msra.mxu0 0.0
        %4717 = vmatprep.subr.mxu0 0.0
        %4718 = vmatpush1.msra.mxu0 0.0
        %4719 = vmatprep.subr.mxu0 0.0
        %4720 = vmatpush1.msra.mxu0 0.0
        %4721 = vmatprep.subr.mxu0 0.0
        %4722 = vmatpush1.msra.mxu0 0.0
        %4723 = vmatprep.mubr.f32.mxu0 0.0
        %4724 = vmatmul.mubr.f32.gmra.mrb[0].mxu0 %v4655
        %v4725 = vpop.f32.mrb[0].mxu0
        %v4726 = vadd.f32 0.0, %v4725
        %v4727 = vpop.f32.mrb[0].mxu0
        %4728 = vdwg.mxu0
        %4730 = vrot.lane.b32.xlu0 %v4378, 8
        %v4731 = vpop.permute.xlu0 %4730
        %4734 = vrot.lane.b32.xlu0 %v4552, 16
        %v4735 = vpop.permute.xlu0 %4734
        %4738 = vrot.lane.b32.xlu0 %v4726, 24
        %v4739 = vpop.permute.xlu0 %4738
        %v4741 = vsel %vm970, %v4204, %v4731
        %v4742 = vsel %vm1646, %v4741, %v4735
        %v4743 = vsel %vm1648, %v4742, %v4739
        %s4744 = scalar_lea.vmem %s14, 32
        %v4745 = vld [vmem:[%s4744] sm:$0xff]
        %v4746 = vld [vmem:[%s4744 + $0x8] sm:$0xff]
        %v4747 = vld [vmem:[%s4744 + $0x10] sm:$0xff]
        %v4748 = vld [vmem:[%s4744 + $0x18] sm:$0xff]
        %s4749 = scalar_lea.vmem %s15, 1
        %v4750 = vld [vmem:[%s4749] sm:$0x1]
        %v4752 = vlaneseq
        %v4753 = vshrl.u32 %v4752, 7
        %v4754 = vsub.s32 0, %v4753
        %v4755 = vrot.slane %v4750, %v4754
        %v4758 = vsel %vm892, %v4743, 0
        %4760 = vmatprep.subr.mxu0 0.0
        %4761 = vmatpush1.msra.mxu0 %v4745
        %4762 = vmatprep.subr.mxu0 0.0
        %4763 = vmatpush1.msra.mxu0 %v4746
        %4764 = vmatprep.subr.mxu0 0.0
        %4765 = vmatpush1.msra.mxu0 %v4747
        %4766 = vmatprep.subr.mxu0 0.0
        %4767 = vmatpush1.msra.mxu0 %v4748
        %4768 = vmatprep.subr.mxu0 0.0
        %4769 = vmatpush1.msra.mxu0 0.0
        %4770 = vmatprep.subr.mxu0 0.0
        %4771 = vmatpush1.msra.mxu0 0.0
        %4772 = vmatprep.subr.mxu0 0.0
        %4773 = vmatpush1.msra.mxu0 0.0
        %4774 = vmatprep.subr.mxu0 0.0
        %4775 = vmatpush1.msra.mxu0 0.0
        %4776 = vmatprep.subr.mxu0 0.0
        %4777 = vmatpush1.msra.mxu0 0.0
        %4778 = vmatprep.subr.mxu0 0.0
        %4779 = vmatpush1.msra.mxu0 0.0
        %4780 = vmatprep.subr.mxu0 0.0
        %4781 = vmatpush1.msra.mxu0 0.0
        %4782 = vmatprep.subr.mxu0 0.0
        %4783 = vmatpush1.msra.mxu0 0.0
        %4784 = vmatprep.subr.mxu0 0.0
        %4785 = vmatpush1.msra.mxu0 0.0
        %4786 = vmatprep.subr.mxu0 0.0
        %4787 = vmatpush1.msra.mxu0 0.0
        %4788 = vmatprep.subr.mxu0 0.0
        %4789 = vmatpush1.msra.mxu0 0.0
        %4790 = vmatprep.subr.mxu0 0.0
        %4791 = vmatpush1.msra.mxu0 0.0
        %4792 = vmatprep.subr.mxu0 0.0
        %4793 = vmatpush1.msra.mxu0 0.0
        %4794 = vmatprep.subr.mxu0 0.0
        %4795 = vmatpush1.msra.mxu0 0.0
        %4796 = vmatprep.subr.mxu0 0.0
        %4797 = vmatpush1.msra.mxu0 0.0
        %4798 = vmatprep.subr.mxu0 0.0
        %4799 = vmatpush1.msra.mxu0 0.0
        %4800 = vmatprep.subr.mxu0 0.0
        %4801 = vmatpush1.msra.mxu0 0.0
        %4802 = vmatprep.subr.mxu0 0.0
        %4803 = vmatpush1.msra.mxu0 0.0
        %4804 = vmatprep.subr.mxu0 0.0
        %4805 = vmatpush1.msra.mxu0 0.0
        %4806 = vmatprep.subr.mxu0 0.0
        %4807 = vmatpush1.msra.mxu0 0.0
        %4808 = vmatprep.subr.mxu0 0.0
        %4809 = vmatpush1.msra.mxu0 0.0
        %4810 = vmatprep.subr.mxu0 0.0
        %4811 = vmatpush1.msra.mxu0 0.0
        %4812 = vmatprep.subr.mxu0 0.0
        %4813 = vmatpush1.msra.mxu0 0.0
        %4814 = vmatprep.subr.mxu0 0.0
        %4815 = vmatpush1.msra.mxu0 0.0
        %4816 = vmatprep.subr.mxu0 0.0
        %4817 = vmatpush1.msra.mxu0 0.0
        %4818 = vmatprep.subr.mxu0 0.0
        %4819 = vmatpush1.msra.mxu0 0.0
        %4820 = vmatprep.subr.mxu0 0.0
        %4821 = vmatpush1.msra.mxu0 0.0
        %4822 = vmatprep.subr.mxu0 0.0
        %4823 = vmatpush1.msra.mxu0 0.0
        %4824 = vmatprep.mubr.f32.mxu0 0.0
        %4825 = vmatmul.mubr.f32.gmra.mrb[0].mxu0 %v4758
        %v4826 = vpop.f32.mrb[0].mxu0
        %v4827 = vadd.f32 %v4755, %v4826
        %v4828 = vpop.f32.mrb[0].mxu0
        %4829 = vdwg.mxu0
        %v4830 = vadd.f32 %v3860, %v4827
        %s4831 = scalar_lea.vmem %s16, 1
        %v4832 = vld [vmem:[%s4831] sm:$0x1]
        %s4833 = scalar_lea.vmem %s17, 1
        %v4834 = vld [vmem:[%s4833] sm:$0x1]
        %v4835 = vsel %vm892, %v4830, 0.0
        %4836 = vadd.xlane.f32.xlu0 %v4835
        %v4837 = vpop.xlane.xlu0 %4836
        %v4838 = vmul.f32 %v4837, %v1740
        %v4839 = vsub.f32 %v4830, %v4838
        %v4840 = vmul.f32 %v4839, %v4839
        %v4841 = vsel %vm892, %v4840, 0.0
        %4842 = vadd.xlane.f32.xlu0 %v4841
        %v4843 = vpop.xlane.xlu0 %4842
        %v4844 = vmul.f32 %v4843, %v1740
        %v4845 = vadd.f32 %v4844, 1e-05
        %v4846 = vrsqrt.pop %v4845
        %v4847 = vmul.f32 %v4839, %v4846
        %v4849 = vlaneseq
        %v4850 = vshrl.u32 %v4849, 7
        %v4851 = vsub.s32 0, %v4850
        %v4852 = vrot.slane %v4832, %v4851
        %v4854 = vmul.f32 %v4847, %v4852
        %v4856 = vlaneseq
        %v4857 = vshrl.u32 %v4856, 7
        %v4858 = vsub.s32 0, %v4857
        %v4859 = vrot.slane %v4834, %v4858
        %v4861 = vadd.f32 %v4854, %v4859
        %s4862 = scalar_lea.vmem %s18, 32
        %v4863 = vld [vmem:[%s4862] sm:$0xff]
        %v4864 = vld [vmem:[%s4862 + $0x8] sm:$0xff]
        %v4865 = vld [vmem:[%s4862 + $0x10] sm:$0xff]
        %v4866 = vld [vmem:[%s4862 + $0x18] sm:$0xff]
        %s4867 = scalar_lea.vmem %s19, 1
        %v4868 = vld [vmem:[%s4867] sm:$0x1]
        %v4870 = vlaneseq
        %v4871 = vshrl.u32 %v4870, 7
        %v4872 = vsub.s32 0, %v4871
        %v4873 = vrot.slane %v4868, %v4872
        %v4876 = vsel %vm892, %v4861, 0
        %4878 = vmatprep.subr.mxu0 0.0
        %4879 = vmatpush1.msra.mxu0 %v4863
        %4880 = vmatprep.subr.mxu0 0.0
        %4881 = vmatpush1.msra.mxu0 %v4864
        %4882 = vmatprep.subr.mxu0 0.0
        %4883 = vmatpush1.msra.mxu0 %v4865
        %4884 = vmatprep.subr.mxu0 0.0
        %4885 = vmatpush1.msra.mxu0 %v4866
        %4886 = vmatprep.subr.mxu0 0.0
        %4887 = vmatpush1.msra.mxu0 0.0
        %4888 = vmatprep.subr.mxu0 0.0
        %4889 = vmatpush1.msra.mxu0 0.0
        %4890 = vmatprep.subr.mxu0 0.0
        %4891 = vmatpush1.msra.mxu0 0.0
        %4892 = vmatprep.subr.mxu0 0.0
        %4893 = vmatpush1.msra.mxu0 0.0
        %4894 = vmatprep.subr.mxu0 0.0
        %4895 = vmatpush1.msra.mxu0 0.0
        %4896 = vmatprep.subr.mxu0 0.0
        %4897 = vmatpush1.msra.mxu0 0.0
        %4898 = vmatprep.subr.mxu0 0.0
        %4899 = vmatpush1.msra.mxu0 0.0
        %4900 = vmatprep.subr.mxu0 0.0
        %4901 = vmatpush1.msra.mxu0 0.0
        %4902 = vmatprep.subr.mxu0 0.0
        %4903 = vmatpush1.msra.mxu0 0.0
        %4904 = vmatprep.subr.mxu0 0.0
        %4905 = vmatpush1.msra.mxu0 0.0
        %4906 = vmatprep.subr.mxu0 0.0
        %4907 = vmatpush1.msra.mxu0 0.0
        %4908 = vmatprep.subr.mxu0 0.0
        %4909 = vmatpush1.msra.mxu0 0.0
        %4910 = vmatprep.subr.mxu0 0.0
        %4911 = vmatpush1.msra.mxu0 0.0
        %4912 = vmatprep.subr.mxu0 0.0
        %4913 = vmatpush1.msra.mxu0 0.0
        %4914 = vmatprep.subr.mxu0 0.0
        %4915 = vmatpush1.msra.mxu0 0.0
        %4916 = vmatprep.subr.mxu0 0.0
        %4917 = vmatpush1.msra.mxu0 0.0
        %4918 = vmatprep.subr.mxu0 0.0
        %4919 = vmatpush1.msra.mxu0 0.0
        %4920 = vmatprep.subr.mxu0 0.0
        %4921 = vmatpush1.msra.mxu0 0.0
        %4922 = vmatprep.subr.mxu0 0.0
        %4923 = vmatpush1.msra.mxu0 0.0
        %4924 = vmatprep.subr.mxu0 0.0
        %4925 = vmatpush1.msra.mxu0 0.0
        %4926 = vmatprep.subr.mxu0 0.0
        %4927 = vmatpush1.msra.mxu0 0.0
        %4928 = vmatprep.subr.mxu0 0.0
        %4929 = vmatpush1.msra.mxu0 0.0
        %4930 = vmatprep.subr.mxu0 0.0
        %4931 = vmatpush1.msra.mxu0 0.0
        %4932 = vmatprep.subr.mxu0 0.0
        %4933 = vmatpush1.msra.mxu0 0.0
        %4934 = vmatprep.subr.mxu0 0.0
        %4935 = vmatpush1.msra.mxu0 0.0
        %4936 = vmatprep.subr.mxu0 0.0
        %4937 = vmatpush1.msra.mxu0 0.0
        %4938 = vmatprep.subr.mxu0 0.0
        %4939 = vmatpush1.msra.mxu0 0.0
        %4940 = vmatprep.subr.mxu0 0.0
        %4941 = vmatpush1.msra.mxu0 0.0
        %4942 = vmatprep.mubr.f32.mxu0 0.0
        %4943 = vmatmul.mubr.f32.gmra.mrb[0].mxu0 %v4876
        %v4944 = vpop.f32.mrb[0].mxu0
        %v4945 = vadd.f32 %v4873, %v4944
        %v4946 = vpop.f32.mrb[0].mxu0
        %4947 = vdwg.mxu0
        %v4948 = vmax.f32 %v4945, 0.0
        %s4949 = scalar_lea.vmem %s20, 64
        %v4950 = vld [vmem:[%s4949] sm:$0xff]
        %v4951 = vld [vmem:[%s4949 + $0x8] sm:$0xff]
        %v4952 = vld [vmem:[%s4949 + $0x10] sm:$0xff]
        %v4953 = vld [vmem:[%s4949 + $0x18] sm:$0xff]
        %v4954 = vld [vmem:[%s4949 + $0x20] sm:$0xff]
        %v4955 = vld [vmem:[%s4949 + $0x28] sm:$0xff]
        %v4956 = vld [vmem:[%s4949 + $0x30] sm:$0xff]
        %v4957 = vld [vmem:[%s4949 + $0x38] sm:$0xff]
        %s4958 = scalar_lea.vmem %s21, 1
        %v4959 = vld [vmem:[%s4958] sm:$0x1]
        %v4961 = vlaneseq
        %v4962 = vshrl.u32 %v4961, 7
        %v4963 = vsub.s32 0, %v4962
        %v4964 = vrot.slane %v4959, %v4963
        %v4967 = vsel %vm2873, %v4948, 0
        %4969 = vmatprep.subr.mxu0 0.0
        %4970 = vmatpush1.msra.mxu0 %v4950
        %4971 = vmatprep.subr.mxu0 0.0
        %4972 = vmatpush1.msra.mxu0 %v4951
        %4973 = vmatprep.subr.mxu0 0.0
        %4974 = vmatpush1.msra.mxu0 %v4952
        %4975 = vmatprep.subr.mxu0 0.0
        %4976 = vmatpush1.msra.mxu0 %v4953
        %4977 = vmatprep.subr.mxu0 0.0
        %4978 = vmatpush1.msra.mxu0 %v4954
        %4979 = vmatprep.subr.mxu0 0.0
        %4980 = vmatpush1.msra.mxu0 %v4955
        %4981 = vmatprep.subr.mxu0 0.0
        %4982 = vmatpush1.msra.mxu0 %v4956
        %4983 = vmatprep.subr.mxu0 0.0
        %4984 = vmatpush1.msra.mxu0 %v4957
        %4985 = vmatprep.subr.mxu0 0.0
        %4986 = vmatpush1.msra.mxu0 0.0
        %4987 = vmatprep.subr.mxu0 0.0
        %4988 = vmatpush1.msra.mxu0 0.0
        %4989 = vmatprep.subr.mxu0 0.0
        %4990 = vmatpush1.msra.mxu0 0.0
        %4991 = vmatprep.subr.mxu0 0.0
        %4992 = vmatpush1.msra.mxu0 0.0
        %4993 = vmatprep.subr.mxu0 0.0
        %4994 = vmatpush1.msra.mxu0 0.0
        %4995 = vmatprep.subr.mxu0 0.0
        %4996 = vmatpush1.msra.mxu0 0.0
        %4997 = vmatprep.subr.mxu0 0.0
        %4998 = vmatpush1.msra.mxu0 0.0
        %4999 = vmatprep.subr.mxu0 0.0
        %5000 = vmatpush1.msra.mxu0 0.0
        %5001 = vmatprep.subr.mxu0 0.0
        %5002 = vmatpush1.msra.mxu0 0.0
        %5003 = vmatprep.subr.mxu0 0.0
        %5004 = vmatpush1.msra.mxu0 0.0
        %5005 = vmatprep.subr.mxu0 0.0
        %5006 = vmatpush1.msra.mxu0 0.0
        %5007 = vmatprep.subr.mxu0 0.0
        %5008 = vmatpush1.msra.mxu0 0.0
        %5009 = vmatprep.subr.mxu0 0.0
        %5010 = vmatpush1.msra.mxu0 0.0
        %5011 = vmatprep.subr.mxu0 0.0
        %5012 = vmatpush1.msra.mxu0 0.0
        %5013 = vmatprep.subr.mxu0 0.0
        %5014 = vmatpush1.msra.mxu0 0.0
        %5015 = vmatprep.subr.mxu0 0.0
        %5016 = vmatpush1.msra.mxu0 0.0
        %5017 = vmatprep.subr.mxu0 0.0
        %5018 = vmatpush1.msra.mxu0 0.0
        %5019 = vmatprep.subr.mxu0 0.0
        %5020 = vmatpush1.msra.mxu0 0.0
        %5021 = vmatprep.subr.mxu0 0.0
        %5022 = vmatpush1.msra.mxu0 0.0
        %5023 = vmatprep.subr.mxu0 0.0
        %5024 = vmatpush1.msra.mxu0 0.0
        %5025 = vmatprep.subr.mxu0 0.0
        %5026 = vmatpush1.msra.mxu0 0.0
        %5027 = vmatprep.subr.mxu0 0.0
        %5028 = vmatpush1.msra.mxu0 0.0
        %5029 = vmatprep.subr.mxu0 0.0
        %5030 = vmatpush1.msra.mxu0 0.0
        %5031 = vmatprep.subr.mxu0 0.0
        %5032 = vmatpush1.msra.mxu0 0.0
        %5033 = vmatprep.mubr.f32.mxu0 0.0
        %5034 = vmatmul.mubr.f32.gmra.mrb[0].mxu0 %v4967
        %v5035 = vpop.f32.mrb[0].mxu0
        %v5036 = vadd.f32 %v4964, %v5035
        %v5037 = vpop.f32.mrb[0].mxu0
        %5038 = vdwg.mxu0
        %v5039 = vadd.f32 %v4861, %v5036
        %s5040 = scalar_lea.vmem %s22, 1
        %v5041 = vld [vmem:[%s5040] sm:$0x1]
        %s5042 = scalar_lea.vmem %s23, 1
        %v5043 = vld [vmem:[%s5042] sm:$0x1]
        %v5044 = vsel %vm892, %v5039, 0.0
        %5045 = vadd.xlane.f32.xlu0 %v5044
        %v5046 = vpop.xlane.xlu0 %5045
        %v5047 = vmul.f32 %v5046, %v1740
        %v5048 = vsub.f32 %v5039, %v5047
        %v5049 = vmul.f32 %v5048, %v5048
        %v5050 = vsel %vm892, %v5049, 0.0
        %5051 = vadd.xlane.f32.xlu0 %v5050
        %v5052 = vpop.xlane.xlu0 %5051
        %v5053 = vmul.f32 %v5052, %v1740
        %v5054 = vadd.f32 %v5053, 1e-05
        %v5055 = vrsqrt.pop %v5054
        %v5056 = vmul.f32 %v5048, %v5055
        %v5058 = vlaneseq
        %v5059 = vshrl.u32 %v5058, 7
        %v5060 = vsub.s32 0, %v5059
        %v5061 = vrot.slane %v5041, %v5060
        %v5063 = vmul.f32 %v5056, %v5061
        %v5065 = vlaneseq
        %v5066 = vshrl.u32 %v5065, 7
        %v5067 = vsub.s32 0, %v5066
        %v5068 = vrot.slane %v5043, %v5067
        %v5070 = vadd.f32 %v5063, %v5068
        %5071 = vst.msk [vmem:[%s859] sm:$0xff] %vm2029, %v4126
        %s5072 = scalar_lea.vmem %s859, 8 [#allocation4]
        %5073 = vst.msk [vmem:[%s5072] sm:$0xff] %vm2029, %v4300
        %s5074 = scalar_lea.vmem %s859, 16 [#allocation4]
        %5075 = vst.msk [vmem:[%s5074] sm:$0xff] %vm2029, %v4474
        %s5076 = scalar_lea.vmem %s859, 24 [#allocation4]
        %5077 = vst.msk [vmem:[%s5076] sm:$0xff] %vm2029, %v4648
        %v5078 = vld [vmem:[%s24] sm:$0xff]
        %v5079 = vld [vmem:[%s24 + $0x8] sm:$0xff]
        %v5080 = vld [vmem:[%s24 + $0x10] sm:$0xff]
        %v5081 = vld [vmem:[%s24 + $0x18] sm:$0xff]
        %v5082 = vld [vmem:[%s25] sm:$0x1]
        %v5084 = vlaneseq
        %v5085 = vshrl.u32 %v5084, 7
        %v5086 = vsub.s32 0, %v5085
        %v5087 = vrot.slane %v5082, %v5086
        %v5090 = vsel %vm892, %v5070, 0
        %5092 = vmatprep.subr.mxu0 0.0
        %5093 = vmatpush1.msra.mxu0 %v5078
        %5094 = vmatprep.subr.mxu0 0.0
        %5095 = vmatpush1.msra.mxu0 %v5079
        %5096 = vmatprep.subr.mxu0 0.0
        %5097 = vmatpush1.msra.mxu0 %v5080
        %5098 = vmatprep.subr.mxu0 0.0
        %5099 = vmatpush1.msra.mxu0 %v5081
        %5100 = vmatprep.subr.mxu0 0.0
        %5101 = vmatpush1.msra.mxu0 0.0
        %5102 = vmatprep.subr.mxu0 0.0
        %5103 = vmatpush1.msra.mxu0 0.0
        %5104 = vmatprep.subr.mxu0 0.0
        %5105 = vmatpush1.msra.mxu0 0.0
        %5106 = vmatprep.subr.mxu0 0.0
        %5107 = vmatpush1.msra.mxu0 0.0
        %5108 = vmatprep.subr.mxu0 0.0
        %5109 = vmatpush1.msra.mxu0 0.0
        %5110 = vmatprep.subr.mxu0 0.0
        %5111 = vmatpush1.msra.mxu0 0.0
        %5112 = vmatprep.subr.mxu0 0.0
        %5113 = vmatpush1.msra.mxu0 0.0
        %5114 = vmatprep.subr.mxu0 0.0
        %5115 = vmatpush1.msra.mxu0 0.0
        %5116 = vmatprep.subr.mxu0 0.0
        %5117 = vmatpush1.msra.mxu0 0.0
        %5118 = vmatprep.subr.mxu0 0.0
        %5119 = vmatpush1.msra.mxu0 0.0
        %5120 = vmatprep.subr.mxu0 0.0
        %5121 = vmatpush1.msra.mxu0 0.0
        %5122 = vmatprep.subr.mxu0 0.0
        %5123 = vmatpush1.msra.mxu0 0.0
        %5124 = vmatprep.subr.mxu0 0.0
        %5125 = vmatpush1.msra.mxu0 0.0
        %5126 = vmatprep.subr.mxu0 0.0
        %5127 = vmatpush1.msra.mxu0 0.0
        %5128 = vmatprep.subr.mxu0 0.0
        %5129 = vmatpush1.msra.mxu0 0.0
        %5130 = vmatprep.subr.mxu0 0.0
        %5131 = vmatpush1.msra.mxu0 0.0
        %5132 = vmatprep.subr.mxu0 0.0
        %5133 = vmatpush1.msra.mxu0 0.0
        %5134 = vmatprep.subr.mxu0 0.0
        %5135 = vmatpush1.msra.mxu0 0.0
        %5136 = vmatprep.subr.mxu0 0.0
        %5137 = vmatpush1.msra.mxu0 0.0
        %5138 = vmatprep.subr.mxu0 0.0
        %5139 = vmatpush1.msra.mxu0 0.0
        %5140 = vmatprep.subr.mxu0 0.0
        %5141 = vmatpush1.msra.mxu0 0.0
        %5142 = vmatprep.subr.mxu0 0.0
        %5143 = vmatpush1.msra.mxu0 0.0
        %5144 = vmatprep.subr.mxu0 0.0
        %5145 = vmatpush1.msra.mxu0 0.0
        %5146 = vmatprep.subr.mxu0 0.0
        %5147 = vmatpush1.msra.mxu0 0.0
        %5148 = vmatprep.subr.mxu0 0.0
        %5149 = vmatpush1.msra.mxu0 0.0
        %5150 = vmatprep.subr.mxu0 0.0
        %5151 = vmatpush1.msra.mxu0 0.0
        %5152 = vmatprep.subr.mxu0 0.0
        %5153 = vmatpush1.msra.mxu0 0.0
        %5154 = vmatprep.subr.mxu0 0.0
        %5155 = vmatpush1.msra.mxu0 0.0
        %5156 = vmatprep.mubr.f32.mxu0 0.0
        %5157 = vmatmul.mubr.f32.gmra.mrb[0].mxu0 %v5090
        %v5158 = vpop.f32.mrb[0].mxu0
        %v5159 = vadd.f32 %v5087, %v5158
        %v5160 = vpop.f32.mrb[0].mxu0
        %5161 = vdwg.mxu0
        %vm5162 = vcmask 146432
        %5163 = vst.msk [vmem:[%s852] sm:$0xff] %vm5162, %v5159
        %s5164 = sand.u32 %s619, 1
        %s5165 = scalar_lea.sflag [#allocation3], %s5164
        %s5166 = sand.u32 %s619, 1
        %s5167 = smul.addr %s5166, 8
        %s5168 = scalar_lea.vmem [#allocation2], %s5167
        %s5169 = sand.u32 %s645, 1
        %s5170 = scalar_lea.sflag [#allocation5], %s5169
        %s5171 = sand.u32 %s645, 1
        %s5172 = smul.addr %s5171, 32
        %s5173 = scalar_lea.vmem [#allocation4], %s5172
        // Predicated region
        $region125: #{seq2seq_forward.3} parent=123 // pred_check
          %p5174 = pneg %p629
        $region126: #{seq2seq_forward.3} parent=123 // pred_check_branch
          %5176 = sbr.rel (%p5174) target = $region128
        $region127: #{seq2seq_forward.3} parent=123 // pred_region
          %s5178 = ssub.s32 128, 128
          %5179 = vsyncadd %s5165, %s5178
          %s5180 = smul.addr %s45, 128
          %s5181 = scalar_lea.hbm %s26, %s5180
          %s5183 = sshll.u32 %s5168, 4
          %s5184 = int_to_ptr.vmem [resolvable:$true] %s5183
          %5186 = dma.vmem_to_hbm [thread:$0]  %s5184, 128, %s5181, %s5165
        $region128: #{seq2seq_forward.3} parent=123 // pred_fallthru
          _
        // Predicated region
        $region129: #{seq2seq_forward.3} parent=123 // pred_check
          %p5187 = pneg %p655
        $region130: #{seq2seq_forward.3} parent=123 // pred_check_branch
          %5189 = sbr.rel (%p5187) target = $region132
        $region131: #{seq2seq_forward.3} parent=123 // pred_region
          %s5191 = ssub.s32 512, 512
          %5192 = vsyncadd %s5170, %s5191
          %s5193 = smul.addr %s45, 4
          %s5194 = smul.addr %s5193, 128
          %s5195 = scalar_lea.hbm %s27, %s5194
          %s5196 = sshll.u32 %s5173, 4
          %s5197 = int_to_ptr.vmem [resolvable:$true] %s5196
          %5202 = dma.vmem_to_hbm [thread:$0]  %s5197, 512, %s5195, %s5170, 128, 128, 8
        $region132: #{seq2seq_forward.3} parent=123 // pred_fallthru
          _
      $region124: #{seq2seq_forward.3} parent=5 // pred_fallthru
        _
      %p5203 = scmp.le.s32.totalorder 2, %s40
      // Predicated region
      $region133: #{seq2seq_forward.3} parent=5 // pred_check
        %p5204 = pneg %p5203
      $region134: #{seq2seq_forward.3} parent=5 // pred_check_branch
        %5206 = sbr.rel (%p5204) target = $region136
      $region135: #{seq2seq_forward.3} parent=5 // pred_region
        %s5207 = ssub.s32 %s40, 2
        // Predicated region
        $region137: #{seq2seq_forward.3} parent=135 // pred_check
          %p5208 = pneg %p635
        $region138: #{seq2seq_forward.3} parent=135 // pred_check_branch
          %5210 = sbr.rel (%p5208) target = $region140
        $region139: #{seq2seq_forward.3} parent=135 // pred_region
          %s5211 = sand.u32 %s620, 1
          %s5212 = scalar_lea.sflag [#allocation3], %s5211
          %s5213 = sand.u32 %s620, 1
          %s5214 = smul.addr %s5213, 8
          %s5215 = scalar_lea.vmem [#allocation2], %s5214
          %5216 = dma.done %s5212, 128
        $region140: #{seq2seq_forward.3} parent=135 // pred_fallthru
          _
        // Predicated region
        $region141: #{seq2seq_forward.3} parent=135 // pred_check
          %p5217 = pneg %p661
        $region142: #{seq2seq_forward.3} parent=135 // pred_check_branch
          %5219 = sbr.rel (%p5217) target = $region144
        $region143: #{seq2seq_forward.3} parent=135 // pred_region
          %s5220 = sand.u32 %s646, 1
          %s5221 = scalar_lea.sflag [#allocation5], %s5220
          %s5222 = sand.u32 %s646, 1
          %s5223 = smul.addr %s5222, 32
          %s5224 = scalar_lea.vmem [#allocation4], %s5223
          %5225 = dma.done %s5221, 512
        $region144: #{seq2seq_forward.3} parent=135 // pred_fallthru
          _
      $region136: #{seq2seq_forward.3} parent=5 // pred_fallthru
        _
    $region6: #{seq2seq_forward.3} parent=1 // loop_footer
      %s44 = sadd.s32 1, %s40
    $region7: #{seq2seq_forward.3} parent=1 // loop_footer_branch
      %39 = sbr.rel target = $region3
    $region8: #{seq2seq_forward.3} parent=1 // loop_exit
      _
    %5226 = vsyncpa [#allocation3], 1
    %s5227 = scalar_lea.sflag [#allocation3], 1
    %5228 = vsyncpa %s5227, 1
    %5229 = vsyncpa [#allocation5], 1
    %s5230 = scalar_lea.sflag [#allocation5], 1
    %5231 = vsyncpa %s5230, 1

</llo_original>
